<compile_context>
chip_gen: v5e
topology: v5e:2x2
jax: 0.10.0
libtpu: 0.0.40
codegen_flags: <defaults>
</compile_context>

<pallas_src>
import functools
from dataclasses import dataclass

import numpy as np
import jax
import jax.numpy as jnp
from jax import lax
from jax.experimental import pallas as pl
from jax.experimental.pallas import tpu as pltpu


# ----------------------------------------------------------------------------- constants / config
MATMUL_DTYPE = jnp.bfloat16     # bf16 matmul operands, f32 accumulation
HIDDEN_DTYPE = jnp.bfloat16     # residual stream storage dtype in HBM
MASK_VALUE = -1e30              # masked attention score (finite -> no NaN in exp)
ATTN_TILE = 128                 # Q / KV tile (matches create_document_ids pad-to-128)
MAX_ROW_TILE = 512              # row tile cap for mem-bound kernels


@dataclass
class Siglip2VisionConfig:
    hidden_size: int = 32
    intermediate_size: int = 64
    num_hidden_layers: int = 2
    num_attention_heads: int = 4
    num_channels: int = 3
    patch_size: int = 4
    layer_norm_eps: float = 1e-6
    attention_dropout: float = 0.0   # inference path: dropout disabled
    num_patches: int = 16            # positional grid is 4x4


@functools.lru_cache(maxsize=None)
def _vmem_limit_bytes():
    # Generation-aware VMEM budget (~75% of physical: ~96 MiB v5e/v6e, ~48 MiB v7x).
    try:
        cap = int(pltpu.get_tpu_info().vmem_capacity_bytes)
        return int(min(max(32 << 20, (cap * 3) // 4), 112 << 20))
    except Exception:
        return 48 << 20


def _cparams(dim_sems):
    return pltpu.CompilerParams(dimension_semantics=dim_sems,
                                vmem_limit_bytes=_vmem_limit_bytes())


def _row_tile(s_pad):
    # Largest multiple-of-128 row tile (<= MAX_ROW_TILE) dividing the padded length.
    for t in (512, 384, 256, 128):
        if t <= MAX_ROW_TILE and s_pad % t == 0:
            return t
    return ATTN_TILE


# ----------------------------------------------------------------------------- kernels
def _embed_kernel(x_ref, w_ref, b_ref, pos_ref, o_ref):
    # patch linear (bf16 x bf16 -> f32 accumulate) + positional-embedding add
    y = jnp.dot(x_ref[...].astype(MATMUL_DTYPE), w_ref[...],
                preferred_element_type=jnp.float32)
    o_ref[...] = (y + b_ref[...] + pos_ref[...]).astype(o_ref.dtype)


def _ln_qkv_kernel(x_ref, lnw_ref, lnb_ref, w_ref, b_ref, q_ref, k_ref, v_ref,
                   *, eps, d):
    # LayerNorm1 + ONE fused (D, 3D) QKV projection.
    # Softmax scale is already folded into the first D columns of w/b.
    x = x_ref[...].astype(jnp.float32)
    mu = jnp.mean(x, axis=-1, keepdims=True)
    xc = x - mu
    var = jnp.mean(xc * xc, axis=-1, keepdims=True)
    y = (xc * lax.rsqrt(var + eps) * lnw_ref[...] + lnb_ref[...]).astype(MATMUL_DTYPE)
    qkv = jnp.dot(y, w_ref[...], preferred_element_type=jnp.float32) + b_ref[...]
    q_ref[...] = qkv[:, :d].astype(q_ref.dtype)
    k_ref[...] = qkv[:, d:2 * d].astype(k_ref.dtype)
    v_ref[...] = qkv[:, 2 * d:].astype(v_ref.dtype)


def _attn_block_kernel(meta_ref,                                    # scalar prefetch (SMEM)
                       q_ref, k_ref, v_ref, dq_ref, dk_ref, res_ref,
                       ow_ref, ob_ref, ln2w_ref, ln2b_ref,
                       w1_ref, b1_ref, w2_ref, b2_ref,
                       o_ref,
                       m_scr, l_scr, acc_scr,
                       *, eps, num_heads, head_dim):
    i = pl.program_id(0)
    j = pl.program_id(1)
    n_active = meta_ref[1, i]          # number of KV tiles that overlap query tile i

    @pl.when(j == 0)
    def _init():
        m_scr[...] = jnp.full(m_scr.shape, -jnp.inf, dtype=m_scr.dtype)
        l_scr[...] = jnp.zeros_like(l_scr)
        acc_scr[...] = jnp.zeros_like(acc_scr)

    # The K/V/doc_col index_maps already restrict this axis to overlapping KV
    # tiles; trailing steps (j >= n_active) re-point at the last active tile
    # (no re-DMA) and are skipped here.
    @pl.when(j < n_active)
    def _compute():
        q = q_ref[...]                                    # (TQ, D) bf16, pre-scaled
        k = k_ref[...]                                    # (TK, D) bf16
        v = v_ref[...]                                    # (TK, D) bf16
        mask = dq_ref[...] == dk_ref[...]                 # (TQ,1)==(1,TK) -> (TQ,TK)
        for h in range(num_heads):                        # heads packed along lanes
            sl = slice(h * head_dim, (h + 1) * head_dim)
            s = lax.dot_general(q[:, sl], k[:, sl],
                                (((1,), (1,)), ((), ())),
                                preferred_element_type=jnp.float32)    # (TQ, TK)
            s = jnp.where(mask, s, MASK_VALUE)
            m_prev = m_scr[h]                                          # (TQ, 1)
            m_new = jnp.maximum(m_prev, jnp.max(s, axis=-1, keepdims=True))
            alpha = jnp.exp(m_prev - m_new)
            p = jnp.exp(s - m_new)
            # FIX: rows whose doc id is absent from this (overlapping) KV tile
            # are fully masked; without this their p would be exp(0)=1 everywhere.
            p = jnp.where(mask, p, 0.0)
            l_scr[h] = alpha * l_scr[h] + jnp.sum(p, axis=-1, keepdims=True)
            pv = lax.dot_general(p.astype(MATMUL_DTYPE), v[:, sl],
                                 (((1,), (0,)), ((), ())),
                                 preferred_element_type=jnp.float32)   # (TQ, Dh)
            acc_scr[h] = alpha * acc_scr[h] + pv
            m_scr[h] = m_new

    @pl.when(j == pl.num_programs(1) - 1)
    def _epilogue():
        # Assemble the lane-dense (TQ, D) attention output once, then a single
        # full-contraction-depth (TQ,D)x(D,D) out-projection MXU matmul.
        o = jnp.concatenate([acc_scr[h] / l_scr[h] for h in range(num_heads)],
                            axis=-1)                                   # (TQ, D) f32
        y = jnp.dot(o.astype(MATMUL_DTYPE), ow_ref[...],
                    preferred_element_type=jnp.float32) + ob_ref[...]
        res2 = y + res_ref[...].astype(jnp.float32)        # prenorm residual_out
        # LayerNorm2
        mu = jnp.mean(res2, axis=-1, keepdims=True)
        xc = res2 - mu
        var = jnp.mean(xc * xc, axis=-1, keepdims=True)
        x2 = xc * lax.rsqrt(var + eps) * ln2w_ref[...] + ln2b_ref[...]
        # MLP: fc1 -> gelu(tanh) -> fc2, then second residual add
        # TODO(synk): mlp_func is undefined in the reference source; assumed the
        # standard Siglip2 MLP (gelu_pytorch_tanh activation).
        h1 = jnp.dot(x2.astype(MATMUL_DTYPE), w1_ref[...],
                     preferred_element_type=jnp.float32) + b1_ref[...]
        h1 = jax.nn.gelu(h1, approximate=True)
        h2 = jnp.dot(h1.astype(MATMUL_DTYPE), w2_ref[...],
                     preferred_element_type=jnp.float32) + b2_ref[...]
        o_ref[...] = (res2 + h2).astype(o_ref.dtype)


def _ln_kernel(x_ref, w_ref, b_ref, o_ref, *, eps):
    x = x_ref[...].astype(jnp.float32)
    mu = jnp.mean(x, axis=-1, keepdims=True)
    xc = x - mu
    var = jnp.mean(xc * xc, axis=-1, keepdims=True)
    o_ref[...] = (xc * lax.rsqrt(var + eps) * w_ref[...] + b_ref[...]).astype(o_ref.dtype)


# ----------------------------------------------------------------------------- wrappers
def embed(seq_patches, w_bf16, b, pos, *, row_tile):
    Sp, Pd = seq_patches.shape
    D = w_bf16.shape[1]
    nt = Sp // row_tile
    return pl.pallas_call(
        _embed_kernel,
        grid=(nt,),
        in_specs=[pl.BlockSpec((row_tile, Pd), lambda i: (i, 0)),
                  pl.BlockSpec((Pd, D), lambda i: (0, 0)),      # weight resident
                  pl.BlockSpec((1, D), lambda i: (0, 0)),
                  pl.BlockSpec((row_tile, D), lambda i: (i, 0))],
        out_specs=pl.BlockSpec((row_tile, D), lambda i: (i, 0)),
        out_shape=jax.ShapeDtypeStruct((Sp, D), HIDDEN_DTYPE),
        compiler_params=_cparams(("parallel",)),
    )(seq_patches, w_bf16, b, pos)


def ln_qkv(x, lw, *, eps, row_tile):
    Sp, D = x.shape
    D3 = lw['qkv_w'].shape[1]
    nt = Sp // row_tile
    row_spec = pl.BlockSpec((row_tile, D), lambda i: (i, 0))
    sds = jax.ShapeDtypeStruct((Sp, D), MATMUL_DTYPE)
    return pl.pallas_call(
        functools.partial(_ln_qkv_kernel, eps=eps, d=D),
        grid=(nt,),
        in_specs=[row_spec,
                  pl.BlockSpec((1, D), lambda i: (0, 0)),
                  pl.BlockSpec((1, D), lambda i: (0, 0)),
                  pl.BlockSpec((D, D3), lambda i: (0, 0)),      # fused QKV weight resident
                  pl.BlockSpec((1, D3), lambda i: (0, 0))],
        out_specs=(row_spec, row_spec, row_spec),
        out_shape=(sds, sds, sds),
        compiler_params=_cparams(("parallel",)),
    )(x, lw['ln1_w'], lw['ln1_b'], lw['qkv_w'], lw['qkv_b'])


def attention_block(q, k, v, doc_row, doc_col, kv_meta, max_kv, residual, lw,
                    *, num_heads, eps):
    Sp, D = residual.shape
    head_dim = D // num_heads
    I = lw['fc1_w'].shape[1]
    nt = Sp // ATTN_TILE
    kern = functools.partial(_attn_block_kernel, eps=eps,
                             num_heads=num_heads, head_dim=head_dim)

    # Data-dependent KV index: only overlapping KV tiles are ever DMA'd.
    def q_map(i, j, meta):
        return (i, 0)

    def kv_map(i, j, meta):
        return (meta[0, i] + jnp.minimum(j, meta[1, i] - 1), 0)

    def dcol_map(i, j, meta):
        return (0, meta[0, i] + jnp.minimum(j, meta[1, i] - 1))

    def w_map(i, j, meta):
        return (0, 0)

    grid_spec = pltpu.PrefetchScalarGridSpec(
        num_scalar_prefetch=1,
        grid=(nt, max_kv),
        in_specs=[
            pl.BlockSpec((ATTN_TILE, D), q_map),        # Q
            pl.BlockSpec((ATTN_TILE, D), kv_map),       # K   (active tiles only)
            pl.BlockSpec((ATTN_TILE, D), kv_map),       # V   (active tiles only)
            pl.BlockSpec((ATTN_TILE, 1), q_map),        # doc ids (query rows)
            pl.BlockSpec((1, ATTN_TILE), dcol_map),     # doc ids (kv cols)
            pl.BlockSpec((ATTN_TILE, D), q_map),        # residual
            pl.BlockSpec((D, D), w_map),                # out_w   (resident)
            pl.BlockSpec((1, D), w_map),                # out_b
            pl.BlockSpec((1, D), w_map),                # ln2_w
            pl.BlockSpec((1, D), w_map),                # ln2_b
            pl.BlockSpec((D, I), w_map),                # fc1_w   (resident)
            pl.BlockSpec((1, I), w_map),                # fc1_b
            pl.BlockSpec((I, D), w_map),                # fc2_w   (resident)
            pl.BlockSpec((1, D), w_map),                # fc2_b
        ],
        out_specs=pl.BlockSpec((ATTN_TILE, D), q_map),
        scratch_shapes=[pltpu.VMEM((num_heads, ATTN_TILE, 1), jnp.float32),          # running max
                        pltpu.VMEM((num_heads, ATTN_TILE, 1), jnp.float32),          # running sum
                        pltpu.VMEM((num_heads, ATTN_TILE, head_dim), jnp.float32)],  # output acc
    )
    return pl.pallas_call(
        kern, grid_spec=grid_spec,
        out_shape=jax.ShapeDtypeStruct((Sp, D), residual.dtype),
        compiler_params=_cparams(("parallel", "arbitrary")),
    )(kv_meta, q, k, v, doc_row, doc_col, residual,
      lw['out_w'], lw['out_b'], lw['ln2_w'], lw['ln2_b'],
      lw['fc1_w'], lw['fc1_b'], lw['fc2_w'], lw['fc2_b'])


def layer_norm(x, w, b, *, eps, row_tile, out_dtype=jnp.float32):
    Sp, D = x.shape
    nt = Sp // row_tile
    return pl.pallas_call(
        functools.partial(_ln_kernel, eps=eps),
        grid=(nt,),
        in_specs=[pl.BlockSpec((row_tile, D), lambda i: (i, 0)),
                  pl.BlockSpec((1, D), lambda i: (0, 0)),
                  pl.BlockSpec((1, D), lambda i: (0, 0))],
        out_specs=pl.BlockSpec((row_tile, D), lambda i: (i, 0)),
        out_shape=jax.ShapeDtypeStruct((Sp, D), out_dtype),
        compiler_params=_cparams(("parallel",)),
    )(x, w, b)


# ----------------------------------------------------------------------------- params
def init_params(key, cfg: Siglip2VisionConfig):
    D, I = cfg.hidden_size, cfg.intermediate_size
    patch_dim = cfg.num_channels * cfg.patch_size * cfg.patch_size

    def lin(k, fan_in, shape):
        return (jax.random.normal(k, shape) * (fan_in ** -0.5)).astype(jnp.float32)

    keys = iter(jax.random.split(key, 4 + 10 * cfg.num_hidden_layers))
    params = {
        # stored already transposed vs torch Linear ([in, out])
        'patch_w': lin(next(keys), patch_dim, (patch_dim, D)),
        'patch_b': lin(next(keys), patch_dim, (D,)),
        'pos_emb': (0.02 * jax.random.normal(next(keys), (cfg.num_patches, D))).astype(jnp.float32),
        'post_ln_w': jnp.ones((D,), jnp.float32),
        'post_ln_b': jax.random.normal(next(keys), (D,), jnp.float32),
        'layers': [],
    }
    for _ in range(cfg.num_hidden_layers):
        params['layers'].append({
            'ln1_w': jnp.ones((D,), jnp.float32),
            'ln1_b': jax.random.normal(next(keys), (D,), jnp.float32),
            'qkv_w': lin(next(keys), D, (D, 3 * D)),
            'qkv_b': lin(next(keys), D, (3 * D,)),
            'out_w': lin(next(keys), D, (D, D)),
            'out_b': lin(next(keys), D, (D,)),
            'ln2_w': jnp.ones((D,), jnp.float32),
            'ln2_b': jax.random.normal(next(keys), (D,), jnp.float32),
            'fc1_w': lin(next(keys), D, (D, I)),
            'fc1_b': lin(next(keys), D, (I,)),
            'fc2_w': lin(next(keys), I, (I, D)),
            'fc2_b': lin(next(keys), I, (D,)),
        })
    return params


def prepare_params(params, cfg: Siglip2VisionConfig):
    """One-time weight prep: bf16 casts, fused QKV with softmax scale folded in,
    (1, N)-shaped f32 biases / LN params.  Called ONCE, outside the forward."""
    D, I = cfg.hidden_size, cfg.intermediate_size
    head_dim = D // cfg.num_attention_heads
    scale = float(head_dim) ** -0.5
    P = int(round(cfg.num_patches ** 0.5))
    prep = {
        'patch_w': params['patch_w'].astype(MATMUL_DTYPE),
        'patch_b': params['patch_b'].reshape(1, D).astype(jnp.float32),
        'pos_grid': params['pos_emb'].reshape(P, P, D).astype(jnp.float32),
        'post_ln_w': params['post_ln_w'].reshape(1, D).astype(jnp.float32),
        'post_ln_b': params['post_ln_b'].reshape(1, D).astype(jnp.float32),
        'layers': [],
    }
    for lp in params['layers']:
        qkv_w = lp['qkv_w'].at[:, :D].multiply(scale)    # fold softmax scale into Q
        qkv_b = lp['qkv_b'].at[:D].multiply(scale)
        prep['layers'].append({
            'ln1_w': lp['ln1_w'].reshape(1, D).astype(jnp.float32),
            'ln1_b': lp['ln1_b'].reshape(1, D).astype(jnp.float32),
            'qkv_w': qkv_w.astype(MATMUL_DTYPE),
            'qkv_b': qkv_b.reshape(1, 3 * D).astype(jnp.float32),
            'out_w': lp['out_w'].astype(MATMUL_DTYPE),
            'out_b': lp['out_b'].reshape(1, D).astype(jnp.float32),
            'ln2_w': lp['ln2_w'].reshape(1, D).astype(jnp.float32),
            'ln2_b': lp['ln2_b'].reshape(1, D).astype(jnp.float32),
            'fc1_w': lp['fc1_w'].astype(MATMUL_DTYPE),
            'fc1_b': lp['fc1_b'].reshape(1, I).astype(jnp.float32),
            'fc2_w': lp['fc2_w'].astype(MATMUL_DTYPE),
            'fc2_b': lp['fc2_b'].reshape(1, D).astype(jnp.float32),
        })
    return prep


# ----------------------------------------------------------------------------- forward
def siglip2_forward(prep, seq_patches, *, token_grids_static, cfg: Siglip2VisionConfig):
    D = cfg.hidden_size
    H = cfg.num_attention_heads
    assert D % H == 0
    eps = cfg.layer_norm_eps
    S = seq_patches.shape[0]

    # ---- static packing metadata (host-side numpy; token_grids_static is static)
    sizes = [int(h) * int(w) for (h, w) in token_grids_static]
    assert sum(sizes) == S
    S_pad = ((S + ATTN_TILE - 1) // ATTN_TILE) * ATTN_TILE
    pad = S_pad - S
    nt = S_pad // ATTN_TILE
    row_tile = _row_tile(S_pad)

    doc_parts = [np.full(s, idx, np.int32) for idx, s in enumerate(sizes)]
    if pad:
        # mirrors create_document_ids: pad rows get unique ids (arange past real rows)
        doc_parts.append(np.arange(S, S_pad, dtype=np.int32))
    doc = np.concatenate(doc_parts)
    doc_row = jnp.asarray(doc.reshape(S_pad, 1))
    doc_col = jnp.asarray(doc.reshape(1, S_pad))

    # per-tile doc-id ranges -> per-query-tile contiguous KV-tile ranges
    doc_t = doc.reshape(nt, ATTN_TILE)
    lo, hi = doc_t.min(axis=1), doc_t.max(axis=1)
    ovl = (lo[None, :] <= hi[:, None]) & (lo[:, None] <= hi[None, :])   # [i, j]
    for r in range(nt):                                                  # sanity: contiguity
        idxs = np.flatnonzero(ovl[r])
        assert idxs.size >= 1 and (np.diff(idxs) == 1).all()
    kv_start = ovl.argmax(axis=1).astype(np.int32)
    kv_num = ovl.sum(axis=1).astype(np.int32)
    max_kv = int(kv_num.max())
    kv_meta = jnp.asarray(np.stack([kv_start, kv_num]).astype(np.int32))  # (2, nt)

    # ---- positional embeddings: per-image bilinear resize of the pos grid (glue)
    # TODO(synk): jax.image.resize(bilinear) approximates F.interpolate(bilinear,
    # align_corners=False, antialias=True); the antialias kernel differs slightly.
    pos_list = []
    for (gh, gw) in token_grids_static:
        pos_list.append(jax.image.resize(prep['pos_grid'], (gh, gw, D),
                                         method='bilinear').reshape(gh * gw, D))
    pos = jnp.concatenate(pos_list, axis=0)
    if pad:
        pos = jnp.pad(pos, ((0, pad), (0, 0)))
        seq_patches = jnp.pad(seq_patches, ((0, pad), (0, 0)))

    # ---- embeddings: patch linear + positional add (one pallas_call)
    hidden = embed(seq_patches, prep['patch_w'], prep['patch_b'], pos, row_tile=row_tile)

    # ---- encoder: exactly two fused pallas_calls per layer
    for lw in prep['layers']:
        q, k, v = ln_qkv(hidden, lw, eps=eps, row_tile=row_tile)
        hidden = attention_block(q, k, v, doc_row, doc_col, kv_meta, max_kv,
                                 hidden, lw, num_heads=H, eps=eps)

    # ---- post layernorm, strip sequence padding
    out = layer_norm(hidden, prep['post_ln_w'], prep['post_ln_b'],
                     eps=eps, row_tile=row_tile, out_dtype=jnp.float32)
    return out[:S]


# ----------------------------------------------------------------------------- pure-JAX reference (f32)
def reference_forward(params, seq_patches, *, token_grids_static, cfg: Siglip2VisionConfig):
    D, H = cfg.hidden_size, cfg.num_attention_heads
    Dh = D // H
    eps = cfg.layer_norm_eps
    scale = float(Dh) ** -0.5
    P = int(round(cfg.num_patches ** 0.5))
    S = seq_patches.shape[0]

    x = seq_patches @ params['patch_w'] + params['patch_b']
    pos_grid = params['pos_emb'].reshape(P, P, D)
    pos = jnp.concatenate(
        [jax.image.resize(pos_grid, (gh, gw, D), method='bilinear').reshape(gh * gw, D)
         for (gh, gw) in token_grids_static], axis=0)
    x = x + pos

    sizes = [int(gh) * int(gw) for (gh, gw) in token_grids_static]
    doc = np.concatenate([np.full(s, i, np.int32) for i, s in enumerate(sizes)])
    mask = jnp.asarray(doc[:, None] == doc[None, :])

    def ln(z, w, b):
        mu = jnp.mean(z, -1, keepdims=True)
        zc = z - mu
        var = jnp.mean(zc * zc, -1, keepdims=True)
        return zc * lax.rsqrt(var + eps) * w + b

    h = x
    for lp in params['layers']:
        y = ln(h, lp['ln1_w'], lp['ln1_b'])
        qkv = y @ lp['qkv_w'] + lp['qkv_b']
        q, k, v = qkv[:, :D], qkv[:, D:2 * D], qkv[:, 2 * D:]
        q = q.reshape(S, H, Dh)
        k = k.reshape(S, H, Dh)
        v = v.reshape(S, H, Dh)
        s = jnp.einsum('qhd,khd->hqk', q, k) * scale
        s = jnp.where(mask[None], s, MASK_VALUE)
        p = jax.nn.softmax(s, axis=-1)
        o = jnp.einsum('hqk,khd->qhd', p, v).reshape(S, D)
        attn = o @ lp['out_w'] + lp['out_b']
        res = h + attn
        y2 = ln(res, lp['ln2_w'], lp['ln2_b'])
        mlp = jax.nn.gelu(y2 @ lp['fc1_w'] + lp['fc1_b'], approximate=True) @ lp['fc2_w'] + lp['fc2_b']
        h = res + mlp
    return ln(h, params['post_ln_w'], params['post_ln_b'])


# ----------------------------------------------------------------------------- main
if __name__ == "__main__":
    cfg = Siglip2VisionConfig(
        hidden_size=32, intermediate_size=64, num_hidden_layers=2,
        num_attention_heads=4, num_channels=3, patch_size=4,
        layer_norm_eps=1e-6, attention_dropout=0.0, num_patches=16,
    )
    # three packed images; seq sizes 128 + 80 + 80 = 288 -> padded to 384 (3 tiles)
    # -> exercises cross-document KV-tile skipping, multi-tile online softmax and
    #    fully-masked query rows inside overlapping KV tiles (the masking fix).
    token_grids_static = ((8, 16), (8, 10), (8, 10))
    S = sum(h * w for (h, w) in token_grids_static)
    patch_dim = cfg.num_channels * cfg.patch_size * cfg.patch_size

    key = jax.random.PRNGKey(0)
    k_in, k_par = jax.random.split(key)
    seq_patches = jax.random.normal(k_in, (S, patch_dim), dtype=jnp.float32)
    params = init_params(k_par, cfg)
    prep = prepare_params(params, cfg)   # one-time bf16 cast / QKV fuse / scale fold

    fwd = jax.jit(functools.partial(siglip2_forward,
                                    token_grids_static=token_grids_static, cfg=cfg))
    out = jax.block_until_ready(fwd(prep, seq_patches))

    assert out.shape == (S, cfg.hidden_size), out.shape
    assert bool(jnp.all(jnp.isfinite(out)))

    ref = reference_forward(params, seq_patches,
                            token_grids_static=token_grids_static, cfg=cfg)
    max_err = float(jnp.max(jnp.abs(out - ref)))
    assert max_err < 0.15, f"kernel/reference mismatch: max abs err = {max_err}"

    print("KERNEL_OK")
</pallas_src>

<mosaic_0001>
module attributes {stable_mosaic.version = 11 : i64} {
  func.func @_ln_qkv_kernel(%arg0: i32, %arg1: memref<384x32xbf16, #tpu.memory_space<vmem>>, %arg2: memref<1x32xf32, #tpu.memory_space<vmem>>, %arg3: memref<1x32xf32, #tpu.memory_space<vmem>>, %arg4: memref<32x96xbf16, #tpu.memory_space<vmem>>, %arg5: memref<1x96xf32, #tpu.memory_space<vmem>>, %arg6: memref<384x32xbf16, #tpu.memory_space<vmem>>, %arg7: memref<384x32xbf16, #tpu.memory_space<vmem>>, %arg8: memref<384x32xbf16, #tpu.memory_space<vmem>>) attributes {dimension_semantics = [#tpu.dimension_semantics<parallel>], iteration_bounds = array<i64: 1>, scalar_prefetch = 0 : i64, scratch_operands = 0 : i64, tpu.core_type = #tpu.core_type<tc>, window_params = [{transform_indices = @transform_0, window_bounds = array<i64: 384, 32>}, {pipeline_mode = #tpu.pipeline_mode<synchronous>, transform_indices = @transform_1, window_bounds = array<i64: 1, 32>}, {pipeline_mode = #tpu.pipeline_mode<synchronous>, transform_indices = @transform_2, window_bounds = array<i64: 1, 32>}, {pipeline_mode = #tpu.pipeline_mode<synchronous>, transform_indices = @transform_3, window_bounds = array<i64: 32, 96>}, {pipeline_mode = #tpu.pipeline_mode<synchronous>, transform_indices = @transform_4, window_bounds = array<i64: 1, 96>}, {transform_indices = @transform_5, window_bounds = array<i64: 384, 32>}, {transform_indices = @transform_6, window_bounds = array<i64: 384, 32>}, {transform_indices = @transform_7, window_bounds = array<i64: 384, 32>}]} {
    %c0 = arith.constant 0 : index
    %c0_0 = arith.constant 0 : index
    %0 = vector.load %arg1[%c0, %c0_0] : memref<384x32xbf16, #tpu.memory_space<vmem>>, vector<384x32xbf16>
    %1 = arith.extf %0 : vector<384x32xbf16> to vector<384x32xf32>
    %cst = arith.constant dense<0.000000e+00> : vector<384xf32>
    %2 = vector.multi_reduction <add>, %1, %cst [1] : vector<384x32xf32> to vector<384xf32>
    %3 = vector.shape_cast %2 : vector<384xf32> to vector<384x1xf32>
    %cst_1 = arith.constant 3.200000e+01 : f32
    %4 = vector.broadcast %cst_1 : f32 to vector<384x1xf32>
    %5 = arith.divf %3, %4 : vector<384x1xf32>
    %6 = vector.broadcast %5 : vector<384x1xf32> to vector<384x32xf32>
    %7 = arith.subf %1, %6 : vector<384x32xf32>
    %8 = arith.mulf %7, %7 : vector<384x32xf32>
    %cst_2 = arith.constant dense<0.000000e+00> : vector<384xf32>
    %9 = vector.multi_reduction <add>, %8, %cst_2 [1] : vector<384x32xf32> to vector<384xf32>
    %10 = vector.shape_cast %9 : vector<384xf32> to vector<384x1xf32>
    %cst_3 = arith.constant 3.200000e+01 : f32
    %11 = vector.broadcast %cst_3 : f32 to vector<384x1xf32>
    %12 = arith.divf %10, %11 : vector<384x1xf32>
    %cst_4 = arith.constant 9.99999997E-7 : f32
    %13 = vector.broadcast %cst_4 : f32 to vector<384x1xf32>
    %14 = arith.addf %12, %13 : vector<384x1xf32>
    %15 = math.rsqrt %14 : vector<384x1xf32>
    %16 = vector.broadcast %15 : vector<384x1xf32> to vector<384x32xf32>
    %17 = arith.mulf %7, %16 : vector<384x32xf32>
    %c0_5 = arith.constant 0 : index
    %c0_6 = arith.constant 0 : index
    %18 = vector.load %arg2[%c0_5, %c0_6] : memref<1x32xf32, #tpu.memory_space<vmem>>, vector<1x32xf32>
    %19 = vector.broadcast %18 : vector<1x32xf32> to vector<384x32xf32>
    %20 = arith.mulf %17, %19 : vector<384x32xf32>
    %c0_7 = arith.constant 0 : index
    %c0_8 = arith.constant 0 : index
    %21 = vector.load %arg3[%c0_7, %c0_8] : memref<1x32xf32, #tpu.memory_space<vmem>>, vector<1x32xf32>
    %22 = vector.broadcast %21 : vector<1x32xf32> to vector<384x32xf32>
    %23 = arith.addf %20, %22 : vector<384x32xf32>
    %24 = arith.truncf %23 : vector<384x32xf32> to vector<384x32xbf16>
    %c0_9 = arith.constant 0 : index
    %c0_10 = arith.constant 0 : index
    %25 = vector.load %arg4[%c0_9, %c0_10] : memref<32x96xbf16, #tpu.memory_space<vmem>>, vector<32x96xbf16>
    %cst_11 = arith.constant dense<0.000000e+00> : vector<384x96xf32>
    %26 = tpu.matmul %24, %25, %cst_11 {dimension_numbers = #tpu.dot_dimension_numbers<[1], [0], [0], [1], [0, 0, 1, 1], [], []>} : vector<384x32xbf16>, vector<32x96xbf16>, vector<384x96xf32> -> vector<384x96xf32>
    %c0_12 = arith.constant 0 : index
    %c0_13 = arith.constant 0 : index
    %27 = vector.load %arg5[%c0_12, %c0_13] : memref<1x96xf32, #tpu.memory_space<vmem>>, vector<1x96xf32>
    %28 = vector.broadcast %27 : vector<1x96xf32> to vector<384x96xf32>
    %29 = arith.addf %26, %28 : vector<384x96xf32>
    %30 = vector.extract_strided_slice %29 {offsets = [0, 0], sizes = [384, 32], strides = [1, 1]} : vector<384x96xf32> to vector<384x32xf32>
    %31 = arith.truncf %30 : vector<384x32xf32> to vector<384x32xbf16>
    %c0_14 = arith.constant 0 : index
    %c0_15 = arith.constant 0 : index
    %32 = vector.load %arg6[%c0_14, %c0_15] : memref<384x32xbf16, #tpu.memory_space<vmem>>, vector<384x32xbf16>
    tpu.vector_store %arg6[%c0_14, %c0_15], %31 {strides = array<i32>} : memref<384x32xbf16, #tpu.memory_space<vmem>>, vector<384x32xbf16>,
    %33 = vector.extract_strided_slice %29 {offsets = [0, 32], sizes = [384, 32], strides = [1, 1]} : vector<384x96xf32> to vector<384x32xf32>
    %34 = arith.truncf %33 : vector<384x32xf32> to vector<384x32xbf16>
    %c0_16 = arith.constant 0 : index
    %c0_17 = arith.constant 0 : index
    %35 = vector.load %arg7[%c0_16, %c0_17] : memref<384x32xbf16, #tpu.memory_space<vmem>>, vector<384x32xbf16>
    tpu.vector_store %arg7[%c0_16, %c0_17], %34 {strides = array<i32>} : memref<384x32xbf16, #tpu.memory_space<vmem>>, vector<384x32xbf16>,
    %36 = vector.extract_strided_slice %29 {offsets = [0, 64], sizes = [384, 32], strides = [1, 1]} : vector<384x96xf32> to vector<384x32xf32>
    %37 = arith.truncf %36 : vector<384x32xf32> to vector<384x32xbf16>
    %c0_18 = arith.constant 0 : index
    %c0_19 = arith.constant 0 : index
    %38 = vector.load %arg8[%c0_18, %c0_19] : memref<384x32xbf16, #tpu.memory_space<vmem>>, vector<384x32xbf16>
    tpu.vector_store %arg8[%c0_18, %c0_19], %37 {strides = array<i32>} : memref<384x32xbf16, #tpu.memory_space<vmem>>, vector<384x32xbf16>,
    return
  }
  func.func @transform_0(%arg0: i32) -> (i32, i32) {
    %c0_i32 = arith.constant 0 : i32
    %c0_i32_0 = arith.constant 0 : i32
    return %arg0, %c0_i32 : i32, i32
  }
  func.func @transform_1(%arg0: i32) -> (i32, i32) {
    %c0_i32 = arith.constant 0 : i32
    %c0_i32_0 = arith.constant 0 : i32
    %c0_i32_1 = arith.constant 0 : i32
    return %c0_i32, %c0_i32_0 : i32, i32
  }
  func.func @transform_2(%arg0: i32) -> (i32, i32) {
    %c0_i32 = arith.constant 0 : i32
    %c0_i32_0 = arith.constant 0 : i32
    %c0_i32_1 = arith.constant 0 : i32
    return %c0_i32, %c0_i32_0 : i32, i32
  }
  func.func @transform_3(%arg0: i32) -> (i32, i32) {
    %c0_i32 = arith.constant 0 : i32
    %c0_i32_0 = arith.constant 0 : i32
    %c0_i32_1 = arith.constant 0 : i32
    return %c0_i32, %c0_i32_0 : i32, i32
  }
  func.func @transform_4(%arg0: i32) -> (i32, i32) {
    %c0_i32 = arith.constant 0 : i32
    %c0_i32_0 = arith.constant 0 : i32
    %c0_i32_1 = arith.constant 0 : i32
    return %c0_i32, %c0_i32_0 : i32, i32
  }
  func.func @transform_5(%arg0: i32) -> (i32, i32) {
    %c0_i32 = arith.constant 0 : i32
    %c0_i32_0 = arith.constant 0 : i32
    return %arg0, %c0_i32 : i32, i32
  }
  func.func @transform_6(%arg0: i32) -> (i32, i32) {
    %c0_i32 = arith.constant 0 : i32
    %c0_i32_0 = arith.constant 0 : i32
    return %arg0, %c0_i32 : i32, i32
  }
  func.func @transform_7(%arg0: i32) -> (i32, i32) {
    %c0_i32 = arith.constant 0 : i32
    %c0_i32_0 = arith.constant 0 : i32
    return %arg0, %c0_i32 : i32, i32
  }
}

module attributes {stable_mosaic.version = 11 : i64} {
  func.func @_embed_kernel(%arg0: i32, %arg1: memref<384x48xf32, #tpu.memory_space<vmem>>, %arg2: memref<48x32xbf16, #tpu.memory_space<vmem>>, %arg3: memref<1x32xf32, #tpu.memory_space<vmem>>, %arg4: memref<384x32xf32, #tpu.memory_space<vmem>>, %arg5: memref<384x32xbf16, #tpu.memory_space<vmem>>) attributes {dimension_semantics = [#tpu.dimension_semantics<parallel>], iteration_bounds = array<i64: 1>, scalar_prefetch = 0 : i64, scratch_operands = 0 : i64, tpu.core_type = #tpu.core_type<tc>, window_params = [{transform_indices = @transform_0, window_bounds = array<i64: 384, 48>}, {pipeline_mode = #tpu.pipeline_mode<synchronous>, transform_indices = @transform_1, window_bounds = array<i64: 48, 32>}, {pipeline_mode = #tpu.pipeline_mode<synchronous>, transform_indices = @transform_2, window_bounds = array<i64: 1, 32>}, {transform_indices = @transform_3, window_bounds = array<i64: 384, 32>}, {transform_indices = @transform_4, window_bounds = array<i64: 384, 32>}]} {
    %c0 = arith.constant 0 : index
    %c0_0 = arith.constant 0 : index
    %0 = vector.load %arg1[%c0, %c0_0] : memref<384x48xf32, #tpu.memory_space<vmem>>, vector<384x48xf32>
    %1 = arith.truncf %0 : vector<384x48xf32> to vector<384x48xbf16>
    %c0_1 = arith.constant 0 : index
    %c0_2 = arith.constant 0 : index
    %2 = vector.load %arg2[%c0_1, %c0_2] : memref<48x32xbf16, #tpu.memory_space<vmem>>, vector<48x32xbf16>
    %cst = arith.constant dense<0.000000e+00> : vector<384x32xf32>
    %3 = tpu.matmul %1, %2, %cst {dimension_numbers = #tpu.dot_dimension_numbers<[1], [0], [0], [1], [0, 0, 1, 1], [], []>} : vector<384x48xbf16>, vector<48x32xbf16>, vector<384x32xf32> -> vector<384x32xf32>
    %c0_3 = arith.constant 0 : index
    %c0_4 = arith.constant 0 : index
    %4 = vector.load %arg3[%c0_3, %c0_4] : memref<1x32xf32, #tpu.memory_space<vmem>>, vector<1x32xf32>
    %5 = vector.broadcast %4 : vector<1x32xf32> to vector<384x32xf32>
    %6 = arith.addf %3, %5 : vector<384x32xf32>
    %c0_5 = arith.constant 0 : index
    %c0_6 = arith.constant 0 : index
    %7 = vector.load %arg4[%c0_5, %c0_6] : memref<384x32xf32, #tpu.memory_space<vmem>>, vector<384x32xf32>
    %8 = arith.addf %6, %7 : vector<384x32xf32>
    %9 = arith.truncf %8 : vector<384x32xf32> to vector<384x32xbf16>
    %c0_7 = arith.constant 0 : index
    %c0_8 = arith.constant 0 : index
    %10 = vector.load %arg5[%c0_7, %c0_8] : memref<384x32xbf16, #tpu.memory_space<vmem>>, vector<384x32xbf16>
    tpu.vector_store %arg5[%c0_7, %c0_8], %9 {strides = array<i32>} : memref<384x32xbf16, #tpu.memory_space<vmem>>, vector<384x32xbf16>,
    return
  }
  func.func @transform_0(%arg0: i32) -> (i32, i32) {
    %c0_i32 = arith.constant 0 : i32
    %c0_i32_0 = arith.constant 0 : i32
    return %arg0, %c0_i32 : i32, i32
  }
  func.func @transform_1(%arg0: i32) -> (i32, i32) {
    %c0_i32 = arith.constant 0 : i32
    %c0_i32_0 = arith.constant 0 : i32
    %c0_i32_1 = arith.constant 0 : i32
    return %c0_i32, %c0_i32_0 : i32, i32
  }
  func.func @transform_2(%arg0: i32) -> (i32, i32) {
    %c0_i32 = arith.constant 0 : i32
    %c0_i32_0 = arith.constant 0 : i32
    %c0_i32_1 = arith.constant 0 : i32
    return %c0_i32, %c0_i32_0 : i32, i32
  }
  func.func @transform_3(%arg0: i32) -> (i32, i32) {
    %c0_i32 = arith.constant 0 : i32
    %c0_i32_0 = arith.constant 0 : i32
    return %arg0, %c0_i32 : i32, i32
  }
  func.func @transform_4(%arg0: i32) -> (i32, i32) {
    %c0_i32 = arith.constant 0 : i32
    %c0_i32_0 = arith.constant 0 : i32
    return %arg0, %c0_i32 : i32, i32
  }
}

module attributes {stable_mosaic.version = 11 : i64} {
  func.func @_ln_kernel(%arg0: i32, %arg1: memref<384x32xbf16, #tpu.memory_space<vmem>>, %arg2: memref<1x32xf32, #tpu.memory_space<vmem>>, %arg3: memref<1x32xf32, #tpu.memory_space<vmem>>, %arg4: memref<384x32xf32, #tpu.memory_space<vmem>>) attributes {dimension_semantics = [#tpu.dimension_semantics<parallel>], iteration_bounds = array<i64: 1>, scalar_prefetch = 0 : i64, scratch_operands = 0 : i64, tpu.core_type = #tpu.core_type<tc>, window_params = [{transform_indices = @transform_0, window_bounds = array<i64: 384, 32>}, {pipeline_mode = #tpu.pipeline_mode<synchronous>, transform_indices = @transform_1, window_bounds = array<i64: 1, 32>}, {pipeline_mode = #tpu.pipeline_mode<synchronous>, transform_indices = @transform_2, window_bounds = array<i64: 1, 32>}, {transform_indices = @transform_3, window_bounds = array<i64: 384, 32>}]} {
    %c0 = arith.constant 0 : index
    %c0_0 = arith.constant 0 : index
    %0 = vector.load %arg1[%c0, %c0_0] : memref<384x32xbf16, #tpu.memory_space<vmem>>, vector<384x32xbf16>
    %1 = arith.extf %0 : vector<384x32xbf16> to vector<384x32xf32>
    %cst = arith.constant dense<0.000000e+00> : vector<384xf32>
    %2 = vector.multi_reduction <add>, %1, %cst [1] : vector<384x32xf32> to vector<384xf32>
    %3 = vector.shape_cast %2 : vector<384xf32> to vector<384x1xf32>
    %cst_1 = arith.constant 3.200000e+01 : f32
    %4 = vector.broadcast %cst_1 : f32 to vector<384x1xf32>
    %5 = arith.divf %3, %4 : vector<384x1xf32>
    %6 = vector.broadcast %5 : vector<384x1xf32> to vector<384x32xf32>
    %7 = arith.subf %1, %6 : vector<384x32xf32>
    %8 = arith.mulf %7, %7 : vector<384x32xf32>
    %cst_2 = arith.constant dense<0.000000e+00> : vector<384xf32>
    %9 = vector.multi_reduction <add>, %8, %cst_2 [1] : vector<384x32xf32> to vector<384xf32>
    %10 = vector.shape_cast %9 : vector<384xf32> to vector<384x1xf32>
    %cst_3 = arith.constant 3.200000e+01 : f32
    %11 = vector.broadcast %cst_3 : f32 to vector<384x1xf32>
    %12 = arith.divf %10, %11 : vector<384x1xf32>
    %cst_4 = arith.constant 9.99999997E-7 : f32
    %13 = vector.broadcast %cst_4 : f32 to vector<384x1xf32>
    %14 = arith.addf %12, %13 : vector<384x1xf32>
    %15 = math.rsqrt %14 : vector<384x1xf32>
    %16 = vector.broadcast %15 : vector<384x1xf32> to vector<384x32xf32>
    %17 = arith.mulf %7, %16 : vector<384x32xf32>
    %c0_5 = arith.constant 0 : index
    %c0_6 = arith.constant 0 : index
    %18 = vector.load %arg2[%c0_5, %c0_6] : memref<1x32xf32, #tpu.memory_space<vmem>>, vector<1x32xf32>
    %19 = vector.broadcast %18 : vector<1x32xf32> to vector<384x32xf32>
    %20 = arith.mulf %17, %19 : vector<384x32xf32>
    %c0_7 = arith.constant 0 : index
    %c0_8 = arith.constant 0 : index
    %21 = vector.load %arg3[%c0_7, %c0_8] : memref<1x32xf32, #tpu.memory_space<vmem>>, vector<1x32xf32>
    %22 = vector.broadcast %21 : vector<1x32xf32> to vector<384x32xf32>
    %23 = arith.addf %20, %22 : vector<384x32xf32>
    %c0_9 = arith.constant 0 : index
    %c0_10 = arith.constant 0 : index
    %24 = vector.load %arg4[%c0_9, %c0_10] : memref<384x32xf32, #tpu.memory_space<vmem>>, vector<384x32xf32>
    tpu.vector_store %arg4[%c0_9, %c0_10], %23 {strides = array<i32>} : memref<384x32xf32, #tpu.memory_space<vmem>>, vector<384x32xf32>,
    return
  }
  func.func @transform_0(%arg0: i32) -> (i32, i32) {
    %c0_i32 = arith.constant 0 : i32
    %c0_i32_0 = arith.constant 0 : i32
    return %arg0, %c0_i32 : i32, i32
  }
  func.func @transform_1(%arg0: i32) -> (i32, i32) {
    %c0_i32 = arith.constant 0 : i32
    %c0_i32_0 = arith.constant 0 : i32
    %c0_i32_1 = arith.constant 0 : i32
    return %c0_i32, %c0_i32_0 : i32, i32
  }
  func.func @transform_2(%arg0: i32) -> (i32, i32) {
    %c0_i32 = arith.constant 0 : i32
    %c0_i32_0 = arith.constant 0 : i32
    %c0_i32_1 = arith.constant 0 : i32
    return %c0_i32, %c0_i32_0 : i32, i32
  }
  func.func @transform_3(%arg0: i32) -> (i32, i32) {
    %c0_i32 = arith.constant 0 : i32
    %c0_i32_0 = arith.constant 0 : i32
    return %arg0, %c0_i32 : i32, i32
  }
}

module attributes {stable_mosaic.version = 11 : i64} {
  func.func @_attn_block_kernel(%arg0: i32, %arg1: i32, %arg2: memref<2x3xi32, #tpu.memory_space<smem>>, %arg3: memref<128x32xbf16, #tpu.memory_space<vmem>>, %arg4: memref<128x32xbf16, #tpu.memory_space<vmem>>, %arg5: memref<128x32xbf16, #tpu.memory_space<vmem>>, %arg6: memref<128x1xi32, #tpu.memory_space<vmem>>, %arg7: memref<1x128xi32, #tpu.memory_space<vmem>>, %arg8: memref<128x32xbf16, #tpu.memory_space<vmem>>, %arg9: memref<32x32xbf16, #tpu.memory_space<vmem>>, %arg10: memref<1x32xf32, #tpu.memory_space<vmem>>, %arg11: memref<1x32xf32, #tpu.memory_space<vmem>>, %arg12: memref<1x32xf32, #tpu.memory_space<vmem>>, %arg13: memref<32x64xbf16, #tpu.memory_space<vmem>>, %arg14: memref<1x64xf32, #tpu.memory_space<vmem>>, %arg15: memref<64x32xbf16, #tpu.memory_space<vmem>>, %arg16: memref<1x32xf32, #tpu.memory_space<vmem>>, %arg17: memref<128x32xbf16, #tpu.memory_space<vmem>>, %arg18: memref<4x128x1xf32, #tpu.memory_space<vmem>>, %arg19: memref<4x128x1xf32, #tpu.memory_space<vmem>>, %arg20: memref<4x128x8xf32, #tpu.memory_space<vmem>>) attributes {dimension_semantics = [#tpu.dimension_semantics<parallel>, #tpu.dimension_semantics<arbitrary>], iteration_bounds = array<i64: 3, 2>, scalar_prefetch = 1 : i64, scratch_operands = 3 : i64, tpu.core_type = #tpu.core_type<tc>, window_params = [{transform_indices = @transform_0, window_bounds = array<i64: 128, 32>}, {transform_indices = @transform_1, window_bounds = array<i64: 128, 32>}, {transform_indices = @transform_2, window_bounds = array<i64: 128, 32>}, {transform_indices = @transform_3, window_bounds = array<i64: 128, 1>}, {transform_indices = @transform_4, window_bounds = array<i64: 1, 128>}, {transform_indices = @transform_5, window_bounds = array<i64: 128, 32>}, {pipeline_mode = #tpu.pipeline_mode<synchronous>, transform_indices = @transform_6, window_bounds = array<i64: 32, 32>}, {pipeline_mode = #tpu.pipeline_mode<synchronous>, transform_indices = @transform_7, window_bounds = array<i64: 1, 32>}, {pipeline_mode = #tpu.pipeline_mode<synchronous>, transform_indices = @transform_8, window_bounds = array<i64: 1, 32>}, {pipeline_mode = #tpu.pipeline_mode<synchronous>, transform_indices = @transform_9, window_bounds = array<i64: 1, 32>}, {pipeline_mode = #tpu.pipeline_mode<synchronous>, transform_indices = @transform_10, window_bounds = array<i64: 32, 64>}, {pipeline_mode = #tpu.pipeline_mode<synchronous>, transform_indices = @transform_11, window_bounds = array<i64: 1, 64>}, {pipeline_mode = #tpu.pipeline_mode<synchronous>, transform_indices = @transform_12, window_bounds = array<i64: 64, 32>}, {pipeline_mode = #tpu.pipeline_mode<synchronous>, transform_indices = @transform_13, window_bounds = array<i64: 1, 32>}, {transform_indices = @transform_14, window_bounds = array<i64: 128, 32>}]} {
    %c1 = arith.constant 1 : index
    %0 = arith.index_cast %arg0 : i32 to index
    %1 = memref.load %arg2[%c1, %0] : memref<2x3xi32, #tpu.memory_space<smem>>
    %c0_i32 = arith.constant 0 : i32
    %2 = arith.cmpi eq, %arg1, %c0_i32 : i32
    %3 = arith.extui %2 : i1 to i32
    %c0_i32_0 = arith.constant 0 : i32
    %4 = arith.cmpi ne, %3, %c0_i32_0 : i32
    scf.if %4 {
      %cst = arith.constant 0xFF800000 : f32
      %11 = vector.broadcast %cst : f32 to vector<4x128x1xf32>
      %c0 = arith.constant 0 : index
      %c0_3 = arith.constant 0 : index
      %c0_4 = arith.constant 0 : index
      %12 = vector.load %arg18[%c0, %c0_3, %c0_4] : memref<4x128x1xf32, #tpu.memory_space<vmem>>, vector<4x128x1xf32>
      tpu.vector_store %arg18[%c0, %c0_3, %c0_4], %11 {strides = array<i32>} : memref<4x128x1xf32, #tpu.memory_space<vmem>>, vector<4x128x1xf32>,
      %cst_5 = arith.constant 0.000000e+00 : f32
      %13 = vector.broadcast %cst_5 : f32 to vector<4x128x1xf32>
      %c0_6 = arith.constant 0 : index
      %c0_7 = arith.constant 0 : index
      %c0_8 = arith.constant 0 : index
      %14 = vector.load %arg19[%c0_6, %c0_7, %c0_8] : memref<4x128x1xf32, #tpu.memory_space<vmem>>, vector<4x128x1xf32>
      tpu.vector_store %arg19[%c0_6, %c0_7, %c0_8], %13 {strides = array<i32>} : memref<4x128x1xf32, #tpu.memory_space<vmem>>, vector<4x128x1xf32>,
      %cst_9 = arith.constant 0.000000e+00 : f32
      %15 = vector.broadcast %cst_9 : f32 to vector<4x128x8xf32>
      %c0_10 = arith.constant 0 : index
      %c0_11 = arith.constant 0 : index
      %c0_12 = arith.constant 0 : index
      %16 = vector.load %arg20[%c0_10, %c0_11, %c0_12] : memref<4x128x8xf32, #tpu.memory_space<vmem>>, vector<4x128x8xf32>
      tpu.vector_store %arg20[%c0_10, %c0_11, %c0_12], %15 {strides = array<i32>} : memref<4x128x8xf32, #tpu.memory_space<vmem>>, vector<4x128x8xf32>,
    } else {
    }
    %5 = arith.cmpi slt, %arg1, %1 : i32
    %6 = arith.extui %5 : i1 to i32
    %c0_i32_1 = arith.constant 0 : i32
    %7 = arith.cmpi ne, %6, %c0_i32_1 : i32
    scf.if %7 {
      %c0 = arith.constant 0 : index
      %c0_3 = arith.constant 0 : index
      %11 = vector.load %arg3[%c0, %c0_3] : memref<128x32xbf16, #tpu.memory_space<vmem>>, vector<128x32xbf16>
      %c0_4 = arith.constant 0 : index
      %c0_5 = arith.constant 0 : index
      %12 = vector.load %arg4[%c0_4, %c0_5] : memref<128x32xbf16, #tpu.memory_space<vmem>>, vector<128x32xbf16>
      %c0_6 = arith.constant 0 : index
      %c0_7 = arith.constant 0 : index
      %13 = vector.load %arg5[%c0_6, %c0_7] : memref<128x32xbf16, #tpu.memory_space<vmem>>, vector<128x32xbf16>
      %c0_8 = arith.constant 0 : index
      %c0_9 = arith.constant 0 : index
      %14 = vector.load %arg6[%c0_8, %c0_9] : memref<128x1xi32, #tpu.memory_space<vmem>>, vector<128x1xi32>
      %c0_10 = arith.constant 0 : index
      %c0_11 = arith.constant 0 : index
      %15 = vector.load %arg7[%c0_10, %c0_11] : memref<1x128xi32, #tpu.memory_space<vmem>>, vector<1x128xi32>
      %16 = vector.broadcast %14 : vector<128x1xi32> to vector<128x128xi32>
      %17 = vector.broadcast %15 : vector<1x128xi32> to vector<128x128xi32>
      %18 = arith.cmpi eq, %16, %17 : vector<128x128xi32>
      %19 = vector.extract_strided_slice %11 {offsets = [0, 0], sizes = [128, 8], strides = [1, 1]} : vector<128x32xbf16> to vector<128x8xbf16>
      %20 = vector.extract_strided_slice %12 {offsets = [0, 0], sizes = [128, 8], strides = [1, 1]} : vector<128x32xbf16> to vector<128x8xbf16>
      %cst = arith.constant dense<0.000000e+00> : vector<128x128xf32>
      %21 = tpu.matmul %19, %20, %cst {dimension_numbers = #tpu.dot_dimension_numbers<[1], [1], [0], [0], [0, 0, 1, 0], [], []>} : vector<128x8xbf16>, vector<128x8xbf16>, vector<128x128xf32> -> vector<128x128xf32>
      %cst_12 = arith.constant -1.000000e+30 : f32
      %22 = vector.broadcast %cst_12 : f32 to vector<128x128xf32>
      %23 = arith.select %18, %21, %22 : vector<128x128xi1>, vector<128x128xf32>
      %c0_13 = arith.constant 0 : index
      %c0_14 = arith.constant 0 : index
      %c0_15 = arith.constant 0 : index
      %24 = vector.load %arg18[%c0_13, %c0_14, %c0_15] : memref<4x128x1xf32, #tpu.memory_space<vmem>>, vector<1x128x1xf32>
      %25 = vector.shape_cast %24 : vector<1x128x1xf32> to vector<128x1xf32>
      %cst_16 = arith.constant dense<0xFF800000> : vector<128xf32>
      %26 = vector.multi_reduction <maximumf>, %23, %cst_16 [1] : vector<128x128xf32> to vector<128xf32>
      %27 = vector.shape_cast %26 : vector<128xf32> to vector<128x1xf32>
      %28 = arith.maximumf %25, %27 : vector<128x1xf32>
      %29 = arith.subf %25, %28 : vector<128x1xf32>
      %30 = math.exp %29 : vector<128x1xf32>
      %31 = vector.broadcast %28 : vector<128x1xf32> to vector<128x128xf32>
      %32 = arith.subf %23, %31 : vector<128x128xf32>
      %33 = math.exp %32 : vector<128x128xf32>
      %cst_17 = arith.constant 0.000000e+00 : f32
      %34 = vector.broadcast %cst_17 : f32 to vector<128x128xf32>
      %35 = arith.select %18, %33, %34 : vector<128x128xi1>, vector<128x128xf32>
      %c0_18 = arith.constant 0 : index
      %c0_19 = arith.constant 0 : index
      %c0_20 = arith.constant 0 : index
      %36 = vector.load %arg19[%c0_18, %c0_19, %c0_20] : memref<4x128x1xf32, #tpu.memory_space<vmem>>, vector<1x128x1xf32>
      %37 = vector.shape_cast %36 : vector<1x128x1xf32> to vector<128x1xf32>
      %38 = arith.mulf %30, %37 : vector<128x1xf32>
      %cst_21 = arith.constant dense<0.000000e+00> : vector<128xf32>
      %39 = vector.multi_reduction <add>, %35, %cst_21 [1] : vector<128x128xf32> to vector<128xf32>
      %40 = vector.shape_cast %39 : vector<128xf32> to vector<128x1xf32>
      %41 = arith.addf %38, %40 : vector<128x1xf32>
      %c0_22 = arith.constant 0 : index
      %c0_23 = arith.constant 0 : index
      %c0_24 = arith.constant 0 : index
      %42 = vector.load %arg19[%c0_22, %c0_23, %c0_24] : memref<4x128x1xf32, #tpu.memory_space<vmem>>, vector<1x128x1xf32>
      %43 = vector.shape_cast %42 : vector<1x128x1xf32> to vector<128x1xf32>
      %44 = vector.shape_cast %41 : vector<128x1xf32> to vector<1x128x1xf32>
      tpu.vector_store %arg19[%c0_22, %c0_23, %c0_24], %44 {strides = array<i32>} : memref<4x128x1xf32, #tpu.memory_space<vmem>>, vector<1x128x1xf32>,
      %45 = arith.truncf %35 : vector<128x128xf32> to vector<128x128xbf16>
      %46 = vector.extract_strided_slice %13 {offsets = [0, 0], sizes = [128, 8], strides = [1, 1]} : vector<128x32xbf16> to vector<128x8xbf16>
      %cst_25 = arith.constant dense<0.000000e+00> : vector<128x8xf32>
      %47 = tpu.matmul %45, %46, %cst_25 {dimension_numbers = #tpu.dot_dimension_numbers<[1], [0], [0], [1], [0, 0, 1, 1], [], []>} : vector<128x128xbf16>, vector<128x8xbf16>, vector<128x8xf32> -> vector<128x8xf32>
      %c0_26 = arith.constant 0 : index
      %c0_27 = arith.constant 0 : index
      %c0_28 = arith.constant 0 : index
      %48 = vector.load %arg20[%c0_26, %c0_27, %c0_28] : memref<4x128x8xf32, #tpu.memory_space<vmem>>, vector<1x128x8xf32>
      %49 = vector.shape_cast %48 : vector<1x128x8xf32> to vector<128x8xf32>
      %50 = vector.broadcast %30 : vector<128x1xf32> to vector<128x8xf32>
      %51 = arith.mulf %50, %49 : vector<128x8xf32>
      %52 = arith.addf %51, %47 : vector<128x8xf32>
      %c0_29 = arith.constant 0 : index
      %c0_30 = arith.constant 0 : index
      %c0_31 = arith.constant 0 : index
      %53 = vector.load %arg20[%c0_29, %c0_30, %c0_31] : memref<4x128x8xf32, #tpu.memory_space<vmem>>, vector<1x128x8xf32>
      %54 = vector.shape_cast %53 : vector<1x128x8xf32> to vector<128x8xf32>
      %55 = vector.shape_cast %52 : vector<128x8xf32> to vector<1x128x8xf32>
      tpu.vector_store %arg20[%c0_29, %c0_30, %c0_31], %55 {strides = array<i32>} : memref<4x128x8xf32, #tpu.memory_space<vmem>>, vector<1x128x8xf32>,
      %c0_32 = arith.constant 0 : index
      %c0_33 = arith.constant 0 : index
      %c0_34 = arith.constant 0 : index
      %56 = vector.load %arg18[%c0_32, %c0_33, %c0_34] : memref<4x128x1xf32, #tpu.memory_space<vmem>>, vector<1x128x1xf32>
      %57 = vector.shape_cast %56 : vector<1x128x1xf32> to vector<128x1xf32>
      %58 = vector.shape_cast %28 : vector<128x1xf32> to vector<1x128x1xf32>
      tpu.vector_store %arg18[%c0_32, %c0_33, %c0_34], %58 {strides = array<i32>} : memref<4x128x1xf32, #tpu.memory_space<vmem>>, vector<1x128x1xf32>,
      %59 = vector.extract_strided_slice %11 {offsets = [0, 8], sizes = [128, 8], strides = [1, 1]} : vector<128x32xbf16> to vector<128x8xbf16>
      %60 = vector.extract_strided_slice %12 {offsets = [0, 8], sizes = [128, 8], strides = [1, 1]} : vector<128x32xbf16> to vector<128x8xbf16>
      %cst_35 = arith.constant dense<0.000000e+00> : vector<128x128xf32>
      %61 = tpu.matmul %59, %60, %cst_35 {dimension_numbers = #tpu.dot_dimension_numbers<[1], [1], [0], [0], [0, 0, 1, 0], [], []>} : vector<128x8xbf16>, vector<128x8xbf16>, vector<128x128xf32> -> vector<128x128xf32>
      %cst_36 = arith.constant -1.000000e+30 : f32
      %62 = vector.broadcast %cst_36 : f32 to vector<128x128xf32>
      %63 = arith.select %18, %61, %62 : vector<128x128xi1>, vector<128x128xf32>
      %c1_37 = arith.constant 1 : index
      %c0_38 = arith.constant 0 : index
      %c0_39 = arith.constant 0 : index
      %64 = vector.load %arg18[%c1_37, %c0_38, %c0_39] : memref<4x128x1xf32, #tpu.memory_space<vmem>>, vector<1x128x1xf32>
      %65 = vector.shape_cast %64 : vector<1x128x1xf32> to vector<128x1xf32>
      %cst_40 = arith.constant dense<0xFF800000> : vector<128xf32>
      %66 = vector.multi_reduction <maximumf>, %63, %cst_40 [1] : vector<128x128xf32> to vector<128xf32>
      %67 = vector.shape_cast %66 : vector<128xf32> to vector<128x1xf32>
      %68 = arith.maximumf %65, %67 : vector<128x1xf32>
      %69 = arith.subf %65, %68 : vector<128x1xf32>
      %70 = math.exp %69 : vector<128x1xf32>
      %71 = vector.broadcast %68 : vector<128x1xf32> to vector<128x128xf32>
      %72 = arith.subf %63, %71 : vector<128x128xf32>
      %73 = math.exp %72 : vector<128x128xf32>
      %cst_41 = arith.constant 0.000000e+00 : f32
      %74 = vector.broadcast %cst_41 : f32 to vector<128x128xf32>
      %75 = arith.select %18, %73, %74 : vector<128x128xi1>, vector<128x128xf32>
      %c1_42 = arith.constant 1 : index
      %c0_43 = arith.constant 0 : index
      %c0_44 = arith.constant 0 : index
      %76 = vector.load %arg19[%c1_42, %c0_43, %c0_44] : memref<4x128x1xf32, #tpu.memory_space<vmem>>, vector<1x128x1xf32>
      %77 = vector.shape_cast %76 : vector<1x128x1xf32> to vector<128x1xf32>
      %78 = arith.mulf %70, %77 : vector<128x1xf32>
      %cst_45 = arith.constant dense<0.000000e+00> : vector<128xf32>
      %79 = vector.multi_reduction <add>, %75, %cst_45 [1] : vector<128x128xf32> to vector<128xf32>
      %80 = vector.shape_cast %79 : vector<128xf32> to vector<128x1xf32>
      %81 = arith.addf %78, %80 : vector<128x1xf32>
      %c1_46 = arith.constant 1 : index
      %c0_47 = arith.constant 0 : index
      %c0_48 = arith.constant 0 : index
      %82 = vector.load %arg19[%c1_46, %c0_47, %c0_48] : memref<4x128x1xf32, #tpu.memory_space<vmem>>, vector<1x128x1xf32>
      %83 = vector.shape_cast %82 : vector<1x128x1xf32> to vector<128x1xf32>
      %84 = vector.shape_cast %81 : vector<128x1xf32> to vector<1x128x1xf32>
      tpu.vector_store %arg19[%c1_46, %c0_47, %c0_48], %84 {strides = array<i32>} : memref<4x128x1xf32, #tpu.memory_space<vmem>>, vector<1x128x1xf32>,
      %85 = arith.truncf %75 : vector<128x128xf32> to vector<128x128xbf16>
      %86 = vector.extract_strided_slice %13 {offsets = [0, 8], sizes = [128, 8], strides = [1, 1]} : vector<128x32xbf16> to vector<128x8xbf16>
      %cst_49 = arith.constant dense<0.000000e+00> : vector<128x8xf32>
      %87 = tpu.matmul %85, %86, %cst_49 {dimension_numbers = #tpu.dot_dimension_numbers<[1], [0], [0], [1], [0, 0, 1, 1], [], []>} : vector<128x128xbf16>, vector<128x8xbf16>, vector<128x8xf32> -> vector<128x8xf32>
      %c1_50 = arith.constant 1 : index
      %c0_51 = arith.constant 0 : index
      %c0_52 = arith.constant 0 : index
      %88 = vector.load %arg20[%c1_50, %c0_51, %c0_52] : memref<4x128x8xf32, #tpu.memory_space<vmem>>, vector<1x128x8xf32>
      %89 = vector.shape_cast %88 : vector<1x128x8xf32> to vector<128x8xf32>
      %90 = vector.broadcast %70 : vector<128x1xf32> to vector<128x8xf32>
      %91 = arith.mulf %90, %89 : vector<128x8xf32>
      %92 = arith.addf %91, %87 : vector<128x8xf32>
      %c1_53 = arith.constant 1 : index
      %c0_54 = arith.constant 0 : index
      %c0_55 = arith.constant 0 : index
      %93 = vector.load %arg20[%c1_53, %c0_54, %c0_55] : memref<4x128x8xf32, #tpu.memory_space<vmem>>, vector<1x128x8xf32>
      %94 = vector.shape_cast %93 : vector<1x128x8xf32> to vector<128x8xf32>
      %95 = vector.shape_cast %92 : vector<128x8xf32> to vector<1x128x8xf32>
      tpu.vector_store %arg20[%c1_53, %c0_54, %c0_55], %95 {strides = array<i32>} : memref<4x128x8xf32, #tpu.memory_space<vmem>>, vector<1x128x8xf32>,
      %c1_56 = arith.constant 1 : index
      %c0_57 = arith.constant 0 : index
      %c0_58 = arith.constant 0 : index
      %96 = vector.load %arg18[%c1_56, %c0_57, %c0_58] : memref<4x128x1xf32, #tpu.memory_space<vmem>>, vector<1x128x1xf32>
      %97 = vector.shape_cast %96 : vector<1x128x1xf32> to vector<128x1xf32>
      %98 = vector.shape_cast %68 : vector<128x1xf32> to vector<1x128x1xf32>
      tpu.vector_store %arg18[%c1_56, %c0_57, %c0_58], %98 {strides = array<i32>} : memref<4x128x1xf32, #tpu.memory_space<vmem>>, vector<1x128x1xf32>,
      %99 = vector.extract_strided_slice %11 {offsets = [0, 16], sizes = [128, 8], strides = [1, 1]} : vector<128x32xbf16> to vector<128x8xbf16>
      %100 = vector.extract_strided_slice %12 {offsets = [0, 16], sizes = [128, 8], strides = [1, 1]} : vector<128x32xbf16> to vector<128x8xbf16>
      %cst_59 = arith.constant dense<0.000000e+00> : vector<128x128xf32>
      %101 = tpu.matmul %99, %100, %cst_59 {dimension_numbers = #tpu.dot_dimension_numbers<[1], [1], [0], [0], [0, 0, 1, 0], [], []>} : vector<128x8xbf16>, vector<128x8xbf16>, vector<128x128xf32> -> vector<128x128xf32>
      %cst_60 = arith.constant -1.000000e+30 : f32
      %102 = vector.broadcast %cst_60 : f32 to vector<128x128xf32>
      %103 = arith.select %18, %101, %102 : vector<128x128xi1>, vector<128x128xf32>
      %c2 = arith.constant 2 : index
      %c0_61 = arith.constant 0 : index
      %c0_62 = arith.constant 0 : index
      %104 = vector.load %arg18[%c2, %c0_61, %c0_62] : memref<4x128x1xf32, #tpu.memory_space<vmem>>, vector<1x128x1xf32>
      %105 = vector.shape_cast %104 : vector<1x128x1xf32> to vector<128x1xf32>
      %cst_63 = arith.constant dense<0xFF800000> : vector<128xf32>
      %106 = vector.multi_reduction <maximumf>, %103, %cst_63 [1] : vector<128x128xf32> to vector<128xf32>
      %107 = vector.shape_cast %106 : vector<128xf32> to vector<128x1xf32>
      %108 = arith.maximumf %105, %107 : vector<128x1xf32>
      %109 = arith.subf %105, %108 : vector<128x1xf32>
      %110 = math.exp %109 : vector<128x1xf32>
      %111 = vector.broadcast %108 : vector<128x1xf32> to vector<128x128xf32>
      %112 = arith.subf %103, %111 : vector<128x128xf32>
      %113 = math.exp %112 : vector<128x128xf32>
      %cst_64 = arith.constant 0.000000e+00 : f32
      %114 = vector.broadcast %cst_64 : f32 to vector<128x128xf32>
      %115 = arith.select %18, %113, %114 : vector<128x128xi1>, vector<128x128xf32>
      %c2_65 = arith.constant 2 : index
      %c0_66 = arith.constant 0 : index
      %c0_67 = arith.constant 0 : index
      %116 = vector.load %arg19[%c2_65, %c0_66, %c0_67] : memref<4x128x1xf32, #tpu.memory_space<vmem>>, vector<1x128x1xf32>
      %117 = vector.shape_cast %116 : vector<1x128x1xf32> to vector<128x1xf32>
      %118 = arith.mulf %110, %117 : vector<128x1xf32>
      %cst_68 = arith.constant dense<0.000000e+00> : vector<128xf32>
      %119 = vector.multi_reduction <add>, %115, %cst_68 [1] : vector<128x128xf32> to vector<128xf32>
      %120 = vector.shape_cast %119 : vector<128xf32> to vector<128x1xf32>
      %121 = arith.addf %118, %120 : vector<128x1xf32>
      %c2_69 = arith.constant 2 : index
      %c0_70 = arith.constant 0 : index
      %c0_71 = arith.constant 0 : index
      %122 = vector.load %arg19[%c2_69, %c0_70, %c0_71] : memref<4x128x1xf32, #tpu.memory_space<vmem>>, vector<1x128x1xf32>
      %123 = vector.shape_cast %122 : vector<1x128x1xf32> to vector<128x1xf32>
      %124 = vector.shape_cast %121 : vector<128x1xf32> to vector<1x128x1xf32>
      tpu.vector_store %arg19[%c2_69, %c0_70, %c0_71], %124 {strides = array<i32>} : memref<4x128x1xf32, #tpu.memory_space<vmem>>, vector<1x128x1xf32>,
      %125 = arith.truncf %115 : vector<128x128xf32> to vector<128x128xbf16>
      %126 = vector.extract_strided_slice %13 {offsets = [0, 16], sizes = [128, 8], strides = [1, 1]} : vector<128x32xbf16> to vector<128x8xbf16>
      %cst_72 = arith.constant dense<0.000000e+00> : vector<128x8xf32>
      %127 = tpu.matmul %125, %126, %cst_72 {dimension_numbers = #tpu.dot_dimension_numbers<[1], [0], [0], [1], [0, 0, 1, 1], [], []>} : vector<128x128xbf16>, vector<128x8xbf16>, vector<128x8xf32> -> vector<128x8xf32>
      %c2_73 = arith.constant 2 : index
      %c0_74 = arith.constant 0 : index
      %c0_75 = arith.constant 0 : index
      %128 = vector.load %arg20[%c2_73, %c0_74, %c0_75] : memref<4x128x8xf32, #tpu.memory_space<vmem>>, vector<1x128x8xf32>
      %129 = vector.shape_cast %128 : vector<1x128x8xf32> to vector<128x8xf32>
      %130 = vector.broadcast %110 : vector<128x1xf32> to vector<128x8xf32>
      %131 = arith.mulf %130, %129 : vector<128x8xf32>
      %132 = arith.addf %131, %127 : vector<128x8xf32>
      %c2_76 = arith.constant 2 : index
      %c0_77 = arith.constant 0 : index
      %c0_78 = arith.constant 0 : index
      %133 = vector.load %arg20[%c2_76, %c0_77, %c0_78] : memref<4x128x8xf32, #tpu.memory_space<vmem>>, vector<1x128x8xf32>
      %134 = vector.shape_cast %133 : vector<1x128x8xf32> to vector<128x8xf32>
      %135 = vector.shape_cast %132 : vector<128x8xf32> to vector<1x128x8xf32>
      tpu.vector_store %arg20[%c2_76, %c0_77, %c0_78], %135 {strides = array<i32>} : memref<4x128x8xf32, #tpu.memory_space<vmem>>, vector<1x128x8xf32>,
      %c2_79 = arith.constant 2 : index
      %c0_80 = arith.constant 0 : index
      %c0_81 = arith.constant 0 : index
      %136 = vector.load %arg18[%c2_79, %c0_80, %c0_81] : memref<4x128x1xf32, #tpu.memory_space<vmem>>, vector<1x128x1xf32>
      %137 = vector.shape_cast %136 : vector<1x128x1xf32> to vector<128x1xf32>
      %138 = vector.shape_cast %108 : vector<128x1xf32> to vector<1x128x1xf32>
      tpu.vector_store %arg18[%c2_79, %c0_80, %c0_81], %138 {strides = array<i32>} : memref<4x128x1xf32, #tpu.memory_space<vmem>>, vector<1x128x1xf32>,
      %139 = vector.extract_strided_slice %11 {offsets = [0, 24], sizes = [128, 8], strides = [1, 1]} : vector<128x32xbf16> to vector<128x8xbf16>
      %140 = vector.extract_strided_slice %12 {offsets = [0, 24], sizes = [128, 8], strides = [1, 1]} : vector<128x32xbf16> to vector<128x8xbf16>
      %cst_82 = arith.constant dense<0.000000e+00> : vector<128x128xf32>
      %141 = tpu.matmul %139, %140, %cst_82 {dimension_numbers = #tpu.dot_dimension_numbers<[1], [1], [0], [0], [0, 0, 1, 0], [], []>} : vector<128x8xbf16>, vector<128x8xbf16>, vector<128x128xf32> -> vector<128x128xf32>
      %cst_83 = arith.constant -1.000000e+30 : f32
      %142 = vector.broadcast %cst_83 : f32 to vector<128x128xf32>
      %143 = arith.select %18, %141, %142 : vector<128x128xi1>, vector<128x128xf32>
      %c3 = arith.constant 3 : index
      %c0_84 = arith.constant 0 : index
      %c0_85 = arith.constant 0 : index
      %144 = vector.load %arg18[%c3, %c0_84, %c0_85] : memref<4x128x1xf32, #tpu.memory_space<vmem>>, vector<1x128x1xf32>
      %145 = vector.shape_cast %144 : vector<1x128x1xf32> to vector<128x1xf32>
      %cst_86 = arith.constant dense<0xFF800000> : vector<128xf32>
      %146 = vector.multi_reduction <maximumf>, %143, %cst_86 [1] : vector<128x128xf32> to vector<128xf32>
      %147 = vector.shape_cast %146 : vector<128xf32> to vector<128x1xf32>
      %148 = arith.maximumf %145, %147 : vector<128x1xf32>
      %149 = arith.subf %145, %148 : vector<128x1xf32>
      %150 = math.exp %149 : vector<128x1xf32>
      %151 = vector.broadcast %148 : vector<128x1xf32> to vector<128x128xf32>
      %152 = arith.subf %143, %151 : vector<128x128xf32>
      %153 = math.exp %152 : vector<128x128xf32>
      %cst_87 = arith.constant 0.000000e+00 : f32
      %154 = vector.broadcast %cst_87 : f32 to vector<128x128xf32>
      %155 = arith.select %18, %153, %154 : vector<128x128xi1>, vector<128x128xf32>
      %c3_88 = arith.constant 3 : index
      %c0_89 = arith.constant 0 : index
      %c0_90 = arith.constant 0 : index
      %156 = vector.load %arg19[%c3_88, %c0_89, %c0_90] : memref<4x128x1xf32, #tpu.memory_space<vmem>>, vector<1x128x1xf32>
      %157 = vector.shape_cast %156 : vector<1x128x1xf32> to vector<128x1xf32>
      %158 = arith.mulf %150, %157 : vector<128x1xf32>
      %cst_91 = arith.constant dense<0.000000e+00> : vector<128xf32>
      %159 = vector.multi_reduction <add>, %155, %cst_91 [1] : vector<128x128xf32> to vector<128xf32>
      %160 = vector.shape_cast %159 : vector<128xf32> to vector<128x1xf32>
      %161 = arith.addf %158, %160 : vector<128x1xf32>
      %c3_92 = arith.constant 3 : index
      %c0_93 = arith.constant 0 : index
      %c0_94 = arith.constant 0 : index
      %162 = vector.load %arg19[%c3_92, %c0_93, %c0_94] : memref<4x128x1xf32, #tpu.memory_space<vmem>>, vector<1x128x1xf32>
      %163 = vector.shape_cast %162 : vector<1x128x1xf32> to vector<128x1xf32>
      %164 = vector.shape_cast %161 : vector<128x1xf32> to vector<1x128x1xf32>
      tpu.vector_store %arg19[%c3_92, %c0_93, %c0_94], %164 {strides = array<i32>} : memref<4x128x1xf32, #tpu.memory_space<vmem>>, vector<1x128x1xf32>,
      %165 = arith.truncf %155 : vector<128x128xf32> to vector<128x128xbf16>
      %166 = vector.extract_strided_slice %13 {offsets = [0, 24], sizes = [128, 8], strides = [1, 1]} : vector<128x32xbf16> to vector<128x8xbf16>
      %cst_95 = arith.constant dense<0.000000e+00> : vector<128x8xf32>
      %167 = tpu.matmul %165, %166, %cst_95 {dimension_numbers = #tpu.dot_dimension_numbers<[1], [0], [0], [1], [0, 0, 1, 1], [], []>} : vector<128x128xbf16>, vector<128x8xbf16>, vector<128x8xf32> -> vector<128x8xf32>
      %c3_96 = arith.constant 3 : index
      %c0_97 = arith.constant 0 : index
      %c0_98 = arith.constant 0 : index
      %168 = vector.load %arg20[%c3_96, %c0_97, %c0_98] : memref<4x128x8xf32, #tpu.memory_space<vmem>>, vector<1x128x8xf32>
      %169 = vector.shape_cast %168 : vector<1x128x8xf32> to vector<128x8xf32>
      %170 = vector.broadcast %150 : vector<128x1xf32> to vector<128x8xf32>
      %171 = arith.mulf %170, %169 : vector<128x8xf32>
      %172 = arith.addf %171, %167 : vector<128x8xf32>
      %c3_99 = arith.constant 3 : index
      %c0_100 = arith.constant 0 : index
      %c0_101 = arith.constant 0 : index
      %173 = vector.load %arg20[%c3_99, %c0_100, %c0_101] : memref<4x128x8xf32, #tpu.memory_space<vmem>>, vector<1x128x8xf32>
      %174 = vector.shape_cast %173 : vector<1x128x8xf32> to vector<128x8xf32>
      %175 = vector.shape_cast %172 : vector<128x8xf32> to vector<1x128x8xf32>
      tpu.vector_store %arg20[%c3_99, %c0_100, %c0_101], %175 {strides = array<i32>} : memref<4x128x8xf32, #tpu.memory_space<vmem>>, vector<1x128x8xf32>,
      %c3_102 = arith.constant 3 : index
      %c0_103 = arith.constant 0 : index
      %c0_104 = arith.constant 0 : index
      %176 = vector.load %arg18[%c3_102, %c0_103, %c0_104] : memref<4x128x1xf32, #tpu.memory_space<vmem>>, vector<1x128x1xf32>
      %177 = vector.shape_cast %176 : vector<1x128x1xf32> to vector<128x1xf32>
      %178 = vector.shape_cast %148 : vector<128x1xf32> to vector<1x128x1xf32>
      tpu.vector_store %arg18[%c3_102, %c0_103, %c0_104], %178 {strides = array<i32>} : memref<4x128x1xf32, #tpu.memory_space<vmem>>, vector<1x128x1xf32>,
    } else {
    }
    %c1_i32 = arith.constant 1 : i32
    %8 = arith.cmpi eq, %arg1, %c1_i32 : i32
    %9 = arith.extui %8 : i1 to i32
    %c0_i32_2 = arith.constant 0 : i32
    %10 = arith.cmpi ne, %9, %c0_i32_2 : i32
    scf.if %10 {
      %c0 = arith.constant 0 : index
      %c0_3 = arith.constant 0 : index
      %c0_4 = arith.constant 0 : index
      %11 = vector.load %arg20[%c0, %c0_3, %c0_4] : memref<4x128x8xf32, #tpu.memory_space<vmem>>, vector<1x128x8xf32>
      %12 = vector.shape_cast %11 : vector<1x128x8xf32> to vector<128x8xf32>
      %c0_5 = arith.constant 0 : index
      %c0_6 = arith.constant 0 : index
      %c0_7 = arith.constant 0 : index
      %13 = vector.load %arg19[%c0_5, %c0_6, %c0_7] : memref<4x128x1xf32, #tpu.memory_space<vmem>>, vector<1x128x1xf32>
      %14 = vector.shape_cast %13 : vector<1x128x1xf32> to vector<128x1xf32>
      %15 = vector.broadcast %14 : vector<128x1xf32> to vector<128x8xf32>
      %16 = arith.divf %12, %15 : vector<128x8xf32>
      %c1_8 = arith.constant 1 : index
      %c0_9 = arith.constant 0 : index
      %c0_10 = arith.constant 0 : index
      %17 = vector.load %arg20[%c1_8, %c0_9, %c0_10] : memref<4x128x8xf32, #tpu.memory_space<vmem>>, vector<1x128x8xf32>
      %18 = vector.shape_cast %17 : vector<1x128x8xf32> to vector<128x8xf32>
      %c1_11 = arith.constant 1 : index
      %c0_12 = arith.constant 0 : index
      %c0_13 = arith.constant 0 : index
      %19 = vector.load %arg19[%c1_11, %c0_12, %c0_13] : memref<4x128x1xf32, #tpu.memory_space<vmem>>, vector<1x128x1xf32>
      %20 = vector.shape_cast %19 : vector<1x128x1xf32> to vector<128x1xf32>
      %21 = vector.broadcast %20 : vector<128x1xf32> to vector<128x8xf32>
      %22 = arith.divf %18, %21 : vector<128x8xf32>
      %c2 = arith.constant 2 : index
      %c0_14 = arith.constant 0 : index
      %c0_15 = arith.constant 0 : index
      %23 = vector.load %arg20[%c2, %c0_14, %c0_15] : memref<4x128x8xf32, #tpu.memory_space<vmem>>, vector<1x128x8xf32>
      %24 = vector.shape_cast %23 : vector<1x128x8xf32> to vector<128x8xf32>
      %c2_16 = arith.constant 2 : index
      %c0_17 = arith.constant 0 : index
      %c0_18 = arith.constant 0 : index
      %25 = vector.load %arg19[%c2_16, %c0_17, %c0_18] : memref<4x128x1xf32, #tpu.memory_space<vmem>>, vector<1x128x1xf32>
      %26 = vector.shape_cast %25 : vector<1x128x1xf32> to vector<128x1xf32>
      %27 = vector.broadcast %26 : vector<128x1xf32> to vector<128x8xf32>
      %28 = arith.divf %24, %27 : vector<128x8xf32>
      %c3 = arith.constant 3 : index
      %c0_19 = arith.constant 0 : index
      %c0_20 = arith.constant 0 : index
      %29 = vector.load %arg20[%c3, %c0_19, %c0_20] : memref<4x128x8xf32, #tpu.memory_space<vmem>>, vector<1x128x8xf32>
      %30 = vector.shape_cast %29 : vector<1x128x8xf32> to vector<128x8xf32>
      %c3_21 = arith.constant 3 : index
      %c0_22 = arith.constant 0 : index
      %c0_23 = arith.constant 0 : index
      %31 = vector.load %arg19[%c3_21, %c0_22, %c0_23] : memref<4x128x1xf32, #tpu.memory_space<vmem>>, vector<1x128x1xf32>
      %32 = vector.shape_cast %31 : vector<1x128x1xf32> to vector<128x1xf32>
      %33 = vector.broadcast %32 : vector<128x1xf32> to vector<128x8xf32>
      %34 = arith.divf %30, %33 : vector<128x8xf32>
      %35 = tpu.concatenate %16, %22, %28, %34 in 1 : vector<128x8xf32>, vector<128x8xf32>, vector<128x8xf32>, vector<128x8xf32> -> vector<128x32xf32>
      %36 = arith.truncf %35 : vector<128x32xf32> to vector<128x32xbf16>
      %c0_24 = arith.constant 0 : index
      %c0_25 = arith.constant 0 : index
      %37 = vector.load %arg9[%c0_24, %c0_25] : memref<32x32xbf16, #tpu.memory_space<vmem>>, vector<32x32xbf16>
      %cst = arith.constant dense<0.000000e+00> : vector<128x32xf32>
      %38 = tpu.matmul %36, %37, %cst {dimension_numbers = #tpu.dot_dimension_numbers<[1], [0], [0], [1], [0, 0, 1, 1], [], []>} : vector<128x32xbf16>, vector<32x32xbf16>, vector<128x32xf32> -> vector<128x32xf32>
      %c0_26 = arith.constant 0 : index
      %c0_27 = arith.constant 0 : index
      %39 = vector.load %arg10[%c0_26, %c0_27] : memref<1x32xf32, #tpu.memory_space<vmem>>, vector<1x32xf32>
      %40 = vector.broadcast %39 : vector<1x32xf32> to vector<128x32xf32>
      %41 = arith.addf %38, %40 : vector<128x32xf32>
      %c0_28 = arith.constant 0 : index
      %c0_29 = arith.constant 0 : index
      %42 = vector.load %arg8[%c0_28, %c0_29] : memref<128x32xbf16, #tpu.memory_space<vmem>>, vector<128x32xbf16>
      %43 = arith.extf %42 : vector<128x32xbf16> to vector<128x32xf32>
      %44 = arith.addf %41, %43 : vector<128x32xf32>
      %cst_30 = arith.constant dense<0.000000e+00> : vector<128xf32>
      %45 = vector.multi_reduction <add>, %44, %cst_30 [1] : vector<128x32xf32> to vector<128xf32>
      %46 = vector.shape_cast %45 : vector<128xf32> to vector<128x1xf32>
      %cst_31 = arith.constant 3.200000e+01 : f32
      %47 = vector.broadcast %cst_31 : f32 to vector<128x1xf32>
      %48 = arith.divf %46, %47 : vector<128x1xf32>
      %49 = vector.broadcast %48 : vector<128x1xf32> to vector<128x32xf32>
      %50 = arith.subf %44, %49 : vector<128x32xf32>
      %51 = arith.mulf %50, %50 : vector<128x32xf32>
      %cst_32 = arith.constant dense<0.000000e+00> : vector<128xf32>
      %52 = vector.multi_reduction <add>, %51, %cst_32 [1] : vector<128x32xf32> to vector<128xf32>
      %53 = vector.shape_cast %52 : vector<128xf32> to vector<128x1xf32>
      %cst_33 = arith.constant 3.200000e+01 : f32
      %54 = vector.broadcast %cst_33 : f32 to vector<128x1xf32>
      %55 = arith.divf %53, %54 : vector<128x1xf32>
      %cst_34 = arith.constant 9.99999997E-7 : f32
      %56 = vector.broadcast %cst_34 : f32 to vector<128x1xf32>
      %57 = arith.addf %55, %56 : vector<128x1xf32>
      %58 = math.rsqrt %57 : vector<128x1xf32>
      %59 = vector.broadcast %58 : vector<128x1xf32> to vector<128x32xf32>
      %60 = arith.mulf %50, %59 : vector<128x32xf32>
      %c0_35 = arith.constant 0 : index
      %c0_36 = arith.constant 0 : index
      %61 = vector.load %arg11[%c0_35, %c0_36] : memref<1x32xf32, #tpu.memory_space<vmem>>, vector<1x32xf32>
      %62 = vector.broadcast %61 : vector<1x32xf32> to vector<128x32xf32>
      %63 = arith.mulf %60, %62 : vector<128x32xf32>
      %c0_37 = arith.constant 0 : index
      %c0_38 = arith.constant 0 : index
      %64 = vector.load %arg12[%c0_37, %c0_38] : memref<1x32xf32, #tpu.memory_space<vmem>>, vector<1x32xf32>
      %65 = vector.broadcast %64 : vector<1x32xf32> to vector<128x32xf32>
      %66 = arith.addf %63, %65 : vector<128x32xf32>
      %67 = arith.truncf %66 : vector<128x32xf32> to vector<128x32xbf16>
      %c0_39 = arith.constant 0 : index
      %c0_40 = arith.constant 0 : index
      %68 = vector.load %arg13[%c0_39, %c0_40] : memref<32x64xbf16, #tpu.memory_space<vmem>>, vector<32x64xbf16>
      %cst_41 = arith.constant dense<0.000000e+00> : vector<128x64xf32>
      %69 = tpu.matmul %67, %68, %cst_41 {dimension_numbers = #tpu.dot_dimension_numbers<[1], [0], [0], [1], [0, 0, 1, 1], [], []>} : vector<128x32xbf16>, vector<32x64xbf16>, vector<128x64xf32> -> vector<128x64xf32>
      %c0_42 = arith.constant 0 : index
      %c0_43 = arith.constant 0 : index
      %70 = vector.load %arg14[%c0_42, %c0_43] : memref<1x64xf32, #tpu.memory_space<vmem>>, vector<1x64xf32>
      %71 = vector.broadcast %70 : vector<1x64xf32> to vector<128x64xf32>
      %72 = arith.addf %69, %71 : vector<128x64xf32>
      %73 = arith.mulf %72, %72 : vector<128x64xf32>
      %74 = arith.mulf %72, %73 : vector<128x64xf32>
      %cst_44 = arith.constant 4.471500e-02 : f32
      %75 = vector.broadcast %cst_44 : f32 to vector<128x64xf32>
      %76 = arith.mulf %75, %74 : vector<128x64xf32>
      %77 = arith.addf %72, %76 : vector<128x64xf32>
      %cst_45 = arith.constant 0.797884583 : f32
      %78 = vector.broadcast %cst_45 : f32 to vector<128x64xf32>
      %79 = arith.mulf %78, %77 : vector<128x64xf32>
      %80 = math.tanh %79 : vector<128x64xf32>
      %cst_46 = arith.constant 1.000000e+00 : f32
      %81 = vector.broadcast %cst_46 : f32 to vector<128x64xf32>
      %82 = arith.addf %81, %80 : vector<128x64xf32>
      %cst_47 = arith.constant 5.000000e-01 : f32
      %83 = vector.broadcast %cst_47 : f32 to vector<128x64xf32>
      %84 = arith.mulf %83, %82 : vector<128x64xf32>
      %85 = arith.mulf %72, %84 : vector<128x64xf32>
      %86 = arith.truncf %85 : vector<128x64xf32> to vector<128x64xbf16>
      %c0_48 = arith.constant 0 : index
      %c0_49 = arith.constant 0 : index
      %87 = vector.load %arg15[%c0_48, %c0_49] : memref<64x32xbf16, #tpu.memory_space<vmem>>, vector<64x32xbf16>
      %cst_50 = arith.constant dense<0.000000e+00> : vector<128x32xf32>
      %88 = tpu.matmul %86, %87, %cst_50 {dimension_numbers = #tpu.dot_dimension_numbers<[1], [0], [0], [1], [0, 0, 1, 1], [], []>} : vector<128x64xbf16>, vector<64x32xbf16>, vector<128x32xf32> -> vector<128x32xf32>
      %c0_51 = arith.constant 0 : index
      %c0_52 = arith.constant 0 : index
      %89 = vector.load %arg16[%c0_51, %c0_52] : memref<1x32xf32, #tpu.memory_space<vmem>>, vector<1x32xf32>
      %90 = vector.broadcast %89 : vector<1x32xf32> to vector<128x32xf32>
      %91 = arith.addf %88, %90 : vector<128x32xf32>
      %92 = arith.addf %44, %91 : vector<128x32xf32>
      %93 = arith.truncf %92 : vector<128x32xf32> to vector<128x32xbf16>
      %c0_53 = arith.constant 0 : index
      %c0_54 = arith.constant 0 : index
      %94 = vector.load %arg17[%c0_53, %c0_54] : memref<128x32xbf16, #tpu.memory_space<vmem>>, vector<128x32xbf16>
      tpu.vector_store %arg17[%c0_53, %c0_54], %93 {strides = array<i32>} : memref<128x32xbf16, #tpu.memory_space<vmem>>, vector<128x32xbf16>,
    } else {
    }
    return
  }
  func.func @transform_0(%arg0: i32, %arg1: i32, %arg2: memref<2x3xi32, #tpu.memory_space<smem>>) -> (i32, i32) {
    %c0_i32 = arith.constant 0 : i32
    %c0_i32_0 = arith.constant 0 : i32
    return %arg0, %c0_i32 : i32, i32
  }
  func.func @transform_1(%arg0: i32, %arg1: i32, %arg2: memref<2x3xi32, #tpu.memory_space<smem>>) -> (i32, i32) {
    %c0 = arith.constant 0 : index
    %0 = arith.index_cast %arg0 : i32 to index
    %1 = memref.load %arg2[%c0, %0] : memref<2x3xi32, #tpu.memory_space<smem>>
    %c1 = arith.constant 1 : index
    %2 = arith.index_cast %arg0 : i32 to index
    %3 = memref.load %arg2[%c1, %2] : memref<2x3xi32, #tpu.memory_space<smem>>
    %c1_i32 = arith.constant 1 : i32
    %4 = arith.subi %3, %c1_i32 : i32
    %5 = arith.minsi %arg1, %4 : i32
    %6 = arith.addi %1, %5 : i32
    %c0_i32 = arith.constant 0 : i32
    %c0_i32_0 = arith.constant 0 : i32
    return %6, %c0_i32 : i32, i32
  }
  func.func @transform_2(%arg0: i32, %arg1: i32, %arg2: memref<2x3xi32, #tpu.memory_space<smem>>) -> (i32, i32) {
    %c0 = arith.constant 0 : index
    %0 = arith.index_cast %arg0 : i32 to index
    %1 = memref.load %arg2[%c0, %0] : memref<2x3xi32, #tpu.memory_space<smem>>
    %c1 = arith.constant 1 : index
    %2 = arith.index_cast %arg0 : i32 to index
    %3 = memref.load %arg2[%c1, %2] : memref<2x3xi32, #tpu.memory_space<smem>>
    %c1_i32 = arith.constant 1 : i32
    %4 = arith.subi %3, %c1_i32 : i32
    %5 = arith.minsi %arg1, %4 : i32
    %6 = arith.addi %1, %5 : i32
    %c0_i32 = arith.constant 0 : i32
    %c0_i32_0 = arith.constant 0 : i32
    return %6, %c0_i32 : i32, i32
  }
  func.func @transform_3(%arg0: i32, %arg1: i32, %arg2: memref<2x3xi32, #tpu.memory_space<smem>>) -> (i32, i32) {
    %c0_i32 = arith.constant 0 : i32
    %c0_i32_0 = arith.constant 0 : i32
    return %arg0, %c0_i32 : i32, i32
  }
  func.func @transform_4(%arg0: i32, %arg1: i32, %arg2: memref<2x3xi32, #tpu.memory_space<smem>>) -> (i32, i32) {
    %c0 = arith.constant 0 : index
    %0 = arith.index_cast %arg0 : i32 to index
    %1 = memref.load %arg2[%c0, %0] : memref<2x3xi32, #tpu.memory_space<smem>>
    %c1 = arith.constant 1 : index
    %2 = arith.index_cast %arg0 : i32 to index
    %3 = memref.load %arg2[%c1, %2] : memref<2x3xi32, #tpu.memory_space<smem>>
    %c1_i32 = arith.constant 1 : i32
    %4 = arith.subi %3, %c1_i32 : i32
    %5 = arith.minsi %arg1, %4 : i32
    %6 = arith.addi %1, %5 : i32
    %c0_i32 = arith.constant 0 : i32
    %c0_i32_0 = arith.constant 0 : i32
    return %c0_i32, %6 : i32, i32
  }
  func.func @transform_5(%arg0: i32, %arg1: i32, %arg2: memref<2x3xi32, #tpu.memory_space<smem>>) -> (i32, i32) {
    %c0_i32 = arith.constant 0 : i32
    %c0_i32_0 = arith.constant 0 : i32
    return %arg0, %c0_i32 : i32, i32
  }
  func.func @transform_6(%arg0: i32, %arg1: i32, %arg2: memref<2x3xi32, #tpu.memory_space<smem>>) -> (i32, i32) {
    %c0_i32 = arith.constant 0 : i32
    %c0_i32_0 = arith.constant 0 : i32
    %c0_i32_1 = arith.constant 0 : i32
    return %c0_i32, %c0_i32_0 : i32, i32
  }
  func.func @transform_7(%arg0: i32, %arg1: i32, %arg2: memref<2x3xi32, #tpu.memory_space<smem>>) -> (i32, i32) {
    %c0_i32 = arith.constant 0 : i32
    %c0_i32_0 = arith.constant 0 : i32
    %c0_i32_1 = arith.constant 0 : i32
    return %c0_i32, %c0_i32_0 : i32, i32
  }
  func.func @transform_8(%arg0: i32, %arg1: i32, %arg2: memref<2x3xi32, #tpu.memory_space<smem>>) -> (i32, i32) {
    %c0_i32 = arith.constant 0 : i32
    %c0_i32_0 = arith.constant 0 : i32
    %c0_i32_1 = arith.constant 0 : i32
    return %c0_i32, %c0_i32_0 : i32, i32
  }
  func.func @transform_9(%arg0: i32, %arg1: i32, %arg2: memref<2x3xi32, #tpu.memory_space<smem>>) -> (i32, i32) {
    %c0_i32 = arith.constant 0 : i32
    %c0_i32_0 = arith.constant 0 : i32
    %c0_i32_1 = arith.constant 0 : i32
    return %c0_i32, %c0_i32_0 : i32, i32
  }
  func.func @transform_10(%arg0: i32, %arg1: i32, %arg2: memref<2x3xi32, #tpu.memory_space<smem>>) -> (i32, i32) {
    %c0_i32 = arith.constant 0 : i32
    %c0_i32_0 = arith.constant 0 : i32
    %c0_i32_1 = arith.constant 0 : i32
    return %c0_i32, %c0_i32_0 : i32, i32
  }
  func.func @transform_11(%arg0: i32, %arg1: i32, %arg2: memref<2x3xi32, #tpu.memory_space<smem>>) -> (i32, i32) {
    %c0_i32 = arith.constant 0 : i32
    %c0_i32_0 = arith.constant 0 : i32
    %c0_i32_1 = arith.constant 0 : i32
    return %c0_i32, %c0_i32_0 : i32, i32
  }
  func.func @transform_12(%arg0: i32, %arg1: i32, %arg2: memref<2x3xi32, #tpu.memory_space<smem>>) -> (i32, i32) {
    %c0_i32 = arith.constant 0 : i32
    %c0_i32_0 = arith.constant 0 : i32
    %c0_i32_1 = arith.constant 0 : i32
    return %c0_i32, %c0_i32_0 : i32, i32
  }
  func.func @transform_13(%arg0: i32, %arg1: i32, %arg2: memref<2x3xi32, #tpu.memory_space<smem>>) -> (i32, i32) {
    %c0_i32 = arith.constant 0 : i32
    %c0_i32_0 = arith.constant 0 : i32
    %c0_i32_1 = arith.constant 0 : i32
    return %c0_i32, %c0_i32_0 : i32, i32
  }
  func.func @transform_14(%arg0: i32, %arg1: i32, %arg2: memref<2x3xi32, #tpu.memory_space<smem>>) -> (i32, i32) {
    %c0_i32 = arith.constant 0 : i32
    %c0_i32_0 = arith.constant 0 : i32
    return %arg0, %c0_i32 : i32, i32
  }
}

</mosaic_0001>

<llo_original>
// kernel: siglip2_forward.6
$region0: #{siglip2_forward.6}
  #allocation0 [shape = 'u32[]', space=smem, size = 0x4, offset = 0x4, fixed_abs, tag = 'smem constant byte address 0x4 - core index']
  #allocation1 [shape = 'u32[72,128]{1,0:T(1,128)}', space=vmem, size = 0x9000, scoped, tag = 'internal scratch']
  %s0 = inlined_call_operand.vmem [shape: f32[384,48], index: 0, kind: input, shape index: {}]
  %s1 = inlined_call_operand.vmem [shape: bf16[48,32], index: 1, kind: input, shape index: {}]
  %s2 = inlined_call_operand.vmem [shape: f32[1,32], index: 2, kind: input, shape index: {}]
  %s3 = inlined_call_operand.vmem [shape: f32[384,32], index: 3, kind: input, shape index: {}]
  %s4 = inlined_call_operand.vmem [shape: bf16[384,32], index: 4, kind: output, shape index: {}]
  %s5 = sld [smem:[#allocation0]]
  $region26: #{siglip2_forward.6} parent=0
    _
  %s7 = ssub.s32 1, %s5
  %s8 = scalar_select 0, %s7, %s5
  // Predicated region
  $region2: #{siglip2_forward.6} parent=0 // pred_check
    _
  $region3: #{siglip2_forward.6} parent=0 // pred_check_branch
    %10 = sbr.rel (0) target = $region5
  $region4: #{siglip2_forward.6} parent=0 // pred_region
    _
  $region5: #{siglip2_forward.6} parent=0 // pred_fallthru
    _
  // Predicated region
  $region6: #{siglip2_forward.6} parent=0 // pred_check
    _
  $region7: #{siglip2_forward.6} parent=0 // pred_check_branch
    %12 = sbr.rel (0) target = $region9
  $region8: #{siglip2_forward.6} parent=0 // pred_region
    _
  $region9: #{siglip2_forward.6} parent=0 // pred_fallthru
    _
  // Predicated region
  $region10: #{siglip2_forward.6} parent=0 // pred_check
    _
  $region11: #{siglip2_forward.6} parent=0 // pred_check_branch
    %14 = sbr.rel (0) target = $region13
  $region12: #{siglip2_forward.6} parent=0 // pred_region
    _
  $region13: #{siglip2_forward.6} parent=0 // pred_fallthru
    _
  // Predicated region
  $region14: #{siglip2_forward.6} parent=0 // pred_check
    _
  $region15: #{siglip2_forward.6} parent=0 // pred_check_branch
    %16 = sbr.rel (0) target = $region17
  $region16: #{siglip2_forward.6} parent=0 // pred_region
    _
  $region17: #{siglip2_forward.6} parent=0 // pred_fallthru
    _
  %v18 = vld [vmem:[%s0] sm:$0xff]
  %v19 = vld [vmem:[%s0 + $0x8] sm:$0xff]
  %v20 = vld [vmem:[%s0 + $0x10] sm:$0xff]
  %v21 = vld [vmem:[%s0 + $0x18] sm:$0xff]
  %v22 = vld [vmem:[%s0 + $0x20] sm:$0xff]
  %v23 = vld [vmem:[%s0 + $0x28] sm:$0xff]
  %v24 = vld [vmem:[%s0 + $0x30] sm:$0xff]
  %v25 = vld [vmem:[%s0 + $0x38] sm:$0xff]
  %v26 = vld [vmem:[%s0 + $0x40] sm:$0xff]
  %v27 = vld [vmem:[%s0 + $0x48] sm:$0xff]
  %v28 = vld [vmem:[%s0 + $0x50] sm:$0xff]
  %v29 = vld [vmem:[%s0 + $0x58] sm:$0xff]
  %v30 = vld [vmem:[%s0 + $0x60] sm:$0xff]
  %v31 = vld [vmem:[%s0 + $0x68] sm:$0xff]
  %v32 = vld [vmem:[%s0 + $0x70] sm:$0xff]
  %v33 = vld [vmem:[%s0 + $0x78] sm:$0xff]
  %v34 = vld [vmem:[%s0 + $0x80] sm:$0xff]
  %v35 = vld [vmem:[%s0 + $0x88] sm:$0xff]
  %v36 = vld [vmem:[%s0 + $0x90] sm:$0xff]
  %v37 = vld [vmem:[%s0 + $0x98] sm:$0xff]
  %v38 = vld [vmem:[%s0 + $0xa0] sm:$0xff]
  %v39 = vld [vmem:[%s0 + $0xa8] sm:$0xff]
  %v40 = vld [vmem:[%s0 + $0xb0] sm:$0xff]
  %v41 = vld [vmem:[%s0 + $0xb8] sm:$0xff]
  %v42 = vld [vmem:[%s0 + $0xc0] sm:$0xff]
  %v43 = vld [vmem:[%s0 + $0xc8] sm:$0xff]
  %v44 = vld [vmem:[%s0 + $0xd0] sm:$0xff]
  %v45 = vld [vmem:[%s0 + $0xd8] sm:$0xff]
  %v46 = vld [vmem:[%s0 + $0xe0] sm:$0xff]
  %v47 = vld [vmem:[%s0 + $0xe8] sm:$0xff]
  %v48 = vld [vmem:[%s0 + $0xf0] sm:$0xff]
  %v49 = vld [vmem:[%s0 + $0xf8] sm:$0xff]
  %v50 = vld [vmem:[%s0 + $0x100] sm:$0xff]
  %v51 = vld [vmem:[%s0 + $0x108] sm:$0xff]
  %v52 = vld [vmem:[%s0 + $0x110] sm:$0xff]
  %v53 = vld [vmem:[%s0 + $0x118] sm:$0xff]
  %v54 = vld [vmem:[%s0 + $0x120] sm:$0xff]
  %v55 = vld [vmem:[%s0 + $0x128] sm:$0xff]
  %v56 = vld [vmem:[%s0 + $0x130] sm:$0xff]
  %v57 = vld [vmem:[%s0 + $0x138] sm:$0xff]
  %v58 = vld [vmem:[%s0 + $0x140] sm:$0xff]
  %v59 = vld [vmem:[%s0 + $0x148] sm:$0xff]
  %v60 = vld [vmem:[%s0 + $0x150] sm:$0xff]
  %v61 = vld [vmem:[%s0 + $0x158] sm:$0xff]
  %v62 = vld [vmem:[%s0 + $0x160] sm:$0xff]
  %v63 = vld [vmem:[%s0 + $0x168] sm:$0xff]
  %v64 = vld [vmem:[%s0 + $0x170] sm:$0xff]
  %v65 = vld [vmem:[%s0 + $0x178] sm:$0xff]
  %v66 = vpack.c.bf16 %v19, %v18
  %v67 = vpack.c.bf16 %v21, %v20
  %v68 = vpack.c.bf16 %v23, %v22
  %v69 = vpack.c.bf16 %v25, %v24
  %v70 = vpack.c.bf16 %v27, %v26
  %v71 = vpack.c.bf16 %v29, %v28
  %v72 = vpack.c.bf16 %v31, %v30
  %v73 = vpack.c.bf16 %v33, %v32
  %v74 = vpack.c.bf16 %v35, %v34
  %v75 = vpack.c.bf16 %v37, %v36
  %v76 = vpack.c.bf16 %v39, %v38
  %v77 = vpack.c.bf16 %v41, %v40
  %v78 = vpack.c.bf16 %v43, %v42
  %v79 = vpack.c.bf16 %v45, %v44
  %v80 = vpack.c.bf16 %v47, %v46
  %v81 = vpack.c.bf16 %v49, %v48
  %v82 = vpack.c.bf16 %v51, %v50
  %v83 = vpack.c.bf16 %v53, %v52
  %v84 = vpack.c.bf16 %v55, %v54
  %v85 = vpack.c.bf16 %v57, %v56
  %v86 = vpack.c.bf16 %v59, %v58
  %v87 = vpack.c.bf16 %v61, %v60
  %v88 = vpack.c.bf16 %v63, %v62
  %v89 = vpack.c.bf16 %v65, %v64
  %v90 = vld [vmem:[%s1] sm:$0xf]
  %v91 = vld [vmem:[%s1 + $0x4] sm:$0xf]
  %v92 = vld [vmem:[%s1 + $0x8] sm:$0xf]
  %v93 = vld [vmem:[%s1 + $0xc] sm:$0xf]
  %v94 = vld [vmem:[%s1 + $0x10] sm:$0xf]
  %v95 = vld [vmem:[%s1 + $0x14] sm:$0xf]
  %v96 = vld [vmem:[%s2] sm:$0x1]
  %v98 = vperm.slane %v96, 0
  %v106 = vunpack.c.l.b16 %v90
  %v107 = vunpack.c.l.b16 %v91
  %v108 = vunpack.c.l.b16 %v92
  %v109 = vunpack.c.l.b16 %v93
  %v110 = vunpack.c.l.b16 %v94
  %v111 = vunpack.c.l.b16 %v95
  %v112 = vpack.c.b16 %v107, %v106
  %v113 = vpack.c.b16 %v109, %v108
  %v114 = vpack.c.b16 %v111, %v110
  %vm118 = vcmask 392192
  %v120 = vsel %vm118, %v66, 0
  %v123 = vsel %vm118, %v67, 0
  %v126 = vsel %vm118, %v68, 0
  %v129 = vsel %vm118, %v69, 0
  %v132 = vsel %vm118, %v70, 0
  %v135 = vsel %vm118, %v71, 0
  %v138 = vsel %vm118, %v72, 0
  %v141 = vsel %vm118, %v73, 0
  %v144 = vsel %vm118, %v74, 0
  %v147 = vsel %vm118, %v75, 0
  %v150 = vsel %vm118, %v76, 0
  %v153 = vsel %vm118, %v77, 0
  %v156 = vsel %vm118, %v78, 0
  %v159 = vsel %vm118, %v79, 0
  %v162 = vsel %vm118, %v80, 0
  %v165 = vsel %vm118, %v81, 0
  %v168 = vsel %vm118, %v82, 0
  %v171 = vsel %vm118, %v83, 0
  %v174 = vsel %vm118, %v84, 0
  %v177 = vsel %vm118, %v85, 0
  %v180 = vsel %vm118, %v86, 0
  %v183 = vsel %vm118, %v87, 0
  %v186 = vsel %vm118, %v88, 0
  %v189 = vsel %vm118, %v89, 0
  %191 = vmatpush.bf16.msra.mxu0 0
  %192 = vmatpush.bf16.msra.mxu0 0
  %193 = vmatpush.bf16.msra.mxu0 0
  %194 = vmatpush.bf16.msra.mxu0 0
  %195 = vmatpush.bf16.msra.mxu0 0
  %196 = vmatpush.bf16.msra.mxu0 %v114
  %197 = vmatpush.bf16.msra.mxu0 %v113
  %198 = vmatpush.bf16.msra.mxu0 %v112
  %199 = vmatmul.bf16.gmra.mxu0 %v120
  %v200 = vpop.f32.mrf.mxu0
  %v201 = vadd.f32 %v98, %v200
  %v202 = vpop.f32.mrf.mxu0
  %v203 = vadd.f32 %v98, %v202
  %204 = vmatmul.bf16.gmra.mxu0 %v123
  %v205 = vpop.f32.mrf.mxu0
  %v206 = vadd.f32 %v98, %v205
  %v207 = vpop.f32.mrf.mxu0
  %v208 = vadd.f32 %v98, %v207
  %209 = vmatmul.bf16.gmra.mxu0 %v126
  %v210 = vpop.f32.mrf.mxu0
  %v211 = vadd.f32 %v98, %v210
  %v212 = vpop.f32.mrf.mxu0
  %v213 = vadd.f32 %v98, %v212
  %214 = vmatmul.bf16.gmra.mxu0 %v129
  %v215 = vpop.f32.mrf.mxu0
  %v216 = vadd.f32 %v98, %v215
  %v217 = vpop.f32.mrf.mxu0
  %v218 = vadd.f32 %v98, %v217
  %219 = vmatmul.bf16.gmra.mxu0 %v132
  %v220 = vpop.f32.mrf.mxu0
  %v221 = vadd.f32 %v98, %v220
  %v222 = vpop.f32.mrf.mxu0
  %v223 = vadd.f32 %v98, %v222
  %224 = vmatmul.bf16.gmra.mxu0 %v135
  %v225 = vpop.f32.mrf.mxu0
  %v226 = vadd.f32 %v98, %v225
  %v227 = vpop.f32.mrf.mxu0
  %v228 = vadd.f32 %v98, %v227
  %229 = vmatmul.bf16.gmra.mxu0 %v138
  %v230 = vpop.f32.mrf.mxu0
  %v231 = vadd.f32 %v98, %v230
  %v232 = vpop.f32.mrf.mxu0
  %v233 = vadd.f32 %v98, %v232
  %234 = vmatmul.bf16.gmra.mxu0 %v141
  %v235 = vpop.f32.mrf.mxu0
  %v236 = vadd.f32 %v98, %v235
  %v237 = vpop.f32.mrf.mxu0
  %v238 = vadd.f32 %v98, %v237
  %239 = vmatmul.bf16.gmra.mxu0 %v144
  %v240 = vpop.f32.mrf.mxu0
  %v241 = vadd.f32 %v98, %v240
  %v242 = vpop.f32.mrf.mxu0
  %v243 = vadd.f32 %v98, %v242
  %244 = vmatmul.bf16.gmra.mxu0 %v147
  %v245 = vpop.f32.mrf.mxu0
  %v246 = vadd.f32 %v98, %v245
  %v247 = vpop.f32.mrf.mxu0
  %v248 = vadd.f32 %v98, %v247
  %249 = vmatmul.bf16.gmra.mxu0 %v150
  %v250 = vpop.f32.mrf.mxu0
  %v251 = vadd.f32 %v98, %v250
  %v252 = vpop.f32.mrf.mxu0
  %v253 = vadd.f32 %v98, %v252
  %254 = vmatmul.bf16.gmra.mxu0 %v153
  %v255 = vpop.f32.mrf.mxu0
  %v256 = vadd.f32 %v98, %v255
  %v257 = vpop.f32.mrf.mxu0
  %v258 = vadd.f32 %v98, %v257
  %259 = vmatmul.bf16.gmra.mxu0 %v156
  %v260 = vpop.f32.mrf.mxu0
  %v261 = vadd.f32 %v98, %v260
  %v262 = vpop.f32.mrf.mxu0
  %v263 = vadd.f32 %v98, %v262
  %264 = vmatmul.bf16.gmra.mxu0 %v159
  %v265 = vpop.f32.mrf.mxu0
  %v266 = vadd.f32 %v98, %v265
  %v267 = vpop.f32.mrf.mxu0
  %v268 = vadd.f32 %v98, %v267
  %269 = vmatmul.bf16.gmra.mxu0 %v162
  %v270 = vpop.f32.mrf.mxu0
  %v271 = vadd.f32 %v98, %v270
  %v272 = vpop.f32.mrf.mxu0
  %v273 = vadd.f32 %v98, %v272
  %274 = vmatmul.bf16.gmra.mxu0 %v165
  %v275 = vpop.f32.mrf.mxu0
  %v276 = vadd.f32 %v98, %v275
  %v277 = vpop.f32.mrf.mxu0
  %v278 = vadd.f32 %v98, %v277
  %279 = vmatmul.bf16.gmra.mxu0 %v168
  %v280 = vpop.f32.mrf.mxu0
  %v281 = vadd.f32 %v98, %v280
  %v282 = vpop.f32.mrf.mxu0
  %v283 = vadd.f32 %v98, %v282
  %284 = vmatmul.bf16.gmra.mxu0 %v171
  %v285 = vpop.f32.mrf.mxu0
  %v286 = vadd.f32 %v98, %v285
  %v287 = vpop.f32.mrf.mxu0
  %v288 = vadd.f32 %v98, %v287
  %289 = vmatmul.bf16.gmra.mxu0 %v174
  %v290 = vpop.f32.mrf.mxu0
  %v291 = vadd.f32 %v98, %v290
  %v292 = vpop.f32.mrf.mxu0
  %v293 = vadd.f32 %v98, %v292
  %294 = vmatmul.bf16.gmra.mxu0 %v177
  %v295 = vpop.f32.mrf.mxu0
  %v296 = vadd.f32 %v98, %v295
  %v297 = vpop.f32.mrf.mxu0
  %v298 = vadd.f32 %v98, %v297
  %299 = vmatmul.bf16.gmra.mxu0 %v180
  %v300 = vpop.f32.mrf.mxu0
  %v301 = vadd.f32 %v98, %v300
  %v302 = vpop.f32.mrf.mxu0
  %v303 = vadd.f32 %v98, %v302
  %304 = vmatmul.bf16.gmra.mxu0 %v183
  %v305 = vpop.f32.mrf.mxu0
  %v306 = vadd.f32 %v98, %v305
  %v307 = vpop.f32.mrf.mxu0
  %v308 = vadd.f32 %v98, %v307
  %309 = vmatmul.bf16.gmra.mxu0 %v186
  %v310 = vpop.f32.mrf.mxu0
  %v311 = vadd.f32 %v98, %v310
  %v312 = vpop.f32.mrf.mxu0
  %v313 = vadd.f32 %v98, %v312
  %314 = vmatmul.bf16.gmra.mxu0 %v189
  %v315 = vpop.f32.mrf.mxu0
  %v316 = vadd.f32 %v98, %v315
  %v317 = vpop.f32.mrf.mxu0
  %v318 = vadd.f32 %v98, %v317
  %319 = vdwg.mxu0
  %v320 = vld [vmem:[%s3] sm:$0xff]
  %v321 = vld [vmem:[%s3 + $0x8] sm:$0xff]
  %v322 = vld [vmem:[%s3 + $0x10] sm:$0xff]
  %v323 = vld [vmem:[%s3 + $0x18] sm:$0xff]
  %v324 = vld [vmem:[%s3 + $0x20] sm:$0xff]
  %v325 = vld [vmem:[%s3 + $0x28] sm:$0xff]
  %v326 = vld [vmem:[%s3 + $0x30] sm:$0xff]
  %v327 = vld [vmem:[%s3 + $0x38] sm:$0xff]
  %v328 = vld [vmem:[%s3 + $0x40] sm:$0xff]
  %v329 = vld [vmem:[%s3 + $0x48] sm:$0xff]
  %v330 = vld [vmem:[%s3 + $0x50] sm:$0xff]
  %v331 = vld [vmem:[%s3 + $0x58] sm:$0xff]
  %v332 = vld [vmem:[%s3 + $0x60] sm:$0xff]
  %v333 = vld [vmem:[%s3 + $0x68] sm:$0xff]
  %v334 = vld [vmem:[%s3 + $0x70] sm:$0xff]
  %v335 = vld [vmem:[%s3 + $0x78] sm:$0xff]
  %v336 = vld [vmem:[%s3 + $0x80] sm:$0xff]
  %v337 = vld [vmem:[%s3 + $0x88] sm:$0xff]
  %v338 = vld [vmem:[%s3 + $0x90] sm:$0xff]
  %v339 = vld [vmem:[%s3 + $0x98] sm:$0xff]
  %v340 = vld [vmem:[%s3 + $0xa0] sm:$0xff]
  %v341 = vld [vmem:[%s3 + $0xa8] sm:$0xff]
  %v342 = vld [vmem:[%s3 + $0xb0] sm:$0xff]
  %v343 = vld [vmem:[%s3 + $0xb8] sm:$0xff]
  %v344 = vld [vmem:[%s3 + $0xc0] sm:$0xff]
  %v345 = vld [vmem:[%s3 + $0xc8] sm:$0xff]
  %v346 = vld [vmem:[%s3 + $0xd0] sm:$0xff]
  %v347 = vld [vmem:[%s3 + $0xd8] sm:$0xff]
  %v348 = vld [vmem:[%s3 + $0xe0] sm:$0xff]
  %v349 = vld [vmem:[%s3 + $0xe8] sm:$0xff]
  %v350 = vld [vmem:[%s3 + $0xf0] sm:$0xff]
  %v351 = vld [vmem:[%s3 + $0xf8] sm:$0xff]
  %v352 = vld [vmem:[%s3 + $0x100] sm:$0xff]
  %v353 = vld [vmem:[%s3 + $0x108] sm:$0xff]
  %v354 = vld [vmem:[%s3 + $0x110] sm:$0xff]
  %v355 = vld [vmem:[%s3 + $0x118] sm:$0xff]
  %v356 = vld [vmem:[%s3 + $0x120] sm:$0xff]
  %v357 = vld [vmem:[%s3 + $0x128] sm:$0xff]
  %v358 = vld [vmem:[%s3 + $0x130] sm:$0xff]
  %v359 = vld [vmem:[%s3 + $0x138] sm:$0xff]
  %v360 = vld [vmem:[%s3 + $0x140] sm:$0xff]
  %v361 = vld [vmem:[%s3 + $0x148] sm:$0xff]
  %v362 = vld [vmem:[%s3 + $0x150] sm:$0xff]
  %v363 = vld [vmem:[%s3 + $0x158] sm:$0xff]
  %v364 = vld [vmem:[%s3 + $0x160] sm:$0xff]
  %v365 = vld [vmem:[%s3 + $0x168] sm:$0xff]
  %v366 = vld [vmem:[%s3 + $0x170] sm:$0xff]
  %v367 = vld [vmem:[%s3 + $0x178] sm:$0xff]
  %v368 = vadd.f32 %v201, %v320
  %v369 = vadd.f32 %v203, %v321
  %v370 = vadd.f32 %v206, %v322
  %v371 = vadd.f32 %v208, %v323
  %v372 = vadd.f32 %v211, %v324
  %v373 = vadd.f32 %v213, %v325
  %v374 = vadd.f32 %v216, %v326
  %v375 = vadd.f32 %v218, %v327
  %v376 = vadd.f32 %v221, %v328
  %v377 = vadd.f32 %v223, %v329
  %v378 = vadd.f32 %v226, %v330
  %v379 = vadd.f32 %v228, %v331
  %v380 = vadd.f32 %v231, %v332
  %v381 = vadd.f32 %v233, %v333
  %v382 = vadd.f32 %v236, %v334
  %v383 = vadd.f32 %v238, %v335
  %v384 = vadd.f32 %v241, %v336
  %v385 = vadd.f32 %v243, %v337
  %v386 = vadd.f32 %v246, %v338
  %v387 = vadd.f32 %v248, %v339
  %v388 = vadd.f32 %v251, %v340
  %v389 = vadd.f32 %v253, %v341
  %v390 = vadd.f32 %v256, %v342
  %v391 = vadd.f32 %v258, %v343
  %v392 = vadd.f32 %v261, %v344
  %v393 = vadd.f32 %v263, %v345
  %v394 = vadd.f32 %v266, %v346
  %v395 = vadd.f32 %v268, %v347
  %v396 = vadd.f32 %v271, %v348
  %v397 = vadd.f32 %v273, %v349
  %v398 = vadd.f32 %v276, %v350
  %v399 = vadd.f32 %v278, %v351
  %v400 = vadd.f32 %v281, %v352
  %v401 = vadd.f32 %v283, %v353
  %v402 = vadd.f32 %v286, %v354
  %v403 = vadd.f32 %v288, %v355
  %v404 = vadd.f32 %v291, %v356
  %v405 = vadd.f32 %v293, %v357
  %v406 = vadd.f32 %v296, %v358
  %v407 = vadd.f32 %v298, %v359
  %v408 = vadd.f32 %v301, %v360
  %v409 = vadd.f32 %v303, %v361
  %v410 = vadd.f32 %v306, %v362
  %v411 = vadd.f32 %v308, %v363
  %v412 = vadd.f32 %v311, %v364
  %v413 = vadd.f32 %v313, %v365
  %v414 = vadd.f32 %v316, %v366
  %v415 = vadd.f32 %v318, %v367
  %v416 = vpack.c.bf16 %v368, %v368
  %v417 = vpack.c.bf16 %v369, %v369
  %v418 = vpack.c.bf16 %v370, %v370
  %v419 = vpack.c.bf16 %v371, %v371
  %v420 = vpack.c.bf16 %v372, %v372
  %v421 = vpack.c.bf16 %v373, %v373
  %v422 = vpack.c.bf16 %v374, %v374
  %v423 = vpack.c.bf16 %v375, %v375
  %v424 = vpack.c.bf16 %v376, %v376
  %v425 = vpack.c.bf16 %v377, %v377
  %v426 = vpack.c.bf16 %v378, %v378
  %v427 = vpack.c.bf16 %v379, %v379
  %v428 = vpack.c.bf16 %v380, %v380
  %v429 = vpack.c.bf16 %v381, %v381
  %v430 = vpack.c.bf16 %v382, %v382
  %v431 = vpack.c.bf16 %v383, %v383
  %v432 = vpack.c.bf16 %v384, %v384
  %v433 = vpack.c.bf16 %v385, %v385
  %v434 = vpack.c.bf16 %v386, %v386
  %v435 = vpack.c.bf16 %v387, %v387
  %v436 = vpack.c.bf16 %v388, %v388
  %v437 = vpack.c.bf16 %v389, %v389
  %v438 = vpack.c.bf16 %v390, %v390
  %v439 = vpack.c.bf16 %v391, %v391
  %v440 = vpack.c.bf16 %v392, %v392
  %v441 = vpack.c.bf16 %v393, %v393
  %v442 = vpack.c.bf16 %v394, %v394
  %v443 = vpack.c.bf16 %v395, %v395
  %v444 = vpack.c.bf16 %v396, %v396
  %v445 = vpack.c.bf16 %v397, %v397
  %v446 = vpack.c.bf16 %v398, %v398
  %v447 = vpack.c.bf16 %v399, %v399
  %v448 = vpack.c.bf16 %v400, %v400
  %v449 = vpack.c.bf16 %v401, %v401
  %v450 = vpack.c.bf16 %v402, %v402
  %v451 = vpack.c.bf16 %v403, %v403
  %v452 = vpack.c.bf16 %v404, %v404
  %v453 = vpack.c.bf16 %v405, %v405
  %v454 = vpack.c.bf16 %v406, %v406
  %v455 = vpack.c.bf16 %v407, %v407
  %v456 = vpack.c.bf16 %v408, %v408
  %v457 = vpack.c.bf16 %v409, %v409
  %v458 = vpack.c.bf16 %v410, %v410
  %v459 = vpack.c.bf16 %v411, %v411
  %v460 = vpack.c.bf16 %v412, %v412
  %v461 = vpack.c.bf16 %v413, %v413
  %v462 = vpack.c.bf16 %v414, %v414
  %v463 = vpack.c.bf16 %v415, %v415
  %vm464 = vcmask 257024
  %465 = vst.msk [vmem:[%s4] sm:$0xf] %vm464, %v416
  %466 = vst.msk [vmem:[%s4 + $0x4] sm:$0xf] %vm464, %v417
  %467 = vst.msk [vmem:[%s4 + $0x8] sm:$0xf] %vm464, %v418
  %468 = vst.msk [vmem:[%s4 + $0xc] sm:$0xf] %vm464, %v419
  %469 = vst.msk [vmem:[%s4 + $0x10] sm:$0xf] %vm464, %v420
  %470 = vst.msk [vmem:[%s4 + $0x14] sm:$0xf] %vm464, %v421
  %471 = vst.msk [vmem:[%s4 + $0x18] sm:$0xf] %vm464, %v422
  %472 = vst.msk [vmem:[%s4 + $0x1c] sm:$0xf] %vm464, %v423
  %473 = vst.msk [vmem:[%s4 + $0x20] sm:$0xf] %vm464, %v424
  %474 = vst.msk [vmem:[%s4 + $0x24] sm:$0xf] %vm464, %v425
  %475 = vst.msk [vmem:[%s4 + $0x28] sm:$0xf] %vm464, %v426
  %476 = vst.msk [vmem:[%s4 + $0x2c] sm:$0xf] %vm464, %v427
  %477 = vst.msk [vmem:[%s4 + $0x30] sm:$0xf] %vm464, %v428
  %478 = vst.msk [vmem:[%s4 + $0x34] sm:$0xf] %vm464, %v429
  %479 = vst.msk [vmem:[%s4 + $0x38] sm:$0xf] %vm464, %v430
  %480 = vst.msk [vmem:[%s4 + $0x3c] sm:$0xf] %vm464, %v431
  %481 = vst.msk [vmem:[%s4 + $0x40] sm:$0xf] %vm464, %v432
  %482 = vst.msk [vmem:[%s4 + $0x44] sm:$0xf] %vm464, %v433
  %483 = vst.msk [vmem:[%s4 + $0x48] sm:$0xf] %vm464, %v434
  %484 = vst.msk [vmem:[%s4 + $0x4c] sm:$0xf] %vm464, %v435
  %485 = vst.msk [vmem:[%s4 + $0x50] sm:$0xf] %vm464, %v436
  %486 = vst.msk [vmem:[%s4 + $0x54] sm:$0xf] %vm464, %v437
  %487 = vst.msk [vmem:[%s4 + $0x58] sm:$0xf] %vm464, %v438
  %488 = vst.msk [vmem:[%s4 + $0x5c] sm:$0xf] %vm464, %v439
  %489 = vst.msk [vmem:[%s4 + $0x60] sm:$0xf] %vm464, %v440
  %490 = vst.msk [vmem:[%s4 + $0x64] sm:$0xf] %vm464, %v441
  %491 = vst.msk [vmem:[%s4 + $0x68] sm:$0xf] %vm464, %v442
  %492 = vst.msk [vmem:[%s4 + $0x6c] sm:$0xf] %vm464, %v443
  %493 = vst.msk [vmem:[%s4 + $0x70] sm:$0xf] %vm464, %v444
  %494 = vst.msk [vmem:[%s4 + $0x74] sm:$0xf] %vm464, %v445
  %495 = vst.msk [vmem:[%s4 + $0x78] sm:$0xf] %vm464, %v446
  %496 = vst.msk [vmem:[%s4 + $0x7c] sm:$0xf] %vm464, %v447
  %497 = vst.msk [vmem:[%s4 + $0x80] sm:$0xf] %vm464, %v448
  %498 = vst.msk [vmem:[%s4 + $0x84] sm:$0xf] %vm464, %v449
  %499 = vst.msk [vmem:[%s4 + $0x88] sm:$0xf] %vm464, %v450
  %500 = vst.msk [vmem:[%s4 + $0x8c] sm:$0xf] %vm464, %v451
  %501 = vst.msk [vmem:[%s4 + $0x90] sm:$0xf] %vm464, %v452
  %502 = vst.msk [vmem:[%s4 + $0x94] sm:$0xf] %vm464, %v453
  %503 = vst.msk [vmem:[%s4 + $0x98] sm:$0xf] %vm464, %v454
  %504 = vst.msk [vmem:[%s4 + $0x9c] sm:$0xf] %vm464, %v455
  %505 = vst.msk [vmem:[%s4 + $0xa0] sm:$0xf] %vm464, %v456
  %506 = vst.msk [vmem:[%s4 + $0xa4] sm:$0xf] %vm464, %v457
  %507 = vst.msk [vmem:[%s4 + $0xa8] sm:$0xf] %vm464, %v458
  %508 = vst.msk [vmem:[%s4 + $0xac] sm:$0xf] %vm464, %v459
  %509 = vst.msk [vmem:[%s4 + $0xb0] sm:$0xf] %vm464, %v460
  %510 = vst.msk [vmem:[%s4 + $0xb4] sm:$0xf] %vm464, %v461
  %511 = vst.msk [vmem:[%s4 + $0xb8] sm:$0xf] %vm464, %v462
  %512 = vst.msk [vmem:[%s4 + $0xbc] sm:$0xf] %vm464, %v463
  // Predicated region
  $region18: #{siglip2_forward.6} parent=0 // pred_check
    _
  $region19: #{siglip2_forward.6} parent=0 // pred_check_branch
    %514 = sbr.rel (0) target = $region21
  $region20: #{siglip2_forward.6} parent=0 // pred_region
    _
  $region21: #{siglip2_forward.6} parent=0 // pred_fallthru
    _
  // Predicated region
  $region22: #{siglip2_forward.6} parent=0 // pred_check
    _
  $region23: #{siglip2_forward.6} parent=0 // pred_check_branch
    %516 = sbr.rel (0) target = $region25
  $region24: #{siglip2_forward.6} parent=0 // pred_region
    _
  $region25: #{siglip2_forward.6} parent=0 // pred_fallthru
    _

// kernel: siglip2_forward.11
$region0: #{siglip2_forward.11}
  #allocation0 [shape = 'u32[]', space=smem, size = 0x4, offset = 0x4, fixed_abs, tag = 'smem constant byte address 0x4 - core index']
  #allocation1 [shape = 'u32[72,128]{1,0:T(1,128)}', space=vmem, size = 0x9000, scoped, tag = 'internal scratch']
  %s0 = inlined_call_operand.vmem [shape: bf16[384,32], index: 0, kind: input, shape index: {}]
  %s1 = inlined_call_operand.vmem [shape: f32[1,32], index: 1, kind: input, shape index: {}]
  %s2 = inlined_call_operand.vmem [shape: f32[1,32], index: 2, kind: input, shape index: {}]
  %s3 = inlined_call_operand.vmem [shape: f32[384,32], index: 3, kind: output, shape index: {}]
  %s4 = sld [smem:[#allocation0]]
  $region22: #{siglip2_forward.11} parent=0
    _
  %s6 = ssub.s32 1, %s4
  %s7 = scalar_select 0, %s6, %s4
  // Predicated region
  $region2: #{siglip2_forward.11} parent=0 // pred_check
    _
  $region3: #{siglip2_forward.11} parent=0 // pred_check_branch
    %9 = sbr.rel (0) target = $region5
  $region4: #{siglip2_forward.11} parent=0 // pred_region
    _
  $region5: #{siglip2_forward.11} parent=0 // pred_fallthru
    _
  // Predicated region
  $region6: #{siglip2_forward.11} parent=0 // pred_check
    _
  $region7: #{siglip2_forward.11} parent=0 // pred_check_branch
    %11 = sbr.rel (0) target = $region9
  $region8: #{siglip2_forward.11} parent=0 // pred_region
    _
  $region9: #{siglip2_forward.11} parent=0 // pred_fallthru
    _
  // Predicated region
  $region10: #{siglip2_forward.11} parent=0 // pred_check
    _
  $region11: #{siglip2_forward.11} parent=0 // pred_check_branch
    %13 = sbr.rel (0) target = $region13
  $region12: #{siglip2_forward.11} parent=0 // pred_region
    _
  $region13: #{siglip2_forward.11} parent=0 // pred_fallthru
    _
  %v14 = vld [vmem:[%s0] sm:$0xf]
  %v15 = vld [vmem:[%s0 + $0x4] sm:$0xf]
  %v16 = vld [vmem:[%s0 + $0x8] sm:$0xf]
  %v17 = vld [vmem:[%s0 + $0xc] sm:$0xf]
  %v18 = vld [vmem:[%s0 + $0x10] sm:$0xf]
  %v19 = vld [vmem:[%s0 + $0x14] sm:$0xf]
  %v20 = vld [vmem:[%s0 + $0x18] sm:$0xf]
  %v21 = vld [vmem:[%s0 + $0x1c] sm:$0xf]
  %v22 = vld [vmem:[%s0 + $0x20] sm:$0xf]
  %v23 = vld [vmem:[%s0 + $0x24] sm:$0xf]
  %v24 = vld [vmem:[%s0 + $0x28] sm:$0xf]
  %v25 = vld [vmem:[%s0 + $0x2c] sm:$0xf]
  %v26 = vld [vmem:[%s0 + $0x30] sm:$0xf]
  %v27 = vld [vmem:[%s0 + $0x34] sm:$0xf]
  %v28 = vld [vmem:[%s0 + $0x38] sm:$0xf]
  %v29 = vld [vmem:[%s0 + $0x3c] sm:$0xf]
  %v30 = vld [vmem:[%s0 + $0x40] sm:$0xf]
  %v31 = vld [vmem:[%s0 + $0x44] sm:$0xf]
  %v32 = vld [vmem:[%s0 + $0x48] sm:$0xf]
  %v33 = vld [vmem:[%s0 + $0x4c] sm:$0xf]
  %v34 = vld [vmem:[%s0 + $0x50] sm:$0xf]
  %v35 = vld [vmem:[%s0 + $0x54] sm:$0xf]
  %v36 = vld [vmem:[%s0 + $0x58] sm:$0xf]
  %v37 = vld [vmem:[%s0 + $0x5c] sm:$0xf]
  %v38 = vld [vmem:[%s0 + $0x60] sm:$0xf]
  %v39 = vld [vmem:[%s0 + $0x64] sm:$0xf]
  %v40 = vld [vmem:[%s0 + $0x68] sm:$0xf]
  %v41 = vld [vmem:[%s0 + $0x6c] sm:$0xf]
  %v42 = vld [vmem:[%s0 + $0x70] sm:$0xf]
  %v43 = vld [vmem:[%s0 + $0x74] sm:$0xf]
  %v44 = vld [vmem:[%s0 + $0x78] sm:$0xf]
  %v45 = vld [vmem:[%s0 + $0x7c] sm:$0xf]
  %v46 = vld [vmem:[%s0 + $0x80] sm:$0xf]
  %v47 = vld [vmem:[%s0 + $0x84] sm:$0xf]
  %v48 = vld [vmem:[%s0 + $0x88] sm:$0xf]
  %v49 = vld [vmem:[%s0 + $0x8c] sm:$0xf]
  %v50 = vld [vmem:[%s0 + $0x90] sm:$0xf]
  %v51 = vld [vmem:[%s0 + $0x94] sm:$0xf]
  %v52 = vld [vmem:[%s0 + $0x98] sm:$0xf]
  %v53 = vld [vmem:[%s0 + $0x9c] sm:$0xf]
  %v54 = vld [vmem:[%s0 + $0xa0] sm:$0xf]
  %v55 = vld [vmem:[%s0 + $0xa4] sm:$0xf]
  %v56 = vld [vmem:[%s0 + $0xa8] sm:$0xf]
  %v57 = vld [vmem:[%s0 + $0xac] sm:$0xf]
  %v58 = vld [vmem:[%s0 + $0xb0] sm:$0xf]
  %v59 = vld [vmem:[%s0 + $0xb4] sm:$0xf]
  %v60 = vld [vmem:[%s0 + $0xb8] sm:$0xf]
  %v61 = vld [vmem:[%s0 + $0xbc] sm:$0xf]
  %v62 = vunpack.c.l.bf16 %v14
  %v63 = vunpack.c.l.bf16 %v15
  %v64 = vunpack.c.l.bf16 %v16
  %v65 = vunpack.c.l.bf16 %v17
  %v66 = vunpack.c.l.bf16 %v18
  %v67 = vunpack.c.l.bf16 %v19
  %v68 = vunpack.c.l.bf16 %v20
  %v69 = vunpack.c.l.bf16 %v21
  %v70 = vunpack.c.l.bf16 %v22
  %v71 = vunpack.c.l.bf16 %v23
  %v72 = vunpack.c.l.bf16 %v24
  %v73 = vunpack.c.l.bf16 %v25
  %v74 = vunpack.c.l.bf16 %v26
  %v75 = vunpack.c.l.bf16 %v27
  %v76 = vunpack.c.l.bf16 %v28
  %v77 = vunpack.c.l.bf16 %v29
  %v78 = vunpack.c.l.bf16 %v30
  %v79 = vunpack.c.l.bf16 %v31
  %v80 = vunpack.c.l.bf16 %v32
  %v81 = vunpack.c.l.bf16 %v33
  %v82 = vunpack.c.l.bf16 %v34
  %v83 = vunpack.c.l.bf16 %v35
  %v84 = vunpack.c.l.bf16 %v36
  %v85 = vunpack.c.l.bf16 %v37
  %v86 = vunpack.c.l.bf16 %v38
  %v87 = vunpack.c.l.bf16 %v39
  %v88 = vunpack.c.l.bf16 %v40
  %v89 = vunpack.c.l.bf16 %v41
  %v90 = vunpack.c.l.bf16 %v42
  %v91 = vunpack.c.l.bf16 %v43
  %v92 = vunpack.c.l.bf16 %v44
  %v93 = vunpack.c.l.bf16 %v45
  %v94 = vunpack.c.l.bf16 %v46
  %v95 = vunpack.c.l.bf16 %v47
  %v96 = vunpack.c.l.bf16 %v48
  %v97 = vunpack.c.l.bf16 %v49
  %v98 = vunpack.c.l.bf16 %v50
  %v99 = vunpack.c.l.bf16 %v51
  %v100 = vunpack.c.l.bf16 %v52
  %v101 = vunpack.c.l.bf16 %v53
  %v102 = vunpack.c.l.bf16 %v54
  %v103 = vunpack.c.l.bf16 %v55
  %v104 = vunpack.c.l.bf16 %v56
  %v105 = vunpack.c.l.bf16 %v57
  %v106 = vunpack.c.l.bf16 %v58
  %v107 = vunpack.c.l.bf16 %v59
  %v108 = vunpack.c.l.bf16 %v60
  %v109 = vunpack.c.l.bf16 %v61
  %vm110 = vcmask 261120
  %v111 = vsel %vm110, %v62, 0.0
  %112 = vadd.xlane.f32.xlu0 %v111
  %v113 = vpop.xlane.xlu0 %112
  %v114 = vsel %vm110, %v63, 0.0
  %115 = vadd.xlane.f32.xlu0 %v114
  %v116 = vpop.xlane.xlu0 %115
  %v117 = vsel %vm110, %v64, 0.0
  %118 = vadd.xlane.f32.xlu0 %v117
  %v119 = vpop.xlane.xlu0 %118
  %v120 = vsel %vm110, %v65, 0.0
  %121 = vadd.xlane.f32.xlu0 %v120
  %v122 = vpop.xlane.xlu0 %121
  %v123 = vsel %vm110, %v66, 0.0
  %124 = vadd.xlane.f32.xlu0 %v123
  %v125 = vpop.xlane.xlu0 %124
  %v126 = vsel %vm110, %v67, 0.0
  %127 = vadd.xlane.f32.xlu0 %v126
  %v128 = vpop.xlane.xlu0 %127
  %v129 = vsel %vm110, %v68, 0.0
  %130 = vadd.xlane.f32.xlu0 %v129
  %v131 = vpop.xlane.xlu0 %130
  %v132 = vsel %vm110, %v69, 0.0
  %133 = vadd.xlane.f32.xlu0 %v132
  %v134 = vpop.xlane.xlu0 %133
  %v135 = vsel %vm110, %v70, 0.0
  %136 = vadd.xlane.f32.xlu0 %v135
  %v137 = vpop.xlane.xlu0 %136
  %v138 = vsel %vm110, %v71, 0.0
  %139 = vadd.xlane.f32.xlu0 %v138
  %v140 = vpop.xlane.xlu0 %139
  %v141 = vsel %vm110, %v72, 0.0
  %142 = vadd.xlane.f32.xlu0 %v141
  %v143 = vpop.xlane.xlu0 %142
  %v144 = vsel %vm110, %v73, 0.0
  %145 = vadd.xlane.f32.xlu0 %v144
  %v146 = vpop.xlane.xlu0 %145
  %v147 = vsel %vm110, %v74, 0.0
  %148 = vadd.xlane.f32.xlu0 %v147
  %v149 = vpop.xlane.xlu0 %148
  %v150 = vsel %vm110, %v75, 0.0
  %151 = vadd.xlane.f32.xlu0 %v150
  %v152 = vpop.xlane.xlu0 %151
  %v153 = vsel %vm110, %v76, 0.0
  %154 = vadd.xlane.f32.xlu0 %v153
  %v155 = vpop.xlane.xlu0 %154
  %v156 = vsel %vm110, %v77, 0.0
  %157 = vadd.xlane.f32.xlu0 %v156
  %v158 = vpop.xlane.xlu0 %157
  %v159 = vsel %vm110, %v78, 0.0
  %160 = vadd.xlane.f32.xlu0 %v159
  %v161 = vpop.xlane.xlu0 %160
  %v162 = vsel %vm110, %v79, 0.0
  %163 = vadd.xlane.f32.xlu0 %v162
  %v164 = vpop.xlane.xlu0 %163
  %v165 = vsel %vm110, %v80, 0.0
  %166 = vadd.xlane.f32.xlu0 %v165
  %v167 = vpop.xlane.xlu0 %166
  %v168 = vsel %vm110, %v81, 0.0
  %169 = vadd.xlane.f32.xlu0 %v168
  %v170 = vpop.xlane.xlu0 %169
  %v171 = vsel %vm110, %v82, 0.0
  %172 = vadd.xlane.f32.xlu0 %v171
  %v173 = vpop.xlane.xlu0 %172
  %v174 = vsel %vm110, %v83, 0.0
  %175 = vadd.xlane.f32.xlu0 %v174
  %v176 = vpop.xlane.xlu0 %175
  %v177 = vsel %vm110, %v84, 0.0
  %178 = vadd.xlane.f32.xlu0 %v177
  %v179 = vpop.xlane.xlu0 %178
  %v180 = vsel %vm110, %v85, 0.0
  %181 = vadd.xlane.f32.xlu0 %v180
  %v182 = vpop.xlane.xlu0 %181
  %v183 = vsel %vm110, %v86, 0.0
  %184 = vadd.xlane.f32.xlu0 %v183
  %v185 = vpop.xlane.xlu0 %184
  %v186 = vsel %vm110, %v87, 0.0
  %187 = vadd.xlane.f32.xlu0 %v186
  %v188 = vpop.xlane.xlu0 %187
  %v189 = vsel %vm110, %v88, 0.0
  %190 = vadd.xlane.f32.xlu0 %v189
  %v191 = vpop.xlane.xlu0 %190
  %v192 = vsel %vm110, %v89, 0.0
  %193 = vadd.xlane.f32.xlu0 %v192
  %v194 = vpop.xlane.xlu0 %193
  %v195 = vsel %vm110, %v90, 0.0
  %196 = vadd.xlane.f32.xlu0 %v195
  %v197 = vpop.xlane.xlu0 %196
  %v198 = vsel %vm110, %v91, 0.0
  %199 = vadd.xlane.f32.xlu0 %v198
  %v200 = vpop.xlane.xlu0 %199
  %v201 = vsel %vm110, %v92, 0.0
  %202 = vadd.xlane.f32.xlu0 %v201
  %v203 = vpop.xlane.xlu0 %202
  %v204 = vsel %vm110, %v93, 0.0
  %205 = vadd.xlane.f32.xlu0 %v204
  %v206 = vpop.xlane.xlu0 %205
  %v207 = vsel %vm110, %v94, 0.0
  %208 = vadd.xlane.f32.xlu0 %v207
  %v209 = vpop.xlane.xlu0 %208
  %v210 = vsel %vm110, %v95, 0.0
  %211 = vadd.xlane.f32.xlu0 %v210
  %v212 = vpop.xlane.xlu0 %211
  %v213 = vsel %vm110, %v96, 0.0
  %214 = vadd.xlane.f32.xlu0 %v213
  %v215 = vpop.xlane.xlu0 %214
  %v216 = vsel %vm110, %v97, 0.0
  %217 = vadd.xlane.f32.xlu0 %v216
  %v218 = vpop.xlane.xlu0 %217
  %v219 = vsel %vm110, %v98, 0.0
  %220 = vadd.xlane.f32.xlu0 %v219
  %v221 = vpop.xlane.xlu0 %220
  %v222 = vsel %vm110, %v99, 0.0
  %223 = vadd.xlane.f32.xlu0 %v222
  %v224 = vpop.xlane.xlu0 %223
  %v225 = vsel %vm110, %v100, 0.0
  %226 = vadd.xlane.f32.xlu0 %v225
  %v227 = vpop.xlane.xlu0 %226
  %v228 = vsel %vm110, %v101, 0.0
  %229 = vadd.xlane.f32.xlu0 %v228
  %v230 = vpop.xlane.xlu0 %229
  %v231 = vsel %vm110, %v102, 0.0
  %232 = vadd.xlane.f32.xlu0 %v231
  %v233 = vpop.xlane.xlu0 %232
  %v234 = vsel %vm110, %v103, 0.0
  %235 = vadd.xlane.f32.xlu0 %v234
  %v236 = vpop.xlane.xlu0 %235
  %v237 = vsel %vm110, %v104, 0.0
  %238 = vadd.xlane.f32.xlu0 %v237
  %v239 = vpop.xlane.xlu0 %238
  %v240 = vsel %vm110, %v105, 0.0
  %241 = vadd.xlane.f32.xlu0 %v240
  %v242 = vpop.xlane.xlu0 %241
  %v243 = vsel %vm110, %v106, 0.0
  %244 = vadd.xlane.f32.xlu0 %v243
  %v245 = vpop.xlane.xlu0 %244
  %v246 = vsel %vm110, %v107, 0.0
  %247 = vadd.xlane.f32.xlu0 %v246
  %v248 = vpop.xlane.xlu0 %247
  %v249 = vsel %vm110, %v108, 0.0
  %250 = vadd.xlane.f32.xlu0 %v249
  %v251 = vpop.xlane.xlu0 %250
  %v252 = vsel %vm110, %v109, 0.0
  %253 = vadd.xlane.f32.xlu0 %v252
  %v254 = vpop.xlane.xlu0 %253
  %v255 = vrcp.pop 32.0
  %v256 = vmul.f32 32.0, %v255
  %v257 = vsub.f32 1.0, %v256
  %v258 = vmul.f32 %v255, %v257
  %v259 = vadd.f32 %v255, %v258
  %vm260 = vweird.f32 %v255
  %v261 = vsel %vm260, %v255, %v259
  %v262 = vmul.f32 %v113, %v261
  %v263 = vmul.f32 %v116, %v261
  %v264 = vmul.f32 %v119, %v261
  %v265 = vmul.f32 %v122, %v261
  %v266 = vmul.f32 %v125, %v261
  %v267 = vmul.f32 %v128, %v261
  %v268 = vmul.f32 %v131, %v261
  %v269 = vmul.f32 %v134, %v261
  %v270 = vmul.f32 %v137, %v261
  %v271 = vmul.f32 %v140, %v261
  %v272 = vmul.f32 %v143, %v261
  %v273 = vmul.f32 %v146, %v261
  %v274 = vmul.f32 %v149, %v261
  %v275 = vmul.f32 %v152, %v261
  %v276 = vmul.f32 %v155, %v261
  %v277 = vmul.f32 %v158, %v261
  %v278 = vmul.f32 %v161, %v261
  %v279 = vmul.f32 %v164, %v261
  %v280 = vmul.f32 %v167, %v261
  %v281 = vmul.f32 %v170, %v261
  %v282 = vmul.f32 %v173, %v261
  %v283 = vmul.f32 %v176, %v261
  %v284 = vmul.f32 %v179, %v261
  %v285 = vmul.f32 %v182, %v261
  %v286 = vmul.f32 %v185, %v261
  %v287 = vmul.f32 %v188, %v261
  %v288 = vmul.f32 %v191, %v261
  %v289 = vmul.f32 %v194, %v261
  %v290 = vmul.f32 %v197, %v261
  %v291 = vmul.f32 %v200, %v261
  %v292 = vmul.f32 %v203, %v261
  %v293 = vmul.f32 %v206, %v261
  %v294 = vmul.f32 %v209, %v261
  %v295 = vmul.f32 %v212, %v261
  %v296 = vmul.f32 %v215, %v261
  %v297 = vmul.f32 %v218, %v261
  %v298 = vmul.f32 %v221, %v261
  %v299 = vmul.f32 %v224, %v261
  %v300 = vmul.f32 %v227, %v261
  %v301 = vmul.f32 %v230, %v261
  %v302 = vmul.f32 %v233, %v261
  %v303 = vmul.f32 %v236, %v261
  %v304 = vmul.f32 %v239, %v261
  %v305 = vmul.f32 %v242, %v261
  %v306 = vmul.f32 %v245, %v261
  %v307 = vmul.f32 %v248, %v261
  %v308 = vmul.f32 %v251, %v261
  %v309 = vmul.f32 %v254, %v261
  %v310 = vsub.f32 %v62, %v262
  %v311 = vsub.f32 %v63, %v263
  %v312 = vsub.f32 %v64, %v264
  %v313 = vsub.f32 %v65, %v265
  %v314 = vsub.f32 %v66, %v266
  %v315 = vsub.f32 %v67, %v267
  %v316 = vsub.f32 %v68, %v268
  %v317 = vsub.f32 %v69, %v269
  %v318 = vsub.f32 %v70, %v270
  %v319 = vsub.f32 %v71, %v271
  %v320 = vsub.f32 %v72, %v272
  %v321 = vsub.f32 %v73, %v273
  %v322 = vsub.f32 %v74, %v274
  %v323 = vsub.f32 %v75, %v275
  %v324 = vsub.f32 %v76, %v276
  %v325 = vsub.f32 %v77, %v277
  %v326 = vsub.f32 %v78, %v278
  %v327 = vsub.f32 %v79, %v279
  %v328 = vsub.f32 %v80, %v280
  %v329 = vsub.f32 %v81, %v281
  %v330 = vsub.f32 %v82, %v282
  %v331 = vsub.f32 %v83, %v283
  %v332 = vsub.f32 %v84, %v284
  %v333 = vsub.f32 %v85, %v285
  %v334 = vsub.f32 %v86, %v286
  %v335 = vsub.f32 %v87, %v287
  %v336 = vsub.f32 %v88, %v288
  %v337 = vsub.f32 %v89, %v289
  %v338 = vsub.f32 %v90, %v290
  %v339 = vsub.f32 %v91, %v291
  %v340 = vsub.f32 %v92, %v292
  %v341 = vsub.f32 %v93, %v293
  %v342 = vsub.f32 %v94, %v294
  %v343 = vsub.f32 %v95, %v295
  %v344 = vsub.f32 %v96, %v296
  %v345 = vsub.f32 %v97, %v297
  %v346 = vsub.f32 %v98, %v298
  %v347 = vsub.f32 %v99, %v299
  %v348 = vsub.f32 %v100, %v300
  %v349 = vsub.f32 %v101, %v301
  %v350 = vsub.f32 %v102, %v302
  %v351 = vsub.f32 %v103, %v303
  %v352 = vsub.f32 %v104, %v304
  %v353 = vsub.f32 %v105, %v305
  %v354 = vsub.f32 %v106, %v306
  %v355 = vsub.f32 %v107, %v307
  %v356 = vsub.f32 %v108, %v308
  %v357 = vsub.f32 %v109, %v309
  %v358 = vmul.f32 %v310, %v310
  %v359 = vmul.f32 %v311, %v311
  %v360 = vmul.f32 %v312, %v312
  %v361 = vmul.f32 %v313, %v313
  %v362 = vmul.f32 %v314, %v314
  %v363 = vmul.f32 %v315, %v315
  %v364 = vmul.f32 %v316, %v316
  %v365 = vmul.f32 %v317, %v317
  %v366 = vmul.f32 %v318, %v318
  %v367 = vmul.f32 %v319, %v319
  %v368 = vmul.f32 %v320, %v320
  %v369 = vmul.f32 %v321, %v321
  %v370 = vmul.f32 %v322, %v322
  %v371 = vmul.f32 %v323, %v323
  %v372 = vmul.f32 %v324, %v324
  %v373 = vmul.f32 %v325, %v325
  %v374 = vmul.f32 %v326, %v326
  %v375 = vmul.f32 %v327, %v327
  %v376 = vmul.f32 %v328, %v328
  %v377 = vmul.f32 %v329, %v329
  %v378 = vmul.f32 %v330, %v330
  %v379 = vmul.f32 %v331, %v331
  %v380 = vmul.f32 %v332, %v332
  %v381 = vmul.f32 %v333, %v333
  %v382 = vmul.f32 %v334, %v334
  %v383 = vmul.f32 %v335, %v335
  %v384 = vmul.f32 %v336, %v336
  %v385 = vmul.f32 %v337, %v337
  %v386 = vmul.f32 %v338, %v338
  %v387 = vmul.f32 %v339, %v339
  %v388 = vmul.f32 %v340, %v340
  %v389 = vmul.f32 %v341, %v341
  %v390 = vmul.f32 %v342, %v342
  %v391 = vmul.f32 %v343, %v343
  %v392 = vmul.f32 %v344, %v344
  %v393 = vmul.f32 %v345, %v345
  %v394 = vmul.f32 %v346, %v346
  %v395 = vmul.f32 %v347, %v347
  %v396 = vmul.f32 %v348, %v348
  %v397 = vmul.f32 %v349, %v349
  %v398 = vmul.f32 %v350, %v350
  %v399 = vmul.f32 %v351, %v351
  %v400 = vmul.f32 %v352, %v352
  %v401 = vmul.f32 %v353, %v353
  %v402 = vmul.f32 %v354, %v354
  %v403 = vmul.f32 %v355, %v355
  %v404 = vmul.f32 %v356, %v356
  %v405 = vmul.f32 %v357, %v357
  %v406 = vsel %vm110, %v358, 0.0
  %407 = vadd.xlane.f32.xlu0 %v406
  %v408 = vpop.xlane.xlu0 %407
  %v409 = vsel %vm110, %v359, 0.0
  %410 = vadd.xlane.f32.xlu0 %v409
  %v411 = vpop.xlane.xlu0 %410
  %v412 = vsel %vm110, %v360, 0.0
  %413 = vadd.xlane.f32.xlu0 %v412
  %v414 = vpop.xlane.xlu0 %413
  %v415 = vsel %vm110, %v361, 0.0
  %416 = vadd.xlane.f32.xlu0 %v415
  %v417 = vpop.xlane.xlu0 %416
  %v418 = vsel %vm110, %v362, 0.0
  %419 = vadd.xlane.f32.xlu0 %v418
  %v420 = vpop.xlane.xlu0 %419
  %v421 = vsel %vm110, %v363, 0.0
  %422 = vadd.xlane.f32.xlu0 %v421
  %v423 = vpop.xlane.xlu0 %422
  %v424 = vsel %vm110, %v364, 0.0
  %425 = vadd.xlane.f32.xlu0 %v424
  %v426 = vpop.xlane.xlu0 %425
  %v427 = vsel %vm110, %v365, 0.0
  %428 = vadd.xlane.f32.xlu0 %v427
  %v429 = vpop.xlane.xlu0 %428
  %v430 = vsel %vm110, %v366, 0.0
  %431 = vadd.xlane.f32.xlu0 %v430
  %v432 = vpop.xlane.xlu0 %431
  %v433 = vsel %vm110, %v367, 0.0
  %434 = vadd.xlane.f32.xlu0 %v433
  %v435 = vpop.xlane.xlu0 %434
  %v436 = vsel %vm110, %v368, 0.0
  %437 = vadd.xlane.f32.xlu0 %v436
  %v438 = vpop.xlane.xlu0 %437
  %v439 = vsel %vm110, %v369, 0.0
  %440 = vadd.xlane.f32.xlu0 %v439
  %v441 = vpop.xlane.xlu0 %440
  %v442 = vsel %vm110, %v370, 0.0
  %443 = vadd.xlane.f32.xlu0 %v442
  %v444 = vpop.xlane.xlu0 %443
  %v445 = vsel %vm110, %v371, 0.0
  %446 = vadd.xlane.f32.xlu0 %v445
  %v447 = vpop.xlane.xlu0 %446
  %v448 = vsel %vm110, %v372, 0.0
  %449 = vadd.xlane.f32.xlu0 %v448
  %v450 = vpop.xlane.xlu0 %449
  %v451 = vsel %vm110, %v373, 0.0
  %452 = vadd.xlane.f32.xlu0 %v451
  %v453 = vpop.xlane.xlu0 %452
  %v454 = vsel %vm110, %v374, 0.0
  %455 = vadd.xlane.f32.xlu0 %v454
  %v456 = vpop.xlane.xlu0 %455
  %v457 = vsel %vm110, %v375, 0.0
  %458 = vadd.xlane.f32.xlu0 %v457
  %v459 = vpop.xlane.xlu0 %458
  %v460 = vsel %vm110, %v376, 0.0
  %461 = vadd.xlane.f32.xlu0 %v460
  %v462 = vpop.xlane.xlu0 %461
  %v463 = vsel %vm110, %v377, 0.0
  %464 = vadd.xlane.f32.xlu0 %v463
  %v465 = vpop.xlane.xlu0 %464
  %v466 = vsel %vm110, %v378, 0.0
  %467 = vadd.xlane.f32.xlu0 %v466
  %v468 = vpop.xlane.xlu0 %467
  %v469 = vsel %vm110, %v379, 0.0
  %470 = vadd.xlane.f32.xlu0 %v469
  %v471 = vpop.xlane.xlu0 %470
  %v472 = vsel %vm110, %v380, 0.0
  %473 = vadd.xlane.f32.xlu0 %v472
  %v474 = vpop.xlane.xlu0 %473
  %v475 = vsel %vm110, %v381, 0.0
  %476 = vadd.xlane.f32.xlu0 %v475
  %v477 = vpop.xlane.xlu0 %476
  %v478 = vsel %vm110, %v382, 0.0
  %479 = vadd.xlane.f32.xlu0 %v478
  %v480 = vpop.xlane.xlu0 %479
  %v481 = vsel %vm110, %v383, 0.0
  %482 = vadd.xlane.f32.xlu0 %v481
  %v483 = vpop.xlane.xlu0 %482
  %v484 = vsel %vm110, %v384, 0.0
  %485 = vadd.xlane.f32.xlu0 %v484
  %v486 = vpop.xlane.xlu0 %485
  %v487 = vsel %vm110, %v385, 0.0
  %488 = vadd.xlane.f32.xlu0 %v487
  %v489 = vpop.xlane.xlu0 %488
  %v490 = vsel %vm110, %v386, 0.0
  %491 = vadd.xlane.f32.xlu0 %v490
  %v492 = vpop.xlane.xlu0 %491
  %v493 = vsel %vm110, %v387, 0.0
  %494 = vadd.xlane.f32.xlu0 %v493
  %v495 = vpop.xlane.xlu0 %494
  %v496 = vsel %vm110, %v388, 0.0
  %497 = vadd.xlane.f32.xlu0 %v496
  %v498 = vpop.xlane.xlu0 %497
  %v499 = vsel %vm110, %v389, 0.0
  %500 = vadd.xlane.f32.xlu0 %v499
  %v501 = vpop.xlane.xlu0 %500
  %v502 = vsel %vm110, %v390, 0.0
  %503 = vadd.xlane.f32.xlu0 %v502
  %v504 = vpop.xlane.xlu0 %503
  %v505 = vsel %vm110, %v391, 0.0
  %506 = vadd.xlane.f32.xlu0 %v505
  %v507 = vpop.xlane.xlu0 %506
  %v508 = vsel %vm110, %v392, 0.0
  %509 = vadd.xlane.f32.xlu0 %v508
  %v510 = vpop.xlane.xlu0 %509
  %v511 = vsel %vm110, %v393, 0.0
  %512 = vadd.xlane.f32.xlu0 %v511
  %v513 = vpop.xlane.xlu0 %512
  %v514 = vsel %vm110, %v394, 0.0
  %515 = vadd.xlane.f32.xlu0 %v514
  %v516 = vpop.xlane.xlu0 %515
  %v517 = vsel %vm110, %v395, 0.0
  %518 = vadd.xlane.f32.xlu0 %v517
  %v519 = vpop.xlane.xlu0 %518
  %v520 = vsel %vm110, %v396, 0.0
  %521 = vadd.xlane.f32.xlu0 %v520
  %v522 = vpop.xlane.xlu0 %521
  %v523 = vsel %vm110, %v397, 0.0
  %524 = vadd.xlane.f32.xlu0 %v523
  %v525 = vpop.xlane.xlu0 %524
  %v526 = vsel %vm110, %v398, 0.0
  %527 = vadd.xlane.f32.xlu0 %v526
  %v528 = vpop.xlane.xlu0 %527
  %v529 = vsel %vm110, %v399, 0.0
  %530 = vadd.xlane.f32.xlu0 %v529
  %v531 = vpop.xlane.xlu0 %530
  %v532 = vsel %vm110, %v400, 0.0
  %533 = vadd.xlane.f32.xlu0 %v532
  %v534 = vpop.xlane.xlu0 %533
  %v535 = vsel %vm110, %v401, 0.0
  %536 = vadd.xlane.f32.xlu0 %v535
  %v537 = vpop.xlane.xlu0 %536
  %v538 = vsel %vm110, %v402, 0.0
  %539 = vadd.xlane.f32.xlu0 %v538
  %v540 = vpop.xlane.xlu0 %539
  %v541 = vsel %vm110, %v403, 0.0
  %542 = vadd.xlane.f32.xlu0 %v541
  %v543 = vpop.xlane.xlu0 %542
  %v544 = vsel %vm110, %v404, 0.0
  %545 = vadd.xlane.f32.xlu0 %v544
  %v546 = vpop.xlane.xlu0 %545
  %v547 = vsel %vm110, %v405, 0.0
  %548 = vadd.xlane.f32.xlu0 %v547
  %v549 = vpop.xlane.xlu0 %548
  %v550 = vmul.f32 %v408, %v261
  %v551 = vmul.f32 %v411, %v261
  %v552 = vmul.f32 %v414, %v261
  %v553 = vmul.f32 %v417, %v261
  %v554 = vmul.f32 %v420, %v261
  %v555 = vmul.f32 %v423, %v261
  %v556 = vmul.f32 %v426, %v261
  %v557 = vmul.f32 %v429, %v261
  %v558 = vmul.f32 %v432, %v261
  %v559 = vmul.f32 %v435, %v261
  %v560 = vmul.f32 %v438, %v261
  %v561 = vmul.f32 %v441, %v261
  %v562 = vmul.f32 %v444, %v261
  %v563 = vmul.f32 %v447, %v261
  %v564 = vmul.f32 %v450, %v261
  %v565 = vmul.f32 %v453, %v261
  %v566 = vmul.f32 %v456, %v261
  %v567 = vmul.f32 %v459, %v261
  %v568 = vmul.f32 %v462, %v261
  %v569 = vmul.f32 %v465, %v261
  %v570 = vmul.f32 %v468, %v261
  %v571 = vmul.f32 %v471, %v261
  %v572 = vmul.f32 %v474, %v261
  %v573 = vmul.f32 %v477, %v261
  %v574 = vmul.f32 %v480, %v261
  %v575 = vmul.f32 %v483, %v261
  %v576 = vmul.f32 %v486, %v261
  %v577 = vmul.f32 %v489, %v261
  %v578 = vmul.f32 %v492, %v261
  %v579 = vmul.f32 %v495, %v261
  %v580 = vmul.f32 %v498, %v261
  %v581 = vmul.f32 %v501, %v261
  %v582 = vmul.f32 %v504, %v261
  %v583 = vmul.f32 %v507, %v261
  %v584 = vmul.f32 %v510, %v261
  %v585 = vmul.f32 %v513, %v261
  %v586 = vmul.f32 %v516, %v261
  %v587 = vmul.f32 %v519, %v261
  %v588 = vmul.f32 %v522, %v261
  %v589 = vmul.f32 %v525, %v261
  %v590 = vmul.f32 %v528, %v261
  %v591 = vmul.f32 %v531, %v261
  %v592 = vmul.f32 %v534, %v261
  %v593 = vmul.f32 %v537, %v261
  %v594 = vmul.f32 %v540, %v261
  %v595 = vmul.f32 %v543, %v261
  %v596 = vmul.f32 %v546, %v261
  %v597 = vmul.f32 %v549, %v261
  %v598 = vadd.f32 %v550, 1e-06
  %v599 = vadd.f32 %v551, 1e-06
  %v600 = vadd.f32 %v552, 1e-06
  %v601 = vadd.f32 %v553, 1e-06
  %v602 = vadd.f32 %v554, 1e-06
  %v603 = vadd.f32 %v555, 1e-06
  %v604 = vadd.f32 %v556, 1e-06
  %v605 = vadd.f32 %v557, 1e-06
  %v606 = vadd.f32 %v558, 1e-06
  %v607 = vadd.f32 %v559, 1e-06
  %v608 = vadd.f32 %v560, 1e-06
  %v609 = vadd.f32 %v561, 1e-06
  %v610 = vadd.f32 %v562, 1e-06
  %v611 = vadd.f32 %v563, 1e-06
  %v612 = vadd.f32 %v564, 1e-06
  %v613 = vadd.f32 %v565, 1e-06
  %v614 = vadd.f32 %v566, 1e-06
  %v615 = vadd.f32 %v567, 1e-06
  %v616 = vadd.f32 %v568, 1e-06
  %v617 = vadd.f32 %v569, 1e-06
  %v618 = vadd.f32 %v570, 1e-06
  %v619 = vadd.f32 %v571, 1e-06
  %v620 = vadd.f32 %v572, 1e-06
  %v621 = vadd.f32 %v573, 1e-06
  %v622 = vadd.f32 %v574, 1e-06
  %v623 = vadd.f32 %v575, 1e-06
  %v624 = vadd.f32 %v576, 1e-06
  %v625 = vadd.f32 %v577, 1e-06
  %v626 = vadd.f32 %v578, 1e-06
  %v627 = vadd.f32 %v579, 1e-06
  %v628 = vadd.f32 %v580, 1e-06
  %v629 = vadd.f32 %v581, 1e-06
  %v630 = vadd.f32 %v582, 1e-06
  %v631 = vadd.f32 %v583, 1e-06
  %v632 = vadd.f32 %v584, 1e-06
  %v633 = vadd.f32 %v585, 1e-06
  %v634 = vadd.f32 %v586, 1e-06
  %v635 = vadd.f32 %v587, 1e-06
  %v636 = vadd.f32 %v588, 1e-06
  %v637 = vadd.f32 %v589, 1e-06
  %v638 = vadd.f32 %v590, 1e-06
  %v639 = vadd.f32 %v591, 1e-06
  %v640 = vadd.f32 %v592, 1e-06
  %v641 = vadd.f32 %v593, 1e-06
  %v642 = vadd.f32 %v594, 1e-06
  %v643 = vadd.f32 %v595, 1e-06
  %v644 = vadd.f32 %v596, 1e-06
  %v645 = vadd.f32 %v597, 1e-06
  %v646 = vrsqrt.pop %v598
  %v647 = vmul.f32 %v646, %v598
  %v648 = vmul.f32 %v647, %v646
  %v649 = vmul.f32 0.5, %v648
  %v650 = vsub.f32 1.5, %v649
  %v651 = vmul.f32 %v646, %v650
  %vm652 = vweird.f32 %v598
  %vm653 = vweird.f32 %v646
  %vm654 = vmor %vm652, %vm653
  %v655 = vsel %vm654, %v646, %v651
  %v656 = vrsqrt.pop %v599
  %v657 = vmul.f32 %v656, %v599
  %v658 = vmul.f32 %v657, %v656
  %v659 = vmul.f32 0.5, %v658
  %v660 = vsub.f32 1.5, %v659
  %v661 = vmul.f32 %v656, %v660
  %vm662 = vweird.f32 %v599
  %vm663 = vweird.f32 %v656
  %vm664 = vmor %vm662, %vm663
  %v665 = vsel %vm664, %v656, %v661
  %v666 = vrsqrt.pop %v600
  %v667 = vmul.f32 %v666, %v600
  %v668 = vmul.f32 %v667, %v666
  %v669 = vmul.f32 0.5, %v668
  %v670 = vsub.f32 1.5, %v669
  %v671 = vmul.f32 %v666, %v670
  %vm672 = vweird.f32 %v600
  %vm673 = vweird.f32 %v666
  %vm674 = vmor %vm672, %vm673
  %v675 = vsel %vm674, %v666, %v671
  %v676 = vrsqrt.pop %v601
  %v677 = vmul.f32 %v676, %v601
  %v678 = vmul.f32 %v677, %v676
  %v679 = vmul.f32 0.5, %v678
  %v680 = vsub.f32 1.5, %v679
  %v681 = vmul.f32 %v676, %v680
  %vm682 = vweird.f32 %v601
  %vm683 = vweird.f32 %v676
  %vm684 = vmor %vm682, %vm683
  %v685 = vsel %vm684, %v676, %v681
  %v686 = vrsqrt.pop %v602
  %v687 = vmul.f32 %v686, %v602
  %v688 = vmul.f32 %v687, %v686
  %v689 = vmul.f32 0.5, %v688
  %v690 = vsub.f32 1.5, %v689
  %v691 = vmul.f32 %v686, %v690
  %vm692 = vweird.f32 %v602
  %vm693 = vweird.f32 %v686
  %vm694 = vmor %vm692, %vm693
  %v695 = vsel %vm694, %v686, %v691
  %v696 = vrsqrt.pop %v603
  %v697 = vmul.f32 %v696, %v603
  %v698 = vmul.f32 %v697, %v696
  %v699 = vmul.f32 0.5, %v698
  %v700 = vsub.f32 1.5, %v699
  %v701 = vmul.f32 %v696, %v700
  %vm702 = vweird.f32 %v603
  %vm703 = vweird.f32 %v696
  %vm704 = vmor %vm702, %vm703
  %v705 = vsel %vm704, %v696, %v701
  %v706 = vrsqrt.pop %v604
  %v707 = vmul.f32 %v706, %v604
  %v708 = vmul.f32 %v707, %v706
  %v709 = vmul.f32 0.5, %v708
  %v710 = vsub.f32 1.5, %v709
  %v711 = vmul.f32 %v706, %v710
  %vm712 = vweird.f32 %v604
  %vm713 = vweird.f32 %v706
  %vm714 = vmor %vm712, %vm713
  %v715 = vsel %vm714, %v706, %v711
  %v716 = vrsqrt.pop %v605
  %v717 = vmul.f32 %v716, %v605
  %v718 = vmul.f32 %v717, %v716
  %v719 = vmul.f32 0.5, %v718
  %v720 = vsub.f32 1.5, %v719
  %v721 = vmul.f32 %v716, %v720
  %vm722 = vweird.f32 %v605
  %vm723 = vweird.f32 %v716
  %vm724 = vmor %vm722, %vm723
  %v725 = vsel %vm724, %v716, %v721
  %v726 = vrsqrt.pop %v606
  %v727 = vmul.f32 %v726, %v606
  %v728 = vmul.f32 %v727, %v726
  %v729 = vmul.f32 0.5, %v728
  %v730 = vsub.f32 1.5, %v729
  %v731 = vmul.f32 %v726, %v730
  %vm732 = vweird.f32 %v606
  %vm733 = vweird.f32 %v726
  %vm734 = vmor %vm732, %vm733
  %v735 = vsel %vm734, %v726, %v731
  %v736 = vrsqrt.pop %v607
  %v737 = vmul.f32 %v736, %v607
  %v738 = vmul.f32 %v737, %v736
  %v739 = vmul.f32 0.5, %v738
  %v740 = vsub.f32 1.5, %v739
  %v741 = vmul.f32 %v736, %v740
  %vm742 = vweird.f32 %v607
  %vm743 = vweird.f32 %v736
  %vm744 = vmor %vm742, %vm743
  %v745 = vsel %vm744, %v736, %v741
  %v746 = vrsqrt.pop %v608
  %v747 = vmul.f32 %v746, %v608
  %v748 = vmul.f32 %v747, %v746
  %v749 = vmul.f32 0.5, %v748
  %v750 = vsub.f32 1.5, %v749
  %v751 = vmul.f32 %v746, %v750
  %vm752 = vweird.f32 %v608
  %vm753 = vweird.f32 %v746
  %vm754 = vmor %vm752, %vm753
  %v755 = vsel %vm754, %v746, %v751
  %v756 = vrsqrt.pop %v609
  %v757 = vmul.f32 %v756, %v609
  %v758 = vmul.f32 %v757, %v756
  %v759 = vmul.f32 0.5, %v758
  %v760 = vsub.f32 1.5, %v759
  %v761 = vmul.f32 %v756, %v760
  %vm762 = vweird.f32 %v609
  %vm763 = vweird.f32 %v756
  %vm764 = vmor %vm762, %vm763
  %v765 = vsel %vm764, %v756, %v761
  %v766 = vrsqrt.pop %v610
  %v767 = vmul.f32 %v766, %v610
  %v768 = vmul.f32 %v767, %v766
  %v769 = vmul.f32 0.5, %v768
  %v770 = vsub.f32 1.5, %v769
  %v771 = vmul.f32 %v766, %v770
  %vm772 = vweird.f32 %v610
  %vm773 = vweird.f32 %v766
  %vm774 = vmor %vm772, %vm773
  %v775 = vsel %vm774, %v766, %v771
  %v776 = vrsqrt.pop %v611
  %v777 = vmul.f32 %v776, %v611
  %v778 = vmul.f32 %v777, %v776
  %v779 = vmul.f32 0.5, %v778
  %v780 = vsub.f32 1.5, %v779
  %v781 = vmul.f32 %v776, %v780
  %vm782 = vweird.f32 %v611
  %vm783 = vweird.f32 %v776
  %vm784 = vmor %vm782, %vm783
  %v785 = vsel %vm784, %v776, %v781
  %v786 = vrsqrt.pop %v612
  %v787 = vmul.f32 %v786, %v612
  %v788 = vmul.f32 %v787, %v786
  %v789 = vmul.f32 0.5, %v788
  %v790 = vsub.f32 1.5, %v789
  %v791 = vmul.f32 %v786, %v790
  %vm792 = vweird.f32 %v612
  %vm793 = vweird.f32 %v786
  %vm794 = vmor %vm792, %vm793
  %v795 = vsel %vm794, %v786, %v791
  %v796 = vrsqrt.pop %v613
  %v797 = vmul.f32 %v796, %v613
  %v798 = vmul.f32 %v797, %v796
  %v799 = vmul.f32 0.5, %v798
  %v800 = vsub.f32 1.5, %v799
  %v801 = vmul.f32 %v796, %v800
  %vm802 = vweird.f32 %v613
  %vm803 = vweird.f32 %v796
  %vm804 = vmor %vm802, %vm803
  %v805 = vsel %vm804, %v796, %v801
  %v806 = vrsqrt.pop %v614
  %v807 = vmul.f32 %v806, %v614
  %v808 = vmul.f32 %v807, %v806
  %v809 = vmul.f32 0.5, %v808
  %v810 = vsub.f32 1.5, %v809
  %v811 = vmul.f32 %v806, %v810
  %vm812 = vweird.f32 %v614
  %vm813 = vweird.f32 %v806
  %vm814 = vmor %vm812, %vm813
  %v815 = vsel %vm814, %v806, %v811
  %v816 = vrsqrt.pop %v615
  %v817 = vmul.f32 %v816, %v615
  %v818 = vmul.f32 %v817, %v816
  %v819 = vmul.f32 0.5, %v818
  %v820 = vsub.f32 1.5, %v819
  %v821 = vmul.f32 %v816, %v820
  %vm822 = vweird.f32 %v615
  %vm823 = vweird.f32 %v816
  %vm824 = vmor %vm822, %vm823
  %v825 = vsel %vm824, %v816, %v821
  %v826 = vrsqrt.pop %v616
  %v827 = vmul.f32 %v826, %v616
  %v828 = vmul.f32 %v827, %v826
  %v829 = vmul.f32 0.5, %v828
  %v830 = vsub.f32 1.5, %v829
  %v831 = vmul.f32 %v826, %v830
  %vm832 = vweird.f32 %v616
  %vm833 = vweird.f32 %v826
  %vm834 = vmor %vm832, %vm833
  %v835 = vsel %vm834, %v826, %v831
  %v836 = vrsqrt.pop %v617
  %v837 = vmul.f32 %v836, %v617
  %v838 = vmul.f32 %v837, %v836
  %v839 = vmul.f32 0.5, %v838
  %v840 = vsub.f32 1.5, %v839
  %v841 = vmul.f32 %v836, %v840
  %vm842 = vweird.f32 %v617
  %vm843 = vweird.f32 %v836
  %vm844 = vmor %vm842, %vm843
  %v845 = vsel %vm844, %v836, %v841
  %v846 = vrsqrt.pop %v618
  %v847 = vmul.f32 %v846, %v618
  %v848 = vmul.f32 %v847, %v846
  %v849 = vmul.f32 0.5, %v848
  %v850 = vsub.f32 1.5, %v849
  %v851 = vmul.f32 %v846, %v850
  %vm852 = vweird.f32 %v618
  %vm853 = vweird.f32 %v846
  %vm854 = vmor %vm852, %vm853
  %v855 = vsel %vm854, %v846, %v851
  %v856 = vrsqrt.pop %v619
  %v857 = vmul.f32 %v856, %v619
  %v858 = vmul.f32 %v857, %v856
  %v859 = vmul.f32 0.5, %v858
  %v860 = vsub.f32 1.5, %v859
  %v861 = vmul.f32 %v856, %v860
  %vm862 = vweird.f32 %v619
  %vm863 = vweird.f32 %v856
  %vm864 = vmor %vm862, %vm863
  %v865 = vsel %vm864, %v856, %v861
  %v866 = vrsqrt.pop %v620
  %v867 = vmul.f32 %v866, %v620
  %v868 = vmul.f32 %v867, %v866
  %v869 = vmul.f32 0.5, %v868
  %v870 = vsub.f32 1.5, %v869
  %v871 = vmul.f32 %v866, %v870
  %vm872 = vweird.f32 %v620
  %vm873 = vweird.f32 %v866
  %vm874 = vmor %vm872, %vm873
  %v875 = vsel %vm874, %v866, %v871
  %v876 = vrsqrt.pop %v621
  %v877 = vmul.f32 %v876, %v621
  %v878 = vmul.f32 %v877, %v876
  %v879 = vmul.f32 0.5, %v878
  %v880 = vsub.f32 1.5, %v879
  %v881 = vmul.f32 %v876, %v880
  %vm882 = vweird.f32 %v621
  %vm883 = vweird.f32 %v876
  %vm884 = vmor %vm882, %vm883
  %v885 = vsel %vm884, %v876, %v881
  %v886 = vrsqrt.pop %v622
  %v887 = vmul.f32 %v886, %v622
  %v888 = vmul.f32 %v887, %v886
  %v889 = vmul.f32 0.5, %v888
  %v890 = vsub.f32 1.5, %v889
  %v891 = vmul.f32 %v886, %v890
  %vm892 = vweird.f32 %v622
  %vm893 = vweird.f32 %v886
  %vm894 = vmor %vm892, %vm893
  %v895 = vsel %vm894, %v886, %v891
  %v896 = vrsqrt.pop %v623
  %v897 = vmul.f32 %v896, %v623
  %v898 = vmul.f32 %v897, %v896
  %v899 = vmul.f32 0.5, %v898
  %v900 = vsub.f32 1.5, %v899
  %v901 = vmul.f32 %v896, %v900
  %vm902 = vweird.f32 %v623
  %vm903 = vweird.f32 %v896
  %vm904 = vmor %vm902, %vm903
  %v905 = vsel %vm904, %v896, %v901
  %v906 = vrsqrt.pop %v624
  %v907 = vmul.f32 %v906, %v624
  %v908 = vmul.f32 %v907, %v906
  %v909 = vmul.f32 0.5, %v908
  %v910 = vsub.f32 1.5, %v909
  %v911 = vmul.f32 %v906, %v910
  %vm912 = vweird.f32 %v624
  %vm913 = vweird.f32 %v906
  %vm914 = vmor %vm912, %vm913
  %v915 = vsel %vm914, %v906, %v911
  %v916 = vrsqrt.pop %v625
  %v917 = vmul.f32 %v916, %v625
  %v918 = vmul.f32 %v917, %v916
  %v919 = vmul.f32 0.5, %v918
  %v920 = vsub.f32 1.5, %v919
  %v921 = vmul.f32 %v916, %v920
  %vm922 = vweird.f32 %v625
  %vm923 = vweird.f32 %v916
  %vm924 = vmor %vm922, %vm923
  %v925 = vsel %vm924, %v916, %v921
  %v926 = vrsqrt.pop %v626
  %v927 = vmul.f32 %v926, %v626
  %v928 = vmul.f32 %v927, %v926
  %v929 = vmul.f32 0.5, %v928
  %v930 = vsub.f32 1.5, %v929
  %v931 = vmul.f32 %v926, %v930
  %vm932 = vweird.f32 %v626
  %vm933 = vweird.f32 %v926
  %vm934 = vmor %vm932, %vm933
  %v935 = vsel %vm934, %v926, %v931
  %v936 = vrsqrt.pop %v627
  %v937 = vmul.f32 %v936, %v627
  %v938 = vmul.f32 %v937, %v936
  %v939 = vmul.f32 0.5, %v938
  %v940 = vsub.f32 1.5, %v939
  %v941 = vmul.f32 %v936, %v940
  %vm942 = vweird.f32 %v627
  %vm943 = vweird.f32 %v936
  %vm944 = vmor %vm942, %vm943
  %v945 = vsel %vm944, %v936, %v941
  %v946 = vrsqrt.pop %v628
  %v947 = vmul.f32 %v946, %v628
  %v948 = vmul.f32 %v947, %v946
  %v949 = vmul.f32 0.5, %v948
  %v950 = vsub.f32 1.5, %v949
  %v951 = vmul.f32 %v946, %v950
  %vm952 = vweird.f32 %v628
  %vm953 = vweird.f32 %v946
  %vm954 = vmor %vm952, %vm953
  %v955 = vsel %vm954, %v946, %v951
  %v956 = vrsqrt.pop %v629
  %v957 = vmul.f32 %v956, %v629
  %v958 = vmul.f32 %v957, %v956
  %v959 = vmul.f32 0.5, %v958
  %v960 = vsub.f32 1.5, %v959
  %v961 = vmul.f32 %v956, %v960
  %vm962 = vweird.f32 %v629
  %vm963 = vweird.f32 %v956
  %vm964 = vmor %vm962, %vm963
  %v965 = vsel %vm964, %v956, %v961
  %v966 = vrsqrt.pop %v630
  %v967 = vmul.f32 %v966, %v630
  %v968 = vmul.f32 %v967, %v966
  %v969 = vmul.f32 0.5, %v968
  %v970 = vsub.f32 1.5, %v969
  %v971 = vmul.f32 %v966, %v970
  %vm972 = vweird.f32 %v630
  %vm973 = vweird.f32 %v966
  %vm974 = vmor %vm972, %vm973
  %v975 = vsel %vm974, %v966, %v971
  %v976 = vrsqrt.pop %v631
  %v977 = vmul.f32 %v976, %v631
  %v978 = vmul.f32 %v977, %v976
  %v979 = vmul.f32 0.5, %v978
  %v980 = vsub.f32 1.5, %v979
  %v981 = vmul.f32 %v976, %v980
  %vm982 = vweird.f32 %v631
  %vm983 = vweird.f32 %v976
  %vm984 = vmor %vm982, %vm983
  %v985 = vsel %vm984, %v976, %v981
  %v986 = vrsqrt.pop %v632
  %v987 = vmul.f32 %v986, %v632
  %v988 = vmul.f32 %v987, %v986
  %v989 = vmul.f32 0.5, %v988
  %v990 = vsub.f32 1.5, %v989
  %v991 = vmul.f32 %v986, %v990
  %vm992 = vweird.f32 %v632
  %vm993 = vweird.f32 %v986
  %vm994 = vmor %vm992, %vm993
  %v995 = vsel %vm994, %v986, %v991
  %v996 = vrsqrt.pop %v633
  %v997 = vmul.f32 %v996, %v633
  %v998 = vmul.f32 %v997, %v996
  %v999 = vmul.f32 0.5, %v998
  %v1000 = vsub.f32 1.5, %v999
  %v1001 = vmul.f32 %v996, %v1000
  %vm1002 = vweird.f32 %v633
  %vm1003 = vweird.f32 %v996
  %vm1004 = vmor %vm1002, %vm1003
  %v1005 = vsel %vm1004, %v996, %v1001
  %v1006 = vrsqrt.pop %v634
  %v1007 = vmul.f32 %v1006, %v634
  %v1008 = vmul.f32 %v1007, %v1006
  %v1009 = vmul.f32 0.5, %v1008
  %v1010 = vsub.f32 1.5, %v1009
  %v1011 = vmul.f32 %v1006, %v1010
  %vm1012 = vweird.f32 %v634
  %vm1013 = vweird.f32 %v1006
  %vm1014 = vmor %vm1012, %vm1013
  %v1015 = vsel %vm1014, %v1006, %v1011
  %v1016 = vrsqrt.pop %v635
  %v1017 = vmul.f32 %v1016, %v635
  %v1018 = vmul.f32 %v1017, %v1016
  %v1019 = vmul.f32 0.5, %v1018
  %v1020 = vsub.f32 1.5, %v1019
  %v1021 = vmul.f32 %v1016, %v1020
  %vm1022 = vweird.f32 %v635
  %vm1023 = vweird.f32 %v1016
  %vm1024 = vmor %vm1022, %vm1023
  %v1025 = vsel %vm1024, %v1016, %v1021
  %v1026 = vrsqrt.pop %v636
  %v1027 = vmul.f32 %v1026, %v636
  %v1028 = vmul.f32 %v1027, %v1026
  %v1029 = vmul.f32 0.5, %v1028
  %v1030 = vsub.f32 1.5, %v1029
  %v1031 = vmul.f32 %v1026, %v1030
  %vm1032 = vweird.f32 %v636
  %vm1033 = vweird.f32 %v1026
  %vm1034 = vmor %vm1032, %vm1033
  %v1035 = vsel %vm1034, %v1026, %v1031
  %v1036 = vrsqrt.pop %v637
  %v1037 = vmul.f32 %v1036, %v637
  %v1038 = vmul.f32 %v1037, %v1036
  %v1039 = vmul.f32 0.5, %v1038
  %v1040 = vsub.f32 1.5, %v1039
  %v1041 = vmul.f32 %v1036, %v1040
  %vm1042 = vweird.f32 %v637
  %vm1043 = vweird.f32 %v1036
  %vm1044 = vmor %vm1042, %vm1043
  %v1045 = vsel %vm1044, %v1036, %v1041
  %v1046 = vrsqrt.pop %v638
  %v1047 = vmul.f32 %v1046, %v638
  %v1048 = vmul.f32 %v1047, %v1046
  %v1049 = vmul.f32 0.5, %v1048
  %v1050 = vsub.f32 1.5, %v1049
  %v1051 = vmul.f32 %v1046, %v1050
  %vm1052 = vweird.f32 %v638
  %vm1053 = vweird.f32 %v1046
  %vm1054 = vmor %vm1052, %vm1053
  %v1055 = vsel %vm1054, %v1046, %v1051
  %v1056 = vrsqrt.pop %v639
  %v1057 = vmul.f32 %v1056, %v639
  %v1058 = vmul.f32 %v1057, %v1056
  %v1059 = vmul.f32 0.5, %v1058
  %v1060 = vsub.f32 1.5, %v1059
  %v1061 = vmul.f32 %v1056, %v1060
  %vm1062 = vweird.f32 %v639
  %vm1063 = vweird.f32 %v1056
  %vm1064 = vmor %vm1062, %vm1063
  %v1065 = vsel %vm1064, %v1056, %v1061
  %v1066 = vrsqrt.pop %v640
  %v1067 = vmul.f32 %v1066, %v640
  %v1068 = vmul.f32 %v1067, %v1066
  %v1069 = vmul.f32 0.5, %v1068
  %v1070 = vsub.f32 1.5, %v1069
  %v1071 = vmul.f32 %v1066, %v1070
  %vm1072 = vweird.f32 %v640
  %vm1073 = vweird.f32 %v1066
  %vm1074 = vmor %vm1072, %vm1073
  %v1075 = vsel %vm1074, %v1066, %v1071
  %v1076 = vrsqrt.pop %v641
  %v1077 = vmul.f32 %v1076, %v641
  %v1078 = vmul.f32 %v1077, %v1076
  %v1079 = vmul.f32 0.5, %v1078
  %v1080 = vsub.f32 1.5, %v1079
  %v1081 = vmul.f32 %v1076, %v1080
  %vm1082 = vweird.f32 %v641
  %vm1083 = vweird.f32 %v1076
  %vm1084 = vmor %vm1082, %vm1083
  %v1085 = vsel %vm1084, %v1076, %v1081
  %v1086 = vrsqrt.pop %v642
  %v1087 = vmul.f32 %v1086, %v642
  %v1088 = vmul.f32 %v1087, %v1086
  %v1089 = vmul.f32 0.5, %v1088
  %v1090 = vsub.f32 1.5, %v1089
  %v1091 = vmul.f32 %v1086, %v1090
  %vm1092 = vweird.f32 %v642
  %vm1093 = vweird.f32 %v1086
  %vm1094 = vmor %vm1092, %vm1093
  %v1095 = vsel %vm1094, %v1086, %v1091
  %v1096 = vrsqrt.pop %v643
  %v1097 = vmul.f32 %v1096, %v643
  %v1098 = vmul.f32 %v1097, %v1096
  %v1099 = vmul.f32 0.5, %v1098
  %v1100 = vsub.f32 1.5, %v1099
  %v1101 = vmul.f32 %v1096, %v1100
  %vm1102 = vweird.f32 %v643
  %vm1103 = vweird.f32 %v1096
  %vm1104 = vmor %vm1102, %vm1103
  %v1105 = vsel %vm1104, %v1096, %v1101
  %v1106 = vrsqrt.pop %v644
  %v1107 = vmul.f32 %v1106, %v644
  %v1108 = vmul.f32 %v1107, %v1106
  %v1109 = vmul.f32 0.5, %v1108
  %v1110 = vsub.f32 1.5, %v1109
  %v1111 = vmul.f32 %v1106, %v1110
  %vm1112 = vweird.f32 %v644
  %vm1113 = vweird.f32 %v1106
  %vm1114 = vmor %vm1112, %vm1113
  %v1115 = vsel %vm1114, %v1106, %v1111
  %v1116 = vrsqrt.pop %v645
  %v1117 = vmul.f32 %v1116, %v645
  %v1118 = vmul.f32 %v1117, %v1116
  %v1119 = vmul.f32 0.5, %v1118
  %v1120 = vsub.f32 1.5, %v1119
  %v1121 = vmul.f32 %v1116, %v1120
  %vm1122 = vweird.f32 %v645
  %vm1123 = vweird.f32 %v1116
  %vm1124 = vmor %vm1122, %vm1123
  %v1125 = vsel %vm1124, %v1116, %v1121
  %v1126 = vmul.f32 %v310, %v655
  %v1127 = vmul.f32 %v311, %v665
  %v1128 = vmul.f32 %v312, %v675
  %v1129 = vmul.f32 %v313, %v685
  %v1130 = vmul.f32 %v314, %v695
  %v1131 = vmul.f32 %v315, %v705
  %v1132 = vmul.f32 %v316, %v715
  %v1133 = vmul.f32 %v317, %v725
  %v1134 = vmul.f32 %v318, %v735
  %v1135 = vmul.f32 %v319, %v745
  %v1136 = vmul.f32 %v320, %v755
  %v1137 = vmul.f32 %v321, %v765
  %v1138 = vmul.f32 %v322, %v775
  %v1139 = vmul.f32 %v323, %v785
  %v1140 = vmul.f32 %v324, %v795
  %v1141 = vmul.f32 %v325, %v805
  %v1142 = vmul.f32 %v326, %v815
  %v1143 = vmul.f32 %v327, %v825
  %v1144 = vmul.f32 %v328, %v835
  %v1145 = vmul.f32 %v329, %v845
  %v1146 = vmul.f32 %v330, %v855
  %v1147 = vmul.f32 %v331, %v865
  %v1148 = vmul.f32 %v332, %v875
  %v1149 = vmul.f32 %v333, %v885
  %v1150 = vmul.f32 %v334, %v895
  %v1151 = vmul.f32 %v335, %v905
  %v1152 = vmul.f32 %v336, %v915
  %v1153 = vmul.f32 %v337, %v925
  %v1154 = vmul.f32 %v338, %v935
  %v1155 = vmul.f32 %v339, %v945
  %v1156 = vmul.f32 %v340, %v955
  %v1157 = vmul.f32 %v341, %v965
  %v1158 = vmul.f32 %v342, %v975
  %v1159 = vmul.f32 %v343, %v985
  %v1160 = vmul.f32 %v344, %v995
  %v1161 = vmul.f32 %v345, %v1005
  %v1162 = vmul.f32 %v346, %v1015
  %v1163 = vmul.f32 %v347, %v1025
  %v1164 = vmul.f32 %v348, %v1035
  %v1165 = vmul.f32 %v349, %v1045
  %v1166 = vmul.f32 %v350, %v1055
  %v1167 = vmul.f32 %v351, %v1065
  %v1168 = vmul.f32 %v352, %v1075
  %v1169 = vmul.f32 %v353, %v1085
  %v1170 = vmul.f32 %v354, %v1095
  %v1171 = vmul.f32 %v355, %v1105
  %v1172 = vmul.f32 %v356, %v1115
  %v1173 = vmul.f32 %v357, %v1125
  %v1174 = vld [vmem:[%s1] sm:$0x1]
  %v1176 = vperm.slane %v1174, 0
  %v1178 = vmul.f32 %v1126, %v1176
  %v1179 = vmul.f32 %v1127, %v1176
  %v1180 = vmul.f32 %v1128, %v1176
  %v1181 = vmul.f32 %v1129, %v1176
  %v1182 = vmul.f32 %v1130, %v1176
  %v1183 = vmul.f32 %v1131, %v1176
  %v1184 = vmul.f32 %v1132, %v1176
  %v1185 = vmul.f32 %v1133, %v1176
  %v1186 = vmul.f32 %v1134, %v1176
  %v1187 = vmul.f32 %v1135, %v1176
  %v1188 = vmul.f32 %v1136, %v1176
  %v1189 = vmul.f32 %v1137, %v1176
  %v1190 = vmul.f32 %v1138, %v1176
  %v1191 = vmul.f32 %v1139, %v1176
  %v1192 = vmul.f32 %v1140, %v1176
  %v1193 = vmul.f32 %v1141, %v1176
  %v1194 = vmul.f32 %v1142, %v1176
  %v1195 = vmul.f32 %v1143, %v1176
  %v1196 = vmul.f32 %v1144, %v1176
  %v1197 = vmul.f32 %v1145, %v1176
  %v1198 = vmul.f32 %v1146, %v1176
  %v1199 = vmul.f32 %v1147, %v1176
  %v1200 = vmul.f32 %v1148, %v1176
  %v1201 = vmul.f32 %v1149, %v1176
  %v1202 = vmul.f32 %v1150, %v1176
  %v1203 = vmul.f32 %v1151, %v1176
  %v1204 = vmul.f32 %v1152, %v1176
  %v1205 = vmul.f32 %v1153, %v1176
  %v1206 = vmul.f32 %v1154, %v1176
  %v1207 = vmul.f32 %v1155, %v1176
  %v1208 = vmul.f32 %v1156, %v1176
  %v1209 = vmul.f32 %v1157, %v1176
  %v1210 = vmul.f32 %v1158, %v1176
  %v1211 = vmul.f32 %v1159, %v1176
  %v1212 = vmul.f32 %v1160, %v1176
  %v1213 = vmul.f32 %v1161, %v1176
  %v1214 = vmul.f32 %v1162, %v1176
  %v1215 = vmul.f32 %v1163, %v1176
  %v1216 = vmul.f32 %v1164, %v1176
  %v1217 = vmul.f32 %v1165, %v1176
  %v1218 = vmul.f32 %v1166, %v1176
  %v1219 = vmul.f32 %v1167, %v1176
  %v1220 = vmul.f32 %v1168, %v1176
  %v1221 = vmul.f32 %v1169, %v1176
  %v1222 = vmul.f32 %v1170, %v1176
  %v1223 = vmul.f32 %v1171, %v1176
  %v1224 = vmul.f32 %v1172, %v1176
  %v1225 = vmul.f32 %v1173, %v1176
  %v1226 = vld [vmem:[%s2] sm:$0x1]
  %v1228 = vperm.slane %v1226, 0
  %v1230 = vadd.f32 %v1178, %v1228
  %v1231 = vadd.f32 %v1179, %v1228
  %v1232 = vadd.f32 %v1180, %v1228
  %v1233 = vadd.f32 %v1181, %v1228
  %v1234 = vadd.f32 %v1182, %v1228
  %v1235 = vadd.f32 %v1183, %v1228
  %v1236 = vadd.f32 %v1184, %v1228
  %v1237 = vadd.f32 %v1185, %v1228
  %v1238 = vadd.f32 %v1186, %v1228
  %v1239 = vadd.f32 %v1187, %v1228
  %v1240 = vadd.f32 %v1188, %v1228
  %v1241 = vadd.f32 %v1189, %v1228
  %v1242 = vadd.f32 %v1190, %v1228
  %v1243 = vadd.f32 %v1191, %v1228
  %v1244 = vadd.f32 %v1192, %v1228
  %v1245 = vadd.f32 %v1193, %v1228
  %v1246 = vadd.f32 %v1194, %v1228
  %v1247 = vadd.f32 %v1195, %v1228
  %v1248 = vadd.f32 %v1196, %v1228
  %v1249 = vadd.f32 %v1197, %v1228
  %v1250 = vadd.f32 %v1198, %v1228
  %v1251 = vadd.f32 %v1199, %v1228
  %v1252 = vadd.f32 %v1200, %v1228
  %v1253 = vadd.f32 %v1201, %v1228
  %v1254 = vadd.f32 %v1202, %v1228
  %v1255 = vadd.f32 %v1203, %v1228
  %v1256 = vadd.f32 %v1204, %v1228
  %v1257 = vadd.f32 %v1205, %v1228
  %v1258 = vadd.f32 %v1206, %v1228
  %v1259 = vadd.f32 %v1207, %v1228
  %v1260 = vadd.f32 %v1208, %v1228
  %v1261 = vadd.f32 %v1209, %v1228
  %v1262 = vadd.f32 %v1210, %v1228
  %v1263 = vadd.f32 %v1211, %v1228
  %v1264 = vadd.f32 %v1212, %v1228
  %v1265 = vadd.f32 %v1213, %v1228
  %v1266 = vadd.f32 %v1214, %v1228
  %v1267 = vadd.f32 %v1215, %v1228
  %v1268 = vadd.f32 %v1216, %v1228
  %v1269 = vadd.f32 %v1217, %v1228
  %v1270 = vadd.f32 %v1218, %v1228
  %v1271 = vadd.f32 %v1219, %v1228
  %v1272 = vadd.f32 %v1220, %v1228
  %v1273 = vadd.f32 %v1221, %v1228
  %v1274 = vadd.f32 %v1222, %v1228
  %v1275 = vadd.f32 %v1223, %v1228
  %v1276 = vadd.f32 %v1224, %v1228
  %v1277 = vadd.f32 %v1225, %v1228
  %1278 = vst.msk [vmem:[%s3] sm:$0xff] %vm110, %v1230
  %1279 = vst.msk [vmem:[%s3 + $0x8] sm:$0xff] %vm110, %v1231
  %1280 = vst.msk [vmem:[%s3 + $0x10] sm:$0xff] %vm110, %v1232
  %1281 = vst.msk [vmem:[%s3 + $0x18] sm:$0xff] %vm110, %v1233
  %1282 = vst.msk [vmem:[%s3 + $0x20] sm:$0xff] %vm110, %v1234
  %1283 = vst.msk [vmem:[%s3 + $0x28] sm:$0xff] %vm110, %v1235
  %1284 = vst.msk [vmem:[%s3 + $0x30] sm:$0xff] %vm110, %v1236
  %1285 = vst.msk [vmem:[%s3 + $0x38] sm:$0xff] %vm110, %v1237
  %1286 = vst.msk [vmem:[%s3 + $0x40] sm:$0xff] %vm110, %v1238
  %1287 = vst.msk [vmem:[%s3 + $0x48] sm:$0xff] %vm110, %v1239
  %1288 = vst.msk [vmem:[%s3 + $0x50] sm:$0xff] %vm110, %v1240
  %1289 = vst.msk [vmem:[%s3 + $0x58] sm:$0xff] %vm110, %v1241
  %1290 = vst.msk [vmem:[%s3 + $0x60] sm:$0xff] %vm110, %v1242
  %1291 = vst.msk [vmem:[%s3 + $0x68] sm:$0xff] %vm110, %v1243
  %1292 = vst.msk [vmem:[%s3 + $0x70] sm:$0xff] %vm110, %v1244
  %1293 = vst.msk [vmem:[%s3 + $0x78] sm:$0xff] %vm110, %v1245
  %1294 = vst.msk [vmem:[%s3 + $0x80] sm:$0xff] %vm110, %v1246
  %1295 = vst.msk [vmem:[%s3 + $0x88] sm:$0xff] %vm110, %v1247
  %1296 = vst.msk [vmem:[%s3 + $0x90] sm:$0xff] %vm110, %v1248
  %1297 = vst.msk [vmem:[%s3 + $0x98] sm:$0xff] %vm110, %v1249
  %1298 = vst.msk [vmem:[%s3 + $0xa0] sm:$0xff] %vm110, %v1250
  %1299 = vst.msk [vmem:[%s3 + $0xa8] sm:$0xff] %vm110, %v1251
  %1300 = vst.msk [vmem:[%s3 + $0xb0] sm:$0xff] %vm110, %v1252
  %1301 = vst.msk [vmem:[%s3 + $0xb8] sm:$0xff] %vm110, %v1253
  %1302 = vst.msk [vmem:[%s3 + $0xc0] sm:$0xff] %vm110, %v1254
  %1303 = vst.msk [vmem:[%s3 + $0xc8] sm:$0xff] %vm110, %v1255
  %1304 = vst.msk [vmem:[%s3 + $0xd0] sm:$0xff] %vm110, %v1256
  %1305 = vst.msk [vmem:[%s3 + $0xd8] sm:$0xff] %vm110, %v1257
  %1306 = vst.msk [vmem:[%s3 + $0xe0] sm:$0xff] %vm110, %v1258
  %1307 = vst.msk [vmem:[%s3 + $0xe8] sm:$0xff] %vm110, %v1259
  %1308 = vst.msk [vmem:[%s3 + $0xf0] sm:$0xff] %vm110, %v1260
  %1309 = vst.msk [vmem:[%s3 + $0xf8] sm:$0xff] %vm110, %v1261
  %1310 = vst.msk [vmem:[%s3 + $0x100] sm:$0xff] %vm110, %v1262
  %1311 = vst.msk [vmem:[%s3 + $0x108] sm:$0xff] %vm110, %v1263
  %1312 = vst.msk [vmem:[%s3 + $0x110] sm:$0xff] %vm110, %v1264
  %1313 = vst.msk [vmem:[%s3 + $0x118] sm:$0xff] %vm110, %v1265
  %1314 = vst.msk [vmem:[%s3 + $0x120] sm:$0xff] %vm110, %v1266
  %1315 = vst.msk [vmem:[%s3 + $0x128] sm:$0xff] %vm110, %v1267
  %1316 = vst.msk [vmem:[%s3 + $0x130] sm:$0xff] %vm110, %v1268
  %1317 = vst.msk [vmem:[%s3 + $0x138] sm:$0xff] %vm110, %v1269
  %1318 = vst.msk [vmem:[%s3 + $0x140] sm:$0xff] %vm110, %v1270
  %1319 = vst.msk [vmem:[%s3 + $0x148] sm:$0xff] %vm110, %v1271
  %1320 = vst.msk [vmem:[%s3 + $0x150] sm:$0xff] %vm110, %v1272
  %1321 = vst.msk [vmem:[%s3 + $0x158] sm:$0xff] %vm110, %v1273
  %1322 = vst.msk [vmem:[%s3 + $0x160] sm:$0xff] %vm110, %v1274
  %1323 = vst.msk [vmem:[%s3 + $0x168] sm:$0xff] %vm110, %v1275
  %1324 = vst.msk [vmem:[%s3 + $0x170] sm:$0xff] %vm110, %v1276
  %1325 = vst.msk [vmem:[%s3 + $0x178] sm:$0xff] %vm110, %v1277
  // Predicated region
  $region14: #{siglip2_forward.11} parent=0 // pred_check
    _
  $region15: #{siglip2_forward.11} parent=0 // pred_check_branch
    %1327 = sbr.rel (0) target = $region17
  $region16: #{siglip2_forward.11} parent=0 // pred_region
    _
  $region17: #{siglip2_forward.11} parent=0 // pred_fallthru
    _
  // Predicated region
  $region18: #{siglip2_forward.11} parent=0 // pred_check
    _
  $region19: #{siglip2_forward.11} parent=0 // pred_check_branch
    %1329 = sbr.rel (0) target = $region21
  $region20: #{siglip2_forward.11} parent=0 // pred_region
    _
  $region21: #{siglip2_forward.11} parent=0 // pred_fallthru
    _

// kernel: siglip2_forward.7
$region0: #{siglip2_forward.7}
  #allocation0 [shape = 'u32[]', space=smem, size = 0x4, offset = 0x4, fixed_abs, tag = 'smem constant byte address 0x4 - core index']
  #allocation1 [shape = 'u32[72,128]{1,0:T(1,128)}', space=vmem, size = 0x9000, scoped, tag = 'internal scratch']
  %s0 = inlined_call_operand.vmem [shape: bf16[384,32], index: 0, kind: input, shape index: {}]
  %s1 = inlined_call_operand.vmem [shape: f32[1,32], index: 1, kind: input, shape index: {}]
  %s2 = inlined_call_operand.vmem [shape: f32[1,32], index: 2, kind: input, shape index: {}]
  %s3 = inlined_call_operand.vmem [shape: bf16[32,96], index: 3, kind: input, shape index: {}]
  %s4 = inlined_call_operand.vmem [shape: f32[1,96], index: 4, kind: input, shape index: {}]
  %s5 = inlined_call_operand.vmem [shape: bf16[384,32], index: 5, kind: output, shape index: {0}]
  %s6 = inlined_call_operand.vmem [shape: bf16[384,32], index: 6, kind: output, shape index: {1}]
  %s7 = inlined_call_operand.vmem [shape: bf16[384,32], index: 7, kind: output, shape index: {2}]
  %8 = xla_tuple %s5, %s6, %s7
  %s9 = sld [smem:[#allocation0]]
  $region46: #{siglip2_forward.7} parent=0
    _
  %s11 = ssub.s32 1, %s9
  %s12 = scalar_select 0, %s11, %s9
  // Predicated region
  $region2: #{siglip2_forward.7} parent=0 // pred_check
    _
  $region3: #{siglip2_forward.7} parent=0 // pred_check_branch
    %14 = sbr.rel (0) target = $region5
  $region4: #{siglip2_forward.7} parent=0 // pred_region
    _
  $region5: #{siglip2_forward.7} parent=0 // pred_fallthru
    _
  // Predicated region
  $region6: #{siglip2_forward.7} parent=0 // pred_check
    _
  $region7: #{siglip2_forward.7} parent=0 // pred_check_branch
    %16 = sbr.rel (0) target = $region9
  $region8: #{siglip2_forward.7} parent=0 // pred_region
    _
  $region9: #{siglip2_forward.7} parent=0 // pred_fallthru
    _
  // Predicated region
  $region10: #{siglip2_forward.7} parent=0 // pred_check
    _
  $region11: #{siglip2_forward.7} parent=0 // pred_check_branch
    %18 = sbr.rel (0) target = $region13
  $region12: #{siglip2_forward.7} parent=0 // pred_region
    _
  $region13: #{siglip2_forward.7} parent=0 // pred_fallthru
    _
  // Predicated region
  $region14: #{siglip2_forward.7} parent=0 // pred_check
    _
  $region15: #{siglip2_forward.7} parent=0 // pred_check_branch
    %20 = sbr.rel (0) target = $region17
  $region16: #{siglip2_forward.7} parent=0 // pred_region
    _
  $region17: #{siglip2_forward.7} parent=0 // pred_fallthru
    _
  // Predicated region
  $region18: #{siglip2_forward.7} parent=0 // pred_check
    _
  $region19: #{siglip2_forward.7} parent=0 // pred_check_branch
    %22 = sbr.rel (0) target = $region21
  $region20: #{siglip2_forward.7} parent=0 // pred_region
    _
  $region21: #{siglip2_forward.7} parent=0 // pred_fallthru
    _
  %v24 = vld [vmem:[%s0] sm:$0xf]
  %v25 = vld [vmem:[%s0 + $0x4] sm:$0xf]
  %v26 = vld [vmem:[%s0 + $0x8] sm:$0xf]
  %v27 = vld [vmem:[%s0 + $0xc] sm:$0xf]
  %v28 = vld [vmem:[%s0 + $0x10] sm:$0xf]
  %v29 = vld [vmem:[%s0 + $0x14] sm:$0xf]
  %v30 = vld [vmem:[%s0 + $0x18] sm:$0xf]
  %v31 = vld [vmem:[%s0 + $0x1c] sm:$0xf]
  %v32 = vld [vmem:[%s0 + $0x20] sm:$0xf]
  %v33 = vld [vmem:[%s0 + $0x24] sm:$0xf]
  %v34 = vld [vmem:[%s0 + $0x28] sm:$0xf]
  %v35 = vld [vmem:[%s0 + $0x2c] sm:$0xf]
  %v36 = vld [vmem:[%s0 + $0x30] sm:$0xf]
  %v37 = vld [vmem:[%s0 + $0x34] sm:$0xf]
  %v38 = vld [vmem:[%s0 + $0x38] sm:$0xf]
  %v39 = vld [vmem:[%s0 + $0x3c] sm:$0xf]
  %v40 = vld [vmem:[%s0 + $0x40] sm:$0xf]
  %v41 = vld [vmem:[%s0 + $0x44] sm:$0xf]
  %v42 = vld [vmem:[%s0 + $0x48] sm:$0xf]
  %v43 = vld [vmem:[%s0 + $0x4c] sm:$0xf]
  %v44 = vld [vmem:[%s0 + $0x50] sm:$0xf]
  %v45 = vld [vmem:[%s0 + $0x54] sm:$0xf]
  %v46 = vld [vmem:[%s0 + $0x58] sm:$0xf]
  %v47 = vld [vmem:[%s0 + $0x5c] sm:$0xf]
  %v48 = vld [vmem:[%s0 + $0x60] sm:$0xf]
  %v49 = vld [vmem:[%s0 + $0x64] sm:$0xf]
  %v50 = vld [vmem:[%s0 + $0x68] sm:$0xf]
  %v51 = vld [vmem:[%s0 + $0x6c] sm:$0xf]
  %v52 = vld [vmem:[%s0 + $0x70] sm:$0xf]
  %v53 = vld [vmem:[%s0 + $0x74] sm:$0xf]
  %v54 = vld [vmem:[%s0 + $0x78] sm:$0xf]
  %v55 = vld [vmem:[%s0 + $0x7c] sm:$0xf]
  %v56 = vld [vmem:[%s0 + $0x80] sm:$0xf]
  %v57 = vld [vmem:[%s0 + $0x84] sm:$0xf]
  %v58 = vld [vmem:[%s0 + $0x88] sm:$0xf]
  %v59 = vld [vmem:[%s0 + $0x8c] sm:$0xf]
  %v60 = vld [vmem:[%s0 + $0x90] sm:$0xf]
  %v61 = vld [vmem:[%s0 + $0x94] sm:$0xf]
  %v62 = vld [vmem:[%s0 + $0x98] sm:$0xf]
  %v63 = vld [vmem:[%s0 + $0x9c] sm:$0xf]
  %v64 = vld [vmem:[%s0 + $0xa0] sm:$0xf]
  %v65 = vld [vmem:[%s0 + $0xa4] sm:$0xf]
  %v66 = vld [vmem:[%s0 + $0xa8] sm:$0xf]
  %v67 = vld [vmem:[%s0 + $0xac] sm:$0xf]
  %v68 = vld [vmem:[%s0 + $0xb0] sm:$0xf]
  %v69 = vld [vmem:[%s0 + $0xb4] sm:$0xf]
  %v70 = vld [vmem:[%s0 + $0xb8] sm:$0xf]
  %v71 = vld [vmem:[%s0 + $0xbc] sm:$0xf]
  %v72 = vunpack.c.l.bf16 %v24
  %v73 = vunpack.c.l.bf16 %v25
  %v74 = vunpack.c.l.bf16 %v26
  %v75 = vunpack.c.l.bf16 %v27
  %v76 = vunpack.c.l.bf16 %v28
  %v77 = vunpack.c.l.bf16 %v29
  %v78 = vunpack.c.l.bf16 %v30
  %v79 = vunpack.c.l.bf16 %v31
  %v80 = vunpack.c.l.bf16 %v32
  %v81 = vunpack.c.l.bf16 %v33
  %v82 = vunpack.c.l.bf16 %v34
  %v83 = vunpack.c.l.bf16 %v35
  %v84 = vunpack.c.l.bf16 %v36
  %v85 = vunpack.c.l.bf16 %v37
  %v86 = vunpack.c.l.bf16 %v38
  %v87 = vunpack.c.l.bf16 %v39
  %v88 = vunpack.c.l.bf16 %v40
  %v89 = vunpack.c.l.bf16 %v41
  %v90 = vunpack.c.l.bf16 %v42
  %v91 = vunpack.c.l.bf16 %v43
  %v92 = vunpack.c.l.bf16 %v44
  %v93 = vunpack.c.l.bf16 %v45
  %v94 = vunpack.c.l.bf16 %v46
  %v95 = vunpack.c.l.bf16 %v47
  %v96 = vunpack.c.l.bf16 %v48
  %v97 = vunpack.c.l.bf16 %v49
  %v98 = vunpack.c.l.bf16 %v50
  %v99 = vunpack.c.l.bf16 %v51
  %v100 = vunpack.c.l.bf16 %v52
  %v101 = vunpack.c.l.bf16 %v53
  %v102 = vunpack.c.l.bf16 %v54
  %v103 = vunpack.c.l.bf16 %v55
  %v104 = vunpack.c.l.bf16 %v56
  %v105 = vunpack.c.l.bf16 %v57
  %v106 = vunpack.c.l.bf16 %v58
  %v107 = vunpack.c.l.bf16 %v59
  %v108 = vunpack.c.l.bf16 %v60
  %v109 = vunpack.c.l.bf16 %v61
  %v110 = vunpack.c.l.bf16 %v62
  %v111 = vunpack.c.l.bf16 %v63
  %v112 = vunpack.c.l.bf16 %v64
  %v113 = vunpack.c.l.bf16 %v65
  %v114 = vunpack.c.l.bf16 %v66
  %v115 = vunpack.c.l.bf16 %v67
  %v116 = vunpack.c.l.bf16 %v68
  %v117 = vunpack.c.l.bf16 %v69
  %v118 = vunpack.c.l.bf16 %v70
  %v119 = vunpack.c.l.bf16 %v71
  %vm120 = vcmask 261120
  %v121 = vsel %vm120, %v72, 0.0
  %122 = vadd.xlane.f32.xlu0 %v121
  %v123 = vpop.xlane.xlu0 %122
  %v124 = vsel %vm120, %v73, 0.0
  %125 = vadd.xlane.f32.xlu0 %v124
  %v126 = vpop.xlane.xlu0 %125
  %v127 = vsel %vm120, %v74, 0.0
  %128 = vadd.xlane.f32.xlu0 %v127
  %v129 = vpop.xlane.xlu0 %128
  %v130 = vsel %vm120, %v75, 0.0
  %131 = vadd.xlane.f32.xlu0 %v130
  %v132 = vpop.xlane.xlu0 %131
  %v133 = vsel %vm120, %v76, 0.0
  %134 = vadd.xlane.f32.xlu0 %v133
  %v135 = vpop.xlane.xlu0 %134
  %v136 = vsel %vm120, %v77, 0.0
  %137 = vadd.xlane.f32.xlu0 %v136
  %v138 = vpop.xlane.xlu0 %137
  %v139 = vsel %vm120, %v78, 0.0
  %140 = vadd.xlane.f32.xlu0 %v139
  %v141 = vpop.xlane.xlu0 %140
  %v142 = vsel %vm120, %v79, 0.0
  %143 = vadd.xlane.f32.xlu0 %v142
  %v144 = vpop.xlane.xlu0 %143
  %v145 = vsel %vm120, %v80, 0.0
  %146 = vadd.xlane.f32.xlu0 %v145
  %v147 = vpop.xlane.xlu0 %146
  %v148 = vsel %vm120, %v81, 0.0
  %149 = vadd.xlane.f32.xlu0 %v148
  %v150 = vpop.xlane.xlu0 %149
  %v151 = vsel %vm120, %v82, 0.0
  %152 = vadd.xlane.f32.xlu0 %v151
  %v153 = vpop.xlane.xlu0 %152
  %v154 = vsel %vm120, %v83, 0.0
  %155 = vadd.xlane.f32.xlu0 %v154
  %v156 = vpop.xlane.xlu0 %155
  %v157 = vsel %vm120, %v84, 0.0
  %158 = vadd.xlane.f32.xlu0 %v157
  %v159 = vpop.xlane.xlu0 %158
  %v160 = vsel %vm120, %v85, 0.0
  %161 = vadd.xlane.f32.xlu0 %v160
  %v162 = vpop.xlane.xlu0 %161
  %v163 = vsel %vm120, %v86, 0.0
  %164 = vadd.xlane.f32.xlu0 %v163
  %v165 = vpop.xlane.xlu0 %164
  %v166 = vsel %vm120, %v87, 0.0
  %167 = vadd.xlane.f32.xlu0 %v166
  %v168 = vpop.xlane.xlu0 %167
  %v169 = vsel %vm120, %v88, 0.0
  %170 = vadd.xlane.f32.xlu0 %v169
  %v171 = vpop.xlane.xlu0 %170
  %v172 = vsel %vm120, %v89, 0.0
  %173 = vadd.xlane.f32.xlu0 %v172
  %v174 = vpop.xlane.xlu0 %173
  %v175 = vsel %vm120, %v90, 0.0
  %176 = vadd.xlane.f32.xlu0 %v175
  %v177 = vpop.xlane.xlu0 %176
  %v178 = vsel %vm120, %v91, 0.0
  %179 = vadd.xlane.f32.xlu0 %v178
  %v180 = vpop.xlane.xlu0 %179
  %v181 = vsel %vm120, %v92, 0.0
  %182 = vadd.xlane.f32.xlu0 %v181
  %v183 = vpop.xlane.xlu0 %182
  %v184 = vsel %vm120, %v93, 0.0
  %185 = vadd.xlane.f32.xlu0 %v184
  %v186 = vpop.xlane.xlu0 %185
  %v187 = vsel %vm120, %v94, 0.0
  %188 = vadd.xlane.f32.xlu0 %v187
  %v189 = vpop.xlane.xlu0 %188
  %v190 = vsel %vm120, %v95, 0.0
  %191 = vadd.xlane.f32.xlu0 %v190
  %v192 = vpop.xlane.xlu0 %191
  %v193 = vsel %vm120, %v96, 0.0
  %194 = vadd.xlane.f32.xlu0 %v193
  %v195 = vpop.xlane.xlu0 %194
  %v196 = vsel %vm120, %v97, 0.0
  %197 = vadd.xlane.f32.xlu0 %v196
  %v198 = vpop.xlane.xlu0 %197
  %v199 = vsel %vm120, %v98, 0.0
  %200 = vadd.xlane.f32.xlu0 %v199
  %v201 = vpop.xlane.xlu0 %200
  %v202 = vsel %vm120, %v99, 0.0
  %203 = vadd.xlane.f32.xlu0 %v202
  %v204 = vpop.xlane.xlu0 %203
  %v205 = vsel %vm120, %v100, 0.0
  %206 = vadd.xlane.f32.xlu0 %v205
  %v207 = vpop.xlane.xlu0 %206
  %v208 = vsel %vm120, %v101, 0.0
  %209 = vadd.xlane.f32.xlu0 %v208
  %v210 = vpop.xlane.xlu0 %209
  %v211 = vsel %vm120, %v102, 0.0
  %212 = vadd.xlane.f32.xlu0 %v211
  %v213 = vpop.xlane.xlu0 %212
  %v214 = vsel %vm120, %v103, 0.0
  %215 = vadd.xlane.f32.xlu0 %v214
  %v216 = vpop.xlane.xlu0 %215
  %v217 = vsel %vm120, %v104, 0.0
  %218 = vadd.xlane.f32.xlu0 %v217
  %v219 = vpop.xlane.xlu0 %218
  %v220 = vsel %vm120, %v105, 0.0
  %221 = vadd.xlane.f32.xlu0 %v220
  %v222 = vpop.xlane.xlu0 %221
  %v223 = vsel %vm120, %v106, 0.0
  %224 = vadd.xlane.f32.xlu0 %v223
  %v225 = vpop.xlane.xlu0 %224
  %v226 = vsel %vm120, %v107, 0.0
  %227 = vadd.xlane.f32.xlu0 %v226
  %v228 = vpop.xlane.xlu0 %227
  %v229 = vsel %vm120, %v108, 0.0
  %230 = vadd.xlane.f32.xlu0 %v229
  %v231 = vpop.xlane.xlu0 %230
  %v232 = vsel %vm120, %v109, 0.0
  %233 = vadd.xlane.f32.xlu0 %v232
  %v234 = vpop.xlane.xlu0 %233
  %v235 = vsel %vm120, %v110, 0.0
  %236 = vadd.xlane.f32.xlu0 %v235
  %v237 = vpop.xlane.xlu0 %236
  %v238 = vsel %vm120, %v111, 0.0
  %239 = vadd.xlane.f32.xlu0 %v238
  %v240 = vpop.xlane.xlu0 %239
  %v241 = vsel %vm120, %v112, 0.0
  %242 = vadd.xlane.f32.xlu0 %v241
  %v243 = vpop.xlane.xlu0 %242
  %v244 = vsel %vm120, %v113, 0.0
  %245 = vadd.xlane.f32.xlu0 %v244
  %v246 = vpop.xlane.xlu0 %245
  %v247 = vsel %vm120, %v114, 0.0
  %248 = vadd.xlane.f32.xlu0 %v247
  %v249 = vpop.xlane.xlu0 %248
  %v250 = vsel %vm120, %v115, 0.0
  %251 = vadd.xlane.f32.xlu0 %v250
  %v252 = vpop.xlane.xlu0 %251
  %v253 = vsel %vm120, %v116, 0.0
  %254 = vadd.xlane.f32.xlu0 %v253
  %v255 = vpop.xlane.xlu0 %254
  %v256 = vsel %vm120, %v117, 0.0
  %257 = vadd.xlane.f32.xlu0 %v256
  %v258 = vpop.xlane.xlu0 %257
  %v259 = vsel %vm120, %v118, 0.0
  %260 = vadd.xlane.f32.xlu0 %v259
  %v261 = vpop.xlane.xlu0 %260
  %v262 = vsel %vm120, %v119, 0.0
  %263 = vadd.xlane.f32.xlu0 %v262
  %v264 = vpop.xlane.xlu0 %263
  %v265 = vrcp.pop 32.0
  %v266 = vmul.f32 32.0, %v265
  %v267 = vsub.f32 1.0, %v266
  %v268 = vmul.f32 %v265, %v267
  %v269 = vadd.f32 %v265, %v268
  %vm270 = vweird.f32 %v265
  %v271 = vsel %vm270, %v265, %v269
  %v272 = vmul.f32 %v123, %v271
  %v273 = vmul.f32 %v126, %v271
  %v274 = vmul.f32 %v129, %v271
  %v275 = vmul.f32 %v132, %v271
  %v276 = vmul.f32 %v135, %v271
  %v277 = vmul.f32 %v138, %v271
  %v278 = vmul.f32 %v141, %v271
  %v279 = vmul.f32 %v144, %v271
  %v280 = vmul.f32 %v147, %v271
  %v281 = vmul.f32 %v150, %v271
  %v282 = vmul.f32 %v153, %v271
  %v283 = vmul.f32 %v156, %v271
  %v284 = vmul.f32 %v159, %v271
  %v285 = vmul.f32 %v162, %v271
  %v286 = vmul.f32 %v165, %v271
  %v287 = vmul.f32 %v168, %v271
  %v288 = vmul.f32 %v171, %v271
  %v289 = vmul.f32 %v174, %v271
  %v290 = vmul.f32 %v177, %v271
  %v291 = vmul.f32 %v180, %v271
  %v292 = vmul.f32 %v183, %v271
  %v293 = vmul.f32 %v186, %v271
  %v294 = vmul.f32 %v189, %v271
  %v295 = vmul.f32 %v192, %v271
  %v296 = vmul.f32 %v195, %v271
  %v297 = vmul.f32 %v198, %v271
  %v298 = vmul.f32 %v201, %v271
  %v299 = vmul.f32 %v204, %v271
  %v300 = vmul.f32 %v207, %v271
  %v301 = vmul.f32 %v210, %v271
  %v302 = vmul.f32 %v213, %v271
  %v303 = vmul.f32 %v216, %v271
  %v304 = vmul.f32 %v219, %v271
  %v305 = vmul.f32 %v222, %v271
  %v306 = vmul.f32 %v225, %v271
  %v307 = vmul.f32 %v228, %v271
  %v308 = vmul.f32 %v231, %v271
  %v309 = vmul.f32 %v234, %v271
  %v310 = vmul.f32 %v237, %v271
  %v311 = vmul.f32 %v240, %v271
  %v312 = vmul.f32 %v243, %v271
  %v313 = vmul.f32 %v246, %v271
  %v314 = vmul.f32 %v249, %v271
  %v315 = vmul.f32 %v252, %v271
  %v316 = vmul.f32 %v255, %v271
  %v317 = vmul.f32 %v258, %v271
  %v318 = vmul.f32 %v261, %v271
  %v319 = vmul.f32 %v264, %v271
  %v320 = vsub.f32 %v72, %v272
  %v321 = vsub.f32 %v73, %v273
  %v322 = vsub.f32 %v74, %v274
  %v323 = vsub.f32 %v75, %v275
  %v324 = vsub.f32 %v76, %v276
  %v325 = vsub.f32 %v77, %v277
  %v326 = vsub.f32 %v78, %v278
  %v327 = vsub.f32 %v79, %v279
  %v328 = vsub.f32 %v80, %v280
  %v329 = vsub.f32 %v81, %v281
  %v330 = vsub.f32 %v82, %v282
  %v331 = vsub.f32 %v83, %v283
  %v332 = vsub.f32 %v84, %v284
  %v333 = vsub.f32 %v85, %v285
  %v334 = vsub.f32 %v86, %v286
  %v335 = vsub.f32 %v87, %v287
  %v336 = vsub.f32 %v88, %v288
  %v337 = vsub.f32 %v89, %v289
  %v338 = vsub.f32 %v90, %v290
  %v339 = vsub.f32 %v91, %v291
  %v340 = vsub.f32 %v92, %v292
  %v341 = vsub.f32 %v93, %v293
  %v342 = vsub.f32 %v94, %v294
  %v343 = vsub.f32 %v95, %v295
  %v344 = vsub.f32 %v96, %v296
  %v345 = vsub.f32 %v97, %v297
  %v346 = vsub.f32 %v98, %v298
  %v347 = vsub.f32 %v99, %v299
  %v348 = vsub.f32 %v100, %v300
  %v349 = vsub.f32 %v101, %v301
  %v350 = vsub.f32 %v102, %v302
  %v351 = vsub.f32 %v103, %v303
  %v352 = vsub.f32 %v104, %v304
  %v353 = vsub.f32 %v105, %v305
  %v354 = vsub.f32 %v106, %v306
  %v355 = vsub.f32 %v107, %v307
  %v356 = vsub.f32 %v108, %v308
  %v357 = vsub.f32 %v109, %v309
  %v358 = vsub.f32 %v110, %v310
  %v359 = vsub.f32 %v111, %v311
  %v360 = vsub.f32 %v112, %v312
  %v361 = vsub.f32 %v113, %v313
  %v362 = vsub.f32 %v114, %v314
  %v363 = vsub.f32 %v115, %v315
  %v364 = vsub.f32 %v116, %v316
  %v365 = vsub.f32 %v117, %v317
  %v366 = vsub.f32 %v118, %v318
  %v367 = vsub.f32 %v119, %v319
  %v368 = vmul.f32 %v320, %v320
  %v369 = vmul.f32 %v321, %v321
  %v370 = vmul.f32 %v322, %v322
  %v371 = vmul.f32 %v323, %v323
  %v372 = vmul.f32 %v324, %v324
  %v373 = vmul.f32 %v325, %v325
  %v374 = vmul.f32 %v326, %v326
  %v375 = vmul.f32 %v327, %v327
  %v376 = vmul.f32 %v328, %v328
  %v377 = vmul.f32 %v329, %v329
  %v378 = vmul.f32 %v330, %v330
  %v379 = vmul.f32 %v331, %v331
  %v380 = vmul.f32 %v332, %v332
  %v381 = vmul.f32 %v333, %v333
  %v382 = vmul.f32 %v334, %v334
  %v383 = vmul.f32 %v335, %v335
  %v384 = vmul.f32 %v336, %v336
  %v385 = vmul.f32 %v337, %v337
  %v386 = vmul.f32 %v338, %v338
  %v387 = vmul.f32 %v339, %v339
  %v388 = vmul.f32 %v340, %v340
  %v389 = vmul.f32 %v341, %v341
  %v390 = vmul.f32 %v342, %v342
  %v391 = vmul.f32 %v343, %v343
  %v392 = vmul.f32 %v344, %v344
  %v393 = vmul.f32 %v345, %v345
  %v394 = vmul.f32 %v346, %v346
  %v395 = vmul.f32 %v347, %v347
  %v396 = vmul.f32 %v348, %v348
  %v397 = vmul.f32 %v349, %v349
  %v398 = vmul.f32 %v350, %v350
  %v399 = vmul.f32 %v351, %v351
  %v400 = vmul.f32 %v352, %v352
  %v401 = vmul.f32 %v353, %v353
  %v402 = vmul.f32 %v354, %v354
  %v403 = vmul.f32 %v355, %v355
  %v404 = vmul.f32 %v356, %v356
  %v405 = vmul.f32 %v357, %v357
  %v406 = vmul.f32 %v358, %v358
  %v407 = vmul.f32 %v359, %v359
  %v408 = vmul.f32 %v360, %v360
  %v409 = vmul.f32 %v361, %v361
  %v410 = vmul.f32 %v362, %v362
  %v411 = vmul.f32 %v363, %v363
  %v412 = vmul.f32 %v364, %v364
  %v413 = vmul.f32 %v365, %v365
  %v414 = vmul.f32 %v366, %v366
  %v415 = vmul.f32 %v367, %v367
  %v416 = vsel %vm120, %v368, 0.0
  %417 = vadd.xlane.f32.xlu0 %v416
  %v418 = vpop.xlane.xlu0 %417
  %v419 = vsel %vm120, %v369, 0.0
  %420 = vadd.xlane.f32.xlu0 %v419
  %v421 = vpop.xlane.xlu0 %420
  %v422 = vsel %vm120, %v370, 0.0
  %423 = vadd.xlane.f32.xlu0 %v422
  %v424 = vpop.xlane.xlu0 %423
  %v425 = vsel %vm120, %v371, 0.0
  %426 = vadd.xlane.f32.xlu0 %v425
  %v427 = vpop.xlane.xlu0 %426
  %v428 = vsel %vm120, %v372, 0.0
  %429 = vadd.xlane.f32.xlu0 %v428
  %v430 = vpop.xlane.xlu0 %429
  %v431 = vsel %vm120, %v373, 0.0
  %432 = vadd.xlane.f32.xlu0 %v431
  %v433 = vpop.xlane.xlu0 %432
  %v434 = vsel %vm120, %v374, 0.0
  %435 = vadd.xlane.f32.xlu0 %v434
  %v436 = vpop.xlane.xlu0 %435
  %v437 = vsel %vm120, %v375, 0.0
  %438 = vadd.xlane.f32.xlu0 %v437
  %v439 = vpop.xlane.xlu0 %438
  %v440 = vsel %vm120, %v376, 0.0
  %441 = vadd.xlane.f32.xlu0 %v440
  %v442 = vpop.xlane.xlu0 %441
  %v443 = vsel %vm120, %v377, 0.0
  %444 = vadd.xlane.f32.xlu0 %v443
  %v445 = vpop.xlane.xlu0 %444
  %v446 = vsel %vm120, %v378, 0.0
  %447 = vadd.xlane.f32.xlu0 %v446
  %v448 = vpop.xlane.xlu0 %447
  %v449 = vsel %vm120, %v379, 0.0
  %450 = vadd.xlane.f32.xlu0 %v449
  %v451 = vpop.xlane.xlu0 %450
  %v452 = vsel %vm120, %v380, 0.0
  %453 = vadd.xlane.f32.xlu0 %v452
  %v454 = vpop.xlane.xlu0 %453
  %v455 = vsel %vm120, %v381, 0.0
  %456 = vadd.xlane.f32.xlu0 %v455
  %v457 = vpop.xlane.xlu0 %456
  %v458 = vsel %vm120, %v382, 0.0
  %459 = vadd.xlane.f32.xlu0 %v458
  %v460 = vpop.xlane.xlu0 %459
  %v461 = vsel %vm120, %v383, 0.0
  %462 = vadd.xlane.f32.xlu0 %v461
  %v463 = vpop.xlane.xlu0 %462
  %v464 = vsel %vm120, %v384, 0.0
  %465 = vadd.xlane.f32.xlu0 %v464
  %v466 = vpop.xlane.xlu0 %465
  %v467 = vsel %vm120, %v385, 0.0
  %468 = vadd.xlane.f32.xlu0 %v467
  %v469 = vpop.xlane.xlu0 %468
  %v470 = vsel %vm120, %v386, 0.0
  %471 = vadd.xlane.f32.xlu0 %v470
  %v472 = vpop.xlane.xlu0 %471
  %v473 = vsel %vm120, %v387, 0.0
  %474 = vadd.xlane.f32.xlu0 %v473
  %v475 = vpop.xlane.xlu0 %474
  %v476 = vsel %vm120, %v388, 0.0
  %477 = vadd.xlane.f32.xlu0 %v476
  %v478 = vpop.xlane.xlu0 %477
  %v479 = vsel %vm120, %v389, 0.0
  %480 = vadd.xlane.f32.xlu0 %v479
  %v481 = vpop.xlane.xlu0 %480
  %v482 = vsel %vm120, %v390, 0.0
  %483 = vadd.xlane.f32.xlu0 %v482
  %v484 = vpop.xlane.xlu0 %483
  %v485 = vsel %vm120, %v391, 0.0
  %486 = vadd.xlane.f32.xlu0 %v485
  %v487 = vpop.xlane.xlu0 %486
  %v488 = vsel %vm120, %v392, 0.0
  %489 = vadd.xlane.f32.xlu0 %v488
  %v490 = vpop.xlane.xlu0 %489
  %v491 = vsel %vm120, %v393, 0.0
  %492 = vadd.xlane.f32.xlu0 %v491
  %v493 = vpop.xlane.xlu0 %492
  %v494 = vsel %vm120, %v394, 0.0
  %495 = vadd.xlane.f32.xlu0 %v494
  %v496 = vpop.xlane.xlu0 %495
  %v497 = vsel %vm120, %v395, 0.0
  %498 = vadd.xlane.f32.xlu0 %v497
  %v499 = vpop.xlane.xlu0 %498
  %v500 = vsel %vm120, %v396, 0.0
  %501 = vadd.xlane.f32.xlu0 %v500
  %v502 = vpop.xlane.xlu0 %501
  %v503 = vsel %vm120, %v397, 0.0
  %504 = vadd.xlane.f32.xlu0 %v503
  %v505 = vpop.xlane.xlu0 %504
  %v506 = vsel %vm120, %v398, 0.0
  %507 = vadd.xlane.f32.xlu0 %v506
  %v508 = vpop.xlane.xlu0 %507
  %v509 = vsel %vm120, %v399, 0.0
  %510 = vadd.xlane.f32.xlu0 %v509
  %v511 = vpop.xlane.xlu0 %510
  %v512 = vsel %vm120, %v400, 0.0
  %513 = vadd.xlane.f32.xlu0 %v512
  %v514 = vpop.xlane.xlu0 %513
  %v515 = vsel %vm120, %v401, 0.0
  %516 = vadd.xlane.f32.xlu0 %v515
  %v517 = vpop.xlane.xlu0 %516
  %v518 = vsel %vm120, %v402, 0.0
  %519 = vadd.xlane.f32.xlu0 %v518
  %v520 = vpop.xlane.xlu0 %519
  %v521 = vsel %vm120, %v403, 0.0
  %522 = vadd.xlane.f32.xlu0 %v521
  %v523 = vpop.xlane.xlu0 %522
  %v524 = vsel %vm120, %v404, 0.0
  %525 = vadd.xlane.f32.xlu0 %v524
  %v526 = vpop.xlane.xlu0 %525
  %v527 = vsel %vm120, %v405, 0.0
  %528 = vadd.xlane.f32.xlu0 %v527
  %v529 = vpop.xlane.xlu0 %528
  %v530 = vsel %vm120, %v406, 0.0
  %531 = vadd.xlane.f32.xlu0 %v530
  %v532 = vpop.xlane.xlu0 %531
  %v533 = vsel %vm120, %v407, 0.0
  %534 = vadd.xlane.f32.xlu0 %v533
  %v535 = vpop.xlane.xlu0 %534
  %v536 = vsel %vm120, %v408, 0.0
  %537 = vadd.xlane.f32.xlu0 %v536
  %v538 = vpop.xlane.xlu0 %537
  %v539 = vsel %vm120, %v409, 0.0
  %540 = vadd.xlane.f32.xlu0 %v539
  %v541 = vpop.xlane.xlu0 %540
  %v542 = vsel %vm120, %v410, 0.0
  %543 = vadd.xlane.f32.xlu0 %v542
  %v544 = vpop.xlane.xlu0 %543
  %v545 = vsel %vm120, %v411, 0.0
  %546 = vadd.xlane.f32.xlu0 %v545
  %v547 = vpop.xlane.xlu0 %546
  %v548 = vsel %vm120, %v412, 0.0
  %549 = vadd.xlane.f32.xlu0 %v548
  %v550 = vpop.xlane.xlu0 %549
  %v551 = vsel %vm120, %v413, 0.0
  %552 = vadd.xlane.f32.xlu0 %v551
  %v553 = vpop.xlane.xlu0 %552
  %v554 = vsel %vm120, %v414, 0.0
  %555 = vadd.xlane.f32.xlu0 %v554
  %v556 = vpop.xlane.xlu0 %555
  %v557 = vsel %vm120, %v415, 0.0
  %558 = vadd.xlane.f32.xlu0 %v557
  %v559 = vpop.xlane.xlu0 %558
  %v560 = vmul.f32 %v418, %v271
  %v561 = vmul.f32 %v421, %v271
  %v562 = vmul.f32 %v424, %v271
  %v563 = vmul.f32 %v427, %v271
  %v564 = vmul.f32 %v430, %v271
  %v565 = vmul.f32 %v433, %v271
  %v566 = vmul.f32 %v436, %v271
  %v567 = vmul.f32 %v439, %v271
  %v568 = vmul.f32 %v442, %v271
  %v569 = vmul.f32 %v445, %v271
  %v570 = vmul.f32 %v448, %v271
  %v571 = vmul.f32 %v451, %v271
  %v572 = vmul.f32 %v454, %v271
  %v573 = vmul.f32 %v457, %v271
  %v574 = vmul.f32 %v460, %v271
  %v575 = vmul.f32 %v463, %v271
  %v576 = vmul.f32 %v466, %v271
  %v577 = vmul.f32 %v469, %v271
  %v578 = vmul.f32 %v472, %v271
  %v579 = vmul.f32 %v475, %v271
  %v580 = vmul.f32 %v478, %v271
  %v581 = vmul.f32 %v481, %v271
  %v582 = vmul.f32 %v484, %v271
  %v583 = vmul.f32 %v487, %v271
  %v584 = vmul.f32 %v490, %v271
  %v585 = vmul.f32 %v493, %v271
  %v586 = vmul.f32 %v496, %v271
  %v587 = vmul.f32 %v499, %v271
  %v588 = vmul.f32 %v502, %v271
  %v589 = vmul.f32 %v505, %v271
  %v590 = vmul.f32 %v508, %v271
  %v591 = vmul.f32 %v511, %v271
  %v592 = vmul.f32 %v514, %v271
  %v593 = vmul.f32 %v517, %v271
  %v594 = vmul.f32 %v520, %v271
  %v595 = vmul.f32 %v523, %v271
  %v596 = vmul.f32 %v526, %v271
  %v597 = vmul.f32 %v529, %v271
  %v598 = vmul.f32 %v532, %v271
  %v599 = vmul.f32 %v535, %v271
  %v600 = vmul.f32 %v538, %v271
  %v601 = vmul.f32 %v541, %v271
  %v602 = vmul.f32 %v544, %v271
  %v603 = vmul.f32 %v547, %v271
  %v604 = vmul.f32 %v550, %v271
  %v605 = vmul.f32 %v553, %v271
  %v606 = vmul.f32 %v556, %v271
  %v607 = vmul.f32 %v559, %v271
  %v608 = vadd.f32 %v560, 1e-06
  %v609 = vadd.f32 %v561, 1e-06
  %v610 = vadd.f32 %v562, 1e-06
  %v611 = vadd.f32 %v563, 1e-06
  %v612 = vadd.f32 %v564, 1e-06
  %v613 = vadd.f32 %v565, 1e-06
  %v614 = vadd.f32 %v566, 1e-06
  %v615 = vadd.f32 %v567, 1e-06
  %v616 = vadd.f32 %v568, 1e-06
  %v617 = vadd.f32 %v569, 1e-06
  %v618 = vadd.f32 %v570, 1e-06
  %v619 = vadd.f32 %v571, 1e-06
  %v620 = vadd.f32 %v572, 1e-06
  %v621 = vadd.f32 %v573, 1e-06
  %v622 = vadd.f32 %v574, 1e-06
  %v623 = vadd.f32 %v575, 1e-06
  %v624 = vadd.f32 %v576, 1e-06
  %v625 = vadd.f32 %v577, 1e-06
  %v626 = vadd.f32 %v578, 1e-06
  %v627 = vadd.f32 %v579, 1e-06
  %v628 = vadd.f32 %v580, 1e-06
  %v629 = vadd.f32 %v581, 1e-06
  %v630 = vadd.f32 %v582, 1e-06
  %v631 = vadd.f32 %v583, 1e-06
  %v632 = vadd.f32 %v584, 1e-06
  %v633 = vadd.f32 %v585, 1e-06
  %v634 = vadd.f32 %v586, 1e-06
  %v635 = vadd.f32 %v587, 1e-06
  %v636 = vadd.f32 %v588, 1e-06
  %v637 = vadd.f32 %v589, 1e-06
  %v638 = vadd.f32 %v590, 1e-06
  %v639 = vadd.f32 %v591, 1e-06
  %v640 = vadd.f32 %v592, 1e-06
  %v641 = vadd.f32 %v593, 1e-06
  %v642 = vadd.f32 %v594, 1e-06
  %v643 = vadd.f32 %v595, 1e-06
  %v644 = vadd.f32 %v596, 1e-06
  %v645 = vadd.f32 %v597, 1e-06
  %v646 = vadd.f32 %v598, 1e-06
  %v647 = vadd.f32 %v599, 1e-06
  %v648 = vadd.f32 %v600, 1e-06
  %v649 = vadd.f32 %v601, 1e-06
  %v650 = vadd.f32 %v602, 1e-06
  %v651 = vadd.f32 %v603, 1e-06
  %v652 = vadd.f32 %v604, 1e-06
  %v653 = vadd.f32 %v605, 1e-06
  %v654 = vadd.f32 %v606, 1e-06
  %v655 = vadd.f32 %v607, 1e-06
  %v656 = vrsqrt.pop %v608
  %v657 = vmul.f32 %v656, %v608
  %v658 = vmul.f32 %v657, %v656
  %v659 = vmul.f32 0.5, %v658
  %v660 = vsub.f32 1.5, %v659
  %v661 = vmul.f32 %v656, %v660
  %vm662 = vweird.f32 %v608
  %vm663 = vweird.f32 %v656
  %vm664 = vmor %vm662, %vm663
  %v665 = vsel %vm664, %v656, %v661
  %v666 = vrsqrt.pop %v609
  %v667 = vmul.f32 %v666, %v609
  %v668 = vmul.f32 %v667, %v666
  %v669 = vmul.f32 0.5, %v668
  %v670 = vsub.f32 1.5, %v669
  %v671 = vmul.f32 %v666, %v670
  %vm672 = vweird.f32 %v609
  %vm673 = vweird.f32 %v666
  %vm674 = vmor %vm672, %vm673
  %v675 = vsel %vm674, %v666, %v671
  %v676 = vrsqrt.pop %v610
  %v677 = vmul.f32 %v676, %v610
  %v678 = vmul.f32 %v677, %v676
  %v679 = vmul.f32 0.5, %v678
  %v680 = vsub.f32 1.5, %v679
  %v681 = vmul.f32 %v676, %v680
  %vm682 = vweird.f32 %v610
  %vm683 = vweird.f32 %v676
  %vm684 = vmor %vm682, %vm683
  %v685 = vsel %vm684, %v676, %v681
  %v686 = vrsqrt.pop %v611
  %v687 = vmul.f32 %v686, %v611
  %v688 = vmul.f32 %v687, %v686
  %v689 = vmul.f32 0.5, %v688
  %v690 = vsub.f32 1.5, %v689
  %v691 = vmul.f32 %v686, %v690
  %vm692 = vweird.f32 %v611
  %vm693 = vweird.f32 %v686
  %vm694 = vmor %vm692, %vm693
  %v695 = vsel %vm694, %v686, %v691
  %v696 = vrsqrt.pop %v612
  %v697 = vmul.f32 %v696, %v612
  %v698 = vmul.f32 %v697, %v696
  %v699 = vmul.f32 0.5, %v698
  %v700 = vsub.f32 1.5, %v699
  %v701 = vmul.f32 %v696, %v700
  %vm702 = vweird.f32 %v612
  %vm703 = vweird.f32 %v696
  %vm704 = vmor %vm702, %vm703
  %v705 = vsel %vm704, %v696, %v701
  %v706 = vrsqrt.pop %v613
  %v707 = vmul.f32 %v706, %v613
  %v708 = vmul.f32 %v707, %v706
  %v709 = vmul.f32 0.5, %v708
  %v710 = vsub.f32 1.5, %v709
  %v711 = vmul.f32 %v706, %v710
  %vm712 = vweird.f32 %v613
  %vm713 = vweird.f32 %v706
  %vm714 = vmor %vm712, %vm713
  %v715 = vsel %vm714, %v706, %v711
  %v716 = vrsqrt.pop %v614
  %v717 = vmul.f32 %v716, %v614
  %v718 = vmul.f32 %v717, %v716
  %v719 = vmul.f32 0.5, %v718
  %v720 = vsub.f32 1.5, %v719
  %v721 = vmul.f32 %v716, %v720
  %vm722 = vweird.f32 %v614
  %vm723 = vweird.f32 %v716
  %vm724 = vmor %vm722, %vm723
  %v725 = vsel %vm724, %v716, %v721
  %v726 = vrsqrt.pop %v615
  %v727 = vmul.f32 %v726, %v615
  %v728 = vmul.f32 %v727, %v726
  %v729 = vmul.f32 0.5, %v728
  %v730 = vsub.f32 1.5, %v729
  %v731 = vmul.f32 %v726, %v730
  %vm732 = vweird.f32 %v615
  %vm733 = vweird.f32 %v726
  %vm734 = vmor %vm732, %vm733
  %v735 = vsel %vm734, %v726, %v731
  %v736 = vrsqrt.pop %v616
  %v737 = vmul.f32 %v736, %v616
  %v738 = vmul.f32 %v737, %v736
  %v739 = vmul.f32 0.5, %v738
  %v740 = vsub.f32 1.5, %v739
  %v741 = vmul.f32 %v736, %v740
  %vm742 = vweird.f32 %v616
  %vm743 = vweird.f32 %v736
  %vm744 = vmor %vm742, %vm743
  %v745 = vsel %vm744, %v736, %v741
  %v746 = vrsqrt.pop %v617
  %v747 = vmul.f32 %v746, %v617
  %v748 = vmul.f32 %v747, %v746
  %v749 = vmul.f32 0.5, %v748
  %v750 = vsub.f32 1.5, %v749
  %v751 = vmul.f32 %v746, %v750
  %vm752 = vweird.f32 %v617
  %vm753 = vweird.f32 %v746
  %vm754 = vmor %vm752, %vm753
  %v755 = vsel %vm754, %v746, %v751
  %v756 = vrsqrt.pop %v618
  %v757 = vmul.f32 %v756, %v618
  %v758 = vmul.f32 %v757, %v756
  %v759 = vmul.f32 0.5, %v758
  %v760 = vsub.f32 1.5, %v759
  %v761 = vmul.f32 %v756, %v760
  %vm762 = vweird.f32 %v618
  %vm763 = vweird.f32 %v756
  %vm764 = vmor %vm762, %vm763
  %v765 = vsel %vm764, %v756, %v761
  %v766 = vrsqrt.pop %v619
  %v767 = vmul.f32 %v766, %v619
  %v768 = vmul.f32 %v767, %v766
  %v769 = vmul.f32 0.5, %v768
  %v770 = vsub.f32 1.5, %v769
  %v771 = vmul.f32 %v766, %v770
  %vm772 = vweird.f32 %v619
  %vm773 = vweird.f32 %v766
  %vm774 = vmor %vm772, %vm773
  %v775 = vsel %vm774, %v766, %v771
  %v776 = vrsqrt.pop %v620
  %v777 = vmul.f32 %v776, %v620
  %v778 = vmul.f32 %v777, %v776
  %v779 = vmul.f32 0.5, %v778
  %v780 = vsub.f32 1.5, %v779
  %v781 = vmul.f32 %v776, %v780
  %vm782 = vweird.f32 %v620
  %vm783 = vweird.f32 %v776
  %vm784 = vmor %vm782, %vm783
  %v785 = vsel %vm784, %v776, %v781
  %v786 = vrsqrt.pop %v621
  %v787 = vmul.f32 %v786, %v621
  %v788 = vmul.f32 %v787, %v786
  %v789 = vmul.f32 0.5, %v788
  %v790 = vsub.f32 1.5, %v789
  %v791 = vmul.f32 %v786, %v790
  %vm792 = vweird.f32 %v621
  %vm793 = vweird.f32 %v786
  %vm794 = vmor %vm792, %vm793
  %v795 = vsel %vm794, %v786, %v791
  %v796 = vrsqrt.pop %v622
  %v797 = vmul.f32 %v796, %v622
  %v798 = vmul.f32 %v797, %v796
  %v799 = vmul.f32 0.5, %v798
  %v800 = vsub.f32 1.5, %v799
  %v801 = vmul.f32 %v796, %v800
  %vm802 = vweird.f32 %v622
  %vm803 = vweird.f32 %v796
  %vm804 = vmor %vm802, %vm803
  %v805 = vsel %vm804, %v796, %v801
  %v806 = vrsqrt.pop %v623
  %v807 = vmul.f32 %v806, %v623
  %v808 = vmul.f32 %v807, %v806
  %v809 = vmul.f32 0.5, %v808
  %v810 = vsub.f32 1.5, %v809
  %v811 = vmul.f32 %v806, %v810
  %vm812 = vweird.f32 %v623
  %vm813 = vweird.f32 %v806
  %vm814 = vmor %vm812, %vm813
  %v815 = vsel %vm814, %v806, %v811
  %v816 = vrsqrt.pop %v624
  %v817 = vmul.f32 %v816, %v624
  %v818 = vmul.f32 %v817, %v816
  %v819 = vmul.f32 0.5, %v818
  %v820 = vsub.f32 1.5, %v819
  %v821 = vmul.f32 %v816, %v820
  %vm822 = vweird.f32 %v624
  %vm823 = vweird.f32 %v816
  %vm824 = vmor %vm822, %vm823
  %v825 = vsel %vm824, %v816, %v821
  %v826 = vrsqrt.pop %v625
  %v827 = vmul.f32 %v826, %v625
  %v828 = vmul.f32 %v827, %v826
  %v829 = vmul.f32 0.5, %v828
  %v830 = vsub.f32 1.5, %v829
  %v831 = vmul.f32 %v826, %v830
  %vm832 = vweird.f32 %v625
  %vm833 = vweird.f32 %v826
  %vm834 = vmor %vm832, %vm833
  %v835 = vsel %vm834, %v826, %v831
  %v836 = vrsqrt.pop %v626
  %v837 = vmul.f32 %v836, %v626
  %v838 = vmul.f32 %v837, %v836
  %v839 = vmul.f32 0.5, %v838
  %v840 = vsub.f32 1.5, %v839
  %v841 = vmul.f32 %v836, %v840
  %vm842 = vweird.f32 %v626
  %vm843 = vweird.f32 %v836
  %vm844 = vmor %vm842, %vm843
  %v845 = vsel %vm844, %v836, %v841
  %v846 = vrsqrt.pop %v627
  %v847 = vmul.f32 %v846, %v627
  %v848 = vmul.f32 %v847, %v846
  %v849 = vmul.f32 0.5, %v848
  %v850 = vsub.f32 1.5, %v849
  %v851 = vmul.f32 %v846, %v850
  %vm852 = vweird.f32 %v627
  %vm853 = vweird.f32 %v846
  %vm854 = vmor %vm852, %vm853
  %v855 = vsel %vm854, %v846, %v851
  %v856 = vrsqrt.pop %v628
  %v857 = vmul.f32 %v856, %v628
  %v858 = vmul.f32 %v857, %v856
  %v859 = vmul.f32 0.5, %v858
  %v860 = vsub.f32 1.5, %v859
  %v861 = vmul.f32 %v856, %v860
  %vm862 = vweird.f32 %v628
  %vm863 = vweird.f32 %v856
  %vm864 = vmor %vm862, %vm863
  %v865 = vsel %vm864, %v856, %v861
  %v866 = vrsqrt.pop %v629
  %v867 = vmul.f32 %v866, %v629
  %v868 = vmul.f32 %v867, %v866
  %v869 = vmul.f32 0.5, %v868
  %v870 = vsub.f32 1.5, %v869
  %v871 = vmul.f32 %v866, %v870
  %vm872 = vweird.f32 %v629
  %vm873 = vweird.f32 %v866
  %vm874 = vmor %vm872, %vm873
  %v875 = vsel %vm874, %v866, %v871
  %v876 = vrsqrt.pop %v630
  %v877 = vmul.f32 %v876, %v630
  %v878 = vmul.f32 %v877, %v876
  %v879 = vmul.f32 0.5, %v878
  %v880 = vsub.f32 1.5, %v879
  %v881 = vmul.f32 %v876, %v880
  %vm882 = vweird.f32 %v630
  %vm883 = vweird.f32 %v876
  %vm884 = vmor %vm882, %vm883
  %v885 = vsel %vm884, %v876, %v881
  %v886 = vrsqrt.pop %v631
  %v887 = vmul.f32 %v886, %v631
  %v888 = vmul.f32 %v887, %v886
  %v889 = vmul.f32 0.5, %v888
  %v890 = vsub.f32 1.5, %v889
  %v891 = vmul.f32 %v886, %v890
  %vm892 = vweird.f32 %v631
  %vm893 = vweird.f32 %v886
  %vm894 = vmor %vm892, %vm893
  %v895 = vsel %vm894, %v886, %v891
  %v896 = vrsqrt.pop %v632
  %v897 = vmul.f32 %v896, %v632
  %v898 = vmul.f32 %v897, %v896
  %v899 = vmul.f32 0.5, %v898
  %v900 = vsub.f32 1.5, %v899
  %v901 = vmul.f32 %v896, %v900
  %vm902 = vweird.f32 %v632
  %vm903 = vweird.f32 %v896
  %vm904 = vmor %vm902, %vm903
  %v905 = vsel %vm904, %v896, %v901
  %v906 = vrsqrt.pop %v633
  %v907 = vmul.f32 %v906, %v633
  %v908 = vmul.f32 %v907, %v906
  %v909 = vmul.f32 0.5, %v908
  %v910 = vsub.f32 1.5, %v909
  %v911 = vmul.f32 %v906, %v910
  %vm912 = vweird.f32 %v633
  %vm913 = vweird.f32 %v906
  %vm914 = vmor %vm912, %vm913
  %v915 = vsel %vm914, %v906, %v911
  %v916 = vrsqrt.pop %v634
  %v917 = vmul.f32 %v916, %v634
  %v918 = vmul.f32 %v917, %v916
  %v919 = vmul.f32 0.5, %v918
  %v920 = vsub.f32 1.5, %v919
  %v921 = vmul.f32 %v916, %v920
  %vm922 = vweird.f32 %v634
  %vm923 = vweird.f32 %v916
  %vm924 = vmor %vm922, %vm923
  %v925 = vsel %vm924, %v916, %v921
  %v926 = vrsqrt.pop %v635
  %v927 = vmul.f32 %v926, %v635
  %v928 = vmul.f32 %v927, %v926
  %v929 = vmul.f32 0.5, %v928
  %v930 = vsub.f32 1.5, %v929
  %v931 = vmul.f32 %v926, %v930
  %vm932 = vweird.f32 %v635
  %vm933 = vweird.f32 %v926
  %vm934 = vmor %vm932, %vm933
  %v935 = vsel %vm934, %v926, %v931
  %v936 = vrsqrt.pop %v636
  %v937 = vmul.f32 %v936, %v636
  %v938 = vmul.f32 %v937, %v936
  %v939 = vmul.f32 0.5, %v938
  %v940 = vsub.f32 1.5, %v939
  %v941 = vmul.f32 %v936, %v940
  %vm942 = vweird.f32 %v636
  %vm943 = vweird.f32 %v936
  %vm944 = vmor %vm942, %vm943
  %v945 = vsel %vm944, %v936, %v941
  %v946 = vrsqrt.pop %v637
  %v947 = vmul.f32 %v946, %v637
  %v948 = vmul.f32 %v947, %v946
  %v949 = vmul.f32 0.5, %v948
  %v950 = vsub.f32 1.5, %v949
  %v951 = vmul.f32 %v946, %v950
  %vm952 = vweird.f32 %v637
  %vm953 = vweird.f32 %v946
  %vm954 = vmor %vm952, %vm953
  %v955 = vsel %vm954, %v946, %v951
  %v956 = vrsqrt.pop %v638
  %v957 = vmul.f32 %v956, %v638
  %v958 = vmul.f32 %v957, %v956
  %v959 = vmul.f32 0.5, %v958
  %v960 = vsub.f32 1.5, %v959
  %v961 = vmul.f32 %v956, %v960
  %vm962 = vweird.f32 %v638
  %vm963 = vweird.f32 %v956
  %vm964 = vmor %vm962, %vm963
  %v965 = vsel %vm964, %v956, %v961
  %v966 = vrsqrt.pop %v639
  %v967 = vmul.f32 %v966, %v639
  %v968 = vmul.f32 %v967, %v966
  %v969 = vmul.f32 0.5, %v968
  %v970 = vsub.f32 1.5, %v969
  %v971 = vmul.f32 %v966, %v970
  %vm972 = vweird.f32 %v639
  %vm973 = vweird.f32 %v966
  %vm974 = vmor %vm972, %vm973
  %v975 = vsel %vm974, %v966, %v971
  %v976 = vrsqrt.pop %v640
  %v977 = vmul.f32 %v976, %v640
  %v978 = vmul.f32 %v977, %v976
  %v979 = vmul.f32 0.5, %v978
  %v980 = vsub.f32 1.5, %v979
  %v981 = vmul.f32 %v976, %v980
  %vm982 = vweird.f32 %v640
  %vm983 = vweird.f32 %v976
  %vm984 = vmor %vm982, %vm983
  %v985 = vsel %vm984, %v976, %v981
  %v986 = vrsqrt.pop %v641
  %v987 = vmul.f32 %v986, %v641
  %v988 = vmul.f32 %v987, %v986
  %v989 = vmul.f32 0.5, %v988
  %v990 = vsub.f32 1.5, %v989
  %v991 = vmul.f32 %v986, %v990
  %vm992 = vweird.f32 %v641
  %vm993 = vweird.f32 %v986
  %vm994 = vmor %vm992, %vm993
  %v995 = vsel %vm994, %v986, %v991
  %v996 = vrsqrt.pop %v642
  %v997 = vmul.f32 %v996, %v642
  %v998 = vmul.f32 %v997, %v996
  %v999 = vmul.f32 0.5, %v998
  %v1000 = vsub.f32 1.5, %v999
  %v1001 = vmul.f32 %v996, %v1000
  %vm1002 = vweird.f32 %v642
  %vm1003 = vweird.f32 %v996
  %vm1004 = vmor %vm1002, %vm1003
  %v1005 = vsel %vm1004, %v996, %v1001
  %v1006 = vrsqrt.pop %v643
  %v1007 = vmul.f32 %v1006, %v643
  %v1008 = vmul.f32 %v1007, %v1006
  %v1009 = vmul.f32 0.5, %v1008
  %v1010 = vsub.f32 1.5, %v1009
  %v1011 = vmul.f32 %v1006, %v1010
  %vm1012 = vweird.f32 %v643
  %vm1013 = vweird.f32 %v1006
  %vm1014 = vmor %vm1012, %vm1013
  %v1015 = vsel %vm1014, %v1006, %v1011
  %v1016 = vrsqrt.pop %v644
  %v1017 = vmul.f32 %v1016, %v644
  %v1018 = vmul.f32 %v1017, %v1016
  %v1019 = vmul.f32 0.5, %v1018
  %v1020 = vsub.f32 1.5, %v1019
  %v1021 = vmul.f32 %v1016, %v1020
  %vm1022 = vweird.f32 %v644
  %vm1023 = vweird.f32 %v1016
  %vm1024 = vmor %vm1022, %vm1023
  %v1025 = vsel %vm1024, %v1016, %v1021
  %v1026 = vrsqrt.pop %v645
  %v1027 = vmul.f32 %v1026, %v645
  %v1028 = vmul.f32 %v1027, %v1026
  %v1029 = vmul.f32 0.5, %v1028
  %v1030 = vsub.f32 1.5, %v1029
  %v1031 = vmul.f32 %v1026, %v1030
  %vm1032 = vweird.f32 %v645
  %vm1033 = vweird.f32 %v1026
  %vm1034 = vmor %vm1032, %vm1033
  %v1035 = vsel %vm1034, %v1026, %v1031
  %v1036 = vrsqrt.pop %v646
  %v1037 = vmul.f32 %v1036, %v646
  %v1038 = vmul.f32 %v1037, %v1036
  %v1039 = vmul.f32 0.5, %v1038
  %v1040 = vsub.f32 1.5, %v1039
  %v1041 = vmul.f32 %v1036, %v1040
  %vm1042 = vweird.f32 %v646
  %vm1043 = vweird.f32 %v1036
  %vm1044 = vmor %vm1042, %vm1043
  %v1045 = vsel %vm1044, %v1036, %v1041
  %v1046 = vrsqrt.pop %v647
  %v1047 = vmul.f32 %v1046, %v647
  %v1048 = vmul.f32 %v1047, %v1046
  %v1049 = vmul.f32 0.5, %v1048
  %v1050 = vsub.f32 1.5, %v1049
  %v1051 = vmul.f32 %v1046, %v1050
  %vm1052 = vweird.f32 %v647
  %vm1053 = vweird.f32 %v1046
  %vm1054 = vmor %vm1052, %vm1053
  %v1055 = vsel %vm1054, %v1046, %v1051
  %v1056 = vrsqrt.pop %v648
  %v1057 = vmul.f32 %v1056, %v648
  %v1058 = vmul.f32 %v1057, %v1056
  %v1059 = vmul.f32 0.5, %v1058
  %v1060 = vsub.f32 1.5, %v1059
  %v1061 = vmul.f32 %v1056, %v1060
  %vm1062 = vweird.f32 %v648
  %vm1063 = vweird.f32 %v1056
  %vm1064 = vmor %vm1062, %vm1063
  %v1065 = vsel %vm1064, %v1056, %v1061
  %v1066 = vrsqrt.pop %v649
  %v1067 = vmul.f32 %v1066, %v649
  %v1068 = vmul.f32 %v1067, %v1066
  %v1069 = vmul.f32 0.5, %v1068
  %v1070 = vsub.f32 1.5, %v1069
  %v1071 = vmul.f32 %v1066, %v1070
  %vm1072 = vweird.f32 %v649
  %vm1073 = vweird.f32 %v1066
  %vm1074 = vmor %vm1072, %vm1073
  %v1075 = vsel %vm1074, %v1066, %v1071
  %v1076 = vrsqrt.pop %v650
  %v1077 = vmul.f32 %v1076, %v650
  %v1078 = vmul.f32 %v1077, %v1076
  %v1079 = vmul.f32 0.5, %v1078
  %v1080 = vsub.f32 1.5, %v1079
  %v1081 = vmul.f32 %v1076, %v1080
  %vm1082 = vweird.f32 %v650
  %vm1083 = vweird.f32 %v1076
  %vm1084 = vmor %vm1082, %vm1083
  %v1085 = vsel %vm1084, %v1076, %v1081
  %v1086 = vrsqrt.pop %v651
  %v1087 = vmul.f32 %v1086, %v651
  %v1088 = vmul.f32 %v1087, %v1086
  %v1089 = vmul.f32 0.5, %v1088
  %v1090 = vsub.f32 1.5, %v1089
  %v1091 = vmul.f32 %v1086, %v1090
  %vm1092 = vweird.f32 %v651
  %vm1093 = vweird.f32 %v1086
  %vm1094 = vmor %vm1092, %vm1093
  %v1095 = vsel %vm1094, %v1086, %v1091
  %v1096 = vrsqrt.pop %v652
  %v1097 = vmul.f32 %v1096, %v652
  %v1098 = vmul.f32 %v1097, %v1096
  %v1099 = vmul.f32 0.5, %v1098
  %v1100 = vsub.f32 1.5, %v1099
  %v1101 = vmul.f32 %v1096, %v1100
  %vm1102 = vweird.f32 %v652
  %vm1103 = vweird.f32 %v1096
  %vm1104 = vmor %vm1102, %vm1103
  %v1105 = vsel %vm1104, %v1096, %v1101
  %v1106 = vrsqrt.pop %v653
  %v1107 = vmul.f32 %v1106, %v653
  %v1108 = vmul.f32 %v1107, %v1106
  %v1109 = vmul.f32 0.5, %v1108
  %v1110 = vsub.f32 1.5, %v1109
  %v1111 = vmul.f32 %v1106, %v1110
  %vm1112 = vweird.f32 %v653
  %vm1113 = vweird.f32 %v1106
  %vm1114 = vmor %vm1112, %vm1113
  %v1115 = vsel %vm1114, %v1106, %v1111
  %v1116 = vrsqrt.pop %v654
  %v1117 = vmul.f32 %v1116, %v654
  %v1118 = vmul.f32 %v1117, %v1116
  %v1119 = vmul.f32 0.5, %v1118
  %v1120 = vsub.f32 1.5, %v1119
  %v1121 = vmul.f32 %v1116, %v1120
  %vm1122 = vweird.f32 %v654
  %vm1123 = vweird.f32 %v1116
  %vm1124 = vmor %vm1122, %vm1123
  %v1125 = vsel %vm1124, %v1116, %v1121
  %v1126 = vrsqrt.pop %v655
  %v1127 = vmul.f32 %v1126, %v655
  %v1128 = vmul.f32 %v1127, %v1126
  %v1129 = vmul.f32 0.5, %v1128
  %v1130 = vsub.f32 1.5, %v1129
  %v1131 = vmul.f32 %v1126, %v1130
  %vm1132 = vweird.f32 %v655
  %vm1133 = vweird.f32 %v1126
  %vm1134 = vmor %vm1132, %vm1133
  %v1135 = vsel %vm1134, %v1126, %v1131
  %v1136 = vmul.f32 %v320, %v665
  %v1137 = vmul.f32 %v321, %v675
  %v1138 = vmul.f32 %v322, %v685
  %v1139 = vmul.f32 %v323, %v695
  %v1140 = vmul.f32 %v324, %v705
  %v1141 = vmul.f32 %v325, %v715
  %v1142 = vmul.f32 %v326, %v725
  %v1143 = vmul.f32 %v327, %v735
  %v1144 = vmul.f32 %v328, %v745
  %v1145 = vmul.f32 %v329, %v755
  %v1146 = vmul.f32 %v330, %v765
  %v1147 = vmul.f32 %v331, %v775
  %v1148 = vmul.f32 %v332, %v785
  %v1149 = vmul.f32 %v333, %v795
  %v1150 = vmul.f32 %v334, %v805
  %v1151 = vmul.f32 %v335, %v815
  %v1152 = vmul.f32 %v336, %v825
  %v1153 = vmul.f32 %v337, %v835
  %v1154 = vmul.f32 %v338, %v845
  %v1155 = vmul.f32 %v339, %v855
  %v1156 = vmul.f32 %v340, %v865
  %v1157 = vmul.f32 %v341, %v875
  %v1158 = vmul.f32 %v342, %v885
  %v1159 = vmul.f32 %v343, %v895
  %v1160 = vmul.f32 %v344, %v905
  %v1161 = vmul.f32 %v345, %v915
  %v1162 = vmul.f32 %v346, %v925
  %v1163 = vmul.f32 %v347, %v935
  %v1164 = vmul.f32 %v348, %v945
  %v1165 = vmul.f32 %v349, %v955
  %v1166 = vmul.f32 %v350, %v965
  %v1167 = vmul.f32 %v351, %v975
  %v1168 = vmul.f32 %v352, %v985
  %v1169 = vmul.f32 %v353, %v995
  %v1170 = vmul.f32 %v354, %v1005
  %v1171 = vmul.f32 %v355, %v1015
  %v1172 = vmul.f32 %v356, %v1025
  %v1173 = vmul.f32 %v357, %v1035
  %v1174 = vmul.f32 %v358, %v1045
  %v1175 = vmul.f32 %v359, %v1055
  %v1176 = vmul.f32 %v360, %v1065
  %v1177 = vmul.f32 %v361, %v1075
  %v1178 = vmul.f32 %v362, %v1085
  %v1179 = vmul.f32 %v363, %v1095
  %v1180 = vmul.f32 %v364, %v1105
  %v1181 = vmul.f32 %v365, %v1115
  %v1182 = vmul.f32 %v366, %v1125
  %v1183 = vmul.f32 %v367, %v1135
  %v1184 = vld [vmem:[%s1] sm:$0x1]
  %v1186 = vperm.slane %v1184, 0
  %v1188 = vmul.f32 %v1136, %v1186
  %v1189 = vmul.f32 %v1137, %v1186
  %v1190 = vmul.f32 %v1138, %v1186
  %v1191 = vmul.f32 %v1139, %v1186
  %v1192 = vmul.f32 %v1140, %v1186
  %v1193 = vmul.f32 %v1141, %v1186
  %v1194 = vmul.f32 %v1142, %v1186
  %v1195 = vmul.f32 %v1143, %v1186
  %v1196 = vmul.f32 %v1144, %v1186
  %v1197 = vmul.f32 %v1145, %v1186
  %v1198 = vmul.f32 %v1146, %v1186
  %v1199 = vmul.f32 %v1147, %v1186
  %v1200 = vmul.f32 %v1148, %v1186
  %v1201 = vmul.f32 %v1149, %v1186
  %v1202 = vmul.f32 %v1150, %v1186
  %v1203 = vmul.f32 %v1151, %v1186
  %v1204 = vmul.f32 %v1152, %v1186
  %v1205 = vmul.f32 %v1153, %v1186
  %v1206 = vmul.f32 %v1154, %v1186
  %v1207 = vmul.f32 %v1155, %v1186
  %v1208 = vmul.f32 %v1156, %v1186
  %v1209 = vmul.f32 %v1157, %v1186
  %v1210 = vmul.f32 %v1158, %v1186
  %v1211 = vmul.f32 %v1159, %v1186
  %v1212 = vmul.f32 %v1160, %v1186
  %v1213 = vmul.f32 %v1161, %v1186
  %v1214 = vmul.f32 %v1162, %v1186
  %v1215 = vmul.f32 %v1163, %v1186
  %v1216 = vmul.f32 %v1164, %v1186
  %v1217 = vmul.f32 %v1165, %v1186
  %v1218 = vmul.f32 %v1166, %v1186
  %v1219 = vmul.f32 %v1167, %v1186
  %v1220 = vmul.f32 %v1168, %v1186
  %v1221 = vmul.f32 %v1169, %v1186
  %v1222 = vmul.f32 %v1170, %v1186
  %v1223 = vmul.f32 %v1171, %v1186
  %v1224 = vmul.f32 %v1172, %v1186
  %v1225 = vmul.f32 %v1173, %v1186
  %v1226 = vmul.f32 %v1174, %v1186
  %v1227 = vmul.f32 %v1175, %v1186
  %v1228 = vmul.f32 %v1176, %v1186
  %v1229 = vmul.f32 %v1177, %v1186
  %v1230 = vmul.f32 %v1178, %v1186
  %v1231 = vmul.f32 %v1179, %v1186
  %v1232 = vmul.f32 %v1180, %v1186
  %v1233 = vmul.f32 %v1181, %v1186
  %v1234 = vmul.f32 %v1182, %v1186
  %v1235 = vmul.f32 %v1183, %v1186
  %v1236 = vld [vmem:[%s2] sm:$0x1]
  %v1238 = vperm.slane %v1236, 0
  %v1240 = vadd.f32 %v1188, %v1238
  %v1241 = vadd.f32 %v1189, %v1238
  %v1242 = vadd.f32 %v1190, %v1238
  %v1243 = vadd.f32 %v1191, %v1238
  %v1244 = vadd.f32 %v1192, %v1238
  %v1245 = vadd.f32 %v1193, %v1238
  %v1246 = vadd.f32 %v1194, %v1238
  %v1247 = vadd.f32 %v1195, %v1238
  %v1248 = vadd.f32 %v1196, %v1238
  %v1249 = vadd.f32 %v1197, %v1238
  %v1250 = vadd.f32 %v1198, %v1238
  %v1251 = vadd.f32 %v1199, %v1238
  %v1252 = vadd.f32 %v1200, %v1238
  %v1253 = vadd.f32 %v1201, %v1238
  %v1254 = vadd.f32 %v1202, %v1238
  %v1255 = vadd.f32 %v1203, %v1238
  %v1256 = vadd.f32 %v1204, %v1238
  %v1257 = vadd.f32 %v1205, %v1238
  %v1258 = vadd.f32 %v1206, %v1238
  %v1259 = vadd.f32 %v1207, %v1238
  %v1260 = vadd.f32 %v1208, %v1238
  %v1261 = vadd.f32 %v1209, %v1238
  %v1262 = vadd.f32 %v1210, %v1238
  %v1263 = vadd.f32 %v1211, %v1238
  %v1264 = vadd.f32 %v1212, %v1238
  %v1265 = vadd.f32 %v1213, %v1238
  %v1266 = vadd.f32 %v1214, %v1238
  %v1267 = vadd.f32 %v1215, %v1238
  %v1268 = vadd.f32 %v1216, %v1238
  %v1269 = vadd.f32 %v1217, %v1238
  %v1270 = vadd.f32 %v1218, %v1238
  %v1271 = vadd.f32 %v1219, %v1238
  %v1272 = vadd.f32 %v1220, %v1238
  %v1273 = vadd.f32 %v1221, %v1238
  %v1274 = vadd.f32 %v1222, %v1238
  %v1275 = vadd.f32 %v1223, %v1238
  %v1276 = vadd.f32 %v1224, %v1238
  %v1277 = vadd.f32 %v1225, %v1238
  %v1278 = vadd.f32 %v1226, %v1238
  %v1279 = vadd.f32 %v1227, %v1238
  %v1280 = vadd.f32 %v1228, %v1238
  %v1281 = vadd.f32 %v1229, %v1238
  %v1282 = vadd.f32 %v1230, %v1238
  %v1283 = vadd.f32 %v1231, %v1238
  %v1284 = vadd.f32 %v1232, %v1238
  %v1285 = vadd.f32 %v1233, %v1238
  %v1286 = vadd.f32 %v1234, %v1238
  %v1287 = vadd.f32 %v1235, %v1238
  %v1288 = vpack.c.bf16 %v1241, %v1240
  %v1289 = vpack.c.bf16 %v1243, %v1242
  %v1290 = vpack.c.bf16 %v1245, %v1244
  %v1291 = vpack.c.bf16 %v1247, %v1246
  %v1292 = vpack.c.bf16 %v1249, %v1248
  %v1293 = vpack.c.bf16 %v1251, %v1250
  %v1294 = vpack.c.bf16 %v1253, %v1252
  %v1295 = vpack.c.bf16 %v1255, %v1254
  %v1296 = vpack.c.bf16 %v1257, %v1256
  %v1297 = vpack.c.bf16 %v1259, %v1258
  %v1298 = vpack.c.bf16 %v1261, %v1260
  %v1299 = vpack.c.bf16 %v1263, %v1262
  %v1300 = vpack.c.bf16 %v1265, %v1264
  %v1301 = vpack.c.bf16 %v1267, %v1266
  %v1302 = vpack.c.bf16 %v1269, %v1268
  %v1303 = vpack.c.bf16 %v1271, %v1270
  %v1304 = vpack.c.bf16 %v1273, %v1272
  %v1305 = vpack.c.bf16 %v1275, %v1274
  %v1306 = vpack.c.bf16 %v1277, %v1276
  %v1307 = vpack.c.bf16 %v1279, %v1278
  %v1308 = vpack.c.bf16 %v1281, %v1280
  %v1309 = vpack.c.bf16 %v1283, %v1282
  %v1310 = vpack.c.bf16 %v1285, %v1284
  %v1311 = vpack.c.bf16 %v1287, %v1286
  %v1312 = vld [vmem:[%s3] sm:$0xf]
  %v1313 = vld [vmem:[%s3 + $0x4] sm:$0xf]
  %v1314 = vld [vmem:[%s3 + $0x8] sm:$0xf]
  %v1315 = vld [vmem:[%s3 + $0xc] sm:$0xf]
  %v1316 = vld [vmem:[%s4] sm:$0x1]
  %v1318 = vperm.slane %v1316, 0
  %v1324 = vunpack.c.l.b16 %v1312
  %v1325 = vunpack.c.l.b16 %v1313
  %v1326 = vunpack.c.l.b16 %v1314
  %v1327 = vunpack.c.l.b16 %v1315
  %v1328 = vpack.c.b16 %v1325, %v1324
  %v1329 = vpack.c.b16 %v1327, %v1326
  %v1333 = vsel %vm120, %v1288, 0
  %v1336 = vsel %vm120, %v1289, 0
  %v1339 = vsel %vm120, %v1290, 0
  %v1342 = vsel %vm120, %v1291, 0
  %v1345 = vsel %vm120, %v1292, 0
  %v1348 = vsel %vm120, %v1293, 0
  %v1351 = vsel %vm120, %v1294, 0
  %v1354 = vsel %vm120, %v1295, 0
  %v1357 = vsel %vm120, %v1296, 0
  %v1360 = vsel %vm120, %v1297, 0
  %v1363 = vsel %vm120, %v1298, 0
  %v1366 = vsel %vm120, %v1299, 0
  %v1369 = vsel %vm120, %v1300, 0
  %v1372 = vsel %vm120, %v1301, 0
  %v1375 = vsel %vm120, %v1302, 0
  %v1378 = vsel %vm120, %v1303, 0
  %v1381 = vsel %vm120, %v1304, 0
  %v1384 = vsel %vm120, %v1305, 0
  %v1387 = vsel %vm120, %v1306, 0
  %v1390 = vsel %vm120, %v1307, 0
  %v1393 = vsel %vm120, %v1308, 0
  %v1396 = vsel %vm120, %v1309, 0
  %v1399 = vsel %vm120, %v1310, 0
  %v1402 = vsel %vm120, %v1311, 0
  %1404 = vmatpush.bf16.msra.mxu0 0
  %1405 = vmatpush.bf16.msra.mxu0 0
  %1406 = vmatpush.bf16.msra.mxu0 0
  %1407 = vmatpush.bf16.msra.mxu0 0
  %1408 = vmatpush.bf16.msra.mxu0 0
  %1409 = vmatpush.bf16.msra.mxu0 0
  %1410 = vmatpush.bf16.msra.mxu0 %v1329
  %1411 = vmatpush.bf16.msra.mxu0 %v1328
  %1412 = vmatmul.bf16.gmra.mxu0 %v1333
  %v1413 = vpop.f32.mrf.mxu0
  %v1414 = vadd.f32 %v1318, %v1413
  %v1415 = vpop.f32.mrf.mxu0
  %v1416 = vadd.f32 %v1318, %v1415
  %1417 = vmatmul.bf16.gmra.mxu0 %v1336
  %v1418 = vpop.f32.mrf.mxu0
  %v1419 = vadd.f32 %v1318, %v1418
  %v1420 = vpop.f32.mrf.mxu0
  %v1421 = vadd.f32 %v1318, %v1420
  %1422 = vmatmul.bf16.gmra.mxu0 %v1339
  %v1423 = vpop.f32.mrf.mxu0
  %v1424 = vadd.f32 %v1318, %v1423
  %v1425 = vpop.f32.mrf.mxu0
  %v1426 = vadd.f32 %v1318, %v1425
  %1427 = vmatmul.bf16.gmra.mxu0 %v1342
  %v1428 = vpop.f32.mrf.mxu0
  %v1429 = vadd.f32 %v1318, %v1428
  %v1430 = vpop.f32.mrf.mxu0
  %v1431 = vadd.f32 %v1318, %v1430
  %1432 = vmatmul.bf16.gmra.mxu0 %v1345
  %v1433 = vpop.f32.mrf.mxu0
  %v1434 = vadd.f32 %v1318, %v1433
  %v1435 = vpop.f32.mrf.mxu0
  %v1436 = vadd.f32 %v1318, %v1435
  %1437 = vmatmul.bf16.gmra.mxu0 %v1348
  %v1438 = vpop.f32.mrf.mxu0
  %v1439 = vadd.f32 %v1318, %v1438
  %v1440 = vpop.f32.mrf.mxu0
  %v1441 = vadd.f32 %v1318, %v1440
  %1442 = vmatmul.bf16.gmra.mxu0 %v1351
  %v1443 = vpop.f32.mrf.mxu0
  %v1444 = vadd.f32 %v1318, %v1443
  %v1445 = vpop.f32.mrf.mxu0
  %v1446 = vadd.f32 %v1318, %v1445
  %1447 = vmatmul.bf16.gmra.mxu0 %v1354
  %v1448 = vpop.f32.mrf.mxu0
  %v1449 = vadd.f32 %v1318, %v1448
  %v1450 = vpop.f32.mrf.mxu0
  %v1451 = vadd.f32 %v1318, %v1450
  %1452 = vmatmul.bf16.gmra.mxu0 %v1357
  %v1453 = vpop.f32.mrf.mxu0
  %v1454 = vadd.f32 %v1318, %v1453
  %v1455 = vpop.f32.mrf.mxu0
  %v1456 = vadd.f32 %v1318, %v1455
  %1457 = vmatmul.bf16.gmra.mxu0 %v1360
  %v1458 = vpop.f32.mrf.mxu0
  %v1459 = vadd.f32 %v1318, %v1458
  %v1460 = vpop.f32.mrf.mxu0
  %v1461 = vadd.f32 %v1318, %v1460
  %1462 = vmatmul.bf16.gmra.mxu0 %v1363
  %v1463 = vpop.f32.mrf.mxu0
  %v1464 = vadd.f32 %v1318, %v1463
  %v1465 = vpop.f32.mrf.mxu0
  %v1466 = vadd.f32 %v1318, %v1465
  %1467 = vmatmul.bf16.gmra.mxu0 %v1366
  %v1468 = vpop.f32.mrf.mxu0
  %v1469 = vadd.f32 %v1318, %v1468
  %v1470 = vpop.f32.mrf.mxu0
  %v1471 = vadd.f32 %v1318, %v1470
  %1472 = vmatmul.bf16.gmra.mxu0 %v1369
  %v1473 = vpop.f32.mrf.mxu0
  %v1474 = vadd.f32 %v1318, %v1473
  %v1475 = vpop.f32.mrf.mxu0
  %v1476 = vadd.f32 %v1318, %v1475
  %1477 = vmatmul.bf16.gmra.mxu0 %v1372
  %v1478 = vpop.f32.mrf.mxu0
  %v1479 = vadd.f32 %v1318, %v1478
  %v1480 = vpop.f32.mrf.mxu0
  %v1481 = vadd.f32 %v1318, %v1480
  %1482 = vmatmul.bf16.gmra.mxu0 %v1375
  %v1483 = vpop.f32.mrf.mxu0
  %v1484 = vadd.f32 %v1318, %v1483
  %v1485 = vpop.f32.mrf.mxu0
  %v1486 = vadd.f32 %v1318, %v1485
  %1487 = vmatmul.bf16.gmra.mxu0 %v1378
  %v1488 = vpop.f32.mrf.mxu0
  %v1489 = vadd.f32 %v1318, %v1488
  %v1490 = vpop.f32.mrf.mxu0
  %v1491 = vadd.f32 %v1318, %v1490
  %1492 = vmatmul.bf16.gmra.mxu0 %v1381
  %v1493 = vpop.f32.mrf.mxu0
  %v1494 = vadd.f32 %v1318, %v1493
  %v1495 = vpop.f32.mrf.mxu0
  %v1496 = vadd.f32 %v1318, %v1495
  %1497 = vmatmul.bf16.gmra.mxu0 %v1384
  %v1498 = vpop.f32.mrf.mxu0
  %v1499 = vadd.f32 %v1318, %v1498
  %v1500 = vpop.f32.mrf.mxu0
  %v1501 = vadd.f32 %v1318, %v1500
  %1502 = vmatmul.bf16.gmra.mxu0 %v1387
  %v1503 = vpop.f32.mrf.mxu0
  %v1504 = vadd.f32 %v1318, %v1503
  %v1505 = vpop.f32.mrf.mxu0
  %v1506 = vadd.f32 %v1318, %v1505
  %1507 = vmatmul.bf16.gmra.mxu0 %v1390
  %v1508 = vpop.f32.mrf.mxu0
  %v1509 = vadd.f32 %v1318, %v1508
  %v1510 = vpop.f32.mrf.mxu0
  %v1511 = vadd.f32 %v1318, %v1510
  %1512 = vmatmul.bf16.gmra.mxu0 %v1393
  %v1513 = vpop.f32.mrf.mxu0
  %v1514 = vadd.f32 %v1318, %v1513
  %v1515 = vpop.f32.mrf.mxu0
  %v1516 = vadd.f32 %v1318, %v1515
  %1517 = vmatmul.bf16.gmra.mxu0 %v1396
  %v1518 = vpop.f32.mrf.mxu0
  %v1519 = vadd.f32 %v1318, %v1518
  %v1520 = vpop.f32.mrf.mxu0
  %v1521 = vadd.f32 %v1318, %v1520
  %1522 = vmatmul.bf16.gmra.mxu0 %v1399
  %v1523 = vpop.f32.mrf.mxu0
  %v1524 = vadd.f32 %v1318, %v1523
  %v1525 = vpop.f32.mrf.mxu0
  %v1526 = vadd.f32 %v1318, %v1525
  %1527 = vmatmul.bf16.gmra.mxu0 %v1402
  %v1528 = vpop.f32.mrf.mxu0
  %v1529 = vadd.f32 %v1318, %v1528
  %v1530 = vpop.f32.mrf.mxu0
  %v1531 = vadd.f32 %v1318, %v1530
  %1532 = vdwg.mxu0
  %v1533 = vpack.c.bf16 %v1414, %v1414
  %v1534 = vpack.c.bf16 %v1416, %v1416
  %v1535 = vpack.c.bf16 %v1419, %v1419
  %v1536 = vpack.c.bf16 %v1421, %v1421
  %v1537 = vpack.c.bf16 %v1424, %v1424
  %v1538 = vpack.c.bf16 %v1426, %v1426
  %v1539 = vpack.c.bf16 %v1429, %v1429
  %v1540 = vpack.c.bf16 %v1431, %v1431
  %v1541 = vpack.c.bf16 %v1434, %v1434
  %v1542 = vpack.c.bf16 %v1436, %v1436
  %v1543 = vpack.c.bf16 %v1439, %v1439
  %v1544 = vpack.c.bf16 %v1441, %v1441
  %v1545 = vpack.c.bf16 %v1444, %v1444
  %v1546 = vpack.c.bf16 %v1446, %v1446
  %v1547 = vpack.c.bf16 %v1449, %v1449
  %v1548 = vpack.c.bf16 %v1451, %v1451
  %v1549 = vpack.c.bf16 %v1454, %v1454
  %v1550 = vpack.c.bf16 %v1456, %v1456
  %v1551 = vpack.c.bf16 %v1459, %v1459
  %v1552 = vpack.c.bf16 %v1461, %v1461
  %v1553 = vpack.c.bf16 %v1464, %v1464
  %v1554 = vpack.c.bf16 %v1466, %v1466
  %v1555 = vpack.c.bf16 %v1469, %v1469
  %v1556 = vpack.c.bf16 %v1471, %v1471
  %v1557 = vpack.c.bf16 %v1474, %v1474
  %v1558 = vpack.c.bf16 %v1476, %v1476
  %v1559 = vpack.c.bf16 %v1479, %v1479
  %v1560 = vpack.c.bf16 %v1481, %v1481
  %v1561 = vpack.c.bf16 %v1484, %v1484
  %v1562 = vpack.c.bf16 %v1486, %v1486
  %v1563 = vpack.c.bf16 %v1489, %v1489
  %v1564 = vpack.c.bf16 %v1491, %v1491
  %v1565 = vpack.c.bf16 %v1494, %v1494
  %v1566 = vpack.c.bf16 %v1496, %v1496
  %v1567 = vpack.c.bf16 %v1499, %v1499
  %v1568 = vpack.c.bf16 %v1501, %v1501
  %v1569 = vpack.c.bf16 %v1504, %v1504
  %v1570 = vpack.c.bf16 %v1506, %v1506
  %v1571 = vpack.c.bf16 %v1509, %v1509
  %v1572 = vpack.c.bf16 %v1511, %v1511
  %v1573 = vpack.c.bf16 %v1514, %v1514
  %v1574 = vpack.c.bf16 %v1516, %v1516
  %v1575 = vpack.c.bf16 %v1519, %v1519
  %v1576 = vpack.c.bf16 %v1521, %v1521
  %v1577 = vpack.c.bf16 %v1524, %v1524
  %v1578 = vpack.c.bf16 %v1526, %v1526
  %v1579 = vpack.c.bf16 %v1529, %v1529
  %v1580 = vpack.c.bf16 %v1531, %v1531
  %vm1581 = vcmask 257024
  %1582 = vst.msk [vmem:[%s5] sm:$0xf] %vm1581, %v1533
  %1583 = vst.msk [vmem:[%s5 + $0x4] sm:$0xf] %vm1581, %v1534
  %1584 = vst.msk [vmem:[%s5 + $0x8] sm:$0xf] %vm1581, %v1535
  %1585 = vst.msk [vmem:[%s5 + $0xc] sm:$0xf] %vm1581, %v1536
  %1586 = vst.msk [vmem:[%s5 + $0x10] sm:$0xf] %vm1581, %v1537
  %1587 = vst.msk [vmem:[%s5 + $0x14] sm:$0xf] %vm1581, %v1538
  %1588 = vst.msk [vmem:[%s5 + $0x18] sm:$0xf] %vm1581, %v1539
  %1589 = vst.msk [vmem:[%s5 + $0x1c] sm:$0xf] %vm1581, %v1540
  %1590 = vst.msk [vmem:[%s5 + $0x20] sm:$0xf] %vm1581, %v1541
  %1591 = vst.msk [vmem:[%s5 + $0x24] sm:$0xf] %vm1581, %v1542
  %1592 = vst.msk [vmem:[%s5 + $0x28] sm:$0xf] %vm1581, %v1543
  %1593 = vst.msk [vmem:[%s5 + $0x2c] sm:$0xf] %vm1581, %v1544
  %1594 = vst.msk [vmem:[%s5 + $0x30] sm:$0xf] %vm1581, %v1545
  %1595 = vst.msk [vmem:[%s5 + $0x34] sm:$0xf] %vm1581, %v1546
  %1596 = vst.msk [vmem:[%s5 + $0x38] sm:$0xf] %vm1581, %v1547
  %1597 = vst.msk [vmem:[%s5 + $0x3c] sm:$0xf] %vm1581, %v1548
  %1598 = vst.msk [vmem:[%s5 + $0x40] sm:$0xf] %vm1581, %v1549
  %1599 = vst.msk [vmem:[%s5 + $0x44] sm:$0xf] %vm1581, %v1550
  %1600 = vst.msk [vmem:[%s5 + $0x48] sm:$0xf] %vm1581, %v1551
  %1601 = vst.msk [vmem:[%s5 + $0x4c] sm:$0xf] %vm1581, %v1552
  %1602 = vst.msk [vmem:[%s5 + $0x50] sm:$0xf] %vm1581, %v1553
  %1603 = vst.msk [vmem:[%s5 + $0x54] sm:$0xf] %vm1581, %v1554
  %1604 = vst.msk [vmem:[%s5 + $0x58] sm:$0xf] %vm1581, %v1555
  %1605 = vst.msk [vmem:[%s5 + $0x5c] sm:$0xf] %vm1581, %v1556
  %1606 = vst.msk [vmem:[%s5 + $0x60] sm:$0xf] %vm1581, %v1557
  %1607 = vst.msk [vmem:[%s5 + $0x64] sm:$0xf] %vm1581, %v1558
  %1608 = vst.msk [vmem:[%s5 + $0x68] sm:$0xf] %vm1581, %v1559
  %1609 = vst.msk [vmem:[%s5 + $0x6c] sm:$0xf] %vm1581, %v1560
  %1610 = vst.msk [vmem:[%s5 + $0x70] sm:$0xf] %vm1581, %v1561
  %1611 = vst.msk [vmem:[%s5 + $0x74] sm:$0xf] %vm1581, %v1562
  %1612 = vst.msk [vmem:[%s5 + $0x78] sm:$0xf] %vm1581, %v1563
  %1613 = vst.msk [vmem:[%s5 + $0x7c] sm:$0xf] %vm1581, %v1564
  %1614 = vst.msk [vmem:[%s5 + $0x80] sm:$0xf] %vm1581, %v1565
  %1615 = vst.msk [vmem:[%s5 + $0x84] sm:$0xf] %vm1581, %v1566
  %1616 = vst.msk [vmem:[%s5 + $0x88] sm:$0xf] %vm1581, %v1567
  %1617 = vst.msk [vmem:[%s5 + $0x8c] sm:$0xf] %vm1581, %v1568
  %1618 = vst.msk [vmem:[%s5 + $0x90] sm:$0xf] %vm1581, %v1569
  %1619 = vst.msk [vmem:[%s5 + $0x94] sm:$0xf] %vm1581, %v1570
  %1620 = vst.msk [vmem:[%s5 + $0x98] sm:$0xf] %vm1581, %v1571
  %1621 = vst.msk [vmem:[%s5 + $0x9c] sm:$0xf] %vm1581, %v1572
  %1622 = vst.msk [vmem:[%s5 + $0xa0] sm:$0xf] %vm1581, %v1573
  %1623 = vst.msk [vmem:[%s5 + $0xa4] sm:$0xf] %vm1581, %v1574
  %1624 = vst.msk [vmem:[%s5 + $0xa8] sm:$0xf] %vm1581, %v1575
  %1625 = vst.msk [vmem:[%s5 + $0xac] sm:$0xf] %vm1581, %v1576
  %1626 = vst.msk [vmem:[%s5 + $0xb0] sm:$0xf] %vm1581, %v1577
  %1627 = vst.msk [vmem:[%s5 + $0xb4] sm:$0xf] %vm1581, %v1578
  %1628 = vst.msk [vmem:[%s5 + $0xb8] sm:$0xf] %vm1581, %v1579
  %1629 = vst.msk [vmem:[%s5 + $0xbc] sm:$0xf] %vm1581, %v1580
  %1678 = vrot.lane.b32.xlu0 %v1533, 96
  %v1679 = vpop.permute.xlu0 %1678
  %1680 = vrot.lane.b32.xlu0 %v1534, 96
  %v1681 = vpop.permute.xlu0 %1680
  %1682 = vrot.lane.b32.xlu0 %v1535, 96
  %v1683 = vpop.permute.xlu0 %1682
  %1684 = vrot.lane.b32.xlu0 %v1536, 96
  %v1685 = vpop.permute.xlu0 %1684
  %1686 = vrot.lane.b32.xlu0 %v1537, 96
  %v1687 = vpop.permute.xlu0 %1686
  %1688 = vrot.lane.b32.xlu0 %v1538, 96
  %v1689 = vpop.permute.xlu0 %1688
  %1690 = vrot.lane.b32.xlu0 %v1539, 96
  %v1691 = vpop.permute.xlu0 %1690
  %1692 = vrot.lane.b32.xlu0 %v1540, 96
  %v1693 = vpop.permute.xlu0 %1692
  %1694 = vrot.lane.b32.xlu0 %v1541, 96
  %v1695 = vpop.permute.xlu0 %1694
  %1696 = vrot.lane.b32.xlu0 %v1542, 96
  %v1697 = vpop.permute.xlu0 %1696
  %1698 = vrot.lane.b32.xlu0 %v1543, 96
  %v1699 = vpop.permute.xlu0 %1698
  %1700 = vrot.lane.b32.xlu0 %v1544, 96
  %v1701 = vpop.permute.xlu0 %1700
  %1702 = vrot.lane.b32.xlu0 %v1545, 96
  %v1703 = vpop.permute.xlu0 %1702
  %1704 = vrot.lane.b32.xlu0 %v1546, 96
  %v1705 = vpop.permute.xlu0 %1704
  %1706 = vrot.lane.b32.xlu0 %v1547, 96
  %v1707 = vpop.permute.xlu0 %1706
  %1708 = vrot.lane.b32.xlu0 %v1548, 96
  %v1709 = vpop.permute.xlu0 %1708
  %1710 = vrot.lane.b32.xlu0 %v1549, 96
  %v1711 = vpop.permute.xlu0 %1710
  %1712 = vrot.lane.b32.xlu0 %v1550, 96
  %v1713 = vpop.permute.xlu0 %1712
  %1714 = vrot.lane.b32.xlu0 %v1551, 96
  %v1715 = vpop.permute.xlu0 %1714
  %1716 = vrot.lane.b32.xlu0 %v1552, 96
  %v1717 = vpop.permute.xlu0 %1716
  %1718 = vrot.lane.b32.xlu0 %v1553, 96
  %v1719 = vpop.permute.xlu0 %1718
  %1720 = vrot.lane.b32.xlu0 %v1554, 96
  %v1721 = vpop.permute.xlu0 %1720
  %1722 = vrot.lane.b32.xlu0 %v1555, 96
  %v1723 = vpop.permute.xlu0 %1722
  %1724 = vrot.lane.b32.xlu0 %v1556, 96
  %v1725 = vpop.permute.xlu0 %1724
  %1726 = vrot.lane.b32.xlu0 %v1557, 96
  %v1727 = vpop.permute.xlu0 %1726
  %1728 = vrot.lane.b32.xlu0 %v1558, 96
  %v1729 = vpop.permute.xlu0 %1728
  %1730 = vrot.lane.b32.xlu0 %v1559, 96
  %v1731 = vpop.permute.xlu0 %1730
  %1732 = vrot.lane.b32.xlu0 %v1560, 96
  %v1733 = vpop.permute.xlu0 %1732
  %1734 = vrot.lane.b32.xlu0 %v1561, 96
  %v1735 = vpop.permute.xlu0 %1734
  %1736 = vrot.lane.b32.xlu0 %v1562, 96
  %v1737 = vpop.permute.xlu0 %1736
  %1738 = vrot.lane.b32.xlu0 %v1563, 96
  %v1739 = vpop.permute.xlu0 %1738
  %1740 = vrot.lane.b32.xlu0 %v1564, 96
  %v1741 = vpop.permute.xlu0 %1740
  %1742 = vrot.lane.b32.xlu0 %v1565, 96
  %v1743 = vpop.permute.xlu0 %1742
  %1744 = vrot.lane.b32.xlu0 %v1566, 96
  %v1745 = vpop.permute.xlu0 %1744
  %1746 = vrot.lane.b32.xlu0 %v1567, 96
  %v1747 = vpop.permute.xlu0 %1746
  %1748 = vrot.lane.b32.xlu0 %v1568, 96
  %v1749 = vpop.permute.xlu0 %1748
  %1750 = vrot.lane.b32.xlu0 %v1569, 96
  %v1751 = vpop.permute.xlu0 %1750
  %1752 = vrot.lane.b32.xlu0 %v1570, 96
  %v1753 = vpop.permute.xlu0 %1752
  %1754 = vrot.lane.b32.xlu0 %v1571, 96
  %v1755 = vpop.permute.xlu0 %1754
  %1756 = vrot.lane.b32.xlu0 %v1572, 96
  %v1757 = vpop.permute.xlu0 %1756
  %1758 = vrot.lane.b32.xlu0 %v1573, 96
  %v1759 = vpop.permute.xlu0 %1758
  %1760 = vrot.lane.b32.xlu0 %v1574, 96
  %v1761 = vpop.permute.xlu0 %1760
  %1762 = vrot.lane.b32.xlu0 %v1575, 96
  %v1763 = vpop.permute.xlu0 %1762
  %1764 = vrot.lane.b32.xlu0 %v1576, 96
  %v1765 = vpop.permute.xlu0 %1764
  %1766 = vrot.lane.b32.xlu0 %v1577, 96
  %v1767 = vpop.permute.xlu0 %1766
  %1768 = vrot.lane.b32.xlu0 %v1578, 96
  %v1769 = vpop.permute.xlu0 %1768
  %1770 = vrot.lane.b32.xlu0 %v1579, 96
  %v1771 = vpop.permute.xlu0 %1770
  %1772 = vrot.lane.b32.xlu0 %v1580, 96
  %v1773 = vpop.permute.xlu0 %1772
  %1822 = vst.msk [vmem:[%s6] sm:$0xf] %vm1581, %v1679
  %1823 = vst.msk [vmem:[%s6 + $0x4] sm:$0xf] %vm1581, %v1681
  %1824 = vst.msk [vmem:[%s6 + $0x8] sm:$0xf] %vm1581, %v1683
  %1825 = vst.msk [vmem:[%s6 + $0xc] sm:$0xf] %vm1581, %v1685
  %1826 = vst.msk [vmem:[%s6 + $0x10] sm:$0xf] %vm1581, %v1687
  %1827 = vst.msk [vmem:[%s6 + $0x14] sm:$0xf] %vm1581, %v1689
  %1828 = vst.msk [vmem:[%s6 + $0x18] sm:$0xf] %vm1581, %v1691
  %1829 = vst.msk [vmem:[%s6 + $0x1c] sm:$0xf] %vm1581, %v1693
  %1830 = vst.msk [vmem:[%s6 + $0x20] sm:$0xf] %vm1581, %v1695
  %1831 = vst.msk [vmem:[%s6 + $0x24] sm:$0xf] %vm1581, %v1697
  %1832 = vst.msk [vmem:[%s6 + $0x28] sm:$0xf] %vm1581, %v1699
  %1833 = vst.msk [vmem:[%s6 + $0x2c] sm:$0xf] %vm1581, %v1701
  %1834 = vst.msk [vmem:[%s6 + $0x30] sm:$0xf] %vm1581, %v1703
  %1835 = vst.msk [vmem:[%s6 + $0x34] sm:$0xf] %vm1581, %v1705
  %1836 = vst.msk [vmem:[%s6 + $0x38] sm:$0xf] %vm1581, %v1707
  %1837 = vst.msk [vmem:[%s6 + $0x3c] sm:$0xf] %vm1581, %v1709
  %1838 = vst.msk [vmem:[%s6 + $0x40] sm:$0xf] %vm1581, %v1711
  %1839 = vst.msk [vmem:[%s6 + $0x44] sm:$0xf] %vm1581, %v1713
  %1840 = vst.msk [vmem:[%s6 + $0x48] sm:$0xf] %vm1581, %v1715
  %1841 = vst.msk [vmem:[%s6 + $0x4c] sm:$0xf] %vm1581, %v1717
  %1842 = vst.msk [vmem:[%s6 + $0x50] sm:$0xf] %vm1581, %v1719
  %1843 = vst.msk [vmem:[%s6 + $0x54] sm:$0xf] %vm1581, %v1721
  %1844 = vst.msk [vmem:[%s6 + $0x58] sm:$0xf] %vm1581, %v1723
  %1845 = vst.msk [vmem:[%s6 + $0x5c] sm:$0xf] %vm1581, %v1725
  %1846 = vst.msk [vmem:[%s6 + $0x60] sm:$0xf] %vm1581, %v1727
  %1847 = vst.msk [vmem:[%s6 + $0x64] sm:$0xf] %vm1581, %v1729
  %1848 = vst.msk [vmem:[%s6 + $0x68] sm:$0xf] %vm1581, %v1731
  %1849 = vst.msk [vmem:[%s6 + $0x6c] sm:$0xf] %vm1581, %v1733
  %1850 = vst.msk [vmem:[%s6 + $0x70] sm:$0xf] %vm1581, %v1735
  %1851 = vst.msk [vmem:[%s6 + $0x74] sm:$0xf] %vm1581, %v1737
  %1852 = vst.msk [vmem:[%s6 + $0x78] sm:$0xf] %vm1581, %v1739
  %1853 = vst.msk [vmem:[%s6 + $0x7c] sm:$0xf] %vm1581, %v1741
  %1854 = vst.msk [vmem:[%s6 + $0x80] sm:$0xf] %vm1581, %v1743
  %1855 = vst.msk [vmem:[%s6 + $0x84] sm:$0xf] %vm1581, %v1745
  %1856 = vst.msk [vmem:[%s6 + $0x88] sm:$0xf] %vm1581, %v1747
  %1857 = vst.msk [vmem:[%s6 + $0x8c] sm:$0xf] %vm1581, %v1749
  %1858 = vst.msk [vmem:[%s6 + $0x90] sm:$0xf] %vm1581, %v1751
  %1859 = vst.msk [vmem:[%s6 + $0x94] sm:$0xf] %vm1581, %v1753
  %1860 = vst.msk [vmem:[%s6 + $0x98] sm:$0xf] %vm1581, %v1755
  %1861 = vst.msk [vmem:[%s6 + $0x9c] sm:$0xf] %vm1581, %v1757
  %1862 = vst.msk [vmem:[%s6 + $0xa0] sm:$0xf] %vm1581, %v1759
  %1863 = vst.msk [vmem:[%s6 + $0xa4] sm:$0xf] %vm1581, %v1761
  %1864 = vst.msk [vmem:[%s6 + $0xa8] sm:$0xf] %vm1581, %v1763
  %1865 = vst.msk [vmem:[%s6 + $0xac] sm:$0xf] %vm1581, %v1765
  %1866 = vst.msk [vmem:[%s6 + $0xb0] sm:$0xf] %vm1581, %v1767
  %1867 = vst.msk [vmem:[%s6 + $0xb4] sm:$0xf] %vm1581, %v1769
  %1868 = vst.msk [vmem:[%s6 + $0xb8] sm:$0xf] %vm1581, %v1771
  %1869 = vst.msk [vmem:[%s6 + $0xbc] sm:$0xf] %vm1581, %v1773
  %1870 = vrot.lane.b32.xlu0 %v1533, 64
  %v1871 = vpop.permute.xlu0 %1870
  %1872 = vrot.lane.b32.xlu0 %v1534, 64
  %v1873 = vpop.permute.xlu0 %1872
  %1874 = vrot.lane.b32.xlu0 %v1535, 64
  %v1875 = vpop.permute.xlu0 %1874
  %1876 = vrot.lane.b32.xlu0 %v1536, 64
  %v1877 = vpop.permute.xlu0 %1876
  %1878 = vrot.lane.b32.xlu0 %v1537, 64
  %v1879 = vpop.permute.xlu0 %1878
  %1880 = vrot.lane.b32.xlu0 %v1538, 64
  %v1881 = vpop.permute.xlu0 %1880
  %1882 = vrot.lane.b32.xlu0 %v1539, 64
  %v1883 = vpop.permute.xlu0 %1882
  %1884 = vrot.lane.b32.xlu0 %v1540, 64
  %v1885 = vpop.permute.xlu0 %1884
  %1886 = vrot.lane.b32.xlu0 %v1541, 64
  %v1887 = vpop.permute.xlu0 %1886
  %1888 = vrot.lane.b32.xlu0 %v1542, 64
  %v1889 = vpop.permute.xlu0 %1888
  %1890 = vrot.lane.b32.xlu0 %v1543, 64
  %v1891 = vpop.permute.xlu0 %1890
  %1892 = vrot.lane.b32.xlu0 %v1544, 64
  %v1893 = vpop.permute.xlu0 %1892
  %1894 = vrot.lane.b32.xlu0 %v1545, 64
  %v1895 = vpop.permute.xlu0 %1894
  %1896 = vrot.lane.b32.xlu0 %v1546, 64
  %v1897 = vpop.permute.xlu0 %1896
  %1898 = vrot.lane.b32.xlu0 %v1547, 64
  %v1899 = vpop.permute.xlu0 %1898
  %1900 = vrot.lane.b32.xlu0 %v1548, 64
  %v1901 = vpop.permute.xlu0 %1900
  %1902 = vrot.lane.b32.xlu0 %v1549, 64
  %v1903 = vpop.permute.xlu0 %1902
  %1904 = vrot.lane.b32.xlu0 %v1550, 64
  %v1905 = vpop.permute.xlu0 %1904
  %1906 = vrot.lane.b32.xlu0 %v1551, 64
  %v1907 = vpop.permute.xlu0 %1906
  %1908 = vrot.lane.b32.xlu0 %v1552, 64
  %v1909 = vpop.permute.xlu0 %1908
  %1910 = vrot.lane.b32.xlu0 %v1553, 64
  %v1911 = vpop.permute.xlu0 %1910
  %1912 = vrot.lane.b32.xlu0 %v1554, 64
  %v1913 = vpop.permute.xlu0 %1912
  %1914 = vrot.lane.b32.xlu0 %v1555, 64
  %v1915 = vpop.permute.xlu0 %1914
  %1916 = vrot.lane.b32.xlu0 %v1556, 64
  %v1917 = vpop.permute.xlu0 %1916
  %1918 = vrot.lane.b32.xlu0 %v1557, 64
  %v1919 = vpop.permute.xlu0 %1918
  %1920 = vrot.lane.b32.xlu0 %v1558, 64
  %v1921 = vpop.permute.xlu0 %1920
  %1922 = vrot.lane.b32.xlu0 %v1559, 64
  %v1923 = vpop.permute.xlu0 %1922
  %1924 = vrot.lane.b32.xlu0 %v1560, 64
  %v1925 = vpop.permute.xlu0 %1924
  %1926 = vrot.lane.b32.xlu0 %v1561, 64
  %v1927 = vpop.permute.xlu0 %1926
  %1928 = vrot.lane.b32.xlu0 %v1562, 64
  %v1929 = vpop.permute.xlu0 %1928
  %1930 = vrot.lane.b32.xlu0 %v1563, 64
  %v1931 = vpop.permute.xlu0 %1930
  %1932 = vrot.lane.b32.xlu0 %v1564, 64
  %v1933 = vpop.permute.xlu0 %1932
  %1934 = vrot.lane.b32.xlu0 %v1565, 64
  %v1935 = vpop.permute.xlu0 %1934
  %1936 = vrot.lane.b32.xlu0 %v1566, 64
  %v1937 = vpop.permute.xlu0 %1936
  %1938 = vrot.lane.b32.xlu0 %v1567, 64
  %v1939 = vpop.permute.xlu0 %1938
  %1940 = vrot.lane.b32.xlu0 %v1568, 64
  %v1941 = vpop.permute.xlu0 %1940
  %1942 = vrot.lane.b32.xlu0 %v1569, 64
  %v1943 = vpop.permute.xlu0 %1942
  %1944 = vrot.lane.b32.xlu0 %v1570, 64
  %v1945 = vpop.permute.xlu0 %1944
  %1946 = vrot.lane.b32.xlu0 %v1571, 64
  %v1947 = vpop.permute.xlu0 %1946
  %1948 = vrot.lane.b32.xlu0 %v1572, 64
  %v1949 = vpop.permute.xlu0 %1948
  %1950 = vrot.lane.b32.xlu0 %v1573, 64
  %v1951 = vpop.permute.xlu0 %1950
  %1952 = vrot.lane.b32.xlu0 %v1574, 64
  %v1953 = vpop.permute.xlu0 %1952
  %1954 = vrot.lane.b32.xlu0 %v1575, 64
  %v1955 = vpop.permute.xlu0 %1954
  %1956 = vrot.lane.b32.xlu0 %v1576, 64
  %v1957 = vpop.permute.xlu0 %1956
  %1958 = vrot.lane.b32.xlu0 %v1577, 64
  %v1959 = vpop.permute.xlu0 %1958
  %1960 = vrot.lane.b32.xlu0 %v1578, 64
  %v1961 = vpop.permute.xlu0 %1960
  %1962 = vrot.lane.b32.xlu0 %v1579, 64
  %v1963 = vpop.permute.xlu0 %1962
  %1964 = vrot.lane.b32.xlu0 %v1580, 64
  %v1965 = vpop.permute.xlu0 %1964
  %2014 = vst.msk [vmem:[%s7] sm:$0xf] %vm1581, %v1871
  %2015 = vst.msk [vmem:[%s7 + $0x4] sm:$0xf] %vm1581, %v1873
  %2016 = vst.msk [vmem:[%s7 + $0x8] sm:$0xf] %vm1581, %v1875
  %2017 = vst.msk [vmem:[%s7 + $0xc] sm:$0xf] %vm1581, %v1877
  %2018 = vst.msk [vmem:[%s7 + $0x10] sm:$0xf] %vm1581, %v1879
  %2019 = vst.msk [vmem:[%s7 + $0x14] sm:$0xf] %vm1581, %v1881
  %2020 = vst.msk [vmem:[%s7 + $0x18] sm:$0xf] %vm1581, %v1883
  %2021 = vst.msk [vmem:[%s7 + $0x1c] sm:$0xf] %vm1581, %v1885
  %2022 = vst.msk [vmem:[%s7 + $0x20] sm:$0xf] %vm1581, %v1887
  %2023 = vst.msk [vmem:[%s7 + $0x24] sm:$0xf] %vm1581, %v1889
  %2024 = vst.msk [vmem:[%s7 + $0x28] sm:$0xf] %vm1581, %v1891
  %2025 = vst.msk [vmem:[%s7 + $0x2c] sm:$0xf] %vm1581, %v1893
  %2026 = vst.msk [vmem:[%s7 + $0x30] sm:$0xf] %vm1581, %v1895
  %2027 = vst.msk [vmem:[%s7 + $0x34] sm:$0xf] %vm1581, %v1897
  %2028 = vst.msk [vmem:[%s7 + $0x38] sm:$0xf] %vm1581, %v1899
  %2029 = vst.msk [vmem:[%s7 + $0x3c] sm:$0xf] %vm1581, %v1901
  %2030 = vst.msk [vmem:[%s7 + $0x40] sm:$0xf] %vm1581, %v1903
  %2031 = vst.msk [vmem:[%s7 + $0x44] sm:$0xf] %vm1581, %v1905
  %2032 = vst.msk [vmem:[%s7 + $0x48] sm:$0xf] %vm1581, %v1907
  %2033 = vst.msk [vmem:[%s7 + $0x4c] sm:$0xf] %vm1581, %v1909
  %2034 = vst.msk [vmem:[%s7 + $0x50] sm:$0xf] %vm1581, %v1911
  %2035 = vst.msk [vmem:[%s7 + $0x54] sm:$0xf] %vm1581, %v1913
  %2036 = vst.msk [vmem:[%s7 + $0x58] sm:$0xf] %vm1581, %v1915
  %2037 = vst.msk [vmem:[%s7 + $0x5c] sm:$0xf] %vm1581, %v1917
  %2038 = vst.msk [vmem:[%s7 + $0x60] sm:$0xf] %vm1581, %v1919
  %2039 = vst.msk [vmem:[%s7 + $0x64] sm:$0xf] %vm1581, %v1921
  %2040 = vst.msk [vmem:[%s7 + $0x68] sm:$0xf] %vm1581, %v1923
  %2041 = vst.msk [vmem:[%s7 + $0x6c] sm:$0xf] %vm1581, %v1925
  %2042 = vst.msk [vmem:[%s7 + $0x70] sm:$0xf] %vm1581, %v1927
  %2043 = vst.msk [vmem:[%s7 + $0x74] sm:$0xf] %vm1581, %v1929
  %2044 = vst.msk [vmem:[%s7 + $0x78] sm:$0xf] %vm1581, %v1931
  %2045 = vst.msk [vmem:[%s7 + $0x7c] sm:$0xf] %vm1581, %v1933
  %2046 = vst.msk [vmem:[%s7 + $0x80] sm:$0xf] %vm1581, %v1935
  %2047 = vst.msk [vmem:[%s7 + $0x84] sm:$0xf] %vm1581, %v1937
  %2048 = vst.msk [vmem:[%s7 + $0x88] sm:$0xf] %vm1581, %v1939
  %2049 = vst.msk [vmem:[%s7 + $0x8c] sm:$0xf] %vm1581, %v1941
  %2050 = vst.msk [vmem:[%s7 + $0x90] sm:$0xf] %vm1581, %v1943
  %2051 = vst.msk [vmem:[%s7 + $0x94] sm:$0xf] %vm1581, %v1945
  %2052 = vst.msk [vmem:[%s7 + $0x98] sm:$0xf] %vm1581, %v1947
  %2053 = vst.msk [vmem:[%s7 + $0x9c] sm:$0xf] %vm1581, %v1949
  %2054 = vst.msk [vmem:[%s7 + $0xa0] sm:$0xf] %vm1581, %v1951
  %2055 = vst.msk [vmem:[%s7 + $0xa4] sm:$0xf] %vm1581, %v1953
  %2056 = vst.msk [vmem:[%s7 + $0xa8] sm:$0xf] %vm1581, %v1955
  %2057 = vst.msk [vmem:[%s7 + $0xac] sm:$0xf] %vm1581, %v1957
  %2058 = vst.msk [vmem:[%s7 + $0xb0] sm:$0xf] %vm1581, %v1959
  %2059 = vst.msk [vmem:[%s7 + $0xb4] sm:$0xf] %vm1581, %v1961
  %2060 = vst.msk [vmem:[%s7 + $0xb8] sm:$0xf] %vm1581, %v1963
  %2061 = vst.msk [vmem:[%s7 + $0xbc] sm:$0xf] %vm1581, %v1965
  // Predicated region
  $region22: #{siglip2_forward.7} parent=0 // pred_check
    _
  $region23: #{siglip2_forward.7} parent=0 // pred_check_branch
    %2063 = sbr.rel (0) target = $region25
  $region24: #{siglip2_forward.7} parent=0 // pred_region
    _
  $region25: #{siglip2_forward.7} parent=0 // pred_fallthru
    _
  // Predicated region
  $region26: #{siglip2_forward.7} parent=0 // pred_check
    _
  $region27: #{siglip2_forward.7} parent=0 // pred_check_branch
    %2065 = sbr.rel (0) target = $region29
  $region28: #{siglip2_forward.7} parent=0 // pred_region
    _
  $region29: #{siglip2_forward.7} parent=0 // pred_fallthru
    _
  // Predicated region
  $region30: #{siglip2_forward.7} parent=0 // pred_check
    _
  $region31: #{siglip2_forward.7} parent=0 // pred_check_branch
    %2067 = sbr.rel (0) target = $region33
  $region32: #{siglip2_forward.7} parent=0 // pred_region
    _
  $region33: #{siglip2_forward.7} parent=0 // pred_fallthru
    _
  // Predicated region
  $region34: #{siglip2_forward.7} parent=0 // pred_check
    _
  $region35: #{siglip2_forward.7} parent=0 // pred_check_branch
    %2069 = sbr.rel (0) target = $region37
  $region36: #{siglip2_forward.7} parent=0 // pred_region
    _
  $region37: #{siglip2_forward.7} parent=0 // pred_fallthru
    _
  // Predicated region
  $region38: #{siglip2_forward.7} parent=0 // pred_check
    _
  $region39: #{siglip2_forward.7} parent=0 // pred_check_branch
    %2071 = sbr.rel (0) target = $region41
  $region40: #{siglip2_forward.7} parent=0 // pred_region
    _
  $region41: #{siglip2_forward.7} parent=0 // pred_fallthru
    _
  // Predicated region
  $region42: #{siglip2_forward.7} parent=0 // pred_check
    _
  $region43: #{siglip2_forward.7} parent=0 // pred_check_branch
    %2073 = sbr.rel (0) target = $region45
  $region44: #{siglip2_forward.7} parent=0 // pred_region
    _
  $region45: #{siglip2_forward.7} parent=0 // pred_fallthru
    _

// kernel: siglip2_forward.8
$region0: #{siglip2_forward.8}
  #allocation0 [shape = 'u32[]', space=smem, size = 0x4, offset = 0x4, fixed_abs, tag = 'smem constant byte address 0x4 - core index']
  #allocation1 [shape = 'u32[72,128]{1,0:T(1,128)}', space=vmem, size = 0x9000, scoped, tag = 'internal scratch']
  #allocation2 [shape = 'f32[4,128,1]{2,1,0:T(8,128)}', space=vmem, size = 0x40000, scoped, tag = 'scratch operand']
  #allocation3 [shape = 'f32[4,128,1]{2,1,0:T(8,128)}', space=vmem, size = 0x40000, scoped, tag = 'scratch operand']
  #allocation4 [shape = 'f32[4,128,8]{2,1,0:T(8,128)}', space=vmem, size = 0x40000, scoped, tag = 'scratch operand']
  #allocation5 [shape = 's32[1]{0}', space=sflag, size = 0x4, scoped, tag = 'scoped memory for siglip2_forward.8']
  #allocation6 [shape = 'u8[1024]{0}', space=smem, size = 0x400, scoped, tag = 'prefetched SMEM operand 0']
  %s0 = inlined_call_operand.vmem [shape: s32[2,3], index: 0, kind: input, shape index: {}]
  %s1 = inlined_call_operand.vmem [shape: bf16[384,32], index: 1, kind: input, shape index: {}]
  %s2 = inlined_call_operand.vmem [shape: bf16[384,32], index: 2, kind: input, shape index: {}]
  %s3 = inlined_call_operand.vmem [shape: bf16[384,32], index: 3, kind: input, shape index: {}]
  %s4 = inlined_call_operand.vmem [shape: s32[384,1], index: 4, kind: input, shape index: {}]
  %s5 = inlined_call_operand.vmem [shape: s32[1,384], index: 5, kind: input, shape index: {}]
  %s6 = inlined_call_operand.vmem [shape: bf16[384,32], index: 6, kind: input, shape index: {}]
  %s7 = inlined_call_operand.vmem [shape: bf16[32,32], index: 7, kind: input, shape index: {}]
  %s8 = inlined_call_operand.vmem [shape: f32[1,32], index: 8, kind: input, shape index: {}]
  %s9 = inlined_call_operand.vmem [shape: f32[1,32], index: 9, kind: input, shape index: {}]
  %s10 = inlined_call_operand.vmem [shape: f32[1,32], index: 10, kind: input, shape index: {}]
  %s11 = inlined_call_operand.vmem [shape: bf16[32,64], index: 11, kind: input, shape index: {}]
  %s12 = inlined_call_operand.vmem [shape: f32[1,64], index: 12, kind: input, shape index: {}]
  %s13 = inlined_call_operand.vmem [shape: bf16[64,32], index: 13, kind: input, shape index: {}]
  %s14 = inlined_call_operand.vmem [shape: f32[1,32], index: 14, kind: input, shape index: {}]
  %s15 = inlined_call_operand.vmem [shape: bf16[384,32], index: 15, kind: output, shape index: {}]
  %s16 = sld [smem:[#allocation0]]
  $region101: #{siglip2_forward.8} parent=0
    _
  %s18 = ssub.s32 1, %s16
  %s19 = scalar_select 0, %s18, %s16
  %s21 = sshll.u32 %s0, 4
  %s22 = int_to_ptr.vmem [resolvable:$true] %s21
  %24 = dma.vmem_to_smem %s22, 32, [#allocation6], [#allocation5]
  %26 = dma.done [#allocation5], 32
  %27 = sfence
  loop: start=0, step=1, limit=8
  $region2: #{siglip2_forward.8} parent=0 // loop_pre_header
    _
  $region3: #{siglip2_forward.8} parent=0 // loop_header
    %s29 = sphi 0, %s33
    %p30 = scmp.ge.s32.totalorder %s29, 8
    %s36 = sphi 0, %s48
    %s37 = sphi 0, %s44
    %s38 = sphi 0, %s36
    %s39 = sphi 0, %s37
    %s40 = sphi 0, %s38
    %s41 = sphi 0, %s39
    %s51 = sphi 0, %s53
    %s54 = sphi 0, %s51
    %s55 = sphi 0, %s54
    %s71 = sphi 0, %s55
    %s103 = sphi 0, %s105
    %s106 = sphi 0, %s103
    %s107 = sphi 0, %s106
    %s123 = sphi 0, %s107
    %s155 = sphi 0, %s157
    %s158 = sphi 0, %s155
    %s159 = sphi 0, %s158
    %s175 = sphi 0, %s159
    %s181 = sphi 0, %s183
    %s184 = sphi 0, %s181
    %s185 = sphi 0, %s184
    %s201 = sphi 0, %s185
    %s233 = sphi 0, %s235
    %s236 = sphi 0, %s233
    %s237 = sphi 0, %s236
    %s253 = sphi 0, %s237
    %s259 = sphi 0, %s261
    %s262 = sphi 0, %s259
    %s263 = sphi 0, %s262
    %s279 = sphi 0, %s263
    %s283 = sphi 0, %s283
    %s285 = sphi 0, %s283
    %s286 = sphi 0, %s285
    %s300 = sphi 0, %s286
    %s304 = sphi 0, %s304
    %s306 = sphi 0, %s304
    %s307 = sphi 0, %s306
    %s321 = sphi 0, %s307
    %s325 = sphi 0, %s325
    %s327 = sphi 0, %s325
    %s328 = sphi 0, %s327
    %s342 = sphi 0, %s328
    %s346 = sphi 0, %s346
    %s348 = sphi 0, %s346
    %s349 = sphi 0, %s348
    %s363 = sphi 0, %s349
    %s367 = sphi 0, %s367
    %s369 = sphi 0, %s367
    %s370 = sphi 0, %s369
    %s384 = sphi 0, %s370
    %s388 = sphi 0, %s388
    %s390 = sphi 0, %s388
    %s391 = sphi 0, %s390
    %s405 = sphi 0, %s391
    %s409 = sphi 0, %s409
    %s411 = sphi 0, %s409
    %s412 = sphi 0, %s411
    %s426 = sphi 0, %s412
    %s430 = sphi 0, %s430
    %s432 = sphi 0, %s430
    %s433 = sphi 0, %s432
    %s447 = sphi 0, %s433
    %s453 = sphi 0, %s455
    %s456 = sphi 0, %s453
    %s457 = sphi 0, %s456
    %s473 = sphi 0, %s457
  $region4: #{siglip2_forward.8} parent=0 // loop_header_branch
    %32 = sbr.rel (%p30) target = $region8
  $region5: #{siglip2_forward.8} parent=0 // loop_body
    %s34 = ssub.s32 %s29, 1
    %s35 = ssub.s32 %s29, 2
    %s42 = sadd.s32 1, %s37
    %p43 = scmp.ge.s32.totalorder %s42, 2
    %s44 = scalar_select %p43, 0, %s42
    %s45 = sadd.s32 1, %s36
    %s46 = scalar_select %p43, %s45, %s36
    %p47 = scmp.ge.s32.totalorder %s46, 3
    %s48 = scalar_select %p47, 0, %s46
    %s49 = ssub.s32 %s36, %s48
    %p50 = scmp.eq.s32.totalorder %s49, 0
    %s52 = sadd.s32 %s51, 1
    %s53 = scalar_select %p50, %s51, %s52
    %p56 = pneg %p50
    %p57 = scmp.eq.s32.totalorder %s29, 5
    %p58 = por %p56, %p57
    %p59 = scmp.ne.s32.totalorder %s51, %s54
    %p60 = scmp.eq.s32.totalorder %s29, 0
    %p61 = por %p59, %p60
    %p62 = scmp.ne.s32.totalorder %s51, %s54
    %p63 = scmp.eq.s32.totalorder %s34, 5
    %p64 = por %p62, %p63
    %p65 = scmp.ne.s32.totalorder %s54, %s55
    %p66 = scmp.eq.s32.totalorder %s34, 0
    %p67 = por %p65, %p66
    %p68 = scmp.ne.s32.totalorder %s54, %s55
    %p69 = scmp.eq.s32.totalorder %s35, 5
    %p70 = por %p68, %p69
    %p72 = scmp.ne.s32.totalorder %s55, %s71
    %p73 = scmp.eq.s32.totalorder %s35, 0
    %p74 = por %p72, %p73
    %s75 = sld [smem:[#allocation6 + %s36]]
    %s76 = sshra.s32 %s36, 7
    %s77 = sand.u32 %s36, 127
    %s78 = sadd.s32 %s76, 1
    %s79 = smul.u32 %s78, 128
    %s80 = sshra.s32 %s36, 7
    %s81 = sand.u32 %s36, 127
    %s82 = sadd.s32 %s79, %s81
    %s83 = sld [smem:[#allocation6 + %s82]]
    %s84 = ssub.s32 %s83, 1
    %p85 = scmp.lt.s32.totalorder %s37, %s84
    %s86 = scalar_select %p85, %s37, %s84
    %s87 = sadd.s32 %s75, %s86
    %s88 = sld [smem:[#allocation6 + %s48]]
    %s89 = sshra.s32 %s48, 7
    %s90 = sand.u32 %s48, 127
    %s91 = sadd.s32 %s89, 1
    %s92 = smul.u32 %s91, 128
    %s93 = sshra.s32 %s48, 7
    %s94 = sand.u32 %s48, 127
    %s95 = sadd.s32 %s92, %s94
    %s96 = sld [smem:[#allocation6 + %s95]]
    %s97 = ssub.s32 %s96, 1
    %p98 = scmp.lt.s32.totalorder %s44, %s97
    %s99 = scalar_select %p98, %s44, %s97
    %s100 = sadd.s32 %s88, %s99
    %s101 = ssub.s32 %s87, %s100
    %p102 = scmp.eq.s32.totalorder %s101, 0
    %s104 = sadd.s32 %s103, 1
    %s105 = scalar_select %p102, %s103, %s104
    %p108 = pneg %p102
    %p109 = scmp.eq.s32.totalorder %s29, 5
    %p110 = por %p108, %p109
    %p111 = scmp.ne.s32.totalorder %s103, %s106
    %p112 = scmp.eq.s32.totalorder %s29, 0
    %p113 = por %p111, %p112
    %p114 = scmp.ne.s32.totalorder %s103, %s106
    %p115 = scmp.eq.s32.totalorder %s34, 5
    %p116 = por %p114, %p115
    %p117 = scmp.ne.s32.totalorder %s106, %s107
    %p118 = scmp.eq.s32.totalorder %s34, 0
    %p119 = por %p117, %p118
    %p120 = scmp.ne.s32.totalorder %s106, %s107
    %p121 = scmp.eq.s32.totalorder %s35, 5
    %p122 = por %p120, %p121
    %p124 = scmp.ne.s32.totalorder %s107, %s123
    %p125 = scmp.eq.s32.totalorder %s35, 0
    %p126 = por %p124, %p125
    %s127 = sld [smem:[#allocation6 + %s36]]
    %s128 = sshra.s32 %s36, 7
    %s129 = sand.u32 %s36, 127
    %s130 = sadd.s32 %s128, 1
    %s131 = smul.u32 %s130, 128
    %s132 = sshra.s32 %s36, 7
    %s133 = sand.u32 %s36, 127
    %s134 = sadd.s32 %s131, %s133
    %s135 = sld [smem:[#allocation6 + %s134]]
    %s136 = ssub.s32 %s135, 1
    %p137 = scmp.lt.s32.totalorder %s37, %s136
    %s138 = scalar_select %p137, %s37, %s136
    %s139 = sadd.s32 %s127, %s138
    %s140 = sld [smem:[#allocation6 + %s48]]
    %s141 = sshra.s32 %s48, 7
    %s142 = sand.u32 %s48, 127
    %s143 = sadd.s32 %s141, 1
    %s144 = smul.u32 %s143, 128
    %s145 = sshra.s32 %s48, 7
    %s146 = sand.u32 %s48, 127
    %s147 = sadd.s32 %s144, %s146
    %s148 = sld [smem:[#allocation6 + %s147]]
    %s149 = ssub.s32 %s148, 1
    %p150 = scmp.lt.s32.totalorder %s44, %s149
    %s151 = scalar_select %p150, %s44, %s149
    %s152 = sadd.s32 %s140, %s151
    %s153 = ssub.s32 %s139, %s152
    %p154 = scmp.eq.s32.totalorder %s153, 0
    %s156 = sadd.s32 %s155, 1
    %s157 = scalar_select %p154, %s155, %s156
    %p160 = pneg %p154
    %p161 = scmp.eq.s32.totalorder %s29, 5
    %p162 = por %p160, %p161
    %p163 = scmp.ne.s32.totalorder %s155, %s158
    %p164 = scmp.eq.s32.totalorder %s29, 0
    %p165 = por %p163, %p164
    %p166 = scmp.ne.s32.totalorder %s155, %s158
    %p167 = scmp.eq.s32.totalorder %s34, 5
    %p168 = por %p166, %p167
    %p169 = scmp.ne.s32.totalorder %s158, %s159
    %p170 = scmp.eq.s32.totalorder %s34, 0
    %p171 = por %p169, %p170
    %p172 = scmp.ne.s32.totalorder %s158, %s159
    %p173 = scmp.eq.s32.totalorder %s35, 5
    %p174 = por %p172, %p173
    %p176 = scmp.ne.s32.totalorder %s159, %s175
    %p177 = scmp.eq.s32.totalorder %s35, 0
    %p178 = por %p176, %p177
    %s179 = ssub.s32 %s36, %s48
    %p180 = scmp.eq.s32.totalorder %s179, 0
    %s182 = sadd.s32 %s181, 1
    %s183 = scalar_select %p180, %s181, %s182
    %p186 = pneg %p180
    %p187 = scmp.eq.s32.totalorder %s29, 5
    %p188 = por %p186, %p187
    %p189 = scmp.ne.s32.totalorder %s181, %s184
    %p190 = scmp.eq.s32.totalorder %s29, 0
    %p191 = por %p189, %p190
    %p192 = scmp.ne.s32.totalorder %s181, %s184
    %p193 = scmp.eq.s32.totalorder %s34, 5
    %p194 = por %p192, %p193
    %p195 = scmp.ne.s32.totalorder %s184, %s185
    %p196 = scmp.eq.s32.totalorder %s34, 0
    %p197 = por %p195, %p196
    %p198 = scmp.ne.s32.totalorder %s184, %s185
    %p199 = scmp.eq.s32.totalorder %s35, 5
    %p200 = por %p198, %p199
    %p202 = scmp.ne.s32.totalorder %s185, %s201
    %p203 = scmp.eq.s32.totalorder %s35, 0
    %p204 = por %p202, %p203
    %s205 = sld [smem:[#allocation6 + %s36]]
    %s206 = sshra.s32 %s36, 7
    %s207 = sand.u32 %s36, 127
    %s208 = sadd.s32 %s206, 1
    %s209 = smul.u32 %s208, 128
    %s210 = sshra.s32 %s36, 7
    %s211 = sand.u32 %s36, 127
    %s212 = sadd.s32 %s209, %s211
    %s213 = sld [smem:[#allocation6 + %s212]]
    %s214 = ssub.s32 %s213, 1
    %p215 = scmp.lt.s32.totalorder %s37, %s214
    %s216 = scalar_select %p215, %s37, %s214
    %s217 = sadd.s32 %s205, %s216
    %s218 = sld [smem:[#allocation6 + %s48]]
    %s219 = sshra.s32 %s48, 7
    %s220 = sand.u32 %s48, 127
    %s221 = sadd.s32 %s219, 1
    %s222 = smul.u32 %s221, 128
    %s223 = sshra.s32 %s48, 7
    %s224 = sand.u32 %s48, 127
    %s225 = sadd.s32 %s222, %s224
    %s226 = sld [smem:[#allocation6 + %s225]]
    %s227 = ssub.s32 %s226, 1
    %p228 = scmp.lt.s32.totalorder %s44, %s227
    %s229 = scalar_select %p228, %s44, %s227
    %s230 = sadd.s32 %s218, %s229
    %s231 = ssub.s32 %s217, %s230
    %p232 = scmp.eq.s32.totalorder %s231, 0
    %s234 = sadd.s32 %s233, 1
    %s235 = scalar_select %p232, %s233, %s234
    %p238 = pneg %p232
    %p239 = scmp.eq.s32.totalorder %s29, 5
    %p240 = por %p238, %p239
    %p241 = scmp.ne.s32.totalorder %s233, %s236
    %p242 = scmp.eq.s32.totalorder %s29, 0
    %p243 = por %p241, %p242
    %p244 = scmp.ne.s32.totalorder %s233, %s236
    %p245 = scmp.eq.s32.totalorder %s34, 5
    %p246 = por %p244, %p245
    %p247 = scmp.ne.s32.totalorder %s236, %s237
    %p248 = scmp.eq.s32.totalorder %s34, 0
    %p249 = por %p247, %p248
    %p250 = scmp.ne.s32.totalorder %s236, %s237
    %p251 = scmp.eq.s32.totalorder %s35, 5
    %p252 = por %p250, %p251
    %p254 = scmp.ne.s32.totalorder %s237, %s253
    %p255 = scmp.eq.s32.totalorder %s35, 0
    %p256 = por %p254, %p255
    %s257 = ssub.s32 %s36, %s48
    %p258 = scmp.eq.s32.totalorder %s257, 0
    %s260 = sadd.s32 %s259, 1
    %s261 = scalar_select %p258, %s259, %s260
    %p264 = pneg %p258
    %p265 = scmp.eq.s32.totalorder %s29, 5
    %p266 = por %p264, %p265
    %p267 = scmp.ne.s32.totalorder %s259, %s262
    %p268 = scmp.eq.s32.totalorder %s29, 0
    %p269 = por %p267, %p268
    %p270 = scmp.ne.s32.totalorder %s259, %s262
    %p271 = scmp.eq.s32.totalorder %s34, 5
    %p272 = por %p270, %p271
    %p273 = scmp.ne.s32.totalorder %s262, %s263
    %p274 = scmp.eq.s32.totalorder %s34, 0
    %p275 = por %p273, %p274
    %p276 = scmp.ne.s32.totalorder %s262, %s263
    %p277 = scmp.eq.s32.totalorder %s35, 5
    %p278 = por %p276, %p277
    %p280 = scmp.ne.s32.totalorder %s263, %s279
    %p281 = scmp.eq.s32.totalorder %s35, 0
    %p282 = por %p280, %p281
    %s284 = sadd.s32 %s283, 1
    %p287 = scmp.eq.s32.totalorder %s29, 5
    %p288 = scmp.ne.s32.totalorder %s283, %s285
    %p289 = scmp.eq.s32.totalorder %s29, 0
    %p290 = por %p288, %p289
    %p291 = scmp.ne.s32.totalorder %s283, %s285
    %p292 = scmp.eq.s32.totalorder %s34, 5
    %p293 = por %p291, %p292
    %p294 = scmp.ne.s32.totalorder %s285, %s286
    %p295 = scmp.eq.s32.totalorder %s34, 0
    %p296 = por %p294, %p295
    %p297 = scmp.ne.s32.totalorder %s285, %s286
    %p298 = scmp.eq.s32.totalorder %s35, 5
    %p299 = por %p297, %p298
    %p301 = scmp.ne.s32.totalorder %s286, %s300
    %p302 = scmp.eq.s32.totalorder %s35, 0
    %p303 = por %p301, %p302
    %s305 = sadd.s32 %s304, 1
    %p308 = scmp.eq.s32.totalorder %s29, 5
    %p309 = scmp.ne.s32.totalorder %s304, %s306
    %p310 = scmp.eq.s32.totalorder %s29, 0
    %p311 = por %p309, %p310
    %p312 = scmp.ne.s32.totalorder %s304, %s306
    %p313 = scmp.eq.s32.totalorder %s34, 5
    %p314 = por %p312, %p313
    %p315 = scmp.ne.s32.totalorder %s306, %s307
    %p316 = scmp.eq.s32.totalorder %s34, 0
    %p317 = por %p315, %p316
    %p318 = scmp.ne.s32.totalorder %s306, %s307
    %p319 = scmp.eq.s32.totalorder %s35, 5
    %p320 = por %p318, %p319
    %p322 = scmp.ne.s32.totalorder %s307, %s321
    %p323 = scmp.eq.s32.totalorder %s35, 0
    %p324 = por %p322, %p323
    %s326 = sadd.s32 %s325, 1
    %p329 = scmp.eq.s32.totalorder %s29, 5
    %p330 = scmp.ne.s32.totalorder %s325, %s327
    %p331 = scmp.eq.s32.totalorder %s29, 0
    %p332 = por %p330, %p331
    %p333 = scmp.ne.s32.totalorder %s325, %s327
    %p334 = scmp.eq.s32.totalorder %s34, 5
    %p335 = por %p333, %p334
    %p336 = scmp.ne.s32.totalorder %s327, %s328
    %p337 = scmp.eq.s32.totalorder %s34, 0
    %p338 = por %p336, %p337
    %p339 = scmp.ne.s32.totalorder %s327, %s328
    %p340 = scmp.eq.s32.totalorder %s35, 5
    %p341 = por %p339, %p340
    %p343 = scmp.ne.s32.totalorder %s328, %s342
    %p344 = scmp.eq.s32.totalorder %s35, 0
    %p345 = por %p343, %p344
    %s347 = sadd.s32 %s346, 1
    %p350 = scmp.eq.s32.totalorder %s29, 5
    %p351 = scmp.ne.s32.totalorder %s346, %s348
    %p352 = scmp.eq.s32.totalorder %s29, 0
    %p353 = por %p351, %p352
    %p354 = scmp.ne.s32.totalorder %s346, %s348
    %p355 = scmp.eq.s32.totalorder %s34, 5
    %p356 = por %p354, %p355
    %p357 = scmp.ne.s32.totalorder %s348, %s349
    %p358 = scmp.eq.s32.totalorder %s34, 0
    %p359 = por %p357, %p358
    %p360 = scmp.ne.s32.totalorder %s348, %s349
    %p361 = scmp.eq.s32.totalorder %s35, 5
    %p362 = por %p360, %p361
    %p364 = scmp.ne.s32.totalorder %s349, %s363
    %p365 = scmp.eq.s32.totalorder %s35, 0
    %p366 = por %p364, %p365
    %s368 = sadd.s32 %s367, 1
    %p371 = scmp.eq.s32.totalorder %s29, 5
    %p372 = scmp.ne.s32.totalorder %s367, %s369
    %p373 = scmp.eq.s32.totalorder %s29, 0
    %p374 = por %p372, %p373
    %p375 = scmp.ne.s32.totalorder %s367, %s369
    %p376 = scmp.eq.s32.totalorder %s34, 5
    %p377 = por %p375, %p376
    %p378 = scmp.ne.s32.totalorder %s369, %s370
    %p379 = scmp.eq.s32.totalorder %s34, 0
    %p380 = por %p378, %p379
    %p381 = scmp.ne.s32.totalorder %s369, %s370
    %p382 = scmp.eq.s32.totalorder %s35, 5
    %p383 = por %p381, %p382
    %p385 = scmp.ne.s32.totalorder %s370, %s384
    %p386 = scmp.eq.s32.totalorder %s35, 0
    %p387 = por %p385, %p386
    %s389 = sadd.s32 %s388, 1
    %p392 = scmp.eq.s32.totalorder %s29, 5
    %p393 = scmp.ne.s32.totalorder %s388, %s390
    %p394 = scmp.eq.s32.totalorder %s29, 0
    %p395 = por %p393, %p394
    %p396 = scmp.ne.s32.totalorder %s388, %s390
    %p397 = scmp.eq.s32.totalorder %s34, 5
    %p398 = por %p396, %p397
    %p399 = scmp.ne.s32.totalorder %s390, %s391
    %p400 = scmp.eq.s32.totalorder %s34, 0
    %p401 = por %p399, %p400
    %p402 = scmp.ne.s32.totalorder %s390, %s391
    %p403 = scmp.eq.s32.totalorder %s35, 5
    %p404 = por %p402, %p403
    %p406 = scmp.ne.s32.totalorder %s391, %s405
    %p407 = scmp.eq.s32.totalorder %s35, 0
    %p408 = por %p406, %p407
    %s410 = sadd.s32 %s409, 1
    %p413 = scmp.eq.s32.totalorder %s29, 5
    %p414 = scmp.ne.s32.totalorder %s409, %s411
    %p415 = scmp.eq.s32.totalorder %s29, 0
    %p416 = por %p414, %p415
    %p417 = scmp.ne.s32.totalorder %s409, %s411
    %p418 = scmp.eq.s32.totalorder %s34, 5
    %p419 = por %p417, %p418
    %p420 = scmp.ne.s32.totalorder %s411, %s412
    %p421 = scmp.eq.s32.totalorder %s34, 0
    %p422 = por %p420, %p421
    %p423 = scmp.ne.s32.totalorder %s411, %s412
    %p424 = scmp.eq.s32.totalorder %s35, 5
    %p425 = por %p423, %p424
    %p427 = scmp.ne.s32.totalorder %s412, %s426
    %p428 = scmp.eq.s32.totalorder %s35, 0
    %p429 = por %p427, %p428
    %s431 = sadd.s32 %s430, 1
    %p434 = scmp.eq.s32.totalorder %s29, 5
    %p435 = scmp.ne.s32.totalorder %s430, %s432
    %p436 = scmp.eq.s32.totalorder %s29, 0
    %p437 = por %p435, %p436
    %p438 = scmp.ne.s32.totalorder %s430, %s432
    %p439 = scmp.eq.s32.totalorder %s34, 5
    %p440 = por %p438, %p439
    %p441 = scmp.ne.s32.totalorder %s432, %s433
    %p442 = scmp.eq.s32.totalorder %s34, 0
    %p443 = por %p441, %p442
    %p444 = scmp.ne.s32.totalorder %s432, %s433
    %p445 = scmp.eq.s32.totalorder %s35, 5
    %p446 = por %p444, %p445
    %p448 = scmp.ne.s32.totalorder %s433, %s447
    %p449 = scmp.eq.s32.totalorder %s35, 0
    %p450 = por %p448, %p449
    %s451 = ssub.s32 %s36, %s48
    %p452 = scmp.eq.s32.totalorder %s451, 0
    %s454 = sadd.s32 %s453, 1
    %s455 = scalar_select %p452, %s453, %s454
    %p458 = pneg %p452
    %p459 = scmp.eq.s32.totalorder %s29, 5
    %p460 = por %p458, %p459
    %p461 = scmp.ne.s32.totalorder %s453, %s456
    %p462 = scmp.eq.s32.totalorder %s29, 0
    %p463 = por %p461, %p462
    %p464 = scmp.ne.s32.totalorder %s453, %s456
    %p465 = scmp.eq.s32.totalorder %s34, 5
    %p466 = por %p464, %p465
    %p467 = scmp.ne.s32.totalorder %s456, %s457
    %p468 = scmp.eq.s32.totalorder %s34, 0
    %p469 = por %p467, %p468
    %p470 = scmp.ne.s32.totalorder %s456, %s457
    %p471 = scmp.eq.s32.totalorder %s35, 5
    %p472 = por %p470, %p471
    %p474 = scmp.ne.s32.totalorder %s457, %s473
    %p475 = scmp.eq.s32.totalorder %s35, 0
    %p476 = por %p474, %p475
    %p477 = scmp.le.s32.totalorder 1, %s29
    %p478 = scmp.lt.s32.totalorder %s29, 7
    %p479 = pnand %p477, %p478
    %p480 = pneg %p479
    // Predicated region
    $region9: #{siglip2_forward.8} parent=5 // pred_check
      _
    $region10: #{siglip2_forward.8} parent=5 // pred_check_branch
      %482 = sbr.rel (%p479) target = $region12
    $region11: #{siglip2_forward.8} parent=5 // pred_region
      %s483 = ssub.s32 %s29, 1
      // Predicated region
      $region13: #{siglip2_forward.8} parent=11 // pred_check
        %p484 = pneg %p296
      $region14: #{siglip2_forward.8} parent=11 // pred_check_branch
        %486 = sbr.rel (%p484) target = $region16
      $region15: #{siglip2_forward.8} parent=11 // pred_region
        _
      $region16: #{siglip2_forward.8} parent=11 // pred_fallthru
        _
      // Predicated region
      $region17: #{siglip2_forward.8} parent=11 // pred_check
        %p487 = pneg %p317
      $region18: #{siglip2_forward.8} parent=11 // pred_check_branch
        %489 = sbr.rel (%p487) target = $region20
      $region19: #{siglip2_forward.8} parent=11 // pred_region
        _
      $region20: #{siglip2_forward.8} parent=11 // pred_fallthru
        _
      // Predicated region
      $region21: #{siglip2_forward.8} parent=11 // pred_check
        %p490 = pneg %p338
      $region22: #{siglip2_forward.8} parent=11 // pred_check_branch
        %492 = sbr.rel (%p490) target = $region24
      $region23: #{siglip2_forward.8} parent=11 // pred_region
        _
      $region24: #{siglip2_forward.8} parent=11 // pred_fallthru
        _
      // Predicated region
      $region25: #{siglip2_forward.8} parent=11 // pred_check
        %p493 = pneg %p359
      $region26: #{siglip2_forward.8} parent=11 // pred_check_branch
        %495 = sbr.rel (%p493) target = $region28
      $region27: #{siglip2_forward.8} parent=11 // pred_region
        _
      $region28: #{siglip2_forward.8} parent=11 // pred_fallthru
        _
      // Predicated region
      $region29: #{siglip2_forward.8} parent=11 // pred_check
        %p496 = pneg %p380
      $region30: #{siglip2_forward.8} parent=11 // pred_check_branch
        %498 = sbr.rel (%p496) target = $region32
      $region31: #{siglip2_forward.8} parent=11 // pred_region
        _
      $region32: #{siglip2_forward.8} parent=11 // pred_fallthru
        _
      // Predicated region
      $region33: #{siglip2_forward.8} parent=11 // pred_check
        %p499 = pneg %p401
      $region34: #{siglip2_forward.8} parent=11 // pred_check_branch
        %501 = sbr.rel (%p499) target = $region36
      $region35: #{siglip2_forward.8} parent=11 // pred_region
        _
      $region36: #{siglip2_forward.8} parent=11 // pred_fallthru
        _
      // Predicated region
      $region37: #{siglip2_forward.8} parent=11 // pred_check
        %p502 = pneg %p422
      $region38: #{siglip2_forward.8} parent=11 // pred_check_branch
        %504 = sbr.rel (%p502) target = $region40
      $region39: #{siglip2_forward.8} parent=11 // pred_region
        _
      $region40: #{siglip2_forward.8} parent=11 // pred_fallthru
        _
      // Predicated region
      $region41: #{siglip2_forward.8} parent=11 // pred_check
        %p505 = pneg %p443
      $region42: #{siglip2_forward.8} parent=11 // pred_check_branch
        %507 = sbr.rel (%p505) target = $region44
      $region43: #{siglip2_forward.8} parent=11 // pred_region
        _
      $region44: #{siglip2_forward.8} parent=11 // pred_fallthru
        _
    $region12: #{siglip2_forward.8} parent=5 // pred_fallthru
      _
    %p508 = scmp.lt.s32.totalorder %s29, 6
    // Predicated region
    $region45: #{siglip2_forward.8} parent=5 // pred_check
      %p509 = pneg %p508
    $region46: #{siglip2_forward.8} parent=5 // pred_check_branch
      %511 = sbr.rel (%p509) target = $region48
    $region47: #{siglip2_forward.8} parent=5 // pred_region
      // Predicated region
      $region49: #{siglip2_forward.8} parent=47 // pred_check
        %p512 = pneg %p61
      $region50: #{siglip2_forward.8} parent=47 // pred_check_branch
        %514 = sbr.rel (%p512) target = $region52
      $region51: #{siglip2_forward.8} parent=47 // pred_region
        %s515 = smul.u32 16, %s36
        %p516 = scmp.lt.s32.totalorder %s515, 47
        %s517 = scalar_select %p516, %s515, 47
        %s518 = smul.addr %s517, 4
        %s519 = scalar_lea.vmem %s1, %s518
        %s520 = smul.u32 16, %s36
      $region52: #{siglip2_forward.8} parent=47 // pred_fallthru
        _
      // Predicated region
      $region53: #{siglip2_forward.8} parent=47 // pred_check
        %p521 = pneg %p113
      $region54: #{siglip2_forward.8} parent=47 // pred_check_branch
        %523 = sbr.rel (%p521) target = $region56
      $region55: #{siglip2_forward.8} parent=47 // pred_region
        %s524 = sld [smem:[#allocation6 + %s36]]
        %s525 = sshra.s32 %s36, 7
        %s526 = sand.u32 %s36, 127
        %s527 = sadd.s32 %s525, 1
        %s528 = smul.u32 %s527, 128
        %s529 = sshra.s32 %s36, 7
        %s530 = sand.u32 %s36, 127
        %s531 = sadd.s32 %s528, %s530
        %s532 = sld [smem:[#allocation6 + %s531]]
        %s533 = ssub.s32 %s532, 1
        %p534 = scmp.lt.s32.totalorder %s37, %s533
        %s535 = scalar_select %p534, %s37, %s533
        %s536 = sadd.s32 %s524, %s535
        %s537 = smul.u32 16, %s536
        %p538 = scmp.lt.s32.totalorder %s537, 47
        %s539 = scalar_select %p538, %s537, 47
        %s540 = smul.addr %s539, 4
        %s541 = scalar_lea.vmem %s2, %s540
        %s542 = sld [smem:[#allocation6 + %s36]]
        %s543 = sshra.s32 %s36, 7
        %s544 = sand.u32 %s36, 127
        %s545 = sadd.s32 %s543, 1
        %s546 = smul.u32 %s545, 128
        %s547 = sshra.s32 %s36, 7
        %s548 = sand.u32 %s36, 127
        %s549 = sadd.s32 %s546, %s548
        %s550 = sld [smem:[#allocation6 + %s549]]
        %s551 = ssub.s32 %s550, 1
        %p552 = scmp.lt.s32.totalorder %s37, %s551
        %s553 = scalar_select %p552, %s37, %s551
        %s554 = sadd.s32 %s542, %s553
        %s555 = smul.u32 16, %s554
      $region56: #{siglip2_forward.8} parent=47 // pred_fallthru
        _
      // Predicated region
      $region57: #{siglip2_forward.8} parent=47 // pred_check
        %p556 = pneg %p165
      $region58: #{siglip2_forward.8} parent=47 // pred_check_branch
        %558 = sbr.rel (%p556) target = $region60
      $region59: #{siglip2_forward.8} parent=47 // pred_region
        %s559 = sld [smem:[#allocation6 + %s36]]
        %s560 = sshra.s32 %s36, 7
        %s561 = sand.u32 %s36, 127
        %s562 = sadd.s32 %s560, 1
        %s563 = smul.u32 %s562, 128
        %s564 = sshra.s32 %s36, 7
        %s565 = sand.u32 %s36, 127
        %s566 = sadd.s32 %s563, %s565
        %s567 = sld [smem:[#allocation6 + %s566]]
        %s568 = ssub.s32 %s567, 1
        %p569 = scmp.lt.s32.totalorder %s37, %s568
        %s570 = scalar_select %p569, %s37, %s568
        %s571 = sadd.s32 %s559, %s570
        %s572 = smul.u32 16, %s571
        %p573 = scmp.lt.s32.totalorder %s572, 47
        %s574 = scalar_select %p573, %s572, 47
        %s575 = smul.addr %s574, 4
        %s576 = scalar_lea.vmem %s3, %s575
        %s577 = sld [smem:[#allocation6 + %s36]]
        %s578 = sshra.s32 %s36, 7
        %s579 = sand.u32 %s36, 127
        %s580 = sadd.s32 %s578, 1
        %s581 = smul.u32 %s580, 128
        %s582 = sshra.s32 %s36, 7
        %s583 = sand.u32 %s36, 127
        %s584 = sadd.s32 %s581, %s583
        %s585 = sld [smem:[#allocation6 + %s584]]
        %s586 = ssub.s32 %s585, 1
        %p587 = scmp.lt.s32.totalorder %s37, %s586
        %s588 = scalar_select %p587, %s37, %s586
        %s589 = sadd.s32 %s577, %s588
        %s590 = smul.u32 16, %s589
      $region60: #{siglip2_forward.8} parent=47 // pred_fallthru
        _
      // Predicated region
      $region61: #{siglip2_forward.8} parent=47 // pred_check
        %p591 = pneg %p191
      $region62: #{siglip2_forward.8} parent=47 // pred_check_branch
        %593 = sbr.rel (%p591) target = $region64
      $region63: #{siglip2_forward.8} parent=47 // pred_region
        %s594 = smul.u32 16, %s36
        %p595 = scmp.lt.s32.totalorder %s594, 47
        %s596 = scalar_select %p595, %s594, 47
        %s597 = smul.addr %s596, 8
        %s598 = scalar_lea.vmem %s4, %s597
        %s599 = smul.u32 16, %s36
      $region64: #{siglip2_forward.8} parent=47 // pred_fallthru
        _
      // Predicated region
      $region65: #{siglip2_forward.8} parent=47 // pred_check
        %p600 = pneg %p243
      $region66: #{siglip2_forward.8} parent=47 // pred_check_branch
        %602 = sbr.rel (%p600) target = $region68
      $region67: #{siglip2_forward.8} parent=47 // pred_region
        %s603 = sld [smem:[#allocation6 + %s36]]
        %s604 = sshra.s32 %s36, 7
        %s605 = sand.u32 %s36, 127
        %s606 = sadd.s32 %s604, 1
        %s607 = smul.u32 %s606, 128
        %s608 = sshra.s32 %s36, 7
        %s609 = sand.u32 %s36, 127
        %s610 = sadd.s32 %s607, %s609
        %s611 = sld [smem:[#allocation6 + %s610]]
        %s612 = ssub.s32 %s611, 1
        %p613 = scmp.lt.s32.totalorder %s37, %s612
        %s614 = scalar_select %p613, %s37, %s612
        %s615 = sadd.s32 %s603, %s614
        %p616 = scmp.lt.s32.totalorder %s615, 2
        %s617 = scalar_select %p616, %s615, 2
        %s618 = scalar_lea.vmem %s5, %s617
        %s619 = sld [smem:[#allocation6 + %s36]]
        %s620 = sshra.s32 %s36, 7
        %s621 = sand.u32 %s36, 127
        %s622 = sadd.s32 %s620, 1
        %s623 = smul.u32 %s622, 128
        %s624 = sshra.s32 %s36, 7
        %s625 = sand.u32 %s36, 127
        %s626 = sadd.s32 %s623, %s625
        %s627 = sld [smem:[#allocation6 + %s626]]
        %s628 = ssub.s32 %s627, 1
        %p629 = scmp.lt.s32.totalorder %s37, %s628
        %s630 = scalar_select %p629, %s37, %s628
        %s631 = sadd.s32 %s619, %s630
      $region68: #{siglip2_forward.8} parent=47 // pred_fallthru
        _
      // Predicated region
      $region69: #{siglip2_forward.8} parent=47 // pred_check
        %p632 = pneg %p269
      $region70: #{siglip2_forward.8} parent=47 // pred_check_branch
        %634 = sbr.rel (%p632) target = $region72
      $region71: #{siglip2_forward.8} parent=47 // pred_region
        %s635 = smul.u32 16, %s36
        %p636 = scmp.lt.s32.totalorder %s635, 47
        %s637 = scalar_select %p636, %s635, 47
        %s638 = smul.addr %s637, 4
        %s639 = scalar_lea.vmem %s6, %s638
        %s640 = smul.u32 16, %s36
      $region72: #{siglip2_forward.8} parent=47 // pred_fallthru
        _
    $region48: #{siglip2_forward.8} parent=5 // pred_fallthru
      _
    %p641 = scmp.le.s32.totalorder 1, %s29
    %p642 = scmp.lt.s32.totalorder %s29, 7
    %p643 = pnand %p641, %p642
    %p644 = pneg %p643
    // Predicated region
    $region73: #{siglip2_forward.8} parent=5 // pred_check
      _
    $region74: #{siglip2_forward.8} parent=5 // pred_check_branch
      %646 = sbr.rel (%p643) target = $region76
    $region75: #{siglip2_forward.8} parent=5 // pred_region
      %s647 = ssub.s32 %s29, 1
      %s648 = smul.u32 16, %s38
      %p649 = scmp.lt.s32.totalorder %s648, 47
      %s650 = scalar_select %p649, %s648, 47
      %s651 = smul.addr %s650, 4
      %s652 = scalar_lea.vmem %s1, %s651
      %p653 = pneg %p67
      %p654 = pneg %p64
      %s655 = sld [smem:[#allocation6 + %s38]]
      %s656 = sshra.s32 %s38, 7
      %s657 = sand.u32 %s38, 127
      %s658 = sadd.s32 %s656, 1
      %s659 = smul.u32 %s658, 128
      %s660 = sshra.s32 %s38, 7
      %s661 = sand.u32 %s38, 127
      %s662 = sadd.s32 %s659, %s661
      %s663 = sld [smem:[#allocation6 + %s662]]
      %s664 = ssub.s32 %s663, 1
      %p665 = scmp.lt.s32.totalorder %s39, %s664
      %s666 = scalar_select %p665, %s39, %s664
      %s667 = sadd.s32 %s655, %s666
      %s668 = smul.u32 16, %s667
      %p669 = scmp.lt.s32.totalorder %s668, 47
      %s670 = scalar_select %p669, %s668, 47
      %s671 = smul.addr %s670, 4
      %s672 = scalar_lea.vmem %s2, %s671
      %p673 = pneg %p119
      %p674 = pneg %p116
      %s675 = sld [smem:[#allocation6 + %s38]]
      %s676 = sshra.s32 %s38, 7
      %s677 = sand.u32 %s38, 127
      %s678 = sadd.s32 %s676, 1
      %s679 = smul.u32 %s678, 128
      %s680 = sshra.s32 %s38, 7
      %s681 = sand.u32 %s38, 127
      %s682 = sadd.s32 %s679, %s681
      %s683 = sld [smem:[#allocation6 + %s682]]
      %s684 = ssub.s32 %s683, 1
      %p685 = scmp.lt.s32.totalorder %s39, %s684
      %s686 = scalar_select %p685, %s39, %s684
      %s687 = sadd.s32 %s675, %s686
      %s688 = smul.u32 16, %s687
      %p689 = scmp.lt.s32.totalorder %s688, 47
      %s690 = scalar_select %p689, %s688, 47
      %s691 = smul.addr %s690, 4
      %s692 = scalar_lea.vmem %s3, %s691
      %p693 = pneg %p171
      %p694 = pneg %p168
      %s695 = smul.u32 16, %s38
      %p696 = scmp.lt.s32.totalorder %s695, 47
      %s697 = scalar_select %p696, %s695, 47
      %s698 = smul.addr %s697, 8
      %s699 = scalar_lea.vmem %s4, %s698
      %p700 = pneg %p197
      %p701 = pneg %p194
      %s702 = sld [smem:[#allocation6 + %s38]]
      %s703 = sshra.s32 %s38, 7
      %s704 = sand.u32 %s38, 127
      %s705 = sadd.s32 %s703, 1
      %s706 = smul.u32 %s705, 128
      %s707 = sshra.s32 %s38, 7
      %s708 = sand.u32 %s38, 127
      %s709 = sadd.s32 %s706, %s708
      %s710 = sld [smem:[#allocation6 + %s709]]
      %s711 = ssub.s32 %s710, 1
      %p712 = scmp.lt.s32.totalorder %s39, %s711
      %s713 = scalar_select %p712, %s39, %s711
      %s714 = sadd.s32 %s702, %s713
      %p715 = scmp.lt.s32.totalorder %s714, 2
      %s716 = scalar_select %p715, %s714, 2
      %s717 = scalar_lea.vmem %s5, %s716
      %p718 = pneg %p249
      %p719 = pneg %p246
      %s720 = smul.u32 16, %s38
      %p721 = scmp.lt.s32.totalorder %s720, 47
      %s722 = scalar_select %p721, %s720, 47
      %s723 = smul.addr %s722, 4
      %s724 = scalar_lea.vmem %s6, %s723
      %p725 = pneg %p275
      %p726 = pneg %p272
      %p727 = pneg %p296
      %p728 = pneg %p293
      %p729 = pneg %p317
      %p730 = pneg %p314
      %p731 = pneg %p338
      %p732 = pneg %p335
      %p733 = pneg %p359
      %p734 = pneg %p356
      %p735 = pneg %p380
      %p736 = pneg %p377
      %p737 = pneg %p401
      %p738 = pneg %p398
      %p739 = pneg %p422
      %p740 = pneg %p419
      %p741 = pneg %p443
      %p742 = pneg %p440
      %p743 = pneg %p469
      %p744 = pneg %p466
      %s745 = smul.u32 16, %s38
      %p746 = scmp.lt.s32.totalorder %s745, 47
      %s747 = scalar_select %p746, %s745, 47
      %s748 = smul.addr %s747, 4
      %s749 = scalar_lea.vmem %s15, %s748
      %s750 = smul.u32 16, %s38
      %p751 = scmp.lt.s32.totalorder %s750, 47
      %s752 = scalar_select %p751, %s750, 47
      %s753 = smul.addr %s752, 4
      %s754 = scalar_lea.vmem %s1, %s753
      %s755 = smul.u32 16, %s38
      %s756 = sld [smem:[#allocation6 + %s38]]
      %s757 = sshra.s32 %s38, 7
      %s758 = sand.u32 %s38, 127
      %s759 = sadd.s32 %s757, 1
      %s760 = smul.u32 %s759, 128
      %s761 = sshra.s32 %s38, 7
      %s762 = sand.u32 %s38, 127
      %s763 = sadd.s32 %s760, %s762
      %s764 = sld [smem:[#allocation6 + %s763]]
      %s765 = ssub.s32 %s764, 1
      %p766 = scmp.lt.s32.totalorder %s39, %s765
      %s767 = scalar_select %p766, %s39, %s765
      %s768 = sadd.s32 %s756, %s767
      %s769 = smul.u32 16, %s768
      %p770 = scmp.lt.s32.totalorder %s769, 47
      %s771 = scalar_select %p770, %s769, 47
      %s772 = smul.addr %s771, 4
      %s773 = scalar_lea.vmem %s2, %s772
      %s774 = sld [smem:[#allocation6 + %s38]]
      %s775 = sshra.s32 %s38, 7
      %s776 = sand.u32 %s38, 127
      %s777 = sadd.s32 %s775, 1
      %s778 = smul.u32 %s777, 128
      %s779 = sshra.s32 %s38, 7
      %s780 = sand.u32 %s38, 127
      %s781 = sadd.s32 %s778, %s780
      %s782 = sld [smem:[#allocation6 + %s781]]
      %s783 = ssub.s32 %s782, 1
      %p784 = scmp.lt.s32.totalorder %s39, %s783
      %s785 = scalar_select %p784, %s39, %s783
      %s786 = sadd.s32 %s774, %s785
      %s787 = smul.u32 16, %s786
      %s788 = sld [smem:[#allocation6 + %s38]]
      %s789 = sshra.s32 %s38, 7
      %s790 = sand.u32 %s38, 127
      %s791 = sadd.s32 %s789, 1
      %s792 = smul.u32 %s791, 128
      %s793 = sshra.s32 %s38, 7
      %s794 = sand.u32 %s38, 127
      %s795 = sadd.s32 %s792, %s794
      %s796 = sld [smem:[#allocation6 + %s795]]
      %s797 = ssub.s32 %s796, 1
      %p798 = scmp.lt.s32.totalorder %s39, %s797
      %s799 = scalar_select %p798, %s39, %s797
      %s800 = sadd.s32 %s788, %s799
      %s801 = smul.u32 16, %s800
      %p802 = scmp.lt.s32.totalorder %s801, 47
      %s803 = scalar_select %p802, %s801, 47
      %s804 = smul.addr %s803, 4
      %s805 = scalar_lea.vmem %s3, %s804
      %s806 = sld [smem:[#allocation6 + %s38]]
      %s807 = sshra.s32 %s38, 7
      %s808 = sand.u32 %s38, 127
      %s809 = sadd.s32 %s807, 1
      %s810 = smul.u32 %s809, 128
      %s811 = sshra.s32 %s38, 7
      %s812 = sand.u32 %s38, 127
      %s813 = sadd.s32 %s810, %s812
      %s814 = sld [smem:[#allocation6 + %s813]]
      %s815 = ssub.s32 %s814, 1
      %p816 = scmp.lt.s32.totalorder %s39, %s815
      %s817 = scalar_select %p816, %s39, %s815
      %s818 = sadd.s32 %s806, %s817
      %s819 = smul.u32 16, %s818
      %s820 = smul.u32 16, %s38
      %p821 = scmp.lt.s32.totalorder %s820, 47
      %s822 = scalar_select %p821, %s820, 47
      %s823 = smul.addr %s822, 8
      %s824 = scalar_lea.vmem %s4, %s823
      %s825 = smul.u32 16, %s38
      %s826 = sld [smem:[#allocation6 + %s38]]
      %s827 = sshra.s32 %s38, 7
      %s828 = sand.u32 %s38, 127
      %s829 = sadd.s32 %s827, 1
      %s830 = smul.u32 %s829, 128
      %s831 = sshra.s32 %s38, 7
      %s832 = sand.u32 %s38, 127
      %s833 = sadd.s32 %s830, %s832
      %s834 = sld [smem:[#allocation6 + %s833]]
      %s835 = ssub.s32 %s834, 1
      %p836 = scmp.lt.s32.totalorder %s39, %s835
      %s837 = scalar_select %p836, %s39, %s835
      %s838 = sadd.s32 %s826, %s837
      %p839 = scmp.lt.s32.totalorder %s838, 2
      %s840 = scalar_select %p839, %s838, 2
      %s841 = scalar_lea.vmem %s5, %s840
      %s842 = sld [smem:[#allocation6 + %s38]]
      %s843 = sshra.s32 %s38, 7
      %s844 = sand.u32 %s38, 127
      %s845 = sadd.s32 %s843, 1
      %s846 = smul.u32 %s845, 128
      %s847 = sshra.s32 %s38, 7
      %s848 = sand.u32 %s38, 127
      %s849 = sadd.s32 %s846, %s848
      %s850 = sld [smem:[#allocation6 + %s849]]
      %s851 = ssub.s32 %s850, 1
      %p852 = scmp.lt.s32.totalorder %s39, %s851
      %s853 = scalar_select %p852, %s39, %s851
      %s854 = sadd.s32 %s842, %s853
      %s855 = smul.u32 16, %s38
      %p856 = scmp.lt.s32.totalorder %s855, 47
      %s857 = scalar_select %p856, %s855, 47
      %s858 = smul.addr %s857, 4
      %s859 = scalar_lea.vmem %s6, %s858
      %s860 = smul.u32 16, %s38
      %s861 = smul.u32 16, %s38
      %p862 = scmp.lt.s32.totalorder %s861, 47
      %s863 = scalar_select %p862, %s861, 47
      %s864 = smul.addr %s863, 4
      %s865 = scalar_lea.vmem %s15, %s864
      %s866 = smul.u32 16, %s38
      %s868 = sshra.s32 %s38, 7
      %s869 = sand.u32 %s38, 127
      %s870 = sadd.s32 %s868, 1
      %s871 = smul.u32 %s870, 128
      %s872 = sshra.s32 %s38, 7
      %s873 = sand.u32 %s38, 127
      %s874 = sadd.s32 %s871, %s873
      %s875 = sld [smem:[#allocation6 + %s874]]
      %p876 = scmp.eq.s32.totalorder %s39, 0
      // Predicated region
      $region77: #{siglip2_forward.8} parent=75 // pred_check
        %p877 = pneg %p876
      $region78: #{siglip2_forward.8} parent=75 // pred_check_branch
        %879 = sbr.rel (%p877) target = $region80
      $region79: #{siglip2_forward.8} parent=75 // pred_region
        %vm880 = vcmask 7168
        %881 = vst.msk [vmem:[#allocation2] sm:$0xff] %vm880, -inf
        %882 = vst.msk [vmem:[#allocation2 + $0x8] sm:$0xff] %vm880, -inf
        %883 = vst.msk [vmem:[#allocation2 + $0x10] sm:$0xff] %vm880, -inf
        %884 = vst.msk [vmem:[#allocation2 + $0x18] sm:$0xff] %vm880, -inf
        %885 = vst.msk [vmem:[#allocation2 + $0x20] sm:$0xff] %vm880, -inf
        %886 = vst.msk [vmem:[#allocation2 + $0x28] sm:$0xff] %vm880, -inf
        %887 = vst.msk [vmem:[#allocation2 + $0x30] sm:$0xff] %vm880, -inf
        %888 = vst.msk [vmem:[#allocation2 + $0x38] sm:$0xff] %vm880, -inf
        %889 = vst.msk [vmem:[#allocation2 + $0x40] sm:$0xff] %vm880, -inf
        %890 = vst.msk [vmem:[#allocation2 + $0x48] sm:$0xff] %vm880, -inf
        %891 = vst.msk [vmem:[#allocation2 + $0x50] sm:$0xff] %vm880, -inf
        %892 = vst.msk [vmem:[#allocation2 + $0x58] sm:$0xff] %vm880, -inf
        %893 = vst.msk [vmem:[#allocation2 + $0x60] sm:$0xff] %vm880, -inf
        %894 = vst.msk [vmem:[#allocation2 + $0x68] sm:$0xff] %vm880, -inf
        %895 = vst.msk [vmem:[#allocation2 + $0x70] sm:$0xff] %vm880, -inf
        %896 = vst.msk [vmem:[#allocation2 + $0x78] sm:$0xff] %vm880, -inf
        %897 = vst.msk [vmem:[#allocation2 + $0x80] sm:$0xff] %vm880, -inf
        %898 = vst.msk [vmem:[#allocation2 + $0x88] sm:$0xff] %vm880, -inf
        %899 = vst.msk [vmem:[#allocation2 + $0x90] sm:$0xff] %vm880, -inf
        %900 = vst.msk [vmem:[#allocation2 + $0x98] sm:$0xff] %vm880, -inf
        %901 = vst.msk [vmem:[#allocation2 + $0xa0] sm:$0xff] %vm880, -inf
        %902 = vst.msk [vmem:[#allocation2 + $0xa8] sm:$0xff] %vm880, -inf
        %903 = vst.msk [vmem:[#allocation2 + $0xb0] sm:$0xff] %vm880, -inf
        %904 = vst.msk [vmem:[#allocation2 + $0xb8] sm:$0xff] %vm880, -inf
        %905 = vst.msk [vmem:[#allocation2 + $0xc0] sm:$0xff] %vm880, -inf
        %906 = vst.msk [vmem:[#allocation2 + $0xc8] sm:$0xff] %vm880, -inf
        %907 = vst.msk [vmem:[#allocation2 + $0xd0] sm:$0xff] %vm880, -inf
        %908 = vst.msk [vmem:[#allocation2 + $0xd8] sm:$0xff] %vm880, -inf
        %909 = vst.msk [vmem:[#allocation2 + $0xe0] sm:$0xff] %vm880, -inf
        %910 = vst.msk [vmem:[#allocation2 + $0xe8] sm:$0xff] %vm880, -inf
        %911 = vst.msk [vmem:[#allocation2 + $0xf0] sm:$0xff] %vm880, -inf
        %912 = vst.msk [vmem:[#allocation2 + $0xf8] sm:$0xff] %vm880, -inf
        %913 = vst.msk [vmem:[#allocation2 + $0x100] sm:$0xff] %vm880, -inf
        %914 = vst.msk [vmem:[#allocation2 + $0x108] sm:$0xff] %vm880, -inf
        %915 = vst.msk [vmem:[#allocation2 + $0x110] sm:$0xff] %vm880, -inf
        %916 = vst.msk [vmem:[#allocation2 + $0x118] sm:$0xff] %vm880, -inf
        %917 = vst.msk [vmem:[#allocation2 + $0x120] sm:$0xff] %vm880, -inf
        %918 = vst.msk [vmem:[#allocation2 + $0x128] sm:$0xff] %vm880, -inf
        %919 = vst.msk [vmem:[#allocation2 + $0x130] sm:$0xff] %vm880, -inf
        %920 = vst.msk [vmem:[#allocation2 + $0x138] sm:$0xff] %vm880, -inf
        %921 = vst.msk [vmem:[#allocation2 + $0x140] sm:$0xff] %vm880, -inf
        %922 = vst.msk [vmem:[#allocation2 + $0x148] sm:$0xff] %vm880, -inf
        %923 = vst.msk [vmem:[#allocation2 + $0x150] sm:$0xff] %vm880, -inf
        %924 = vst.msk [vmem:[#allocation2 + $0x158] sm:$0xff] %vm880, -inf
        %925 = vst.msk [vmem:[#allocation2 + $0x160] sm:$0xff] %vm880, -inf
        %926 = vst.msk [vmem:[#allocation2 + $0x168] sm:$0xff] %vm880, -inf
        %927 = vst.msk [vmem:[#allocation2 + $0x170] sm:$0xff] %vm880, -inf
        %928 = vst.msk [vmem:[#allocation2 + $0x178] sm:$0xff] %vm880, -inf
        %929 = vst.msk [vmem:[#allocation2 + $0x180] sm:$0xff] %vm880, -inf
        %930 = vst.msk [vmem:[#allocation2 + $0x188] sm:$0xff] %vm880, -inf
        %931 = vst.msk [vmem:[#allocation2 + $0x190] sm:$0xff] %vm880, -inf
        %932 = vst.msk [vmem:[#allocation2 + $0x198] sm:$0xff] %vm880, -inf
        %933 = vst.msk [vmem:[#allocation2 + $0x1a0] sm:$0xff] %vm880, -inf
        %934 = vst.msk [vmem:[#allocation2 + $0x1a8] sm:$0xff] %vm880, -inf
        %935 = vst.msk [vmem:[#allocation2 + $0x1b0] sm:$0xff] %vm880, -inf
        %936 = vst.msk [vmem:[#allocation2 + $0x1b8] sm:$0xff] %vm880, -inf
        %937 = vst.msk [vmem:[#allocation2 + $0x1c0] sm:$0xff] %vm880, -inf
        %938 = vst.msk [vmem:[#allocation2 + $0x1c8] sm:$0xff] %vm880, -inf
        %939 = vst.msk [vmem:[#allocation2 + $0x1d0] sm:$0xff] %vm880, -inf
        %940 = vst.msk [vmem:[#allocation2 + $0x1d8] sm:$0xff] %vm880, -inf
        %941 = vst.msk [vmem:[#allocation2 + $0x1e0] sm:$0xff] %vm880, -inf
        %942 = vst.msk [vmem:[#allocation2 + $0x1e8] sm:$0xff] %vm880, -inf
        %943 = vst.msk [vmem:[#allocation2 + $0x1f0] sm:$0xff] %vm880, -inf
        %944 = vst.msk [vmem:[#allocation2 + $0x1f8] sm:$0xff] %vm880, -inf
        %945 = vst.msk [vmem:[#allocation3] sm:$0xff] %vm880, 0.0
        %946 = vst.msk [vmem:[#allocation3 + $0x8] sm:$0xff] %vm880, 0.0
        %947 = vst.msk [vmem:[#allocation3 + $0x10] sm:$0xff] %vm880, 0.0
        %948 = vst.msk [vmem:[#allocation3 + $0x18] sm:$0xff] %vm880, 0.0
        %949 = vst.msk [vmem:[#allocation3 + $0x20] sm:$0xff] %vm880, 0.0
        %950 = vst.msk [vmem:[#allocation3 + $0x28] sm:$0xff] %vm880, 0.0
        %951 = vst.msk [vmem:[#allocation3 + $0x30] sm:$0xff] %vm880, 0.0
        %952 = vst.msk [vmem:[#allocation3 + $0x38] sm:$0xff] %vm880, 0.0
        %953 = vst.msk [vmem:[#allocation3 + $0x40] sm:$0xff] %vm880, 0.0
        %954 = vst.msk [vmem:[#allocation3 + $0x48] sm:$0xff] %vm880, 0.0
        %955 = vst.msk [vmem:[#allocation3 + $0x50] sm:$0xff] %vm880, 0.0
        %956 = vst.msk [vmem:[#allocation3 + $0x58] sm:$0xff] %vm880, 0.0
        %957 = vst.msk [vmem:[#allocation3 + $0x60] sm:$0xff] %vm880, 0.0
        %958 = vst.msk [vmem:[#allocation3 + $0x68] sm:$0xff] %vm880, 0.0
        %959 = vst.msk [vmem:[#allocation3 + $0x70] sm:$0xff] %vm880, 0.0
        %960 = vst.msk [vmem:[#allocation3 + $0x78] sm:$0xff] %vm880, 0.0
        %961 = vst.msk [vmem:[#allocation3 + $0x80] sm:$0xff] %vm880, 0.0
        %962 = vst.msk [vmem:[#allocation3 + $0x88] sm:$0xff] %vm880, 0.0
        %963 = vst.msk [vmem:[#allocation3 + $0x90] sm:$0xff] %vm880, 0.0
        %964 = vst.msk [vmem:[#allocation3 + $0x98] sm:$0xff] %vm880, 0.0
        %965 = vst.msk [vmem:[#allocation3 + $0xa0] sm:$0xff] %vm880, 0.0
        %966 = vst.msk [vmem:[#allocation3 + $0xa8] sm:$0xff] %vm880, 0.0
        %967 = vst.msk [vmem:[#allocation3 + $0xb0] sm:$0xff] %vm880, 0.0
        %968 = vst.msk [vmem:[#allocation3 + $0xb8] sm:$0xff] %vm880, 0.0
        %969 = vst.msk [vmem:[#allocation3 + $0xc0] sm:$0xff] %vm880, 0.0
        %970 = vst.msk [vmem:[#allocation3 + $0xc8] sm:$0xff] %vm880, 0.0
        %971 = vst.msk [vmem:[#allocation3 + $0xd0] sm:$0xff] %vm880, 0.0
        %972 = vst.msk [vmem:[#allocation3 + $0xd8] sm:$0xff] %vm880, 0.0
        %973 = vst.msk [vmem:[#allocation3 + $0xe0] sm:$0xff] %vm880, 0.0
        %974 = vst.msk [vmem:[#allocation3 + $0xe8] sm:$0xff] %vm880, 0.0
        %975 = vst.msk [vmem:[#allocation3 + $0xf0] sm:$0xff] %vm880, 0.0
        %976 = vst.msk [vmem:[#allocation3 + $0xf8] sm:$0xff] %vm880, 0.0
        %977 = vst.msk [vmem:[#allocation3 + $0x100] sm:$0xff] %vm880, 0.0
        %978 = vst.msk [vmem:[#allocation3 + $0x108] sm:$0xff] %vm880, 0.0
        %979 = vst.msk [vmem:[#allocation3 + $0x110] sm:$0xff] %vm880, 0.0
        %980 = vst.msk [vmem:[#allocation3 + $0x118] sm:$0xff] %vm880, 0.0
        %981 = vst.msk [vmem:[#allocation3 + $0x120] sm:$0xff] %vm880, 0.0
        %982 = vst.msk [vmem:[#allocation3 + $0x128] sm:$0xff] %vm880, 0.0
        %983 = vst.msk [vmem:[#allocation3 + $0x130] sm:$0xff] %vm880, 0.0
        %984 = vst.msk [vmem:[#allocation3 + $0x138] sm:$0xff] %vm880, 0.0
        %985 = vst.msk [vmem:[#allocation3 + $0x140] sm:$0xff] %vm880, 0.0
        %986 = vst.msk [vmem:[#allocation3 + $0x148] sm:$0xff] %vm880, 0.0
        %987 = vst.msk [vmem:[#allocation3 + $0x150] sm:$0xff] %vm880, 0.0
        %988 = vst.msk [vmem:[#allocation3 + $0x158] sm:$0xff] %vm880, 0.0
        %989 = vst.msk [vmem:[#allocation3 + $0x160] sm:$0xff] %vm880, 0.0
        %990 = vst.msk [vmem:[#allocation3 + $0x168] sm:$0xff] %vm880, 0.0
        %991 = vst.msk [vmem:[#allocation3 + $0x170] sm:$0xff] %vm880, 0.0
        %992 = vst.msk [vmem:[#allocation3 + $0x178] sm:$0xff] %vm880, 0.0
        %993 = vst.msk [vmem:[#allocation3 + $0x180] sm:$0xff] %vm880, 0.0
        %994 = vst.msk [vmem:[#allocation3 + $0x188] sm:$0xff] %vm880, 0.0
        %995 = vst.msk [vmem:[#allocation3 + $0x190] sm:$0xff] %vm880, 0.0
        %996 = vst.msk [vmem:[#allocation3 + $0x198] sm:$0xff] %vm880, 0.0
        %997 = vst.msk [vmem:[#allocation3 + $0x1a0] sm:$0xff] %vm880, 0.0
        %998 = vst.msk [vmem:[#allocation3 + $0x1a8] sm:$0xff] %vm880, 0.0
        %999 = vst.msk [vmem:[#allocation3 + $0x1b0] sm:$0xff] %vm880, 0.0
        %1000 = vst.msk [vmem:[#allocation3 + $0x1b8] sm:$0xff] %vm880, 0.0
        %1001 = vst.msk [vmem:[#allocation3 + $0x1c0] sm:$0xff] %vm880, 0.0
        %1002 = vst.msk [vmem:[#allocation3 + $0x1c8] sm:$0xff] %vm880, 0.0
        %1003 = vst.msk [vmem:[#allocation3 + $0x1d0] sm:$0xff] %vm880, 0.0
        %1004 = vst.msk [vmem:[#allocation3 + $0x1d8] sm:$0xff] %vm880, 0.0
        %1005 = vst.msk [vmem:[#allocation3 + $0x1e0] sm:$0xff] %vm880, 0.0
        %1006 = vst.msk [vmem:[#allocation3 + $0x1e8] sm:$0xff] %vm880, 0.0
        %1007 = vst.msk [vmem:[#allocation3 + $0x1f0] sm:$0xff] %vm880, 0.0
        %1008 = vst.msk [vmem:[#allocation3 + $0x1f8] sm:$0xff] %vm880, 0.0
        %vm1009 = vcmask 64512
        %1010 = vst.msk [vmem:[#allocation4] sm:$0xff] %vm1009, 0.0
        %1011 = vst.msk [vmem:[#allocation4 + $0x8] sm:$0xff] %vm1009, 0.0
        %1012 = vst.msk [vmem:[#allocation4 + $0x10] sm:$0xff] %vm1009, 0.0
        %1013 = vst.msk [vmem:[#allocation4 + $0x18] sm:$0xff] %vm1009, 0.0
        %1014 = vst.msk [vmem:[#allocation4 + $0x20] sm:$0xff] %vm1009, 0.0
        %1015 = vst.msk [vmem:[#allocation4 + $0x28] sm:$0xff] %vm1009, 0.0
        %1016 = vst.msk [vmem:[#allocation4 + $0x30] sm:$0xff] %vm1009, 0.0
        %1017 = vst.msk [vmem:[#allocation4 + $0x38] sm:$0xff] %vm1009, 0.0
        %1018 = vst.msk [vmem:[#allocation4 + $0x40] sm:$0xff] %vm1009, 0.0
        %1019 = vst.msk [vmem:[#allocation4 + $0x48] sm:$0xff] %vm1009, 0.0
        %1020 = vst.msk [vmem:[#allocation4 + $0x50] sm:$0xff] %vm1009, 0.0
        %1021 = vst.msk [vmem:[#allocation4 + $0x58] sm:$0xff] %vm1009, 0.0
        %1022 = vst.msk [vmem:[#allocation4 + $0x60] sm:$0xff] %vm1009, 0.0
        %1023 = vst.msk [vmem:[#allocation4 + $0x68] sm:$0xff] %vm1009, 0.0
        %1024 = vst.msk [vmem:[#allocation4 + $0x70] sm:$0xff] %vm1009, 0.0
        %1025 = vst.msk [vmem:[#allocation4 + $0x78] sm:$0xff] %vm1009, 0.0
        %1026 = vst.msk [vmem:[#allocation4 + $0x80] sm:$0xff] %vm1009, 0.0
        %1027 = vst.msk [vmem:[#allocation4 + $0x88] sm:$0xff] %vm1009, 0.0
        %1028 = vst.msk [vmem:[#allocation4 + $0x90] sm:$0xff] %vm1009, 0.0
        %1029 = vst.msk [vmem:[#allocation4 + $0x98] sm:$0xff] %vm1009, 0.0
        %1030 = vst.msk [vmem:[#allocation4 + $0xa0] sm:$0xff] %vm1009, 0.0
        %1031 = vst.msk [vmem:[#allocation4 + $0xa8] sm:$0xff] %vm1009, 0.0
        %1032 = vst.msk [vmem:[#allocation4 + $0xb0] sm:$0xff] %vm1009, 0.0
        %1033 = vst.msk [vmem:[#allocation4 + $0xb8] sm:$0xff] %vm1009, 0.0
        %1034 = vst.msk [vmem:[#allocation4 + $0xc0] sm:$0xff] %vm1009, 0.0
        %1035 = vst.msk [vmem:[#allocation4 + $0xc8] sm:$0xff] %vm1009, 0.0
        %1036 = vst.msk [vmem:[#allocation4 + $0xd0] sm:$0xff] %vm1009, 0.0
        %1037 = vst.msk [vmem:[#allocation4 + $0xd8] sm:$0xff] %vm1009, 0.0
        %1038 = vst.msk [vmem:[#allocation4 + $0xe0] sm:$0xff] %vm1009, 0.0
        %1039 = vst.msk [vmem:[#allocation4 + $0xe8] sm:$0xff] %vm1009, 0.0
        %1040 = vst.msk [vmem:[#allocation4 + $0xf0] sm:$0xff] %vm1009, 0.0
        %1041 = vst.msk [vmem:[#allocation4 + $0xf8] sm:$0xff] %vm1009, 0.0
        %1042 = vst.msk [vmem:[#allocation4 + $0x100] sm:$0xff] %vm1009, 0.0
        %1043 = vst.msk [vmem:[#allocation4 + $0x108] sm:$0xff] %vm1009, 0.0
        %1044 = vst.msk [vmem:[#allocation4 + $0x110] sm:$0xff] %vm1009, 0.0
        %1045 = vst.msk [vmem:[#allocation4 + $0x118] sm:$0xff] %vm1009, 0.0
        %1046 = vst.msk [vmem:[#allocation4 + $0x120] sm:$0xff] %vm1009, 0.0
        %1047 = vst.msk [vmem:[#allocation4 + $0x128] sm:$0xff] %vm1009, 0.0
        %1048 = vst.msk [vmem:[#allocation4 + $0x130] sm:$0xff] %vm1009, 0.0
        %1049 = vst.msk [vmem:[#allocation4 + $0x138] sm:$0xff] %vm1009, 0.0
        %1050 = vst.msk [vmem:[#allocation4 + $0x140] sm:$0xff] %vm1009, 0.0
        %1051 = vst.msk [vmem:[#allocation4 + $0x148] sm:$0xff] %vm1009, 0.0
        %1052 = vst.msk [vmem:[#allocation4 + $0x150] sm:$0xff] %vm1009, 0.0
        %1053 = vst.msk [vmem:[#allocation4 + $0x158] sm:$0xff] %vm1009, 0.0
        %1054 = vst.msk [vmem:[#allocation4 + $0x160] sm:$0xff] %vm1009, 0.0
        %1055 = vst.msk [vmem:[#allocation4 + $0x168] sm:$0xff] %vm1009, 0.0
        %1056 = vst.msk [vmem:[#allocation4 + $0x170] sm:$0xff] %vm1009, 0.0
        %1057 = vst.msk [vmem:[#allocation4 + $0x178] sm:$0xff] %vm1009, 0.0
        %1058 = vst.msk [vmem:[#allocation4 + $0x180] sm:$0xff] %vm1009, 0.0
        %1059 = vst.msk [vmem:[#allocation4 + $0x188] sm:$0xff] %vm1009, 0.0
        %1060 = vst.msk [vmem:[#allocation4 + $0x190] sm:$0xff] %vm1009, 0.0
        %1061 = vst.msk [vmem:[#allocation4 + $0x198] sm:$0xff] %vm1009, 0.0
        %1062 = vst.msk [vmem:[#allocation4 + $0x1a0] sm:$0xff] %vm1009, 0.0
        %1063 = vst.msk [vmem:[#allocation4 + $0x1a8] sm:$0xff] %vm1009, 0.0
        %1064 = vst.msk [vmem:[#allocation4 + $0x1b0] sm:$0xff] %vm1009, 0.0
        %1065 = vst.msk [vmem:[#allocation4 + $0x1b8] sm:$0xff] %vm1009, 0.0
        %1066 = vst.msk [vmem:[#allocation4 + $0x1c0] sm:$0xff] %vm1009, 0.0
        %1067 = vst.msk [vmem:[#allocation4 + $0x1c8] sm:$0xff] %vm1009, 0.0
        %1068 = vst.msk [vmem:[#allocation4 + $0x1d0] sm:$0xff] %vm1009, 0.0
        %1069 = vst.msk [vmem:[#allocation4 + $0x1d8] sm:$0xff] %vm1009, 0.0
        %1070 = vst.msk [vmem:[#allocation4 + $0x1e0] sm:$0xff] %vm1009, 0.0
        %1071 = vst.msk [vmem:[#allocation4 + $0x1e8] sm:$0xff] %vm1009, 0.0
        %1072 = vst.msk [vmem:[#allocation4 + $0x1f0] sm:$0xff] %vm1009, 0.0
        %1073 = vst.msk [vmem:[#allocation4 + $0x1f8] sm:$0xff] %vm1009, 0.0
      $region80: #{siglip2_forward.8} parent=75 // pred_fallthru
        _
      %p1074 = scmp.lt.s32.totalorder %s39, %s875
      // Predicated region
      $region81: #{siglip2_forward.8} parent=75 // pred_check
        %p1075 = pneg %p1074
      $region82: #{siglip2_forward.8} parent=75 // pred_check_branch
        %1077 = sbr.rel (%p1075) target = $region84
      $region83: #{siglip2_forward.8} parent=75 // pred_region
        %v1078 = vld [vmem:[%s754] sm:$0xf]
        %v1079 = vld [vmem:[%s754 + $0x4] sm:$0xf]
        %v1080 = vld [vmem:[%s754 + $0x8] sm:$0xf]
        %v1081 = vld [vmem:[%s754 + $0xc] sm:$0xf]
        %v1082 = vld [vmem:[%s754 + $0x10] sm:$0xf]
        %v1083 = vld [vmem:[%s754 + $0x14] sm:$0xf]
        %v1084 = vld [vmem:[%s754 + $0x18] sm:$0xf]
        %v1085 = vld [vmem:[%s754 + $0x1c] sm:$0xf]
        %v1086 = vld [vmem:[%s754 + $0x20] sm:$0xf]
        %v1087 = vld [vmem:[%s754 + $0x24] sm:$0xf]
        %v1088 = vld [vmem:[%s754 + $0x28] sm:$0xf]
        %v1089 = vld [vmem:[%s754 + $0x2c] sm:$0xf]
        %v1090 = vld [vmem:[%s754 + $0x30] sm:$0xf]
        %v1091 = vld [vmem:[%s754 + $0x34] sm:$0xf]
        %v1092 = vld [vmem:[%s754 + $0x38] sm:$0xf]
        %v1093 = vld [vmem:[%s754 + $0x3c] sm:$0xf]
        %v1094 = vld [vmem:[%s773] sm:$0xf]
        %v1095 = vld [vmem:[%s773 + $0x4] sm:$0xf]
        %v1096 = vld [vmem:[%s773 + $0x8] sm:$0xf]
        %v1097 = vld [vmem:[%s773 + $0xc] sm:$0xf]
        %v1098 = vld [vmem:[%s773 + $0x10] sm:$0xf]
        %v1099 = vld [vmem:[%s773 + $0x14] sm:$0xf]
        %v1100 = vld [vmem:[%s773 + $0x18] sm:$0xf]
        %v1101 = vld [vmem:[%s773 + $0x1c] sm:$0xf]
        %v1102 = vld [vmem:[%s773 + $0x20] sm:$0xf]
        %v1103 = vld [vmem:[%s773 + $0x24] sm:$0xf]
        %v1104 = vld [vmem:[%s773 + $0x28] sm:$0xf]
        %v1105 = vld [vmem:[%s773 + $0x2c] sm:$0xf]
        %v1106 = vld [vmem:[%s773 + $0x30] sm:$0xf]
        %v1107 = vld [vmem:[%s773 + $0x34] sm:$0xf]
        %v1108 = vld [vmem:[%s773 + $0x38] sm:$0xf]
        %v1109 = vld [vmem:[%s773 + $0x3c] sm:$0xf]
        %v1110 = vld [vmem:[%s805] sm:$0xf]
        %v1111 = vld [vmem:[%s805 + $0x4] sm:$0xf]
        %v1112 = vld [vmem:[%s805 + $0x8] sm:$0xf]
        %v1113 = vld [vmem:[%s805 + $0xc] sm:$0xf]
        %v1114 = vld [vmem:[%s805 + $0x10] sm:$0xf]
        %v1115 = vld [vmem:[%s805 + $0x14] sm:$0xf]
        %v1116 = vld [vmem:[%s805 + $0x18] sm:$0xf]
        %v1117 = vld [vmem:[%s805 + $0x1c] sm:$0xf]
        %v1118 = vld [vmem:[%s805 + $0x20] sm:$0xf]
        %v1119 = vld [vmem:[%s805 + $0x24] sm:$0xf]
        %v1120 = vld [vmem:[%s805 + $0x28] sm:$0xf]
        %v1121 = vld [vmem:[%s805 + $0x2c] sm:$0xf]
        %v1122 = vld [vmem:[%s805 + $0x30] sm:$0xf]
        %v1123 = vld [vmem:[%s805 + $0x34] sm:$0xf]
        %v1124 = vld [vmem:[%s805 + $0x38] sm:$0xf]
        %v1125 = vld [vmem:[%s805 + $0x3c] sm:$0xf]
        %v1126 = vld [vmem:[%s824] sm:$0xff]
        %v1127 = vld [vmem:[%s824 + $0x8] sm:$0xff]
        %v1128 = vld [vmem:[%s824 + $0x10] sm:$0xff]
        %v1129 = vld [vmem:[%s824 + $0x18] sm:$0xff]
        %v1130 = vld [vmem:[%s824 + $0x20] sm:$0xff]
        %v1131 = vld [vmem:[%s824 + $0x28] sm:$0xff]
        %v1132 = vld [vmem:[%s824 + $0x30] sm:$0xff]
        %v1133 = vld [vmem:[%s824 + $0x38] sm:$0xff]
        %v1134 = vld [vmem:[%s824 + $0x40] sm:$0xff]
        %v1135 = vld [vmem:[%s824 + $0x48] sm:$0xff]
        %v1136 = vld [vmem:[%s824 + $0x50] sm:$0xff]
        %v1137 = vld [vmem:[%s824 + $0x58] sm:$0xff]
        %v1138 = vld [vmem:[%s824 + $0x60] sm:$0xff]
        %v1139 = vld [vmem:[%s824 + $0x68] sm:$0xff]
        %v1140 = vld [vmem:[%s824 + $0x70] sm:$0xff]
        %v1141 = vld [vmem:[%s824 + $0x78] sm:$0xff]
        %v1142 = vld [vmem:[%s841] sm:$0x1]
        %1143 = vset.pattern.permute.xlu0 0
        %1144 = vperm.xlu0 %1143, %v1126
        %v1145 = vpop.permute.xlu0 %1144
        %1146 = vset.pattern.permute.xlu0 0
        %1147 = vperm.xlu0 %1146, %v1127
        %v1148 = vpop.permute.xlu0 %1147
        %1149 = vset.pattern.permute.xlu0 0
        %1150 = vperm.xlu0 %1149, %v1128
        %v1151 = vpop.permute.xlu0 %1150
        %1152 = vset.pattern.permute.xlu0 0
        %1153 = vperm.xlu0 %1152, %v1129
        %v1154 = vpop.permute.xlu0 %1153
        %1155 = vset.pattern.permute.xlu0 0
        %1156 = vperm.xlu0 %1155, %v1130
        %v1157 = vpop.permute.xlu0 %1156
        %1158 = vset.pattern.permute.xlu0 0
        %1159 = vperm.xlu0 %1158, %v1131
        %v1160 = vpop.permute.xlu0 %1159
        %1161 = vset.pattern.permute.xlu0 0
        %1162 = vperm.xlu0 %1161, %v1132
        %v1163 = vpop.permute.xlu0 %1162
        %1164 = vset.pattern.permute.xlu0 0
        %1165 = vperm.xlu0 %1164, %v1133
        %v1166 = vpop.permute.xlu0 %1165
        %1167 = vset.pattern.permute.xlu0 0
        %1168 = vperm.xlu0 %1167, %v1134
        %v1169 = vpop.permute.xlu0 %1168
        %1170 = vset.pattern.permute.xlu0 0
        %1171 = vperm.xlu0 %1170, %v1135
        %v1172 = vpop.permute.xlu0 %1171
        %1173 = vset.pattern.permute.xlu0 0
        %1174 = vperm.xlu0 %1173, %v1136
        %v1175 = vpop.permute.xlu0 %1174
        %1176 = vset.pattern.permute.xlu0 0
        %1177 = vperm.xlu0 %1176, %v1137
        %v1178 = vpop.permute.xlu0 %1177
        %1179 = vset.pattern.permute.xlu0 0
        %1180 = vperm.xlu0 %1179, %v1138
        %v1181 = vpop.permute.xlu0 %1180
        %1182 = vset.pattern.permute.xlu0 0
        %1183 = vperm.xlu0 %1182, %v1139
        %v1184 = vpop.permute.xlu0 %1183
        %1185 = vset.pattern.permute.xlu0 0
        %1186 = vperm.xlu0 %1185, %v1140
        %v1187 = vpop.permute.xlu0 %1186
        %1188 = vset.pattern.permute.xlu0 0
        %1189 = vperm.xlu0 %1188, %v1141
        %v1190 = vpop.permute.xlu0 %1189
        %v1191 = vperm.slane %v1142, 0
        %vm1192 = vcmp.eq.s32.totalorder %v1145, %v1191
        %vm1193 = vcmp.eq.s32.totalorder %v1148, %v1191
        %vm1194 = vcmp.eq.s32.totalorder %v1151, %v1191
        %vm1195 = vcmp.eq.s32.totalorder %v1154, %v1191
        %vm1196 = vcmp.eq.s32.totalorder %v1157, %v1191
        %vm1197 = vcmp.eq.s32.totalorder %v1160, %v1191
        %vm1198 = vcmp.eq.s32.totalorder %v1163, %v1191
        %vm1199 = vcmp.eq.s32.totalorder %v1166, %v1191
        %vm1200 = vcmp.eq.s32.totalorder %v1169, %v1191
        %vm1201 = vcmp.eq.s32.totalorder %v1172, %v1191
        %vm1202 = vcmp.eq.s32.totalorder %v1175, %v1191
        %vm1203 = vcmp.eq.s32.totalorder %v1178, %v1191
        %vm1204 = vcmp.eq.s32.totalorder %v1181, %v1191
        %vm1205 = vcmp.eq.s32.totalorder %v1184, %v1191
        %vm1206 = vcmp.eq.s32.totalorder %v1187, %v1191
        %vm1207 = vcmp.eq.s32.totalorder %v1190, %v1191
        %v1224 = vunpack.c.l.b16 %v1078
        %v1225 = vunpack.c.l.b16 %v1079
        %v1226 = vunpack.c.l.b16 %v1080
        %v1227 = vunpack.c.l.b16 %v1081
        %v1228 = vunpack.c.l.b16 %v1082
        %v1229 = vunpack.c.l.b16 %v1083
        %v1230 = vunpack.c.l.b16 %v1084
        %v1231 = vunpack.c.l.b16 %v1085
        %v1232 = vunpack.c.l.b16 %v1086
        %v1233 = vunpack.c.l.b16 %v1087
        %v1234 = vunpack.c.l.b16 %v1088
        %v1235 = vunpack.c.l.b16 %v1089
        %v1236 = vunpack.c.l.b16 %v1090
        %v1237 = vunpack.c.l.b16 %v1091
        %v1238 = vunpack.c.l.b16 %v1092
        %v1239 = vunpack.c.l.b16 %v1093
        %v1240 = vpack.c.b16 %v1225, %v1224
        %v1241 = vpack.c.b16 %v1227, %v1226
        %v1242 = vpack.c.b16 %v1229, %v1228
        %v1243 = vpack.c.b16 %v1231, %v1230
        %v1244 = vpack.c.b16 %v1233, %v1232
        %v1245 = vpack.c.b16 %v1235, %v1234
        %v1246 = vpack.c.b16 %v1237, %v1236
        %v1247 = vpack.c.b16 %v1239, %v1238
        %v1264 = vunpack.c.l.b16 %v1094
        %v1265 = vunpack.c.l.b16 %v1095
        %v1266 = vunpack.c.l.b16 %v1096
        %v1267 = vunpack.c.l.b16 %v1097
        %v1268 = vunpack.c.l.b16 %v1098
        %v1269 = vunpack.c.l.b16 %v1099
        %v1270 = vunpack.c.l.b16 %v1100
        %v1271 = vunpack.c.l.b16 %v1101
        %v1272 = vunpack.c.l.b16 %v1102
        %v1273 = vunpack.c.l.b16 %v1103
        %v1274 = vunpack.c.l.b16 %v1104
        %v1275 = vunpack.c.l.b16 %v1105
        %v1276 = vunpack.c.l.b16 %v1106
        %v1277 = vunpack.c.l.b16 %v1107
        %v1278 = vunpack.c.l.b16 %v1108
        %v1279 = vunpack.c.l.b16 %v1109
        %v1280 = vpack.c.b16 %v1265, %v1264
        %v1281 = vpack.c.b16 %v1267, %v1266
        %v1282 = vpack.c.b16 %v1269, %v1268
        %v1283 = vpack.c.b16 %v1271, %v1270
        %v1284 = vpack.c.b16 %v1273, %v1272
        %v1285 = vpack.c.b16 %v1275, %v1274
        %v1286 = vpack.c.b16 %v1277, %v1276
        %v1287 = vpack.c.b16 %v1279, %v1278
        %vm1288 = vcmask 64512
        %v1290 = vsel %vm1288, %v1240, 0
        %v1293 = vsel %vm1288, %v1241, 0
        %v1296 = vsel %vm1288, %v1242, 0
        %v1299 = vsel %vm1288, %v1243, 0
        %v1302 = vsel %vm1288, %v1244, 0
        %v1305 = vsel %vm1288, %v1245, 0
        %v1308 = vsel %vm1288, %v1246, 0
        %v1311 = vsel %vm1288, %v1247, 0
        %v1314 = vsel %vm1288, %v1280, 0
        %v1317 = vsel %vm1288, %v1281, 0
        %v1320 = vsel %vm1288, %v1282, 0
        %v1323 = vsel %vm1288, %v1283, 0
        %v1326 = vsel %vm1288, %v1284, 0
        %v1329 = vsel %vm1288, %v1285, 0
        %v1332 = vsel %vm1288, %v1286, 0
        %v1335 = vsel %vm1288, %v1287, 0
        %1337 = vmatpush.bf16.xpose.msra.mxu0 %v1335
        %1338 = vmatpush.bf16.xpose.msra.mxu0 %v1332
        %1339 = vmatpush.bf16.xpose.msra.mxu0 %v1329
        %1340 = vmatpush.bf16.xpose.msra.mxu0 %v1326
        %1341 = vmatpush.bf16.xpose.msra.mxu0 %v1323
        %1342 = vmatpush.bf16.xpose.msra.mxu0 %v1320
        %1343 = vmatpush.bf16.xpose.msra.mxu0 %v1317
        %1344 = vmatpush.bf16.xpose.msra.mxu0 %v1314
        %1345 = vmatmul.bf16.gmra.mxu0 %v1290
        %v1346 = vpop.f32.mrf.mxu0
        %v1347 = vadd.f32 0.0, %v1346
        %v1348 = vpop.f32.mrf.mxu0
        %v1349 = vadd.f32 0.0, %v1348
        %1350 = vmatmul.bf16.gmra.mxu0 %v1293
        %v1351 = vpop.f32.mrf.mxu0
        %v1352 = vadd.f32 0.0, %v1351
        %v1353 = vpop.f32.mrf.mxu0
        %v1354 = vadd.f32 0.0, %v1353
        %1355 = vmatmul.bf16.gmra.mxu0 %v1296
        %v1356 = vpop.f32.mrf.mxu0
        %v1357 = vadd.f32 0.0, %v1356
        %v1358 = vpop.f32.mrf.mxu0
        %v1359 = vadd.f32 0.0, %v1358
        %1360 = vmatmul.bf16.gmra.mxu0 %v1299
        %v1361 = vpop.f32.mrf.mxu0
        %v1362 = vadd.f32 0.0, %v1361
        %v1363 = vpop.f32.mrf.mxu0
        %v1364 = vadd.f32 0.0, %v1363
        %1365 = vmatmul.bf16.gmra.mxu0 %v1302
        %v1366 = vpop.f32.mrf.mxu0
        %v1367 = vadd.f32 0.0, %v1366
        %v1368 = vpop.f32.mrf.mxu0
        %v1369 = vadd.f32 0.0, %v1368
        %1370 = vmatmul.bf16.gmra.mxu0 %v1305
        %v1371 = vpop.f32.mrf.mxu0
        %v1372 = vadd.f32 0.0, %v1371
        %v1373 = vpop.f32.mrf.mxu0
        %v1374 = vadd.f32 0.0, %v1373
        %1375 = vmatmul.bf16.gmra.mxu0 %v1308
        %v1376 = vpop.f32.mrf.mxu0
        %v1377 = vadd.f32 0.0, %v1376
        %v1378 = vpop.f32.mrf.mxu0
        %v1379 = vadd.f32 0.0, %v1378
        %1380 = vmatmul.bf16.gmra.mxu0 %v1311
        %v1381 = vpop.f32.mrf.mxu0
        %v1382 = vadd.f32 0.0, %v1381
        %v1383 = vpop.f32.mrf.mxu0
        %v1384 = vadd.f32 0.0, %v1383
        %1385 = vdwg.mxu0
        %v1386 = vsel %vm1192, %v1347, -1e+30
        %v1387 = vsel %vm1193, %v1349, -1e+30
        %v1388 = vsel %vm1194, %v1352, -1e+30
        %v1389 = vsel %vm1195, %v1354, -1e+30
        %v1390 = vsel %vm1196, %v1357, -1e+30
        %v1391 = vsel %vm1197, %v1359, -1e+30
        %v1392 = vsel %vm1198, %v1362, -1e+30
        %v1393 = vsel %vm1199, %v1364, -1e+30
        %v1394 = vsel %vm1200, %v1367, -1e+30
        %v1395 = vsel %vm1201, %v1369, -1e+30
        %v1396 = vsel %vm1202, %v1372, -1e+30
        %v1397 = vsel %vm1203, %v1374, -1e+30
        %v1398 = vsel %vm1204, %v1377, -1e+30
        %v1399 = vsel %vm1205, %v1379, -1e+30
        %v1400 = vsel %vm1206, %v1382, -1e+30
        %v1401 = vsel %vm1207, %v1384, -1e+30
        %v1402 = vld [vmem:[#allocation2] sm:$0xff]
        %v1403 = vld [vmem:[#allocation2 + $0x8] sm:$0xff]
        %v1404 = vld [vmem:[#allocation2 + $0x10] sm:$0xff]
        %v1405 = vld [vmem:[#allocation2 + $0x18] sm:$0xff]
        %v1406 = vld [vmem:[#allocation2 + $0x20] sm:$0xff]
        %v1407 = vld [vmem:[#allocation2 + $0x28] sm:$0xff]
        %v1408 = vld [vmem:[#allocation2 + $0x30] sm:$0xff]
        %v1409 = vld [vmem:[#allocation2 + $0x38] sm:$0xff]
        %v1410 = vld [vmem:[#allocation2 + $0x40] sm:$0xff]
        %v1411 = vld [vmem:[#allocation2 + $0x48] sm:$0xff]
        %v1412 = vld [vmem:[#allocation2 + $0x50] sm:$0xff]
        %v1413 = vld [vmem:[#allocation2 + $0x58] sm:$0xff]
        %v1414 = vld [vmem:[#allocation2 + $0x60] sm:$0xff]
        %v1415 = vld [vmem:[#allocation2 + $0x68] sm:$0xff]
        %v1416 = vld [vmem:[#allocation2 + $0x70] sm:$0xff]
        %v1417 = vld [vmem:[#allocation2 + $0x78] sm:$0xff]
        %1418 = vmax.xlane.f32.xlu0 %v1386
        %v1419 = vpop.xlane.xlu0 %1418
        %1420 = vmax.xlane.f32.xlu0 %v1387
        %v1421 = vpop.xlane.xlu0 %1420
        %1422 = vmax.xlane.f32.xlu0 %v1388
        %v1423 = vpop.xlane.xlu0 %1422
        %1424 = vmax.xlane.f32.xlu0 %v1389
        %v1425 = vpop.xlane.xlu0 %1424
        %1426 = vmax.xlane.f32.xlu0 %v1390
        %v1427 = vpop.xlane.xlu0 %1426
        %1428 = vmax.xlane.f32.xlu0 %v1391
        %v1429 = vpop.xlane.xlu0 %1428
        %1430 = vmax.xlane.f32.xlu0 %v1392
        %v1431 = vpop.xlane.xlu0 %1430
        %1432 = vmax.xlane.f32.xlu0 %v1393
        %v1433 = vpop.xlane.xlu0 %1432
        %1434 = vmax.xlane.f32.xlu0 %v1394
        %v1435 = vpop.xlane.xlu0 %1434
        %1436 = vmax.xlane.f32.xlu0 %v1395
        %v1437 = vpop.xlane.xlu0 %1436
        %1438 = vmax.xlane.f32.xlu0 %v1396
        %v1439 = vpop.xlane.xlu0 %1438
        %1440 = vmax.xlane.f32.xlu0 %v1397
        %v1441 = vpop.xlane.xlu0 %1440
        %1442 = vmax.xlane.f32.xlu0 %v1398
        %v1443 = vpop.xlane.xlu0 %1442
        %1444 = vmax.xlane.f32.xlu0 %v1399
        %v1445 = vpop.xlane.xlu0 %1444
        %1446 = vmax.xlane.f32.xlu0 %v1400
        %v1447 = vpop.xlane.xlu0 %1446
        %1448 = vmax.xlane.f32.xlu0 %v1401
        %v1449 = vpop.xlane.xlu0 %1448
        %v1450 = vmax.f32 %v1402, %v1419
        %v1451 = vmax.f32 %v1403, %v1421
        %v1452 = vmax.f32 %v1404, %v1423
        %v1453 = vmax.f32 %v1405, %v1425
        %v1454 = vmax.f32 %v1406, %v1427
        %v1455 = vmax.f32 %v1407, %v1429
        %v1456 = vmax.f32 %v1408, %v1431
        %v1457 = vmax.f32 %v1409, %v1433
        %v1458 = vmax.f32 %v1410, %v1435
        %v1459 = vmax.f32 %v1411, %v1437
        %v1460 = vmax.f32 %v1412, %v1439
        %v1461 = vmax.f32 %v1413, %v1441
        %v1462 = vmax.f32 %v1414, %v1443
        %v1463 = vmax.f32 %v1415, %v1445
        %v1464 = vmax.f32 %v1416, %v1447
        %v1465 = vmax.f32 %v1417, %v1449
        %v1466 = vsub.f32 %v1402, %v1450
        %v1467 = vsub.f32 %v1403, %v1451
        %v1468 = vsub.f32 %v1404, %v1452
        %v1469 = vsub.f32 %v1405, %v1453
        %v1470 = vsub.f32 %v1406, %v1454
        %v1471 = vsub.f32 %v1407, %v1455
        %v1472 = vsub.f32 %v1408, %v1456
        %v1473 = vsub.f32 %v1409, %v1457
        %v1474 = vsub.f32 %v1410, %v1458
        %v1475 = vsub.f32 %v1411, %v1459
        %v1476 = vsub.f32 %v1412, %v1460
        %v1477 = vsub.f32 %v1413, %v1461
        %v1478 = vsub.f32 %v1414, %v1462
        %v1479 = vsub.f32 %v1415, %v1463
        %v1480 = vsub.f32 %v1416, %v1464
        %v1481 = vsub.f32 %v1417, %v1465
        %v1482 = vmul.f32 %v1466, 1.442695
        %v1483 = vpow.pop %v1482
        %v1484 = vmul.f32 %v1467, 1.442695
        %v1485 = vpow.pop %v1484
        %v1486 = vmul.f32 %v1468, 1.442695
        %v1487 = vpow.pop %v1486
        %v1488 = vmul.f32 %v1469, 1.442695
        %v1489 = vpow.pop %v1488
        %v1490 = vmul.f32 %v1470, 1.442695
        %v1491 = vpow.pop %v1490
        %v1492 = vmul.f32 %v1471, 1.442695
        %v1493 = vpow.pop %v1492
        %v1494 = vmul.f32 %v1472, 1.442695
        %v1495 = vpow.pop %v1494
        %v1496 = vmul.f32 %v1473, 1.442695
        %v1497 = vpow.pop %v1496
        %v1498 = vmul.f32 %v1474, 1.442695
        %v1499 = vpow.pop %v1498
        %v1500 = vmul.f32 %v1475, 1.442695
        %v1501 = vpow.pop %v1500
        %v1502 = vmul.f32 %v1476, 1.442695
        %v1503 = vpow.pop %v1502
        %v1504 = vmul.f32 %v1477, 1.442695
        %v1505 = vpow.pop %v1504
        %v1506 = vmul.f32 %v1478, 1.442695
        %v1507 = vpow.pop %v1506
        %v1508 = vmul.f32 %v1479, 1.442695
        %v1509 = vpow.pop %v1508
        %v1510 = vmul.f32 %v1480, 1.442695
        %v1511 = vpow.pop %v1510
        %v1512 = vmul.f32 %v1481, 1.442695
        %v1513 = vpow.pop %v1512
        %1515 = vset.pattern.permute.xlu0 0
        %1516 = vperm.xlu0 %1515, %v1450
        %v1517 = vpop.permute.xlu0 %1516
        %1520 = vset.pattern.permute.xlu0 0
        %1521 = vperm.xlu0 %1520, %v1451
        %v1522 = vpop.permute.xlu0 %1521
        %1525 = vset.pattern.permute.xlu0 0
        %1526 = vperm.xlu0 %1525, %v1452
        %v1527 = vpop.permute.xlu0 %1526
        %1530 = vset.pattern.permute.xlu0 0
        %1531 = vperm.xlu0 %1530, %v1453
        %v1532 = vpop.permute.xlu0 %1531
        %1535 = vset.pattern.permute.xlu0 0
        %1536 = vperm.xlu0 %1535, %v1454
        %v1537 = vpop.permute.xlu0 %1536
        %1540 = vset.pattern.permute.xlu0 0
        %1541 = vperm.xlu0 %1540, %v1455
        %v1542 = vpop.permute.xlu0 %1541
        %1545 = vset.pattern.permute.xlu0 0
        %1546 = vperm.xlu0 %1545, %v1456
        %v1547 = vpop.permute.xlu0 %1546
        %1550 = vset.pattern.permute.xlu0 0
        %1551 = vperm.xlu0 %1550, %v1457
        %v1552 = vpop.permute.xlu0 %1551
        %1555 = vset.pattern.permute.xlu0 0
        %1556 = vperm.xlu0 %1555, %v1458
        %v1557 = vpop.permute.xlu0 %1556
        %1560 = vset.pattern.permute.xlu0 0
        %1561 = vperm.xlu0 %1560, %v1459
        %v1562 = vpop.permute.xlu0 %1561
        %1565 = vset.pattern.permute.xlu0 0
        %1566 = vperm.xlu0 %1565, %v1460
        %v1567 = vpop.permute.xlu0 %1566
        %1570 = vset.pattern.permute.xlu0 0
        %1571 = vperm.xlu0 %1570, %v1461
        %v1572 = vpop.permute.xlu0 %1571
        %1575 = vset.pattern.permute.xlu0 0
        %1576 = vperm.xlu0 %1575, %v1462
        %v1577 = vpop.permute.xlu0 %1576
        %1580 = vset.pattern.permute.xlu0 0
        %1581 = vperm.xlu0 %1580, %v1463
        %v1582 = vpop.permute.xlu0 %1581
        %1585 = vset.pattern.permute.xlu0 0
        %1586 = vperm.xlu0 %1585, %v1464
        %v1587 = vpop.permute.xlu0 %1586
        %1590 = vset.pattern.permute.xlu0 0
        %1591 = vperm.xlu0 %1590, %v1465
        %v1592 = vpop.permute.xlu0 %1591
        %v1594 = vsub.f32 %v1386, %v1517
        %v1595 = vsub.f32 %v1387, %v1522
        %v1596 = vsub.f32 %v1388, %v1527
        %v1597 = vsub.f32 %v1389, %v1532
        %v1598 = vsub.f32 %v1390, %v1537
        %v1599 = vsub.f32 %v1391, %v1542
        %v1600 = vsub.f32 %v1392, %v1547
        %v1601 = vsub.f32 %v1393, %v1552
        %v1602 = vsub.f32 %v1394, %v1557
        %v1603 = vsub.f32 %v1395, %v1562
        %v1604 = vsub.f32 %v1396, %v1567
        %v1605 = vsub.f32 %v1397, %v1572
        %v1606 = vsub.f32 %v1398, %v1577
        %v1607 = vsub.f32 %v1399, %v1582
        %v1608 = vsub.f32 %v1400, %v1587
        %v1609 = vsub.f32 %v1401, %v1592
        %v1610 = vmul.f32 %v1594, 1.442695
        %v1611 = vpow.pop %v1610
        %v1612 = vmul.f32 %v1595, 1.442695
        %v1613 = vpow.pop %v1612
        %v1614 = vmul.f32 %v1596, 1.442695
        %v1615 = vpow.pop %v1614
        %v1616 = vmul.f32 %v1597, 1.442695
        %v1617 = vpow.pop %v1616
        %v1618 = vmul.f32 %v1598, 1.442695
        %v1619 = vpow.pop %v1618
        %v1620 = vmul.f32 %v1599, 1.442695
        %v1621 = vpow.pop %v1620
        %v1622 = vmul.f32 %v1600, 1.442695
        %v1623 = vpow.pop %v1622
        %v1624 = vmul.f32 %v1601, 1.442695
        %v1625 = vpow.pop %v1624
        %v1626 = vmul.f32 %v1602, 1.442695
        %v1627 = vpow.pop %v1626
        %v1628 = vmul.f32 %v1603, 1.442695
        %v1629 = vpow.pop %v1628
        %v1630 = vmul.f32 %v1604, 1.442695
        %v1631 = vpow.pop %v1630
        %v1632 = vmul.f32 %v1605, 1.442695
        %v1633 = vpow.pop %v1632
        %v1634 = vmul.f32 %v1606, 1.442695
        %v1635 = vpow.pop %v1634
        %v1636 = vmul.f32 %v1607, 1.442695
        %v1637 = vpow.pop %v1636
        %v1638 = vmul.f32 %v1608, 1.442695
        %v1639 = vpow.pop %v1638
        %v1640 = vmul.f32 %v1609, 1.442695
        %v1641 = vpow.pop %v1640
        %v1642 = vsel %vm1192, %v1611, 0.0
        %v1643 = vsel %vm1193, %v1613, 0.0
        %v1644 = vsel %vm1194, %v1615, 0.0
        %v1645 = vsel %vm1195, %v1617, 0.0
        %v1646 = vsel %vm1196, %v1619, 0.0
        %v1647 = vsel %vm1197, %v1621, 0.0
        %v1648 = vsel %vm1198, %v1623, 0.0
        %v1649 = vsel %vm1199, %v1625, 0.0
        %v1650 = vsel %vm1200, %v1627, 0.0
        %v1651 = vsel %vm1201, %v1629, 0.0
        %v1652 = vsel %vm1202, %v1631, 0.0
        %v1653 = vsel %vm1203, %v1633, 0.0
        %v1654 = vsel %vm1204, %v1635, 0.0
        %v1655 = vsel %vm1205, %v1637, 0.0
        %v1656 = vsel %vm1206, %v1639, 0.0
        %v1657 = vsel %vm1207, %v1641, 0.0
        %v1658 = vld [vmem:[#allocation3] sm:$0xff]
        %v1659 = vld [vmem:[#allocation3 + $0x8] sm:$0xff]
        %v1660 = vld [vmem:[#allocation3 + $0x10] sm:$0xff]
        %v1661 = vld [vmem:[#allocation3 + $0x18] sm:$0xff]
        %v1662 = vld [vmem:[#allocation3 + $0x20] sm:$0xff]
        %v1663 = vld [vmem:[#allocation3 + $0x28] sm:$0xff]
        %v1664 = vld [vmem:[#allocation3 + $0x30] sm:$0xff]
        %v1665 = vld [vmem:[#allocation3 + $0x38] sm:$0xff]
        %v1666 = vld [vmem:[#allocation3 + $0x40] sm:$0xff]
        %v1667 = vld [vmem:[#allocation3 + $0x48] sm:$0xff]
        %v1668 = vld [vmem:[#allocation3 + $0x50] sm:$0xff]
        %v1669 = vld [vmem:[#allocation3 + $0x58] sm:$0xff]
        %v1670 = vld [vmem:[#allocation3 + $0x60] sm:$0xff]
        %v1671 = vld [vmem:[#allocation3 + $0x68] sm:$0xff]
        %v1672 = vld [vmem:[#allocation3 + $0x70] sm:$0xff]
        %v1673 = vld [vmem:[#allocation3 + $0x78] sm:$0xff]
        %v1674 = vmul.f32 %v1483, %v1658
        %v1675 = vmul.f32 %v1485, %v1659
        %v1676 = vmul.f32 %v1487, %v1660
        %v1677 = vmul.f32 %v1489, %v1661
        %v1678 = vmul.f32 %v1491, %v1662
        %v1679 = vmul.f32 %v1493, %v1663
        %v1680 = vmul.f32 %v1495, %v1664
        %v1681 = vmul.f32 %v1497, %v1665
        %v1682 = vmul.f32 %v1499, %v1666
        %v1683 = vmul.f32 %v1501, %v1667
        %v1684 = vmul.f32 %v1503, %v1668
        %v1685 = vmul.f32 %v1505, %v1669
        %v1686 = vmul.f32 %v1507, %v1670
        %v1687 = vmul.f32 %v1509, %v1671
        %v1688 = vmul.f32 %v1511, %v1672
        %v1689 = vmul.f32 %v1513, %v1673
        %1690 = vadd.xlane.f32.xlu0 %v1642
        %v1691 = vpop.xlane.xlu0 %1690
        %1692 = vadd.xlane.f32.xlu0 %v1643
        %v1693 = vpop.xlane.xlu0 %1692
        %1694 = vadd.xlane.f32.xlu0 %v1644
        %v1695 = vpop.xlane.xlu0 %1694
        %1696 = vadd.xlane.f32.xlu0 %v1645
        %v1697 = vpop.xlane.xlu0 %1696
        %1698 = vadd.xlane.f32.xlu0 %v1646
        %v1699 = vpop.xlane.xlu0 %1698
        %1700 = vadd.xlane.f32.xlu0 %v1647
        %v1701 = vpop.xlane.xlu0 %1700
        %1702 = vadd.xlane.f32.xlu0 %v1648
        %v1703 = vpop.xlane.xlu0 %1702
        %1704 = vadd.xlane.f32.xlu0 %v1649
        %v1705 = vpop.xlane.xlu0 %1704
        %1706 = vadd.xlane.f32.xlu0 %v1650
        %v1707 = vpop.xlane.xlu0 %1706
        %1708 = vadd.xlane.f32.xlu0 %v1651
        %v1709 = vpop.xlane.xlu0 %1708
        %1710 = vadd.xlane.f32.xlu0 %v1652
        %v1711 = vpop.xlane.xlu0 %1710
        %1712 = vadd.xlane.f32.xlu0 %v1653
        %v1713 = vpop.xlane.xlu0 %1712
        %1714 = vadd.xlane.f32.xlu0 %v1654
        %v1715 = vpop.xlane.xlu0 %1714
        %1716 = vadd.xlane.f32.xlu0 %v1655
        %v1717 = vpop.xlane.xlu0 %1716
        %1718 = vadd.xlane.f32.xlu0 %v1656
        %v1719 = vpop.xlane.xlu0 %1718
        %1720 = vadd.xlane.f32.xlu0 %v1657
        %v1721 = vpop.xlane.xlu0 %1720
        %v1722 = vadd.f32 %v1674, %v1691
        %v1723 = vadd.f32 %v1675, %v1693
        %v1724 = vadd.f32 %v1676, %v1695
        %v1725 = vadd.f32 %v1677, %v1697
        %v1726 = vadd.f32 %v1678, %v1699
        %v1727 = vadd.f32 %v1679, %v1701
        %v1728 = vadd.f32 %v1680, %v1703
        %v1729 = vadd.f32 %v1681, %v1705
        %v1730 = vadd.f32 %v1682, %v1707
        %v1731 = vadd.f32 %v1683, %v1709
        %v1732 = vadd.f32 %v1684, %v1711
        %v1733 = vadd.f32 %v1685, %v1713
        %v1734 = vadd.f32 %v1686, %v1715
        %v1735 = vadd.f32 %v1687, %v1717
        %v1736 = vadd.f32 %v1688, %v1719
        %v1737 = vadd.f32 %v1689, %v1721
        %vm1738 = vcmask 7168
        %1739 = vst.msk [vmem:[#allocation3] sm:$0xff] %vm1738, %v1722
        %1740 = vst.msk [vmem:[#allocation3 + $0x8] sm:$0xff] %vm1738, %v1723
        %1741 = vst.msk [vmem:[#allocation3 + $0x10] sm:$0xff] %vm1738, %v1724
        %1742 = vst.msk [vmem:[#allocation3 + $0x18] sm:$0xff] %vm1738, %v1725
        %1743 = vst.msk [vmem:[#allocation3 + $0x20] sm:$0xff] %vm1738, %v1726
        %1744 = vst.msk [vmem:[#allocation3 + $0x28] sm:$0xff] %vm1738, %v1727
        %1745 = vst.msk [vmem:[#allocation3 + $0x30] sm:$0xff] %vm1738, %v1728
        %1746 = vst.msk [vmem:[#allocation3 + $0x38] sm:$0xff] %vm1738, %v1729
        %1747 = vst.msk [vmem:[#allocation3 + $0x40] sm:$0xff] %vm1738, %v1730
        %1748 = vst.msk [vmem:[#allocation3 + $0x48] sm:$0xff] %vm1738, %v1731
        %1749 = vst.msk [vmem:[#allocation3 + $0x50] sm:$0xff] %vm1738, %v1732
        %1750 = vst.msk [vmem:[#allocation3 + $0x58] sm:$0xff] %vm1738, %v1733
        %1751 = vst.msk [vmem:[#allocation3 + $0x60] sm:$0xff] %vm1738, %v1734
        %1752 = vst.msk [vmem:[#allocation3 + $0x68] sm:$0xff] %vm1738, %v1735
        %1753 = vst.msk [vmem:[#allocation3 + $0x70] sm:$0xff] %vm1738, %v1736
        %1754 = vst.msk [vmem:[#allocation3 + $0x78] sm:$0xff] %vm1738, %v1737
        %v1755 = vpack.c.bf16 %v1643, %v1642
        %v1756 = vpack.c.bf16 %v1645, %v1644
        %v1757 = vpack.c.bf16 %v1647, %v1646
        %v1758 = vpack.c.bf16 %v1649, %v1648
        %v1759 = vpack.c.bf16 %v1651, %v1650
        %v1760 = vpack.c.bf16 %v1653, %v1652
        %v1761 = vpack.c.bf16 %v1655, %v1654
        %v1762 = vpack.c.bf16 %v1657, %v1656
        %v1779 = vunpack.c.l.b16 %v1110
        %v1780 = vunpack.c.l.b16 %v1111
        %v1781 = vunpack.c.l.b16 %v1112
        %v1782 = vunpack.c.l.b16 %v1113
        %v1783 = vunpack.c.l.b16 %v1114
        %v1784 = vunpack.c.l.b16 %v1115
        %v1785 = vunpack.c.l.b16 %v1116
        %v1786 = vunpack.c.l.b16 %v1117
        %v1787 = vunpack.c.l.b16 %v1118
        %v1788 = vunpack.c.l.b16 %v1119
        %v1789 = vunpack.c.l.b16 %v1120
        %v1790 = vunpack.c.l.b16 %v1121
        %v1791 = vunpack.c.l.b16 %v1122
        %v1792 = vunpack.c.l.b16 %v1123
        %v1793 = vunpack.c.l.b16 %v1124
        %v1794 = vunpack.c.l.b16 %v1125
        %v1795 = vpack.c.b16 %v1780, %v1779
        %v1796 = vpack.c.b16 %v1782, %v1781
        %v1797 = vpack.c.b16 %v1784, %v1783
        %v1798 = vpack.c.b16 %v1786, %v1785
        %v1799 = vpack.c.b16 %v1788, %v1787
        %v1800 = vpack.c.b16 %v1790, %v1789
        %v1801 = vpack.c.b16 %v1792, %v1791
        %v1802 = vpack.c.b16 %v1794, %v1793
        %1811 = vmatpush.bf16.msra.mxu0 %v1802
        %1812 = vmatpush.bf16.msra.mxu0 %v1801
        %1813 = vmatpush.bf16.msra.mxu0 %v1800
        %1814 = vmatpush.bf16.msra.mxu0 %v1799
        %1815 = vmatpush.bf16.msra.mxu0 %v1798
        %1816 = vmatpush.bf16.msra.mxu0 %v1797
        %1817 = vmatpush.bf16.msra.mxu0 %v1796
        %1818 = vmatpush.bf16.msra.mxu0 %v1795
        %1819 = vmatmul.bf16.gmra.mxu0 %v1755
        %v1820 = vpop.f32.mrf.mxu0
        %v1821 = vadd.f32 0.0, %v1820
        %v1822 = vpop.f32.mrf.mxu0
        %v1823 = vadd.f32 0.0, %v1822
        %1824 = vmatmul.bf16.gmra.mxu0 %v1756
        %v1825 = vpop.f32.mrf.mxu0
        %v1826 = vadd.f32 0.0, %v1825
        %v1827 = vpop.f32.mrf.mxu0
        %v1828 = vadd.f32 0.0, %v1827
        %1829 = vmatmul.bf16.gmra.mxu0 %v1757
        %v1830 = vpop.f32.mrf.mxu0
        %v1831 = vadd.f32 0.0, %v1830
        %v1832 = vpop.f32.mrf.mxu0
        %v1833 = vadd.f32 0.0, %v1832
        %1834 = vmatmul.bf16.gmra.mxu0 %v1758
        %v1835 = vpop.f32.mrf.mxu0
        %v1836 = vadd.f32 0.0, %v1835
        %v1837 = vpop.f32.mrf.mxu0
        %v1838 = vadd.f32 0.0, %v1837
        %1839 = vmatmul.bf16.gmra.mxu0 %v1759
        %v1840 = vpop.f32.mrf.mxu0
        %v1841 = vadd.f32 0.0, %v1840
        %v1842 = vpop.f32.mrf.mxu0
        %v1843 = vadd.f32 0.0, %v1842
        %1844 = vmatmul.bf16.gmra.mxu0 %v1760
        %v1845 = vpop.f32.mrf.mxu0
        %v1846 = vadd.f32 0.0, %v1845
        %v1847 = vpop.f32.mrf.mxu0
        %v1848 = vadd.f32 0.0, %v1847
        %1849 = vmatmul.bf16.gmra.mxu0 %v1761
        %v1850 = vpop.f32.mrf.mxu0
        %v1851 = vadd.f32 0.0, %v1850
        %v1852 = vpop.f32.mrf.mxu0
        %v1853 = vadd.f32 0.0, %v1852
        %1854 = vmatmul.bf16.gmra.mxu0 %v1762
        %v1855 = vpop.f32.mrf.mxu0
        %v1856 = vadd.f32 0.0, %v1855
        %v1857 = vpop.f32.mrf.mxu0
        %v1858 = vadd.f32 0.0, %v1857
        %1859 = vdwg.mxu0
        %v1860 = vld [vmem:[#allocation4] sm:$0xff]
        %v1861 = vld [vmem:[#allocation4 + $0x8] sm:$0xff]
        %v1862 = vld [vmem:[#allocation4 + $0x10] sm:$0xff]
        %v1863 = vld [vmem:[#allocation4 + $0x18] sm:$0xff]
        %v1864 = vld [vmem:[#allocation4 + $0x20] sm:$0xff]
        %v1865 = vld [vmem:[#allocation4 + $0x28] sm:$0xff]
        %v1866 = vld [vmem:[#allocation4 + $0x30] sm:$0xff]
        %v1867 = vld [vmem:[#allocation4 + $0x38] sm:$0xff]
        %v1868 = vld [vmem:[#allocation4 + $0x40] sm:$0xff]
        %v1869 = vld [vmem:[#allocation4 + $0x48] sm:$0xff]
        %v1870 = vld [vmem:[#allocation4 + $0x50] sm:$0xff]
        %v1871 = vld [vmem:[#allocation4 + $0x58] sm:$0xff]
        %v1872 = vld [vmem:[#allocation4 + $0x60] sm:$0xff]
        %v1873 = vld [vmem:[#allocation4 + $0x68] sm:$0xff]
        %v1874 = vld [vmem:[#allocation4 + $0x70] sm:$0xff]
        %v1875 = vld [vmem:[#allocation4 + $0x78] sm:$0xff]
        %1877 = vset.pattern.permute.xlu0 0
        %1878 = vperm.xlu0 %1877, %v1483
        %v1879 = vpop.permute.xlu0 %1878
        %1882 = vset.pattern.permute.xlu0 0
        %1883 = vperm.xlu0 %1882, %v1485
        %v1884 = vpop.permute.xlu0 %1883
        %1887 = vset.pattern.permute.xlu0 0
        %1888 = vperm.xlu0 %1887, %v1487
        %v1889 = vpop.permute.xlu0 %1888
        %1892 = vset.pattern.permute.xlu0 0
        %1893 = vperm.xlu0 %1892, %v1489
        %v1894 = vpop.permute.xlu0 %1893
        %1897 = vset.pattern.permute.xlu0 0
        %1898 = vperm.xlu0 %1897, %v1491
        %v1899 = vpop.permute.xlu0 %1898
        %1902 = vset.pattern.permute.xlu0 0
        %1903 = vperm.xlu0 %1902, %v1493
        %v1904 = vpop.permute.xlu0 %1903
        %1907 = vset.pattern.permute.xlu0 0
        %1908 = vperm.xlu0 %1907, %v1495
        %v1909 = vpop.permute.xlu0 %1908
        %1912 = vset.pattern.permute.xlu0 0
        %1913 = vperm.xlu0 %1912, %v1497
        %v1914 = vpop.permute.xlu0 %1913
        %1917 = vset.pattern.permute.xlu0 0
        %1918 = vperm.xlu0 %1917, %v1499
        %v1919 = vpop.permute.xlu0 %1918
        %1922 = vset.pattern.permute.xlu0 0
        %1923 = vperm.xlu0 %1922, %v1501
        %v1924 = vpop.permute.xlu0 %1923
        %1927 = vset.pattern.permute.xlu0 0
        %1928 = vperm.xlu0 %1927, %v1503
        %v1929 = vpop.permute.xlu0 %1928
        %1932 = vset.pattern.permute.xlu0 0
        %1933 = vperm.xlu0 %1932, %v1505
        %v1934 = vpop.permute.xlu0 %1933
        %1937 = vset.pattern.permute.xlu0 0
        %1938 = vperm.xlu0 %1937, %v1507
        %v1939 = vpop.permute.xlu0 %1938
        %1942 = vset.pattern.permute.xlu0 0
        %1943 = vperm.xlu0 %1942, %v1509
        %v1944 = vpop.permute.xlu0 %1943
        %1947 = vset.pattern.permute.xlu0 0
        %1948 = vperm.xlu0 %1947, %v1511
        %v1949 = vpop.permute.xlu0 %1948
        %1952 = vset.pattern.permute.xlu0 0
        %1953 = vperm.xlu0 %1952, %v1513
        %v1954 = vpop.permute.xlu0 %1953
        %v1956 = vmul.f32 %v1879, %v1860
        %v1957 = vmul.f32 %v1884, %v1861
        %v1958 = vmul.f32 %v1889, %v1862
        %v1959 = vmul.f32 %v1894, %v1863
        %v1960 = vmul.f32 %v1899, %v1864
        %v1961 = vmul.f32 %v1904, %v1865
        %v1962 = vmul.f32 %v1909, %v1866
        %v1963 = vmul.f32 %v1914, %v1867
        %v1964 = vmul.f32 %v1919, %v1868
        %v1965 = vmul.f32 %v1924, %v1869
        %v1966 = vmul.f32 %v1929, %v1870
        %v1967 = vmul.f32 %v1934, %v1871
        %v1968 = vmul.f32 %v1939, %v1872
        %v1969 = vmul.f32 %v1944, %v1873
        %v1970 = vmul.f32 %v1949, %v1874
        %v1971 = vmul.f32 %v1954, %v1875
        %v1972 = vadd.f32 %v1956, %v1821
        %v1973 = vadd.f32 %v1957, %v1823
        %v1974 = vadd.f32 %v1958, %v1826
        %v1975 = vadd.f32 %v1959, %v1828
        %v1976 = vadd.f32 %v1960, %v1831
        %v1977 = vadd.f32 %v1961, %v1833
        %v1978 = vadd.f32 %v1962, %v1836
        %v1979 = vadd.f32 %v1963, %v1838
        %v1980 = vadd.f32 %v1964, %v1841
        %v1981 = vadd.f32 %v1965, %v1843
        %v1982 = vadd.f32 %v1966, %v1846
        %v1983 = vadd.f32 %v1967, %v1848
        %v1984 = vadd.f32 %v1968, %v1851
        %v1985 = vadd.f32 %v1969, %v1853
        %v1986 = vadd.f32 %v1970, %v1856
        %v1987 = vadd.f32 %v1971, %v1858
        %1988 = vst.msk [vmem:[#allocation4] sm:$0xff] %vm1288, %v1972
        %1989 = vst.msk [vmem:[#allocation4 + $0x8] sm:$0xff] %vm1288, %v1973
        %1990 = vst.msk [vmem:[#allocation4 + $0x10] sm:$0xff] %vm1288, %v1974
        %1991 = vst.msk [vmem:[#allocation4 + $0x18] sm:$0xff] %vm1288, %v1975
        %1992 = vst.msk [vmem:[#allocation4 + $0x20] sm:$0xff] %vm1288, %v1976
        %1993 = vst.msk [vmem:[#allocation4 + $0x28] sm:$0xff] %vm1288, %v1977
        %1994 = vst.msk [vmem:[#allocation4 + $0x30] sm:$0xff] %vm1288, %v1978
        %1995 = vst.msk [vmem:[#allocation4 + $0x38] sm:$0xff] %vm1288, %v1979
        %1996 = vst.msk [vmem:[#allocation4 + $0x40] sm:$0xff] %vm1288, %v1980
        %1997 = vst.msk [vmem:[#allocation4 + $0x48] sm:$0xff] %vm1288, %v1981
        %1998 = vst.msk [vmem:[#allocation4 + $0x50] sm:$0xff] %vm1288, %v1982
        %1999 = vst.msk [vmem:[#allocation4 + $0x58] sm:$0xff] %vm1288, %v1983
        %2000 = vst.msk [vmem:[#allocation4 + $0x60] sm:$0xff] %vm1288, %v1984
        %2001 = vst.msk [vmem:[#allocation4 + $0x68] sm:$0xff] %vm1288, %v1985
        %2002 = vst.msk [vmem:[#allocation4 + $0x70] sm:$0xff] %vm1288, %v1986
        %2003 = vst.msk [vmem:[#allocation4 + $0x78] sm:$0xff] %vm1288, %v1987
        %2004 = vst.msk [vmem:[#allocation2] sm:$0xff] %vm1738, %v1450
        %2005 = vst.msk [vmem:[#allocation2 + $0x8] sm:$0xff] %vm1738, %v1451
        %2006 = vst.msk [vmem:[#allocation2 + $0x10] sm:$0xff] %vm1738, %v1452
        %2007 = vst.msk [vmem:[#allocation2 + $0x18] sm:$0xff] %vm1738, %v1453
        %2008 = vst.msk [vmem:[#allocation2 + $0x20] sm:$0xff] %vm1738, %v1454
        %2009 = vst.msk [vmem:[#allocation2 + $0x28] sm:$0xff] %vm1738, %v1455
        %2010 = vst.msk [vmem:[#allocation2 + $0x30] sm:$0xff] %vm1738, %v1456
        %2011 = vst.msk [vmem:[#allocation2 + $0x38] sm:$0xff] %vm1738, %v1457
        %2012 = vst.msk [vmem:[#allocation2 + $0x40] sm:$0xff] %vm1738, %v1458
        %2013 = vst.msk [vmem:[#allocation2 + $0x48] sm:$0xff] %vm1738, %v1459
        %2014 = vst.msk [vmem:[#allocation2 + $0x50] sm:$0xff] %vm1738, %v1460
        %2015 = vst.msk [vmem:[#allocation2 + $0x58] sm:$0xff] %vm1738, %v1461
        %2016 = vst.msk [vmem:[#allocation2 + $0x60] sm:$0xff] %vm1738, %v1462
        %2017 = vst.msk [vmem:[#allocation2 + $0x68] sm:$0xff] %vm1738, %v1463
        %2018 = vst.msk [vmem:[#allocation2 + $0x70] sm:$0xff] %vm1738, %v1464
        %2019 = vst.msk [vmem:[#allocation2 + $0x78] sm:$0xff] %vm1738, %v1465
        %2020 = vrot.lane.b32.xlu0 %v1240, 120
        %v2021 = vpop.permute.xlu0 %2020
        %2022 = vrot.lane.b32.xlu0 %v1241, 120
        %v2023 = vpop.permute.xlu0 %2022
        %2024 = vrot.lane.b32.xlu0 %v1242, 120
        %v2025 = vpop.permute.xlu0 %2024
        %2026 = vrot.lane.b32.xlu0 %v1243, 120
        %v2027 = vpop.permute.xlu0 %2026
        %2028 = vrot.lane.b32.xlu0 %v1244, 120
        %v2029 = vpop.permute.xlu0 %2028
        %2030 = vrot.lane.b32.xlu0 %v1245, 120
        %v2031 = vpop.permute.xlu0 %2030
        %2032 = vrot.lane.b32.xlu0 %v1246, 120
        %v2033 = vpop.permute.xlu0 %2032
        %2034 = vrot.lane.b32.xlu0 %v1247, 120
        %v2035 = vpop.permute.xlu0 %2034
        %2036 = vrot.lane.b32.xlu0 %v1280, 120
        %v2037 = vpop.permute.xlu0 %2036
        %2038 = vrot.lane.b32.xlu0 %v1281, 120
        %v2039 = vpop.permute.xlu0 %2038
        %2040 = vrot.lane.b32.xlu0 %v1282, 120
        %v2041 = vpop.permute.xlu0 %2040
        %2042 = vrot.lane.b32.xlu0 %v1283, 120
        %v2043 = vpop.permute.xlu0 %2042
        %2044 = vrot.lane.b32.xlu0 %v1284, 120
        %v2045 = vpop.permute.xlu0 %2044
        %2046 = vrot.lane.b32.xlu0 %v1285, 120
        %v2047 = vpop.permute.xlu0 %2046
        %2048 = vrot.lane.b32.xlu0 %v1286, 120
        %v2049 = vpop.permute.xlu0 %2048
        %2050 = vrot.lane.b32.xlu0 %v1287, 120
        %v2051 = vpop.permute.xlu0 %2050
        %v2053 = vsel %vm1288, %v2021, 0
        %v2056 = vsel %vm1288, %v2023, 0
        %v2059 = vsel %vm1288, %v2025, 0
        %v2062 = vsel %vm1288, %v2027, 0
        %v2065 = vsel %vm1288, %v2029, 0
        %v2068 = vsel %vm1288, %v2031, 0
        %v2071 = vsel %vm1288, %v2033, 0
        %v2074 = vsel %vm1288, %v2035, 0
        %v2077 = vsel %vm1288, %v2037, 0
        %v2080 = vsel %vm1288, %v2039, 0
        %v2083 = vsel %vm1288, %v2041, 0
        %v2086 = vsel %vm1288, %v2043, 0
        %v2089 = vsel %vm1288, %v2045, 0
        %v2092 = vsel %vm1288, %v2047, 0
        %v2095 = vsel %vm1288, %v2049, 0
        %v2098 = vsel %vm1288, %v2051, 0
        %2100 = vmatpush.bf16.xpose.msra.mxu0 %v2098
        %2101 = vmatpush.bf16.xpose.msra.mxu0 %v2095
        %2102 = vmatpush.bf16.xpose.msra.mxu0 %v2092
        %2103 = vmatpush.bf16.xpose.msra.mxu0 %v2089
        %2104 = vmatpush.bf16.xpose.msra.mxu0 %v2086
        %2105 = vmatpush.bf16.xpose.msra.mxu0 %v2083
        %2106 = vmatpush.bf16.xpose.msra.mxu0 %v2080
        %2107 = vmatpush.bf16.xpose.msra.mxu0 %v2077
        %2108 = vmatmul.bf16.gmra.mxu0 %v2053
        %v2109 = vpop.f32.mrf.mxu0
        %v2110 = vadd.f32 0.0, %v2109
        %v2111 = vpop.f32.mrf.mxu0
        %v2112 = vadd.f32 0.0, %v2111
        %2113 = vmatmul.bf16.gmra.mxu0 %v2056
        %v2114 = vpop.f32.mrf.mxu0
        %v2115 = vadd.f32 0.0, %v2114
        %v2116 = vpop.f32.mrf.mxu0
        %v2117 = vadd.f32 0.0, %v2116
        %2118 = vmatmul.bf16.gmra.mxu0 %v2059
        %v2119 = vpop.f32.mrf.mxu0
        %v2120 = vadd.f32 0.0, %v2119
        %v2121 = vpop.f32.mrf.mxu0
        %v2122 = vadd.f32 0.0, %v2121
        %2123 = vmatmul.bf16.gmra.mxu0 %v2062
        %v2124 = vpop.f32.mrf.mxu0
        %v2125 = vadd.f32 0.0, %v2124
        %v2126 = vpop.f32.mrf.mxu0
        %v2127 = vadd.f32 0.0, %v2126
        %2128 = vmatmul.bf16.gmra.mxu0 %v2065
        %v2129 = vpop.f32.mrf.mxu0
        %v2130 = vadd.f32 0.0, %v2129
        %v2131 = vpop.f32.mrf.mxu0
        %v2132 = vadd.f32 0.0, %v2131
        %2133 = vmatmul.bf16.gmra.mxu0 %v2068
        %v2134 = vpop.f32.mrf.mxu0
        %v2135 = vadd.f32 0.0, %v2134
        %v2136 = vpop.f32.mrf.mxu0
        %v2137 = vadd.f32 0.0, %v2136
        %2138 = vmatmul.bf16.gmra.mxu0 %v2071
        %v2139 = vpop.f32.mrf.mxu0
        %v2140 = vadd.f32 0.0, %v2139
        %v2141 = vpop.f32.mrf.mxu0
        %v2142 = vadd.f32 0.0, %v2141
        %2143 = vmatmul.bf16.gmra.mxu0 %v2074
        %v2144 = vpop.f32.mrf.mxu0
        %v2145 = vadd.f32 0.0, %v2144
        %v2146 = vpop.f32.mrf.mxu0
        %v2147 = vadd.f32 0.0, %v2146
        %2148 = vdwg.mxu0
        %v2149 = vsel %vm1192, %v2110, -1e+30
        %v2150 = vsel %vm1193, %v2112, -1e+30
        %v2151 = vsel %vm1194, %v2115, -1e+30
        %v2152 = vsel %vm1195, %v2117, -1e+30
        %v2153 = vsel %vm1196, %v2120, -1e+30
        %v2154 = vsel %vm1197, %v2122, -1e+30
        %v2155 = vsel %vm1198, %v2125, -1e+30
        %v2156 = vsel %vm1199, %v2127, -1e+30
        %v2157 = vsel %vm1200, %v2130, -1e+30
        %v2158 = vsel %vm1201, %v2132, -1e+30
        %v2159 = vsel %vm1202, %v2135, -1e+30
        %v2160 = vsel %vm1203, %v2137, -1e+30
        %v2161 = vsel %vm1204, %v2140, -1e+30
        %v2162 = vsel %vm1205, %v2142, -1e+30
        %v2163 = vsel %vm1206, %v2145, -1e+30
        %v2164 = vsel %vm1207, %v2147, -1e+30
        %s2165 = scalar_lea.vmem [#allocation2], 128
        %v2166 = vld [vmem:[%s2165] sm:$0xff]
        %v2167 = vld [vmem:[%s2165 + $0x8] sm:$0xff]
        %v2168 = vld [vmem:[%s2165 + $0x10] sm:$0xff]
        %v2169 = vld [vmem:[%s2165 + $0x18] sm:$0xff]
        %v2170 = vld [vmem:[%s2165 + $0x20] sm:$0xff]
        %v2171 = vld [vmem:[%s2165 + $0x28] sm:$0xff]
        %v2172 = vld [vmem:[%s2165 + $0x30] sm:$0xff]
        %v2173 = vld [vmem:[%s2165 + $0x38] sm:$0xff]
        %v2174 = vld [vmem:[%s2165 + $0x40] sm:$0xff]
        %v2175 = vld [vmem:[%s2165 + $0x48] sm:$0xff]
        %v2176 = vld [vmem:[%s2165 + $0x50] sm:$0xff]
        %v2177 = vld [vmem:[%s2165 + $0x58] sm:$0xff]
        %v2178 = vld [vmem:[%s2165 + $0x60] sm:$0xff]
        %v2179 = vld [vmem:[%s2165 + $0x68] sm:$0xff]
        %v2180 = vld [vmem:[%s2165 + $0x70] sm:$0xff]
        %v2181 = vld [vmem:[%s2165 + $0x78] sm:$0xff]
        %2182 = vmax.xlane.f32.xlu0 %v2149
        %v2183 = vpop.xlane.xlu0 %2182
        %2184 = vmax.xlane.f32.xlu0 %v2150
        %v2185 = vpop.xlane.xlu0 %2184
        %2186 = vmax.xlane.f32.xlu0 %v2151
        %v2187 = vpop.xlane.xlu0 %2186
        %2188 = vmax.xlane.f32.xlu0 %v2152
        %v2189 = vpop.xlane.xlu0 %2188
        %2190 = vmax.xlane.f32.xlu0 %v2153
        %v2191 = vpop.xlane.xlu0 %2190
        %2192 = vmax.xlane.f32.xlu0 %v2154
        %v2193 = vpop.xlane.xlu0 %2192
        %2194 = vmax.xlane.f32.xlu0 %v2155
        %v2195 = vpop.xlane.xlu0 %2194
        %2196 = vmax.xlane.f32.xlu0 %v2156
        %v2197 = vpop.xlane.xlu0 %2196
        %2198 = vmax.xlane.f32.xlu0 %v2157
        %v2199 = vpop.xlane.xlu0 %2198
        %2200 = vmax.xlane.f32.xlu0 %v2158
        %v2201 = vpop.xlane.xlu0 %2200
        %2202 = vmax.xlane.f32.xlu0 %v2159
        %v2203 = vpop.xlane.xlu0 %2202
        %2204 = vmax.xlane.f32.xlu0 %v2160
        %v2205 = vpop.xlane.xlu0 %2204
        %2206 = vmax.xlane.f32.xlu0 %v2161
        %v2207 = vpop.xlane.xlu0 %2206
        %2208 = vmax.xlane.f32.xlu0 %v2162
        %v2209 = vpop.xlane.xlu0 %2208
        %2210 = vmax.xlane.f32.xlu0 %v2163
        %v2211 = vpop.xlane.xlu0 %2210
        %2212 = vmax.xlane.f32.xlu0 %v2164
        %v2213 = vpop.xlane.xlu0 %2212
        %v2214 = vmax.f32 %v2166, %v2183
        %v2215 = vmax.f32 %v2167, %v2185
        %v2216 = vmax.f32 %v2168, %v2187
        %v2217 = vmax.f32 %v2169, %v2189
        %v2218 = vmax.f32 %v2170, %v2191
        %v2219 = vmax.f32 %v2171, %v2193
        %v2220 = vmax.f32 %v2172, %v2195
        %v2221 = vmax.f32 %v2173, %v2197
        %v2222 = vmax.f32 %v2174, %v2199
        %v2223 = vmax.f32 %v2175, %v2201
        %v2224 = vmax.f32 %v2176, %v2203
        %v2225 = vmax.f32 %v2177, %v2205
        %v2226 = vmax.f32 %v2178, %v2207
        %v2227 = vmax.f32 %v2179, %v2209
        %v2228 = vmax.f32 %v2180, %v2211
        %v2229 = vmax.f32 %v2181, %v2213
        %v2230 = vsub.f32 %v2166, %v2214
        %v2231 = vsub.f32 %v2167, %v2215
        %v2232 = vsub.f32 %v2168, %v2216
        %v2233 = vsub.f32 %v2169, %v2217
        %v2234 = vsub.f32 %v2170, %v2218
        %v2235 = vsub.f32 %v2171, %v2219
        %v2236 = vsub.f32 %v2172, %v2220
        %v2237 = vsub.f32 %v2173, %v2221
        %v2238 = vsub.f32 %v2174, %v2222
        %v2239 = vsub.f32 %v2175, %v2223
        %v2240 = vsub.f32 %v2176, %v2224
        %v2241 = vsub.f32 %v2177, %v2225
        %v2242 = vsub.f32 %v2178, %v2226
        %v2243 = vsub.f32 %v2179, %v2227
        %v2244 = vsub.f32 %v2180, %v2228
        %v2245 = vsub.f32 %v2181, %v2229
        %v2246 = vmul.f32 %v2230, 1.442695
        %v2247 = vpow.pop %v2246
        %v2248 = vmul.f32 %v2231, 1.442695
        %v2249 = vpow.pop %v2248
        %v2250 = vmul.f32 %v2232, 1.442695
        %v2251 = vpow.pop %v2250
        %v2252 = vmul.f32 %v2233, 1.442695
        %v2253 = vpow.pop %v2252
        %v2254 = vmul.f32 %v2234, 1.442695
        %v2255 = vpow.pop %v2254
        %v2256 = vmul.f32 %v2235, 1.442695
        %v2257 = vpow.pop %v2256
        %v2258 = vmul.f32 %v2236, 1.442695
        %v2259 = vpow.pop %v2258
        %v2260 = vmul.f32 %v2237, 1.442695
        %v2261 = vpow.pop %v2260
        %v2262 = vmul.f32 %v2238, 1.442695
        %v2263 = vpow.pop %v2262
        %v2264 = vmul.f32 %v2239, 1.442695
        %v2265 = vpow.pop %v2264
        %v2266 = vmul.f32 %v2240, 1.442695
        %v2267 = vpow.pop %v2266
        %v2268 = vmul.f32 %v2241, 1.442695
        %v2269 = vpow.pop %v2268
        %v2270 = vmul.f32 %v2242, 1.442695
        %v2271 = vpow.pop %v2270
        %v2272 = vmul.f32 %v2243, 1.442695
        %v2273 = vpow.pop %v2272
        %v2274 = vmul.f32 %v2244, 1.442695
        %v2275 = vpow.pop %v2274
        %v2276 = vmul.f32 %v2245, 1.442695
        %v2277 = vpow.pop %v2276
        %2279 = vset.pattern.permute.xlu0 0
        %2280 = vperm.xlu0 %2279, %v2214
        %v2281 = vpop.permute.xlu0 %2280
        %2284 = vset.pattern.permute.xlu0 0
        %2285 = vperm.xlu0 %2284, %v2215
        %v2286 = vpop.permute.xlu0 %2285
        %2289 = vset.pattern.permute.xlu0 0
        %2290 = vperm.xlu0 %2289, %v2216
        %v2291 = vpop.permute.xlu0 %2290
        %2294 = vset.pattern.permute.xlu0 0
        %2295 = vperm.xlu0 %2294, %v2217
        %v2296 = vpop.permute.xlu0 %2295
        %2299 = vset.pattern.permute.xlu0 0
        %2300 = vperm.xlu0 %2299, %v2218
        %v2301 = vpop.permute.xlu0 %2300
        %2304 = vset.pattern.permute.xlu0 0
        %2305 = vperm.xlu0 %2304, %v2219
        %v2306 = vpop.permute.xlu0 %2305
        %2309 = vset.pattern.permute.xlu0 0
        %2310 = vperm.xlu0 %2309, %v2220
        %v2311 = vpop.permute.xlu0 %2310
        %2314 = vset.pattern.permute.xlu0 0
        %2315 = vperm.xlu0 %2314, %v2221
        %v2316 = vpop.permute.xlu0 %2315
        %2319 = vset.pattern.permute.xlu0 0
        %2320 = vperm.xlu0 %2319, %v2222
        %v2321 = vpop.permute.xlu0 %2320
        %2324 = vset.pattern.permute.xlu0 0
        %2325 = vperm.xlu0 %2324, %v2223
        %v2326 = vpop.permute.xlu0 %2325
        %2329 = vset.pattern.permute.xlu0 0
        %2330 = vperm.xlu0 %2329, %v2224
        %v2331 = vpop.permute.xlu0 %2330
        %2334 = vset.pattern.permute.xlu0 0
        %2335 = vperm.xlu0 %2334, %v2225
        %v2336 = vpop.permute.xlu0 %2335
        %2339 = vset.pattern.permute.xlu0 0
        %2340 = vperm.xlu0 %2339, %v2226
        %v2341 = vpop.permute.xlu0 %2340
        %2344 = vset.pattern.permute.xlu0 0
        %2345 = vperm.xlu0 %2344, %v2227
        %v2346 = vpop.permute.xlu0 %2345
        %2349 = vset.pattern.permute.xlu0 0
        %2350 = vperm.xlu0 %2349, %v2228
        %v2351 = vpop.permute.xlu0 %2350
        %2354 = vset.pattern.permute.xlu0 0
        %2355 = vperm.xlu0 %2354, %v2229
        %v2356 = vpop.permute.xlu0 %2355
        %v2358 = vsub.f32 %v2149, %v2281
        %v2359 = vsub.f32 %v2150, %v2286
        %v2360 = vsub.f32 %v2151, %v2291
        %v2361 = vsub.f32 %v2152, %v2296
        %v2362 = vsub.f32 %v2153, %v2301
        %v2363 = vsub.f32 %v2154, %v2306
        %v2364 = vsub.f32 %v2155, %v2311
        %v2365 = vsub.f32 %v2156, %v2316
        %v2366 = vsub.f32 %v2157, %v2321
        %v2367 = vsub.f32 %v2158, %v2326
        %v2368 = vsub.f32 %v2159, %v2331
        %v2369 = vsub.f32 %v2160, %v2336
        %v2370 = vsub.f32 %v2161, %v2341
        %v2371 = vsub.f32 %v2162, %v2346
        %v2372 = vsub.f32 %v2163, %v2351
        %v2373 = vsub.f32 %v2164, %v2356
        %v2374 = vmul.f32 %v2358, 1.442695
        %v2375 = vpow.pop %v2374
        %v2376 = vmul.f32 %v2359, 1.442695
        %v2377 = vpow.pop %v2376
        %v2378 = vmul.f32 %v2360, 1.442695
        %v2379 = vpow.pop %v2378
        %v2380 = vmul.f32 %v2361, 1.442695
        %v2381 = vpow.pop %v2380
        %v2382 = vmul.f32 %v2362, 1.442695
        %v2383 = vpow.pop %v2382
        %v2384 = vmul.f32 %v2363, 1.442695
        %v2385 = vpow.pop %v2384
        %v2386 = vmul.f32 %v2364, 1.442695
        %v2387 = vpow.pop %v2386
        %v2388 = vmul.f32 %v2365, 1.442695
        %v2389 = vpow.pop %v2388
        %v2390 = vmul.f32 %v2366, 1.442695
        %v2391 = vpow.pop %v2390
        %v2392 = vmul.f32 %v2367, 1.442695
        %v2393 = vpow.pop %v2392
        %v2394 = vmul.f32 %v2368, 1.442695
        %v2395 = vpow.pop %v2394
        %v2396 = vmul.f32 %v2369, 1.442695
        %v2397 = vpow.pop %v2396
        %v2398 = vmul.f32 %v2370, 1.442695
        %v2399 = vpow.pop %v2398
        %v2400 = vmul.f32 %v2371, 1.442695
        %v2401 = vpow.pop %v2400
        %v2402 = vmul.f32 %v2372, 1.442695
        %v2403 = vpow.pop %v2402
        %v2404 = vmul.f32 %v2373, 1.442695
        %v2405 = vpow.pop %v2404
        %v2406 = vsel %vm1192, %v2375, 0.0
        %v2407 = vsel %vm1193, %v2377, 0.0
        %v2408 = vsel %vm1194, %v2379, 0.0
        %v2409 = vsel %vm1195, %v2381, 0.0
        %v2410 = vsel %vm1196, %v2383, 0.0
        %v2411 = vsel %vm1197, %v2385, 0.0
        %v2412 = vsel %vm1198, %v2387, 0.0
        %v2413 = vsel %vm1199, %v2389, 0.0
        %v2414 = vsel %vm1200, %v2391, 0.0
        %v2415 = vsel %vm1201, %v2393, 0.0
        %v2416 = vsel %vm1202, %v2395, 0.0
        %v2417 = vsel %vm1203, %v2397, 0.0
        %v2418 = vsel %vm1204, %v2399, 0.0
        %v2419 = vsel %vm1205, %v2401, 0.0
        %v2420 = vsel %vm1206, %v2403, 0.0
        %v2421 = vsel %vm1207, %v2405, 0.0
        %s2422 = scalar_lea.vmem [#allocation3], 128
        %v2423 = vld [vmem:[%s2422] sm:$0xff]
        %v2424 = vld [vmem:[%s2422 + $0x8] sm:$0xff]
        %v2425 = vld [vmem:[%s2422 + $0x10] sm:$0xff]
        %v2426 = vld [vmem:[%s2422 + $0x18] sm:$0xff]
        %v2427 = vld [vmem:[%s2422 + $0x20] sm:$0xff]
        %v2428 = vld [vmem:[%s2422 + $0x28] sm:$0xff]
        %v2429 = vld [vmem:[%s2422 + $0x30] sm:$0xff]
        %v2430 = vld [vmem:[%s2422 + $0x38] sm:$0xff]
        %v2431 = vld [vmem:[%s2422 + $0x40] sm:$0xff]
        %v2432 = vld [vmem:[%s2422 + $0x48] sm:$0xff]
        %v2433 = vld [vmem:[%s2422 + $0x50] sm:$0xff]
        %v2434 = vld [vmem:[%s2422 + $0x58] sm:$0xff]
        %v2435 = vld [vmem:[%s2422 + $0x60] sm:$0xff]
        %v2436 = vld [vmem:[%s2422 + $0x68] sm:$0xff]
        %v2437 = vld [vmem:[%s2422 + $0x70] sm:$0xff]
        %v2438 = vld [vmem:[%s2422 + $0x78] sm:$0xff]
        %v2439 = vmul.f32 %v2247, %v2423
        %v2440 = vmul.f32 %v2249, %v2424
        %v2441 = vmul.f32 %v2251, %v2425
        %v2442 = vmul.f32 %v2253, %v2426
        %v2443 = vmul.f32 %v2255, %v2427
        %v2444 = vmul.f32 %v2257, %v2428
        %v2445 = vmul.f32 %v2259, %v2429
        %v2446 = vmul.f32 %v2261, %v2430
        %v2447 = vmul.f32 %v2263, %v2431
        %v2448 = vmul.f32 %v2265, %v2432
        %v2449 = vmul.f32 %v2267, %v2433
        %v2450 = vmul.f32 %v2269, %v2434
        %v2451 = vmul.f32 %v2271, %v2435
        %v2452 = vmul.f32 %v2273, %v2436
        %v2453 = vmul.f32 %v2275, %v2437
        %v2454 = vmul.f32 %v2277, %v2438
        %2455 = vadd.xlane.f32.xlu0 %v2406
        %v2456 = vpop.xlane.xlu0 %2455
        %2457 = vadd.xlane.f32.xlu0 %v2407
        %v2458 = vpop.xlane.xlu0 %2457
        %2459 = vadd.xlane.f32.xlu0 %v2408
        %v2460 = vpop.xlane.xlu0 %2459
        %2461 = vadd.xlane.f32.xlu0 %v2409
        %v2462 = vpop.xlane.xlu0 %2461
        %2463 = vadd.xlane.f32.xlu0 %v2410
        %v2464 = vpop.xlane.xlu0 %2463
        %2465 = vadd.xlane.f32.xlu0 %v2411
        %v2466 = vpop.xlane.xlu0 %2465
        %2467 = vadd.xlane.f32.xlu0 %v2412
        %v2468 = vpop.xlane.xlu0 %2467
        %2469 = vadd.xlane.f32.xlu0 %v2413
        %v2470 = vpop.xlane.xlu0 %2469
        %2471 = vadd.xlane.f32.xlu0 %v2414
        %v2472 = vpop.xlane.xlu0 %2471
        %2473 = vadd.xlane.f32.xlu0 %v2415
        %v2474 = vpop.xlane.xlu0 %2473
        %2475 = vadd.xlane.f32.xlu0 %v2416
        %v2476 = vpop.xlane.xlu0 %2475
        %2477 = vadd.xlane.f32.xlu0 %v2417
        %v2478 = vpop.xlane.xlu0 %2477
        %2479 = vadd.xlane.f32.xlu0 %v2418
        %v2480 = vpop.xlane.xlu0 %2479
        %2481 = vadd.xlane.f32.xlu0 %v2419
        %v2482 = vpop.xlane.xlu0 %2481
        %2483 = vadd.xlane.f32.xlu0 %v2420
        %v2484 = vpop.xlane.xlu0 %2483
        %2485 = vadd.xlane.f32.xlu0 %v2421
        %v2486 = vpop.xlane.xlu0 %2485
        %v2487 = vadd.f32 %v2439, %v2456
        %v2488 = vadd.f32 %v2440, %v2458
        %v2489 = vadd.f32 %v2441, %v2460
        %v2490 = vadd.f32 %v2442, %v2462
        %v2491 = vadd.f32 %v2443, %v2464
        %v2492 = vadd.f32 %v2444, %v2466
        %v2493 = vadd.f32 %v2445, %v2468
        %v2494 = vadd.f32 %v2446, %v2470
        %v2495 = vadd.f32 %v2447, %v2472
        %v2496 = vadd.f32 %v2448, %v2474
        %v2497 = vadd.f32 %v2449, %v2476
        %v2498 = vadd.f32 %v2450, %v2478
        %v2499 = vadd.f32 %v2451, %v2480
        %v2500 = vadd.f32 %v2452, %v2482
        %v2501 = vadd.f32 %v2453, %v2484
        %v2502 = vadd.f32 %v2454, %v2486
        %2503 = vst.msk [vmem:[%s2422] sm:$0xff] %vm1738, %v2487
        %2504 = vst.msk [vmem:[%s2422 + $0x8] sm:$0xff] %vm1738, %v2488
        %2505 = vst.msk [vmem:[%s2422 + $0x10] sm:$0xff] %vm1738, %v2489
        %2506 = vst.msk [vmem:[%s2422 + $0x18] sm:$0xff] %vm1738, %v2490
        %2507 = vst.msk [vmem:[%s2422 + $0x20] sm:$0xff] %vm1738, %v2491
        %2508 = vst.msk [vmem:[%s2422 + $0x28] sm:$0xff] %vm1738, %v2492
        %2509 = vst.msk [vmem:[%s2422 + $0x30] sm:$0xff] %vm1738, %v2493
        %2510 = vst.msk [vmem:[%s2422 + $0x38] sm:$0xff] %vm1738, %v2494
        %2511 = vst.msk [vmem:[%s2422 + $0x40] sm:$0xff] %vm1738, %v2495
        %2512 = vst.msk [vmem:[%s2422 + $0x48] sm:$0xff] %vm1738, %v2496
        %2513 = vst.msk [vmem:[%s2422 + $0x50] sm:$0xff] %vm1738, %v2497
        %2514 = vst.msk [vmem:[%s2422 + $0x58] sm:$0xff] %vm1738, %v2498
        %2515 = vst.msk [vmem:[%s2422 + $0x60] sm:$0xff] %vm1738, %v2499
        %2516 = vst.msk [vmem:[%s2422 + $0x68] sm:$0xff] %vm1738, %v2500
        %2517 = vst.msk [vmem:[%s2422 + $0x70] sm:$0xff] %vm1738, %v2501
        %2518 = vst.msk [vmem:[%s2422 + $0x78] sm:$0xff] %vm1738, %v2502
        %v2519 = vpack.c.bf16 %v2407, %v2406
        %v2520 = vpack.c.bf16 %v2409, %v2408
        %v2521 = vpack.c.bf16 %v2411, %v2410
        %v2522 = vpack.c.bf16 %v2413, %v2412
        %v2523 = vpack.c.bf16 %v2415, %v2414
        %v2524 = vpack.c.bf16 %v2417, %v2416
        %v2525 = vpack.c.bf16 %v2419, %v2418
        %v2526 = vpack.c.bf16 %v2421, %v2420
        %2527 = vrot.lane.b32.xlu0 %v1795, 120
        %v2528 = vpop.permute.xlu0 %2527
        %2529 = vrot.lane.b32.xlu0 %v1796, 120
        %v2530 = vpop.permute.xlu0 %2529
        %2531 = vrot.lane.b32.xlu0 %v1797, 120
        %v2532 = vpop.permute.xlu0 %2531
        %2533 = vrot.lane.b32.xlu0 %v1798, 120
        %v2534 = vpop.permute.xlu0 %2533
        %2535 = vrot.lane.b32.xlu0 %v1799, 120
        %v2536 = vpop.permute.xlu0 %2535
        %2537 = vrot.lane.b32.xlu0 %v1800, 120
        %v2538 = vpop.permute.xlu0 %2537
        %2539 = vrot.lane.b32.xlu0 %v1801, 120
        %v2540 = vpop.permute.xlu0 %2539
        %2541 = vrot.lane.b32.xlu0 %v1802, 120
        %v2542 = vpop.permute.xlu0 %2541
        %2551 = vmatpush.bf16.msra.mxu0 %v2542
        %2552 = vmatpush.bf16.msra.mxu0 %v2540
        %2553 = vmatpush.bf16.msra.mxu0 %v2538
        %2554 = vmatpush.bf16.msra.mxu0 %v2536
        %2555 = vmatpush.bf16.msra.mxu0 %v2534
        %2556 = vmatpush.bf16.msra.mxu0 %v2532
        %2557 = vmatpush.bf16.msra.mxu0 %v2530
        %2558 = vmatpush.bf16.msra.mxu0 %v2528
        %2559 = vmatmul.bf16.gmra.mxu0 %v2519
        %v2560 = vpop.f32.mrf.mxu0
        %v2561 = vadd.f32 0.0, %v2560
        %v2562 = vpop.f32.mrf.mxu0
        %v2563 = vadd.f32 0.0, %v2562
        %2564 = vmatmul.bf16.gmra.mxu0 %v2520
        %v2565 = vpop.f32.mrf.mxu0
        %v2566 = vadd.f32 0.0, %v2565
        %v2567 = vpop.f32.mrf.mxu0
        %v2568 = vadd.f32 0.0, %v2567
        %2569 = vmatmul.bf16.gmra.mxu0 %v2521
        %v2570 = vpop.f32.mrf.mxu0
        %v2571 = vadd.f32 0.0, %v2570
        %v2572 = vpop.f32.mrf.mxu0
        %v2573 = vadd.f32 0.0, %v2572
        %2574 = vmatmul.bf16.gmra.mxu0 %v2522
        %v2575 = vpop.f32.mrf.mxu0
        %v2576 = vadd.f32 0.0, %v2575
        %v2577 = vpop.f32.mrf.mxu0
        %v2578 = vadd.f32 0.0, %v2577
        %2579 = vmatmul.bf16.gmra.mxu0 %v2523
        %v2580 = vpop.f32.mrf.mxu0
        %v2581 = vadd.f32 0.0, %v2580
        %v2582 = vpop.f32.mrf.mxu0
        %v2583 = vadd.f32 0.0, %v2582
        %2584 = vmatmul.bf16.gmra.mxu0 %v2524
        %v2585 = vpop.f32.mrf.mxu0
        %v2586 = vadd.f32 0.0, %v2585
        %v2587 = vpop.f32.mrf.mxu0
        %v2588 = vadd.f32 0.0, %v2587
        %2589 = vmatmul.bf16.gmra.mxu0 %v2525
        %v2590 = vpop.f32.mrf.mxu0
        %v2591 = vadd.f32 0.0, %v2590
        %v2592 = vpop.f32.mrf.mxu0
        %v2593 = vadd.f32 0.0, %v2592
        %2594 = vmatmul.bf16.gmra.mxu0 %v2526
        %v2595 = vpop.f32.mrf.mxu0
        %v2596 = vadd.f32 0.0, %v2595
        %v2597 = vpop.f32.mrf.mxu0
        %v2598 = vadd.f32 0.0, %v2597
        %2599 = vdwg.mxu0
        %s2600 = scalar_lea.vmem [#allocation4], 128
        %v2601 = vld [vmem:[%s2600] sm:$0xff]
        %v2602 = vld [vmem:[%s2600 + $0x8] sm:$0xff]
        %v2603 = vld [vmem:[%s2600 + $0x10] sm:$0xff]
        %v2604 = vld [vmem:[%s2600 + $0x18] sm:$0xff]
        %v2605 = vld [vmem:[%s2600 + $0x20] sm:$0xff]
        %v2606 = vld [vmem:[%s2600 + $0x28] sm:$0xff]
        %v2607 = vld [vmem:[%s2600 + $0x30] sm:$0xff]
        %v2608 = vld [vmem:[%s2600 + $0x38] sm:$0xff]
        %v2609 = vld [vmem:[%s2600 + $0x40] sm:$0xff]
        %v2610 = vld [vmem:[%s2600 + $0x48] sm:$0xff]
        %v2611 = vld [vmem:[%s2600 + $0x50] sm:$0xff]
        %v2612 = vld [vmem:[%s2600 + $0x58] sm:$0xff]
        %v2613 = vld [vmem:[%s2600 + $0x60] sm:$0xff]
        %v2614 = vld [vmem:[%s2600 + $0x68] sm:$0xff]
        %v2615 = vld [vmem:[%s2600 + $0x70] sm:$0xff]
        %v2616 = vld [vmem:[%s2600 + $0x78] sm:$0xff]
        %2618 = vset.pattern.permute.xlu0 0
        %2619 = vperm.xlu0 %2618, %v2247
        %v2620 = vpop.permute.xlu0 %2619
        %2623 = vset.pattern.permute.xlu0 0
        %2624 = vperm.xlu0 %2623, %v2249
        %v2625 = vpop.permute.xlu0 %2624
        %2628 = vset.pattern.permute.xlu0 0
        %2629 = vperm.xlu0 %2628, %v2251
        %v2630 = vpop.permute.xlu0 %2629
        %2633 = vset.pattern.permute.xlu0 0
        %2634 = vperm.xlu0 %2633, %v2253
        %v2635 = vpop.permute.xlu0 %2634
        %2638 = vset.pattern.permute.xlu0 0
        %2639 = vperm.xlu0 %2638, %v2255
        %v2640 = vpop.permute.xlu0 %2639
        %2643 = vset.pattern.permute.xlu0 0
        %2644 = vperm.xlu0 %2643, %v2257
        %v2645 = vpop.permute.xlu0 %2644
        %2648 = vset.pattern.permute.xlu0 0
        %2649 = vperm.xlu0 %2648, %v2259
        %v2650 = vpop.permute.xlu0 %2649
        %2653 = vset.pattern.permute.xlu0 0
        %2654 = vperm.xlu0 %2653, %v2261
        %v2655 = vpop.permute.xlu0 %2654
        %2658 = vset.pattern.permute.xlu0 0
        %2659 = vperm.xlu0 %2658, %v2263
        %v2660 = vpop.permute.xlu0 %2659
        %2663 = vset.pattern.permute.xlu0 0
        %2664 = vperm.xlu0 %2663, %v2265
        %v2665 = vpop.permute.xlu0 %2664
        %2668 = vset.pattern.permute.xlu0 0
        %2669 = vperm.xlu0 %2668, %v2267
        %v2670 = vpop.permute.xlu0 %2669
        %2673 = vset.pattern.permute.xlu0 0
        %2674 = vperm.xlu0 %2673, %v2269
        %v2675 = vpop.permute.xlu0 %2674
        %2678 = vset.pattern.permute.xlu0 0
        %2679 = vperm.xlu0 %2678, %v2271
        %v2680 = vpop.permute.xlu0 %2679
        %2683 = vset.pattern.permute.xlu0 0
        %2684 = vperm.xlu0 %2683, %v2273
        %v2685 = vpop.permute.xlu0 %2684
        %2688 = vset.pattern.permute.xlu0 0
        %2689 = vperm.xlu0 %2688, %v2275
        %v2690 = vpop.permute.xlu0 %2689
        %2693 = vset.pattern.permute.xlu0 0
        %2694 = vperm.xlu0 %2693, %v2277
        %v2695 = vpop.permute.xlu0 %2694
        %v2697 = vmul.f32 %v2620, %v2601
        %v2698 = vmul.f32 %v2625, %v2602
        %v2699 = vmul.f32 %v2630, %v2603
        %v2700 = vmul.f32 %v2635, %v2604
        %v2701 = vmul.f32 %v2640, %v2605
        %v2702 = vmul.f32 %v2645, %v2606
        %v2703 = vmul.f32 %v2650, %v2607
        %v2704 = vmul.f32 %v2655, %v2608
        %v2705 = vmul.f32 %v2660, %v2609
        %v2706 = vmul.f32 %v2665, %v2610
        %v2707 = vmul.f32 %v2670, %v2611
        %v2708 = vmul.f32 %v2675, %v2612
        %v2709 = vmul.f32 %v2680, %v2613
        %v2710 = vmul.f32 %v2685, %v2614
        %v2711 = vmul.f32 %v2690, %v2615
        %v2712 = vmul.f32 %v2695, %v2616
        %v2713 = vadd.f32 %v2697, %v2561
        %v2714 = vadd.f32 %v2698, %v2563
        %v2715 = vadd.f32 %v2699, %v2566
        %v2716 = vadd.f32 %v2700, %v2568
        %v2717 = vadd.f32 %v2701, %v2571
        %v2718 = vadd.f32 %v2702, %v2573
        %v2719 = vadd.f32 %v2703, %v2576
        %v2720 = vadd.f32 %v2704, %v2578
        %v2721 = vadd.f32 %v2705, %v2581
        %v2722 = vadd.f32 %v2706, %v2583
        %v2723 = vadd.f32 %v2707, %v2586
        %v2724 = vadd.f32 %v2708, %v2588
        %v2725 = vadd.f32 %v2709, %v2591
        %v2726 = vadd.f32 %v2710, %v2593
        %v2727 = vadd.f32 %v2711, %v2596
        %v2728 = vadd.f32 %v2712, %v2598
        %2729 = vst.msk [vmem:[%s2600] sm:$0xff] %vm1288, %v2713
        %2730 = vst.msk [vmem:[%s2600 + $0x8] sm:$0xff] %vm1288, %v2714
        %2731 = vst.msk [vmem:[%s2600 + $0x10] sm:$0xff] %vm1288, %v2715
        %2732 = vst.msk [vmem:[%s2600 + $0x18] sm:$0xff] %vm1288, %v2716
        %2733 = vst.msk [vmem:[%s2600 + $0x20] sm:$0xff] %vm1288, %v2717
        %2734 = vst.msk [vmem:[%s2600 + $0x28] sm:$0xff] %vm1288, %v2718
        %2735 = vst.msk [vmem:[%s2600 + $0x30] sm:$0xff] %vm1288, %v2719
        %2736 = vst.msk [vmem:[%s2600 + $0x38] sm:$0xff] %vm1288, %v2720
        %2737 = vst.msk [vmem:[%s2600 + $0x40] sm:$0xff] %vm1288, %v2721
        %2738 = vst.msk [vmem:[%s2600 + $0x48] sm:$0xff] %vm1288, %v2722
        %2739 = vst.msk [vmem:[%s2600 + $0x50] sm:$0xff] %vm1288, %v2723
        %2740 = vst.msk [vmem:[%s2600 + $0x58] sm:$0xff] %vm1288, %v2724
        %2741 = vst.msk [vmem:[%s2600 + $0x60] sm:$0xff] %vm1288, %v2725
        %2742 = vst.msk [vmem:[%s2600 + $0x68] sm:$0xff] %vm1288, %v2726
        %2743 = vst.msk [vmem:[%s2600 + $0x70] sm:$0xff] %vm1288, %v2727
        %2744 = vst.msk [vmem:[%s2600 + $0x78] sm:$0xff] %vm1288, %v2728
        %2745 = vst.msk [vmem:[%s2165] sm:$0xff] %vm1738, %v2214
        %2746 = vst.msk [vmem:[%s2165 + $0x8] sm:$0xff] %vm1738, %v2215
        %2747 = vst.msk [vmem:[%s2165 + $0x10] sm:$0xff] %vm1738, %v2216
        %2748 = vst.msk [vmem:[%s2165 + $0x18] sm:$0xff] %vm1738, %v2217
        %2749 = vst.msk [vmem:[%s2165 + $0x20] sm:$0xff] %vm1738, %v2218
        %2750 = vst.msk [vmem:[%s2165 + $0x28] sm:$0xff] %vm1738, %v2219
        %2751 = vst.msk [vmem:[%s2165 + $0x30] sm:$0xff] %vm1738, %v2220
        %2752 = vst.msk [vmem:[%s2165 + $0x38] sm:$0xff] %vm1738, %v2221
        %2753 = vst.msk [vmem:[%s2165 + $0x40] sm:$0xff] %vm1738, %v2222
        %2754 = vst.msk [vmem:[%s2165 + $0x48] sm:$0xff] %vm1738, %v2223
        %2755 = vst.msk [vmem:[%s2165 + $0x50] sm:$0xff] %vm1738, %v2224
        %2756 = vst.msk [vmem:[%s2165 + $0x58] sm:$0xff] %vm1738, %v2225
        %2757 = vst.msk [vmem:[%s2165 + $0x60] sm:$0xff] %vm1738, %v2226
        %2758 = vst.msk [vmem:[%s2165 + $0x68] sm:$0xff] %vm1738, %v2227
        %2759 = vst.msk [vmem:[%s2165 + $0x70] sm:$0xff] %vm1738, %v2228
        %2760 = vst.msk [vmem:[%s2165 + $0x78] sm:$0xff] %vm1738, %v2229
        %2761 = vrot.lane.b32.xlu0 %v1240, 112
        %v2762 = vpop.permute.xlu0 %2761
        %2763 = vrot.lane.b32.xlu0 %v1241, 112
        %v2764 = vpop.permute.xlu0 %2763
        %2765 = vrot.lane.b32.xlu0 %v1242, 112
        %v2766 = vpop.permute.xlu0 %2765
        %2767 = vrot.lane.b32.xlu0 %v1243, 112
        %v2768 = vpop.permute.xlu0 %2767
        %2769 = vrot.lane.b32.xlu0 %v1244, 112
        %v2770 = vpop.permute.xlu0 %2769
        %2771 = vrot.lane.b32.xlu0 %v1245, 112
        %v2772 = vpop.permute.xlu0 %2771
        %2773 = vrot.lane.b32.xlu0 %v1246, 112
        %v2774 = vpop.permute.xlu0 %2773
        %2775 = vrot.lane.b32.xlu0 %v1247, 112
        %v2776 = vpop.permute.xlu0 %2775
        %2777 = vrot.lane.b32.xlu0 %v1280, 112
        %v2778 = vpop.permute.xlu0 %2777
        %2779 = vrot.lane.b32.xlu0 %v1281, 112
        %v2780 = vpop.permute.xlu0 %2779
        %2781 = vrot.lane.b32.xlu0 %v1282, 112
        %v2782 = vpop.permute.xlu0 %2781
        %2783 = vrot.lane.b32.xlu0 %v1283, 112
        %v2784 = vpop.permute.xlu0 %2783
        %2785 = vrot.lane.b32.xlu0 %v1284, 112
        %v2786 = vpop.permute.xlu0 %2785
        %2787 = vrot.lane.b32.xlu0 %v1285, 112
        %v2788 = vpop.permute.xlu0 %2787
        %2789 = vrot.lane.b32.xlu0 %v1286, 112
        %v2790 = vpop.permute.xlu0 %2789
        %2791 = vrot.lane.b32.xlu0 %v1287, 112
        %v2792 = vpop.permute.xlu0 %2791
        %v2794 = vsel %vm1288, %v2762, 0
        %v2797 = vsel %vm1288, %v2764, 0
        %v2800 = vsel %vm1288, %v2766, 0
        %v2803 = vsel %vm1288, %v2768, 0
        %v2806 = vsel %vm1288, %v2770, 0
        %v2809 = vsel %vm1288, %v2772, 0
        %v2812 = vsel %vm1288, %v2774, 0
        %v2815 = vsel %vm1288, %v2776, 0
        %v2818 = vsel %vm1288, %v2778, 0
        %v2821 = vsel %vm1288, %v2780, 0
        %v2824 = vsel %vm1288, %v2782, 0
        %v2827 = vsel %vm1288, %v2784, 0
        %v2830 = vsel %vm1288, %v2786, 0
        %v2833 = vsel %vm1288, %v2788, 0
        %v2836 = vsel %vm1288, %v2790, 0
        %v2839 = vsel %vm1288, %v2792, 0
        %2841 = vmatpush.bf16.xpose.msra.mxu0 %v2839
        %2842 = vmatpush.bf16.xpose.msra.mxu0 %v2836
        %2843 = vmatpush.bf16.xpose.msra.mxu0 %v2833
        %2844 = vmatpush.bf16.xpose.msra.mxu0 %v2830
        %2845 = vmatpush.bf16.xpose.msra.mxu0 %v2827
        %2846 = vmatpush.bf16.xpose.msra.mxu0 %v2824
        %2847 = vmatpush.bf16.xpose.msra.mxu0 %v2821
        %2848 = vmatpush.bf16.xpose.msra.mxu0 %v2818
        %2849 = vmatmul.bf16.gmra.mxu0 %v2794
        %v2850 = vpop.f32.mrf.mxu0
        %v2851 = vadd.f32 0.0, %v2850
        %v2852 = vpop.f32.mrf.mxu0
        %v2853 = vadd.f32 0.0, %v2852
        %2854 = vmatmul.bf16.gmra.mxu0 %v2797
        %v2855 = vpop.f32.mrf.mxu0
        %v2856 = vadd.f32 0.0, %v2855
        %v2857 = vpop.f32.mrf.mxu0
        %v2858 = vadd.f32 0.0, %v2857
        %2859 = vmatmul.bf16.gmra.mxu0 %v2800
        %v2860 = vpop.f32.mrf.mxu0
        %v2861 = vadd.f32 0.0, %v2860
        %v2862 = vpop.f32.mrf.mxu0
        %v2863 = vadd.f32 0.0, %v2862
        %2864 = vmatmul.bf16.gmra.mxu0 %v2803
        %v2865 = vpop.f32.mrf.mxu0
        %v2866 = vadd.f32 0.0, %v2865
        %v2867 = vpop.f32.mrf.mxu0
        %v2868 = vadd.f32 0.0, %v2867
        %2869 = vmatmul.bf16.gmra.mxu0 %v2806
        %v2870 = vpop.f32.mrf.mxu0
        %v2871 = vadd.f32 0.0, %v2870
        %v2872 = vpop.f32.mrf.mxu0
        %v2873 = vadd.f32 0.0, %v2872
        %2874 = vmatmul.bf16.gmra.mxu0 %v2809
        %v2875 = vpop.f32.mrf.mxu0
        %v2876 = vadd.f32 0.0, %v2875
        %v2877 = vpop.f32.mrf.mxu0
        %v2878 = vadd.f32 0.0, %v2877
        %2879 = vmatmul.bf16.gmra.mxu0 %v2812
        %v2880 = vpop.f32.mrf.mxu0
        %v2881 = vadd.f32 0.0, %v2880
        %v2882 = vpop.f32.mrf.mxu0
        %v2883 = vadd.f32 0.0, %v2882
        %2884 = vmatmul.bf16.gmra.mxu0 %v2815
        %v2885 = vpop.f32.mrf.mxu0
        %v2886 = vadd.f32 0.0, %v2885
        %v2887 = vpop.f32.mrf.mxu0
        %v2888 = vadd.f32 0.0, %v2887
        %2889 = vdwg.mxu0
        %v2890 = vsel %vm1192, %v2851, -1e+30
        %v2891 = vsel %vm1193, %v2853, -1e+30
        %v2892 = vsel %vm1194, %v2856, -1e+30
        %v2893 = vsel %vm1195, %v2858, -1e+30
        %v2894 = vsel %vm1196, %v2861, -1e+30
        %v2895 = vsel %vm1197, %v2863, -1e+30
        %v2896 = vsel %vm1198, %v2866, -1e+30
        %v2897 = vsel %vm1199, %v2868, -1e+30
        %v2898 = vsel %vm1200, %v2871, -1e+30
        %v2899 = vsel %vm1201, %v2873, -1e+30
        %v2900 = vsel %vm1202, %v2876, -1e+30
        %v2901 = vsel %vm1203, %v2878, -1e+30
        %v2902 = vsel %vm1204, %v2881, -1e+30
        %v2903 = vsel %vm1205, %v2883, -1e+30
        %v2904 = vsel %vm1206, %v2886, -1e+30
        %v2905 = vsel %vm1207, %v2888, -1e+30
        %s2906 = scalar_lea.vmem [#allocation2], 256
        %v2907 = vld [vmem:[%s2906] sm:$0xff]
        %v2908 = vld [vmem:[%s2906 + $0x8] sm:$0xff]
        %v2909 = vld [vmem:[%s2906 + $0x10] sm:$0xff]
        %v2910 = vld [vmem:[%s2906 + $0x18] sm:$0xff]
        %v2911 = vld [vmem:[%s2906 + $0x20] sm:$0xff]
        %v2912 = vld [vmem:[%s2906 + $0x28] sm:$0xff]
        %v2913 = vld [vmem:[%s2906 + $0x30] sm:$0xff]
        %v2914 = vld [vmem:[%s2906 + $0x38] sm:$0xff]
        %v2915 = vld [vmem:[%s2906 + $0x40] sm:$0xff]
        %v2916 = vld [vmem:[%s2906 + $0x48] sm:$0xff]
        %v2917 = vld [vmem:[%s2906 + $0x50] sm:$0xff]
        %v2918 = vld [vmem:[%s2906 + $0x58] sm:$0xff]
        %v2919 = vld [vmem:[%s2906 + $0x60] sm:$0xff]
        %v2920 = vld [vmem:[%s2906 + $0x68] sm:$0xff]
        %v2921 = vld [vmem:[%s2906 + $0x70] sm:$0xff]
        %v2922 = vld [vmem:[%s2906 + $0x78] sm:$0xff]
        %2923 = vmax.xlane.f32.xlu0 %v2890
        %v2924 = vpop.xlane.xlu0 %2923
        %2925 = vmax.xlane.f32.xlu0 %v2891
        %v2926 = vpop.xlane.xlu0 %2925
        %2927 = vmax.xlane.f32.xlu0 %v2892
        %v2928 = vpop.xlane.xlu0 %2927
        %2929 = vmax.xlane.f32.xlu0 %v2893
        %v2930 = vpop.xlane.xlu0 %2929
        %2931 = vmax.xlane.f32.xlu0 %v2894
        %v2932 = vpop.xlane.xlu0 %2931
        %2933 = vmax.xlane.f32.xlu0 %v2895
        %v2934 = vpop.xlane.xlu0 %2933
        %2935 = vmax.xlane.f32.xlu0 %v2896
        %v2936 = vpop.xlane.xlu0 %2935
        %2937 = vmax.xlane.f32.xlu0 %v2897
        %v2938 = vpop.xlane.xlu0 %2937
        %2939 = vmax.xlane.f32.xlu0 %v2898
        %v2940 = vpop.xlane.xlu0 %2939
        %2941 = vmax.xlane.f32.xlu0 %v2899
        %v2942 = vpop.xlane.xlu0 %2941
        %2943 = vmax.xlane.f32.xlu0 %v2900
        %v2944 = vpop.xlane.xlu0 %2943
        %2945 = vmax.xlane.f32.xlu0 %v2901
        %v2946 = vpop.xlane.xlu0 %2945
        %2947 = vmax.xlane.f32.xlu0 %v2902
        %v2948 = vpop.xlane.xlu0 %2947
        %2949 = vmax.xlane.f32.xlu0 %v2903
        %v2950 = vpop.xlane.xlu0 %2949
        %2951 = vmax.xlane.f32.xlu0 %v2904
        %v2952 = vpop.xlane.xlu0 %2951
        %2953 = vmax.xlane.f32.xlu0 %v2905
        %v2954 = vpop.xlane.xlu0 %2953
        %v2955 = vmax.f32 %v2907, %v2924
        %v2956 = vmax.f32 %v2908, %v2926
        %v2957 = vmax.f32 %v2909, %v2928
        %v2958 = vmax.f32 %v2910, %v2930
        %v2959 = vmax.f32 %v2911, %v2932
        %v2960 = vmax.f32 %v2912, %v2934
        %v2961 = vmax.f32 %v2913, %v2936
        %v2962 = vmax.f32 %v2914, %v2938
        %v2963 = vmax.f32 %v2915, %v2940
        %v2964 = vmax.f32 %v2916, %v2942
        %v2965 = vmax.f32 %v2917, %v2944
        %v2966 = vmax.f32 %v2918, %v2946
        %v2967 = vmax.f32 %v2919, %v2948
        %v2968 = vmax.f32 %v2920, %v2950
        %v2969 = vmax.f32 %v2921, %v2952
        %v2970 = vmax.f32 %v2922, %v2954
        %v2971 = vsub.f32 %v2907, %v2955
        %v2972 = vsub.f32 %v2908, %v2956
        %v2973 = vsub.f32 %v2909, %v2957
        %v2974 = vsub.f32 %v2910, %v2958
        %v2975 = vsub.f32 %v2911, %v2959
        %v2976 = vsub.f32 %v2912, %v2960
        %v2977 = vsub.f32 %v2913, %v2961
        %v2978 = vsub.f32 %v2914, %v2962
        %v2979 = vsub.f32 %v2915, %v2963
        %v2980 = vsub.f32 %v2916, %v2964
        %v2981 = vsub.f32 %v2917, %v2965
        %v2982 = vsub.f32 %v2918, %v2966
        %v2983 = vsub.f32 %v2919, %v2967
        %v2984 = vsub.f32 %v2920, %v2968
        %v2985 = vsub.f32 %v2921, %v2969
        %v2986 = vsub.f32 %v2922, %v2970
        %v2987 = vmul.f32 %v2971, 1.442695
        %v2988 = vpow.pop %v2987
        %v2989 = vmul.f32 %v2972, 1.442695
        %v2990 = vpow.pop %v2989
        %v2991 = vmul.f32 %v2973, 1.442695
        %v2992 = vpow.pop %v2991
        %v2993 = vmul.f32 %v2974, 1.442695
        %v2994 = vpow.pop %v2993
        %v2995 = vmul.f32 %v2975, 1.442695
        %v2996 = vpow.pop %v2995
        %v2997 = vmul.f32 %v2976, 1.442695
        %v2998 = vpow.pop %v2997
        %v2999 = vmul.f32 %v2977, 1.442695
        %v3000 = vpow.pop %v2999
        %v3001 = vmul.f32 %v2978, 1.442695
        %v3002 = vpow.pop %v3001
        %v3003 = vmul.f32 %v2979, 1.442695
        %v3004 = vpow.pop %v3003
        %v3005 = vmul.f32 %v2980, 1.442695
        %v3006 = vpow.pop %v3005
        %v3007 = vmul.f32 %v2981, 1.442695
        %v3008 = vpow.pop %v3007
        %v3009 = vmul.f32 %v2982, 1.442695
        %v3010 = vpow.pop %v3009
        %v3011 = vmul.f32 %v2983, 1.442695
        %v3012 = vpow.pop %v3011
        %v3013 = vmul.f32 %v2984, 1.442695
        %v3014 = vpow.pop %v3013
        %v3015 = vmul.f32 %v2985, 1.442695
        %v3016 = vpow.pop %v3015
        %v3017 = vmul.f32 %v2986, 1.442695
        %v3018 = vpow.pop %v3017
        %3020 = vset.pattern.permute.xlu0 0
        %3021 = vperm.xlu0 %3020, %v2955
        %v3022 = vpop.permute.xlu0 %3021
        %3025 = vset.pattern.permute.xlu0 0
        %3026 = vperm.xlu0 %3025, %v2956
        %v3027 = vpop.permute.xlu0 %3026
        %3030 = vset.pattern.permute.xlu0 0
        %3031 = vperm.xlu0 %3030, %v2957
        %v3032 = vpop.permute.xlu0 %3031
        %3035 = vset.pattern.permute.xlu0 0
        %3036 = vperm.xlu0 %3035, %v2958
        %v3037 = vpop.permute.xlu0 %3036
        %3040 = vset.pattern.permute.xlu0 0
        %3041 = vperm.xlu0 %3040, %v2959
        %v3042 = vpop.permute.xlu0 %3041
        %3045 = vset.pattern.permute.xlu0 0
        %3046 = vperm.xlu0 %3045, %v2960
        %v3047 = vpop.permute.xlu0 %3046
        %3050 = vset.pattern.permute.xlu0 0
        %3051 = vperm.xlu0 %3050, %v2961
        %v3052 = vpop.permute.xlu0 %3051
        %3055 = vset.pattern.permute.xlu0 0
        %3056 = vperm.xlu0 %3055, %v2962
        %v3057 = vpop.permute.xlu0 %3056
        %3060 = vset.pattern.permute.xlu0 0
        %3061 = vperm.xlu0 %3060, %v2963
        %v3062 = vpop.permute.xlu0 %3061
        %3065 = vset.pattern.permute.xlu0 0
        %3066 = vperm.xlu0 %3065, %v2964
        %v3067 = vpop.permute.xlu0 %3066
        %3070 = vset.pattern.permute.xlu0 0
        %3071 = vperm.xlu0 %3070, %v2965
        %v3072 = vpop.permute.xlu0 %3071
        %3075 = vset.pattern.permute.xlu0 0
        %3076 = vperm.xlu0 %3075, %v2966
        %v3077 = vpop.permute.xlu0 %3076
        %3080 = vset.pattern.permute.xlu0 0
        %3081 = vperm.xlu0 %3080, %v2967
        %v3082 = vpop.permute.xlu0 %3081
        %3085 = vset.pattern.permute.xlu0 0
        %3086 = vperm.xlu0 %3085, %v2968
        %v3087 = vpop.permute.xlu0 %3086
        %3090 = vset.pattern.permute.xlu0 0
        %3091 = vperm.xlu0 %3090, %v2969
        %v3092 = vpop.permute.xlu0 %3091
        %3095 = vset.pattern.permute.xlu0 0
        %3096 = vperm.xlu0 %3095, %v2970
        %v3097 = vpop.permute.xlu0 %3096
        %v3099 = vsub.f32 %v2890, %v3022
        %v3100 = vsub.f32 %v2891, %v3027
        %v3101 = vsub.f32 %v2892, %v3032
        %v3102 = vsub.f32 %v2893, %v3037
        %v3103 = vsub.f32 %v2894, %v3042
        %v3104 = vsub.f32 %v2895, %v3047
        %v3105 = vsub.f32 %v2896, %v3052
        %v3106 = vsub.f32 %v2897, %v3057
        %v3107 = vsub.f32 %v2898, %v3062
        %v3108 = vsub.f32 %v2899, %v3067
        %v3109 = vsub.f32 %v2900, %v3072
        %v3110 = vsub.f32 %v2901, %v3077
        %v3111 = vsub.f32 %v2902, %v3082
        %v3112 = vsub.f32 %v2903, %v3087
        %v3113 = vsub.f32 %v2904, %v3092
        %v3114 = vsub.f32 %v2905, %v3097
        %v3115 = vmul.f32 %v3099, 1.442695
        %v3116 = vpow.pop %v3115
        %v3117 = vmul.f32 %v3100, 1.442695
        %v3118 = vpow.pop %v3117
        %v3119 = vmul.f32 %v3101, 1.442695
        %v3120 = vpow.pop %v3119
        %v3121 = vmul.f32 %v3102, 1.442695
        %v3122 = vpow.pop %v3121
        %v3123 = vmul.f32 %v3103, 1.442695
        %v3124 = vpow.pop %v3123
        %v3125 = vmul.f32 %v3104, 1.442695
        %v3126 = vpow.pop %v3125
        %v3127 = vmul.f32 %v3105, 1.442695
        %v3128 = vpow.pop %v3127
        %v3129 = vmul.f32 %v3106, 1.442695
        %v3130 = vpow.pop %v3129
        %v3131 = vmul.f32 %v3107, 1.442695
        %v3132 = vpow.pop %v3131
        %v3133 = vmul.f32 %v3108, 1.442695
        %v3134 = vpow.pop %v3133
        %v3135 = vmul.f32 %v3109, 1.442695
        %v3136 = vpow.pop %v3135
        %v3137 = vmul.f32 %v3110, 1.442695
        %v3138 = vpow.pop %v3137
        %v3139 = vmul.f32 %v3111, 1.442695
        %v3140 = vpow.pop %v3139
        %v3141 = vmul.f32 %v3112, 1.442695
        %v3142 = vpow.pop %v3141
        %v3143 = vmul.f32 %v3113, 1.442695
        %v3144 = vpow.pop %v3143
        %v3145 = vmul.f32 %v3114, 1.442695
        %v3146 = vpow.pop %v3145
        %v3147 = vsel %vm1192, %v3116, 0.0
        %v3148 = vsel %vm1193, %v3118, 0.0
        %v3149 = vsel %vm1194, %v3120, 0.0
        %v3150 = vsel %vm1195, %v3122, 0.0
        %v3151 = vsel %vm1196, %v3124, 0.0
        %v3152 = vsel %vm1197, %v3126, 0.0
        %v3153 = vsel %vm1198, %v3128, 0.0
        %v3154 = vsel %vm1199, %v3130, 0.0
        %v3155 = vsel %vm1200, %v3132, 0.0
        %v3156 = vsel %vm1201, %v3134, 0.0
        %v3157 = vsel %vm1202, %v3136, 0.0
        %v3158 = vsel %vm1203, %v3138, 0.0
        %v3159 = vsel %vm1204, %v3140, 0.0
        %v3160 = vsel %vm1205, %v3142, 0.0
        %v3161 = vsel %vm1206, %v3144, 0.0
        %v3162 = vsel %vm1207, %v3146, 0.0
        %s3163 = scalar_lea.vmem [#allocation3], 256
        %v3164 = vld [vmem:[%s3163] sm:$0xff]
        %v3165 = vld [vmem:[%s3163 + $0x8] sm:$0xff]
        %v3166 = vld [vmem:[%s3163 + $0x10] sm:$0xff]
        %v3167 = vld [vmem:[%s3163 + $0x18] sm:$0xff]
        %v3168 = vld [vmem:[%s3163 + $0x20] sm:$0xff]
        %v3169 = vld [vmem:[%s3163 + $0x28] sm:$0xff]
        %v3170 = vld [vmem:[%s3163 + $0x30] sm:$0xff]
        %v3171 = vld [vmem:[%s3163 + $0x38] sm:$0xff]
        %v3172 = vld [vmem:[%s3163 + $0x40] sm:$0xff]
        %v3173 = vld [vmem:[%s3163 + $0x48] sm:$0xff]
        %v3174 = vld [vmem:[%s3163 + $0x50] sm:$0xff]
        %v3175 = vld [vmem:[%s3163 + $0x58] sm:$0xff]
        %v3176 = vld [vmem:[%s3163 + $0x60] sm:$0xff]
        %v3177 = vld [vmem:[%s3163 + $0x68] sm:$0xff]
        %v3178 = vld [vmem:[%s3163 + $0x70] sm:$0xff]
        %v3179 = vld [vmem:[%s3163 + $0x78] sm:$0xff]
        %v3180 = vmul.f32 %v2988, %v3164
        %v3181 = vmul.f32 %v2990, %v3165
        %v3182 = vmul.f32 %v2992, %v3166
        %v3183 = vmul.f32 %v2994, %v3167
        %v3184 = vmul.f32 %v2996, %v3168
        %v3185 = vmul.f32 %v2998, %v3169
        %v3186 = vmul.f32 %v3000, %v3170
        %v3187 = vmul.f32 %v3002, %v3171
        %v3188 = vmul.f32 %v3004, %v3172
        %v3189 = vmul.f32 %v3006, %v3173
        %v3190 = vmul.f32 %v3008, %v3174
        %v3191 = vmul.f32 %v3010, %v3175
        %v3192 = vmul.f32 %v3012, %v3176
        %v3193 = vmul.f32 %v3014, %v3177
        %v3194 = vmul.f32 %v3016, %v3178
        %v3195 = vmul.f32 %v3018, %v3179
        %3196 = vadd.xlane.f32.xlu0 %v3147
        %v3197 = vpop.xlane.xlu0 %3196
        %3198 = vadd.xlane.f32.xlu0 %v3148
        %v3199 = vpop.xlane.xlu0 %3198
        %3200 = vadd.xlane.f32.xlu0 %v3149
        %v3201 = vpop.xlane.xlu0 %3200
        %3202 = vadd.xlane.f32.xlu0 %v3150
        %v3203 = vpop.xlane.xlu0 %3202
        %3204 = vadd.xlane.f32.xlu0 %v3151
        %v3205 = vpop.xlane.xlu0 %3204
        %3206 = vadd.xlane.f32.xlu0 %v3152
        %v3207 = vpop.xlane.xlu0 %3206
        %3208 = vadd.xlane.f32.xlu0 %v3153
        %v3209 = vpop.xlane.xlu0 %3208
        %3210 = vadd.xlane.f32.xlu0 %v3154
        %v3211 = vpop.xlane.xlu0 %3210
        %3212 = vadd.xlane.f32.xlu0 %v3155
        %v3213 = vpop.xlane.xlu0 %3212
        %3214 = vadd.xlane.f32.xlu0 %v3156
        %v3215 = vpop.xlane.xlu0 %3214
        %3216 = vadd.xlane.f32.xlu0 %v3157
        %v3217 = vpop.xlane.xlu0 %3216
        %3218 = vadd.xlane.f32.xlu0 %v3158
        %v3219 = vpop.xlane.xlu0 %3218
        %3220 = vadd.xlane.f32.xlu0 %v3159
        %v3221 = vpop.xlane.xlu0 %3220
        %3222 = vadd.xlane.f32.xlu0 %v3160
        %v3223 = vpop.xlane.xlu0 %3222
        %3224 = vadd.xlane.f32.xlu0 %v3161
        %v3225 = vpop.xlane.xlu0 %3224
        %3226 = vadd.xlane.f32.xlu0 %v3162
        %v3227 = vpop.xlane.xlu0 %3226
        %v3228 = vadd.f32 %v3180, %v3197
        %v3229 = vadd.f32 %v3181, %v3199
        %v3230 = vadd.f32 %v3182, %v3201
        %v3231 = vadd.f32 %v3183, %v3203
        %v3232 = vadd.f32 %v3184, %v3205
        %v3233 = vadd.f32 %v3185, %v3207
        %v3234 = vadd.f32 %v3186, %v3209
        %v3235 = vadd.f32 %v3187, %v3211
        %v3236 = vadd.f32 %v3188, %v3213
        %v3237 = vadd.f32 %v3189, %v3215
        %v3238 = vadd.f32 %v3190, %v3217
        %v3239 = vadd.f32 %v3191, %v3219
        %v3240 = vadd.f32 %v3192, %v3221
        %v3241 = vadd.f32 %v3193, %v3223
        %v3242 = vadd.f32 %v3194, %v3225
        %v3243 = vadd.f32 %v3195, %v3227
        %3244 = vst.msk [vmem:[%s3163] sm:$0xff] %vm1738, %v3228
        %3245 = vst.msk [vmem:[%s3163 + $0x8] sm:$0xff] %vm1738, %v3229
        %3246 = vst.msk [vmem:[%s3163 + $0x10] sm:$0xff] %vm1738, %v3230
        %3247 = vst.msk [vmem:[%s3163 + $0x18] sm:$0xff] %vm1738, %v3231
        %3248 = vst.msk [vmem:[%s3163 + $0x20] sm:$0xff] %vm1738, %v3232
        %3249 = vst.msk [vmem:[%s3163 + $0x28] sm:$0xff] %vm1738, %v3233
        %3250 = vst.msk [vmem:[%s3163 + $0x30] sm:$0xff] %vm1738, %v3234
        %3251 = vst.msk [vmem:[%s3163 + $0x38] sm:$0xff] %vm1738, %v3235
        %3252 = vst.msk [vmem:[%s3163 + $0x40] sm:$0xff] %vm1738, %v3236
        %3253 = vst.msk [vmem:[%s3163 + $0x48] sm:$0xff] %vm1738, %v3237
        %3254 = vst.msk [vmem:[%s3163 + $0x50] sm:$0xff] %vm1738, %v3238
        %3255 = vst.msk [vmem:[%s3163 + $0x58] sm:$0xff] %vm1738, %v3239
        %3256 = vst.msk [vmem:[%s3163 + $0x60] sm:$0xff] %vm1738, %v3240
        %3257 = vst.msk [vmem:[%s3163 + $0x68] sm:$0xff] %vm1738, %v3241
        %3258 = vst.msk [vmem:[%s3163 + $0x70] sm:$0xff] %vm1738, %v3242
        %3259 = vst.msk [vmem:[%s3163 + $0x78] sm:$0xff] %vm1738, %v3243
        %v3260 = vpack.c.bf16 %v3148, %v3147
        %v3261 = vpack.c.bf16 %v3150, %v3149
        %v3262 = vpack.c.bf16 %v3152, %v3151
        %v3263 = vpack.c.bf16 %v3154, %v3153
        %v3264 = vpack.c.bf16 %v3156, %v3155
        %v3265 = vpack.c.bf16 %v3158, %v3157
        %v3266 = vpack.c.bf16 %v3160, %v3159
        %v3267 = vpack.c.bf16 %v3162, %v3161
        %3268 = vrot.lane.b32.xlu0 %v1795, 112
        %v3269 = vpop.permute.xlu0 %3268
        %3270 = vrot.lane.b32.xlu0 %v1796, 112
        %v3271 = vpop.permute.xlu0 %3270
        %3272 = vrot.lane.b32.xlu0 %v1797, 112
        %v3273 = vpop.permute.xlu0 %3272
        %3274 = vrot.lane.b32.xlu0 %v1798, 112
        %v3275 = vpop.permute.xlu0 %3274
        %3276 = vrot.lane.b32.xlu0 %v1799, 112
        %v3277 = vpop.permute.xlu0 %3276
        %3278 = vrot.lane.b32.xlu0 %v1800, 112
        %v3279 = vpop.permute.xlu0 %3278
        %3280 = vrot.lane.b32.xlu0 %v1801, 112
        %v3281 = vpop.permute.xlu0 %3280
        %3282 = vrot.lane.b32.xlu0 %v1802, 112
        %v3283 = vpop.permute.xlu0 %3282
        %3292 = vmatpush.bf16.msra.mxu0 %v3283
        %3293 = vmatpush.bf16.msra.mxu0 %v3281
        %3294 = vmatpush.bf16.msra.mxu0 %v3279
        %3295 = vmatpush.bf16.msra.mxu0 %v3277
        %3296 = vmatpush.bf16.msra.mxu0 %v3275
        %3297 = vmatpush.bf16.msra.mxu0 %v3273
        %3298 = vmatpush.bf16.msra.mxu0 %v3271
        %3299 = vmatpush.bf16.msra.mxu0 %v3269
        %3300 = vmatmul.bf16.gmra.mxu0 %v3260
        %v3301 = vpop.f32.mrf.mxu0
        %v3302 = vadd.f32 0.0, %v3301
        %v3303 = vpop.f32.mrf.mxu0
        %v3304 = vadd.f32 0.0, %v3303
        %3305 = vmatmul.bf16.gmra.mxu0 %v3261
        %v3306 = vpop.f32.mrf.mxu0
        %v3307 = vadd.f32 0.0, %v3306
        %v3308 = vpop.f32.mrf.mxu0
        %v3309 = vadd.f32 0.0, %v3308
        %3310 = vmatmul.bf16.gmra.mxu0 %v3262
        %v3311 = vpop.f32.mrf.mxu0
        %v3312 = vadd.f32 0.0, %v3311
        %v3313 = vpop.f32.mrf.mxu0
        %v3314 = vadd.f32 0.0, %v3313
        %3315 = vmatmul.bf16.gmra.mxu0 %v3263
        %v3316 = vpop.f32.mrf.mxu0
        %v3317 = vadd.f32 0.0, %v3316
        %v3318 = vpop.f32.mrf.mxu0
        %v3319 = vadd.f32 0.0, %v3318
        %3320 = vmatmul.bf16.gmra.mxu0 %v3264
        %v3321 = vpop.f32.mrf.mxu0
        %v3322 = vadd.f32 0.0, %v3321
        %v3323 = vpop.f32.mrf.mxu0
        %v3324 = vadd.f32 0.0, %v3323
        %3325 = vmatmul.bf16.gmra.mxu0 %v3265
        %v3326 = vpop.f32.mrf.mxu0
        %v3327 = vadd.f32 0.0, %v3326
        %v3328 = vpop.f32.mrf.mxu0
        %v3329 = vadd.f32 0.0, %v3328
        %3330 = vmatmul.bf16.gmra.mxu0 %v3266
        %v3331 = vpop.f32.mrf.mxu0
        %v3332 = vadd.f32 0.0, %v3331
        %v3333 = vpop.f32.mrf.mxu0
        %v3334 = vadd.f32 0.0, %v3333
        %3335 = vmatmul.bf16.gmra.mxu0 %v3267
        %v3336 = vpop.f32.mrf.mxu0
        %v3337 = vadd.f32 0.0, %v3336
        %v3338 = vpop.f32.mrf.mxu0
        %v3339 = vadd.f32 0.0, %v3338
        %3340 = vdwg.mxu0
        %s3341 = scalar_lea.vmem [#allocation4], 256
        %v3342 = vld [vmem:[%s3341] sm:$0xff]
        %v3343 = vld [vmem:[%s3341 + $0x8] sm:$0xff]
        %v3344 = vld [vmem:[%s3341 + $0x10] sm:$0xff]
        %v3345 = vld [vmem:[%s3341 + $0x18] sm:$0xff]
        %v3346 = vld [vmem:[%s3341 + $0x20] sm:$0xff]
        %v3347 = vld [vmem:[%s3341 + $0x28] sm:$0xff]
        %v3348 = vld [vmem:[%s3341 + $0x30] sm:$0xff]
        %v3349 = vld [vmem:[%s3341 + $0x38] sm:$0xff]
        %v3350 = vld [vmem:[%s3341 + $0x40] sm:$0xff]
        %v3351 = vld [vmem:[%s3341 + $0x48] sm:$0xff]
        %v3352 = vld [vmem:[%s3341 + $0x50] sm:$0xff]
        %v3353 = vld [vmem:[%s3341 + $0x58] sm:$0xff]
        %v3354 = vld [vmem:[%s3341 + $0x60] sm:$0xff]
        %v3355 = vld [vmem:[%s3341 + $0x68] sm:$0xff]
        %v3356 = vld [vmem:[%s3341 + $0x70] sm:$0xff]
        %v3357 = vld [vmem:[%s3341 + $0x78] sm:$0xff]
        %3359 = vset.pattern.permute.xlu0 0
        %3360 = vperm.xlu0 %3359, %v2988
        %v3361 = vpop.permute.xlu0 %3360
        %3364 = vset.pattern.permute.xlu0 0
        %3365 = vperm.xlu0 %3364, %v2990
        %v3366 = vpop.permute.xlu0 %3365
        %3369 = vset.pattern.permute.xlu0 0
        %3370 = vperm.xlu0 %3369, %v2992
        %v3371 = vpop.permute.xlu0 %3370
        %3374 = vset.pattern.permute.xlu0 0
        %3375 = vperm.xlu0 %3374, %v2994
        %v3376 = vpop.permute.xlu0 %3375
        %3379 = vset.pattern.permute.xlu0 0
        %3380 = vperm.xlu0 %3379, %v2996
        %v3381 = vpop.permute.xlu0 %3380
        %3384 = vset.pattern.permute.xlu0 0
        %3385 = vperm.xlu0 %3384, %v2998
        %v3386 = vpop.permute.xlu0 %3385
        %3389 = vset.pattern.permute.xlu0 0
        %3390 = vperm.xlu0 %3389, %v3000
        %v3391 = vpop.permute.xlu0 %3390
        %3394 = vset.pattern.permute.xlu0 0
        %3395 = vperm.xlu0 %3394, %v3002
        %v3396 = vpop.permute.xlu0 %3395
        %3399 = vset.pattern.permute.xlu0 0
        %3400 = vperm.xlu0 %3399, %v3004
        %v3401 = vpop.permute.xlu0 %3400
        %3404 = vset.pattern.permute.xlu0 0
        %3405 = vperm.xlu0 %3404, %v3006
        %v3406 = vpop.permute.xlu0 %3405
        %3409 = vset.pattern.permute.xlu0 0
        %3410 = vperm.xlu0 %3409, %v3008
        %v3411 = vpop.permute.xlu0 %3410
        %3414 = vset.pattern.permute.xlu0 0
        %3415 = vperm.xlu0 %3414, %v3010
        %v3416 = vpop.permute.xlu0 %3415
        %3419 = vset.pattern.permute.xlu0 0
        %3420 = vperm.xlu0 %3419, %v3012
        %v3421 = vpop.permute.xlu0 %3420
        %3424 = vset.pattern.permute.xlu0 0
        %3425 = vperm.xlu0 %3424, %v3014
        %v3426 = vpop.permute.xlu0 %3425
        %3429 = vset.pattern.permute.xlu0 0
        %3430 = vperm.xlu0 %3429, %v3016
        %v3431 = vpop.permute.xlu0 %3430
        %3434 = vset.pattern.permute.xlu0 0
        %3435 = vperm.xlu0 %3434, %v3018
        %v3436 = vpop.permute.xlu0 %3435
        %v3438 = vmul.f32 %v3361, %v3342
        %v3439 = vmul.f32 %v3366, %v3343
        %v3440 = vmul.f32 %v3371, %v3344
        %v3441 = vmul.f32 %v3376, %v3345
        %v3442 = vmul.f32 %v3381, %v3346
        %v3443 = vmul.f32 %v3386, %v3347
        %v3444 = vmul.f32 %v3391, %v3348
        %v3445 = vmul.f32 %v3396, %v3349
        %v3446 = vmul.f32 %v3401, %v3350
        %v3447 = vmul.f32 %v3406, %v3351
        %v3448 = vmul.f32 %v3411, %v3352
        %v3449 = vmul.f32 %v3416, %v3353
        %v3450 = vmul.f32 %v3421, %v3354
        %v3451 = vmul.f32 %v3426, %v3355
        %v3452 = vmul.f32 %v3431, %v3356
        %v3453 = vmul.f32 %v3436, %v3357
        %v3454 = vadd.f32 %v3438, %v3302
        %v3455 = vadd.f32 %v3439, %v3304
        %v3456 = vadd.f32 %v3440, %v3307
        %v3457 = vadd.f32 %v3441, %v3309
        %v3458 = vadd.f32 %v3442, %v3312
        %v3459 = vadd.f32 %v3443, %v3314
        %v3460 = vadd.f32 %v3444, %v3317
        %v3461 = vadd.f32 %v3445, %v3319
        %v3462 = vadd.f32 %v3446, %v3322
        %v3463 = vadd.f32 %v3447, %v3324
        %v3464 = vadd.f32 %v3448, %v3327
        %v3465 = vadd.f32 %v3449, %v3329
        %v3466 = vadd.f32 %v3450, %v3332
        %v3467 = vadd.f32 %v3451, %v3334
        %v3468 = vadd.f32 %v3452, %v3337
        %v3469 = vadd.f32 %v3453, %v3339
        %3470 = vst.msk [vmem:[%s3341] sm:$0xff] %vm1288, %v3454
        %3471 = vst.msk [vmem:[%s3341 + $0x8] sm:$0xff] %vm1288, %v3455
        %3472 = vst.msk [vmem:[%s3341 + $0x10] sm:$0xff] %vm1288, %v3456
        %3473 = vst.msk [vmem:[%s3341 + $0x18] sm:$0xff] %vm1288, %v3457
        %3474 = vst.msk [vmem:[%s3341 + $0x20] sm:$0xff] %vm1288, %v3458
        %3475 = vst.msk [vmem:[%s3341 + $0x28] sm:$0xff] %vm1288, %v3459
        %3476 = vst.msk [vmem:[%s3341 + $0x30] sm:$0xff] %vm1288, %v3460
        %3477 = vst.msk [vmem:[%s3341 + $0x38] sm:$0xff] %vm1288, %v3461
        %3478 = vst.msk [vmem:[%s3341 + $0x40] sm:$0xff] %vm1288, %v3462
        %3479 = vst.msk [vmem:[%s3341 + $0x48] sm:$0xff] %vm1288, %v3463
        %3480 = vst.msk [vmem:[%s3341 + $0x50] sm:$0xff] %vm1288, %v3464
        %3481 = vst.msk [vmem:[%s3341 + $0x58] sm:$0xff] %vm1288, %v3465
        %3482 = vst.msk [vmem:[%s3341 + $0x60] sm:$0xff] %vm1288, %v3466
        %3483 = vst.msk [vmem:[%s3341 + $0x68] sm:$0xff] %vm1288, %v3467
        %3484 = vst.msk [vmem:[%s3341 + $0x70] sm:$0xff] %vm1288, %v3468
        %3485 = vst.msk [vmem:[%s3341 + $0x78] sm:$0xff] %vm1288, %v3469
        %3486 = vst.msk [vmem:[%s2906] sm:$0xff] %vm1738, %v2955
        %3487 = vst.msk [vmem:[%s2906 + $0x8] sm:$0xff] %vm1738, %v2956
        %3488 = vst.msk [vmem:[%s2906 + $0x10] sm:$0xff] %vm1738, %v2957
        %3489 = vst.msk [vmem:[%s2906 + $0x18] sm:$0xff] %vm1738, %v2958
        %3490 = vst.msk [vmem:[%s2906 + $0x20] sm:$0xff] %vm1738, %v2959
        %3491 = vst.msk [vmem:[%s2906 + $0x28] sm:$0xff] %vm1738, %v2960
        %3492 = vst.msk [vmem:[%s2906 + $0x30] sm:$0xff] %vm1738, %v2961
        %3493 = vst.msk [vmem:[%s2906 + $0x38] sm:$0xff] %vm1738, %v2962
        %3494 = vst.msk [vmem:[%s2906 + $0x40] sm:$0xff] %vm1738, %v2963
        %3495 = vst.msk [vmem:[%s2906 + $0x48] sm:$0xff] %vm1738, %v2964
        %3496 = vst.msk [vmem:[%s2906 + $0x50] sm:$0xff] %vm1738, %v2965
        %3497 = vst.msk [vmem:[%s2906 + $0x58] sm:$0xff] %vm1738, %v2966
        %3498 = vst.msk [vmem:[%s2906 + $0x60] sm:$0xff] %vm1738, %v2967
        %3499 = vst.msk [vmem:[%s2906 + $0x68] sm:$0xff] %vm1738, %v2968
        %3500 = vst.msk [vmem:[%s2906 + $0x70] sm:$0xff] %vm1738, %v2969
        %3501 = vst.msk [vmem:[%s2906 + $0x78] sm:$0xff] %vm1738, %v2970
        %3502 = vrot.lane.b32.xlu0 %v1240, 104
        %v3503 = vpop.permute.xlu0 %3502
        %3504 = vrot.lane.b32.xlu0 %v1241, 104
        %v3505 = vpop.permute.xlu0 %3504
        %3506 = vrot.lane.b32.xlu0 %v1242, 104
        %v3507 = vpop.permute.xlu0 %3506
        %3508 = vrot.lane.b32.xlu0 %v1243, 104
        %v3509 = vpop.permute.xlu0 %3508
        %3510 = vrot.lane.b32.xlu0 %v1244, 104
        %v3511 = vpop.permute.xlu0 %3510
        %3512 = vrot.lane.b32.xlu0 %v1245, 104
        %v3513 = vpop.permute.xlu0 %3512
        %3514 = vrot.lane.b32.xlu0 %v1246, 104
        %v3515 = vpop.permute.xlu0 %3514
        %3516 = vrot.lane.b32.xlu0 %v1247, 104
        %v3517 = vpop.permute.xlu0 %3516
        %3518 = vrot.lane.b32.xlu0 %v1280, 104
        %v3519 = vpop.permute.xlu0 %3518
        %3520 = vrot.lane.b32.xlu0 %v1281, 104
        %v3521 = vpop.permute.xlu0 %3520
        %3522 = vrot.lane.b32.xlu0 %v1282, 104
        %v3523 = vpop.permute.xlu0 %3522
        %3524 = vrot.lane.b32.xlu0 %v1283, 104
        %v3525 = vpop.permute.xlu0 %3524
        %3526 = vrot.lane.b32.xlu0 %v1284, 104
        %v3527 = vpop.permute.xlu0 %3526
        %3528 = vrot.lane.b32.xlu0 %v1285, 104
        %v3529 = vpop.permute.xlu0 %3528
        %3530 = vrot.lane.b32.xlu0 %v1286, 104
        %v3531 = vpop.permute.xlu0 %3530
        %3532 = vrot.lane.b32.xlu0 %v1287, 104
        %v3533 = vpop.permute.xlu0 %3532
        %v3535 = vsel %vm1288, %v3503, 0
        %v3538 = vsel %vm1288, %v3505, 0
        %v3541 = vsel %vm1288, %v3507, 0
        %v3544 = vsel %vm1288, %v3509, 0
        %v3547 = vsel %vm1288, %v3511, 0
        %v3550 = vsel %vm1288, %v3513, 0
        %v3553 = vsel %vm1288, %v3515, 0
        %v3556 = vsel %vm1288, %v3517, 0
        %v3559 = vsel %vm1288, %v3519, 0
        %v3562 = vsel %vm1288, %v3521, 0
        %v3565 = vsel %vm1288, %v3523, 0
        %v3568 = vsel %vm1288, %v3525, 0
        %v3571 = vsel %vm1288, %v3527, 0
        %v3574 = vsel %vm1288, %v3529, 0
        %v3577 = vsel %vm1288, %v3531, 0
        %v3580 = vsel %vm1288, %v3533, 0
        %3582 = vmatpush.bf16.xpose.msra.mxu0 %v3580
        %3583 = vmatpush.bf16.xpose.msra.mxu0 %v3577
        %3584 = vmatpush.bf16.xpose.msra.mxu0 %v3574
        %3585 = vmatpush.bf16.xpose.msra.mxu0 %v3571
        %3586 = vmatpush.bf16.xpose.msra.mxu0 %v3568
        %3587 = vmatpush.bf16.xpose.msra.mxu0 %v3565
        %3588 = vmatpush.bf16.xpose.msra.mxu0 %v3562
        %3589 = vmatpush.bf16.xpose.msra.mxu0 %v3559
        %3590 = vmatmul.bf16.gmra.mxu0 %v3535
        %v3591 = vpop.f32.mrf.mxu0
        %v3592 = vadd.f32 0.0, %v3591
        %v3593 = vpop.f32.mrf.mxu0
        %v3594 = vadd.f32 0.0, %v3593
        %3595 = vmatmul.bf16.gmra.mxu0 %v3538
        %v3596 = vpop.f32.mrf.mxu0
        %v3597 = vadd.f32 0.0, %v3596
        %v3598 = vpop.f32.mrf.mxu0
        %v3599 = vadd.f32 0.0, %v3598
        %3600 = vmatmul.bf16.gmra.mxu0 %v3541
        %v3601 = vpop.f32.mrf.mxu0
        %v3602 = vadd.f32 0.0, %v3601
        %v3603 = vpop.f32.mrf.mxu0
        %v3604 = vadd.f32 0.0, %v3603
        %3605 = vmatmul.bf16.gmra.mxu0 %v3544
        %v3606 = vpop.f32.mrf.mxu0
        %v3607 = vadd.f32 0.0, %v3606
        %v3608 = vpop.f32.mrf.mxu0
        %v3609 = vadd.f32 0.0, %v3608
        %3610 = vmatmul.bf16.gmra.mxu0 %v3547
        %v3611 = vpop.f32.mrf.mxu0
        %v3612 = vadd.f32 0.0, %v3611
        %v3613 = vpop.f32.mrf.mxu0
        %v3614 = vadd.f32 0.0, %v3613
        %3615 = vmatmul.bf16.gmra.mxu0 %v3550
        %v3616 = vpop.f32.mrf.mxu0
        %v3617 = vadd.f32 0.0, %v3616
        %v3618 = vpop.f32.mrf.mxu0
        %v3619 = vadd.f32 0.0, %v3618
        %3620 = vmatmul.bf16.gmra.mxu0 %v3553
        %v3621 = vpop.f32.mrf.mxu0
        %v3622 = vadd.f32 0.0, %v3621
        %v3623 = vpop.f32.mrf.mxu0
        %v3624 = vadd.f32 0.0, %v3623
        %3625 = vmatmul.bf16.gmra.mxu0 %v3556
        %v3626 = vpop.f32.mrf.mxu0
        %v3627 = vadd.f32 0.0, %v3626
        %v3628 = vpop.f32.mrf.mxu0
        %v3629 = vadd.f32 0.0, %v3628
        %3630 = vdwg.mxu0
        %v3631 = vsel %vm1192, %v3592, -1e+30
        %v3632 = vsel %vm1193, %v3594, -1e+30
        %v3633 = vsel %vm1194, %v3597, -1e+30
        %v3634 = vsel %vm1195, %v3599, -1e+30
        %v3635 = vsel %vm1196, %v3602, -1e+30
        %v3636 = vsel %vm1197, %v3604, -1e+30
        %v3637 = vsel %vm1198, %v3607, -1e+30
        %v3638 = vsel %vm1199, %v3609, -1e+30
        %v3639 = vsel %vm1200, %v3612, -1e+30
        %v3640 = vsel %vm1201, %v3614, -1e+30
        %v3641 = vsel %vm1202, %v3617, -1e+30
        %v3642 = vsel %vm1203, %v3619, -1e+30
        %v3643 = vsel %vm1204, %v3622, -1e+30
        %v3644 = vsel %vm1205, %v3624, -1e+30
        %v3645 = vsel %vm1206, %v3627, -1e+30
        %v3646 = vsel %vm1207, %v3629, -1e+30
        %s3647 = scalar_lea.vmem [#allocation2], 384
        %v3648 = vld [vmem:[%s3647] sm:$0xff]
        %v3649 = vld [vmem:[%s3647 + $0x8] sm:$0xff]
        %v3650 = vld [vmem:[%s3647 + $0x10] sm:$0xff]
        %v3651 = vld [vmem:[%s3647 + $0x18] sm:$0xff]
        %v3652 = vld [vmem:[%s3647 + $0x20] sm:$0xff]
        %v3653 = vld [vmem:[%s3647 + $0x28] sm:$0xff]
        %v3654 = vld [vmem:[%s3647 + $0x30] sm:$0xff]
        %v3655 = vld [vmem:[%s3647 + $0x38] sm:$0xff]
        %v3656 = vld [vmem:[%s3647 + $0x40] sm:$0xff]
        %v3657 = vld [vmem:[%s3647 + $0x48] sm:$0xff]
        %v3658 = vld [vmem:[%s3647 + $0x50] sm:$0xff]
        %v3659 = vld [vmem:[%s3647 + $0x58] sm:$0xff]
        %v3660 = vld [vmem:[%s3647 + $0x60] sm:$0xff]
        %v3661 = vld [vmem:[%s3647 + $0x68] sm:$0xff]
        %v3662 = vld [vmem:[%s3647 + $0x70] sm:$0xff]
        %v3663 = vld [vmem:[%s3647 + $0x78] sm:$0xff]
        %3664 = vmax.xlane.f32.xlu0 %v3631
        %v3665 = vpop.xlane.xlu0 %3664
        %3666 = vmax.xlane.f32.xlu0 %v3632
        %v3667 = vpop.xlane.xlu0 %3666
        %3668 = vmax.xlane.f32.xlu0 %v3633
        %v3669 = vpop.xlane.xlu0 %3668
        %3670 = vmax.xlane.f32.xlu0 %v3634
        %v3671 = vpop.xlane.xlu0 %3670
        %3672 = vmax.xlane.f32.xlu0 %v3635
        %v3673 = vpop.xlane.xlu0 %3672
        %3674 = vmax.xlane.f32.xlu0 %v3636
        %v3675 = vpop.xlane.xlu0 %3674
        %3676 = vmax.xlane.f32.xlu0 %v3637
        %v3677 = vpop.xlane.xlu0 %3676
        %3678 = vmax.xlane.f32.xlu0 %v3638
        %v3679 = vpop.xlane.xlu0 %3678
        %3680 = vmax.xlane.f32.xlu0 %v3639
        %v3681 = vpop.xlane.xlu0 %3680
        %3682 = vmax.xlane.f32.xlu0 %v3640
        %v3683 = vpop.xlane.xlu0 %3682
        %3684 = vmax.xlane.f32.xlu0 %v3641
        %v3685 = vpop.xlane.xlu0 %3684
        %3686 = vmax.xlane.f32.xlu0 %v3642
        %v3687 = vpop.xlane.xlu0 %3686
        %3688 = vmax.xlane.f32.xlu0 %v3643
        %v3689 = vpop.xlane.xlu0 %3688
        %3690 = vmax.xlane.f32.xlu0 %v3644
        %v3691 = vpop.xlane.xlu0 %3690
        %3692 = vmax.xlane.f32.xlu0 %v3645
        %v3693 = vpop.xlane.xlu0 %3692
        %3694 = vmax.xlane.f32.xlu0 %v3646
        %v3695 = vpop.xlane.xlu0 %3694
        %v3696 = vmax.f32 %v3648, %v3665
        %v3697 = vmax.f32 %v3649, %v3667
        %v3698 = vmax.f32 %v3650, %v3669
        %v3699 = vmax.f32 %v3651, %v3671
        %v3700 = vmax.f32 %v3652, %v3673
        %v3701 = vmax.f32 %v3653, %v3675
        %v3702 = vmax.f32 %v3654, %v3677
        %v3703 = vmax.f32 %v3655, %v3679
        %v3704 = vmax.f32 %v3656, %v3681
        %v3705 = vmax.f32 %v3657, %v3683
        %v3706 = vmax.f32 %v3658, %v3685
        %v3707 = vmax.f32 %v3659, %v3687
        %v3708 = vmax.f32 %v3660, %v3689
        %v3709 = vmax.f32 %v3661, %v3691
        %v3710 = vmax.f32 %v3662, %v3693
        %v3711 = vmax.f32 %v3663, %v3695
        %v3712 = vsub.f32 %v3648, %v3696
        %v3713 = vsub.f32 %v3649, %v3697
        %v3714 = vsub.f32 %v3650, %v3698
        %v3715 = vsub.f32 %v3651, %v3699
        %v3716 = vsub.f32 %v3652, %v3700
        %v3717 = vsub.f32 %v3653, %v3701
        %v3718 = vsub.f32 %v3654, %v3702
        %v3719 = vsub.f32 %v3655, %v3703
        %v3720 = vsub.f32 %v3656, %v3704
        %v3721 = vsub.f32 %v3657, %v3705
        %v3722 = vsub.f32 %v3658, %v3706
        %v3723 = vsub.f32 %v3659, %v3707
        %v3724 = vsub.f32 %v3660, %v3708
        %v3725 = vsub.f32 %v3661, %v3709
        %v3726 = vsub.f32 %v3662, %v3710
        %v3727 = vsub.f32 %v3663, %v3711
        %v3728 = vmul.f32 %v3712, 1.442695
        %v3729 = vpow.pop %v3728
        %v3730 = vmul.f32 %v3713, 1.442695
        %v3731 = vpow.pop %v3730
        %v3732 = vmul.f32 %v3714, 1.442695
        %v3733 = vpow.pop %v3732
        %v3734 = vmul.f32 %v3715, 1.442695
        %v3735 = vpow.pop %v3734
        %v3736 = vmul.f32 %v3716, 1.442695
        %v3737 = vpow.pop %v3736
        %v3738 = vmul.f32 %v3717, 1.442695
        %v3739 = vpow.pop %v3738
        %v3740 = vmul.f32 %v3718, 1.442695
        %v3741 = vpow.pop %v3740
        %v3742 = vmul.f32 %v3719, 1.442695
        %v3743 = vpow.pop %v3742
        %v3744 = vmul.f32 %v3720, 1.442695
        %v3745 = vpow.pop %v3744
        %v3746 = vmul.f32 %v3721, 1.442695
        %v3747 = vpow.pop %v3746
        %v3748 = vmul.f32 %v3722, 1.442695
        %v3749 = vpow.pop %v3748
        %v3750 = vmul.f32 %v3723, 1.442695
        %v3751 = vpow.pop %v3750
        %v3752 = vmul.f32 %v3724, 1.442695
        %v3753 = vpow.pop %v3752
        %v3754 = vmul.f32 %v3725, 1.442695
        %v3755 = vpow.pop %v3754
        %v3756 = vmul.f32 %v3726, 1.442695
        %v3757 = vpow.pop %v3756
        %v3758 = vmul.f32 %v3727, 1.442695
        %v3759 = vpow.pop %v3758
        %3761 = vset.pattern.permute.xlu0 0
        %3762 = vperm.xlu0 %3761, %v3696
        %v3763 = vpop.permute.xlu0 %3762
        %3766 = vset.pattern.permute.xlu0 0
        %3767 = vperm.xlu0 %3766, %v3697
        %v3768 = vpop.permute.xlu0 %3767
        %3771 = vset.pattern.permute.xlu0 0
        %3772 = vperm.xlu0 %3771, %v3698
        %v3773 = vpop.permute.xlu0 %3772
        %3776 = vset.pattern.permute.xlu0 0
        %3777 = vperm.xlu0 %3776, %v3699
        %v3778 = vpop.permute.xlu0 %3777
        %3781 = vset.pattern.permute.xlu0 0
        %3782 = vperm.xlu0 %3781, %v3700
        %v3783 = vpop.permute.xlu0 %3782
        %3786 = vset.pattern.permute.xlu0 0
        %3787 = vperm.xlu0 %3786, %v3701
        %v3788 = vpop.permute.xlu0 %3787
        %3791 = vset.pattern.permute.xlu0 0
        %3792 = vperm.xlu0 %3791, %v3702
        %v3793 = vpop.permute.xlu0 %3792
        %3796 = vset.pattern.permute.xlu0 0
        %3797 = vperm.xlu0 %3796, %v3703
        %v3798 = vpop.permute.xlu0 %3797
        %3801 = vset.pattern.permute.xlu0 0
        %3802 = vperm.xlu0 %3801, %v3704
        %v3803 = vpop.permute.xlu0 %3802
        %3806 = vset.pattern.permute.xlu0 0
        %3807 = vperm.xlu0 %3806, %v3705
        %v3808 = vpop.permute.xlu0 %3807
        %3811 = vset.pattern.permute.xlu0 0
        %3812 = vperm.xlu0 %3811, %v3706
        %v3813 = vpop.permute.xlu0 %3812
        %3816 = vset.pattern.permute.xlu0 0
        %3817 = vperm.xlu0 %3816, %v3707
        %v3818 = vpop.permute.xlu0 %3817
        %3821 = vset.pattern.permute.xlu0 0
        %3822 = vperm.xlu0 %3821, %v3708
        %v3823 = vpop.permute.xlu0 %3822
        %3826 = vset.pattern.permute.xlu0 0
        %3827 = vperm.xlu0 %3826, %v3709
        %v3828 = vpop.permute.xlu0 %3827
        %3831 = vset.pattern.permute.xlu0 0
        %3832 = vperm.xlu0 %3831, %v3710
        %v3833 = vpop.permute.xlu0 %3832
        %3836 = vset.pattern.permute.xlu0 0
        %3837 = vperm.xlu0 %3836, %v3711
        %v3838 = vpop.permute.xlu0 %3837
        %v3840 = vsub.f32 %v3631, %v3763
        %v3841 = vsub.f32 %v3632, %v3768
        %v3842 = vsub.f32 %v3633, %v3773
        %v3843 = vsub.f32 %v3634, %v3778
        %v3844 = vsub.f32 %v3635, %v3783
        %v3845 = vsub.f32 %v3636, %v3788
        %v3846 = vsub.f32 %v3637, %v3793
        %v3847 = vsub.f32 %v3638, %v3798
        %v3848 = vsub.f32 %v3639, %v3803
        %v3849 = vsub.f32 %v3640, %v3808
        %v3850 = vsub.f32 %v3641, %v3813
        %v3851 = vsub.f32 %v3642, %v3818
        %v3852 = vsub.f32 %v3643, %v3823
        %v3853 = vsub.f32 %v3644, %v3828
        %v3854 = vsub.f32 %v3645, %v3833
        %v3855 = vsub.f32 %v3646, %v3838
        %v3856 = vmul.f32 %v3840, 1.442695
        %v3857 = vpow.pop %v3856
        %v3858 = vmul.f32 %v3841, 1.442695
        %v3859 = vpow.pop %v3858
        %v3860 = vmul.f32 %v3842, 1.442695
        %v3861 = vpow.pop %v3860
        %v3862 = vmul.f32 %v3843, 1.442695
        %v3863 = vpow.pop %v3862
        %v3864 = vmul.f32 %v3844, 1.442695
        %v3865 = vpow.pop %v3864
        %v3866 = vmul.f32 %v3845, 1.442695
        %v3867 = vpow.pop %v3866
        %v3868 = vmul.f32 %v3846, 1.442695
        %v3869 = vpow.pop %v3868
        %v3870 = vmul.f32 %v3847, 1.442695
        %v3871 = vpow.pop %v3870
        %v3872 = vmul.f32 %v3848, 1.442695
        %v3873 = vpow.pop %v3872
        %v3874 = vmul.f32 %v3849, 1.442695
        %v3875 = vpow.pop %v3874
        %v3876 = vmul.f32 %v3850, 1.442695
        %v3877 = vpow.pop %v3876
        %v3878 = vmul.f32 %v3851, 1.442695
        %v3879 = vpow.pop %v3878
        %v3880 = vmul.f32 %v3852, 1.442695
        %v3881 = vpow.pop %v3880
        %v3882 = vmul.f32 %v3853, 1.442695
        %v3883 = vpow.pop %v3882
        %v3884 = vmul.f32 %v3854, 1.442695
        %v3885 = vpow.pop %v3884
        %v3886 = vmul.f32 %v3855, 1.442695
        %v3887 = vpow.pop %v3886
        %v3888 = vsel %vm1192, %v3857, 0.0
        %v3889 = vsel %vm1193, %v3859, 0.0
        %v3890 = vsel %vm1194, %v3861, 0.0
        %v3891 = vsel %vm1195, %v3863, 0.0
        %v3892 = vsel %vm1196, %v3865, 0.0
        %v3893 = vsel %vm1197, %v3867, 0.0
        %v3894 = vsel %vm1198, %v3869, 0.0
        %v3895 = vsel %vm1199, %v3871, 0.0
        %v3896 = vsel %vm1200, %v3873, 0.0
        %v3897 = vsel %vm1201, %v3875, 0.0
        %v3898 = vsel %vm1202, %v3877, 0.0
        %v3899 = vsel %vm1203, %v3879, 0.0
        %v3900 = vsel %vm1204, %v3881, 0.0
        %v3901 = vsel %vm1205, %v3883, 0.0
        %v3902 = vsel %vm1206, %v3885, 0.0
        %v3903 = vsel %vm1207, %v3887, 0.0
        %s3904 = scalar_lea.vmem [#allocation3], 384
        %v3905 = vld [vmem:[%s3904] sm:$0xff]
        %v3906 = vld [vmem:[%s3904 + $0x8] sm:$0xff]
        %v3907 = vld [vmem:[%s3904 + $0x10] sm:$0xff]
        %v3908 = vld [vmem:[%s3904 + $0x18] sm:$0xff]
        %v3909 = vld [vmem:[%s3904 + $0x20] sm:$0xff]
        %v3910 = vld [vmem:[%s3904 + $0x28] sm:$0xff]
        %v3911 = vld [vmem:[%s3904 + $0x30] sm:$0xff]
        %v3912 = vld [vmem:[%s3904 + $0x38] sm:$0xff]
        %v3913 = vld [vmem:[%s3904 + $0x40] sm:$0xff]
        %v3914 = vld [vmem:[%s3904 + $0x48] sm:$0xff]
        %v3915 = vld [vmem:[%s3904 + $0x50] sm:$0xff]
        %v3916 = vld [vmem:[%s3904 + $0x58] sm:$0xff]
        %v3917 = vld [vmem:[%s3904 + $0x60] sm:$0xff]
        %v3918 = vld [vmem:[%s3904 + $0x68] sm:$0xff]
        %v3919 = vld [vmem:[%s3904 + $0x70] sm:$0xff]
        %v3920 = vld [vmem:[%s3904 + $0x78] sm:$0xff]
        %v3921 = vmul.f32 %v3729, %v3905
        %v3922 = vmul.f32 %v3731, %v3906
        %v3923 = vmul.f32 %v3733, %v3907
        %v3924 = vmul.f32 %v3735, %v3908
        %v3925 = vmul.f32 %v3737, %v3909
        %v3926 = vmul.f32 %v3739, %v3910
        %v3927 = vmul.f32 %v3741, %v3911
        %v3928 = vmul.f32 %v3743, %v3912
        %v3929 = vmul.f32 %v3745, %v3913
        %v3930 = vmul.f32 %v3747, %v3914
        %v3931 = vmul.f32 %v3749, %v3915
        %v3932 = vmul.f32 %v3751, %v3916
        %v3933 = vmul.f32 %v3753, %v3917
        %v3934 = vmul.f32 %v3755, %v3918
        %v3935 = vmul.f32 %v3757, %v3919
        %v3936 = vmul.f32 %v3759, %v3920
        %3937 = vadd.xlane.f32.xlu0 %v3888
        %v3938 = vpop.xlane.xlu0 %3937
        %3939 = vadd.xlane.f32.xlu0 %v3889
        %v3940 = vpop.xlane.xlu0 %3939
        %3941 = vadd.xlane.f32.xlu0 %v3890
        %v3942 = vpop.xlane.xlu0 %3941
        %3943 = vadd.xlane.f32.xlu0 %v3891
        %v3944 = vpop.xlane.xlu0 %3943
        %3945 = vadd.xlane.f32.xlu0 %v3892
        %v3946 = vpop.xlane.xlu0 %3945
        %3947 = vadd.xlane.f32.xlu0 %v3893
        %v3948 = vpop.xlane.xlu0 %3947
        %3949 = vadd.xlane.f32.xlu0 %v3894
        %v3950 = vpop.xlane.xlu0 %3949
        %3951 = vadd.xlane.f32.xlu0 %v3895
        %v3952 = vpop.xlane.xlu0 %3951
        %3953 = vadd.xlane.f32.xlu0 %v3896
        %v3954 = vpop.xlane.xlu0 %3953
        %3955 = vadd.xlane.f32.xlu0 %v3897
        %v3956 = vpop.xlane.xlu0 %3955
        %3957 = vadd.xlane.f32.xlu0 %v3898
        %v3958 = vpop.xlane.xlu0 %3957
        %3959 = vadd.xlane.f32.xlu0 %v3899
        %v3960 = vpop.xlane.xlu0 %3959
        %3961 = vadd.xlane.f32.xlu0 %v3900
        %v3962 = vpop.xlane.xlu0 %3961
        %3963 = vadd.xlane.f32.xlu0 %v3901
        %v3964 = vpop.xlane.xlu0 %3963
        %3965 = vadd.xlane.f32.xlu0 %v3902
        %v3966 = vpop.xlane.xlu0 %3965
        %3967 = vadd.xlane.f32.xlu0 %v3903
        %v3968 = vpop.xlane.xlu0 %3967
        %v3969 = vadd.f32 %v3921, %v3938
        %v3970 = vadd.f32 %v3922, %v3940
        %v3971 = vadd.f32 %v3923, %v3942
        %v3972 = vadd.f32 %v3924, %v3944
        %v3973 = vadd.f32 %v3925, %v3946
        %v3974 = vadd.f32 %v3926, %v3948
        %v3975 = vadd.f32 %v3927, %v3950
        %v3976 = vadd.f32 %v3928, %v3952
        %v3977 = vadd.f32 %v3929, %v3954
        %v3978 = vadd.f32 %v3930, %v3956
        %v3979 = vadd.f32 %v3931, %v3958
        %v3980 = vadd.f32 %v3932, %v3960
        %v3981 = vadd.f32 %v3933, %v3962
        %v3982 = vadd.f32 %v3934, %v3964
        %v3983 = vadd.f32 %v3935, %v3966
        %v3984 = vadd.f32 %v3936, %v3968
        %3985 = vst.msk [vmem:[%s3904] sm:$0xff] %vm1738, %v3969
        %3986 = vst.msk [vmem:[%s3904 + $0x8] sm:$0xff] %vm1738, %v3970
        %3987 = vst.msk [vmem:[%s3904 + $0x10] sm:$0xff] %vm1738, %v3971
        %3988 = vst.msk [vmem:[%s3904 + $0x18] sm:$0xff] %vm1738, %v3972
        %3989 = vst.msk [vmem:[%s3904 + $0x20] sm:$0xff] %vm1738, %v3973
        %3990 = vst.msk [vmem:[%s3904 + $0x28] sm:$0xff] %vm1738, %v3974
        %3991 = vst.msk [vmem:[%s3904 + $0x30] sm:$0xff] %vm1738, %v3975
        %3992 = vst.msk [vmem:[%s3904 + $0x38] sm:$0xff] %vm1738, %v3976
        %3993 = vst.msk [vmem:[%s3904 + $0x40] sm:$0xff] %vm1738, %v3977
        %3994 = vst.msk [vmem:[%s3904 + $0x48] sm:$0xff] %vm1738, %v3978
        %3995 = vst.msk [vmem:[%s3904 + $0x50] sm:$0xff] %vm1738, %v3979
        %3996 = vst.msk [vmem:[%s3904 + $0x58] sm:$0xff] %vm1738, %v3980
        %3997 = vst.msk [vmem:[%s3904 + $0x60] sm:$0xff] %vm1738, %v3981
        %3998 = vst.msk [vmem:[%s3904 + $0x68] sm:$0xff] %vm1738, %v3982
        %3999 = vst.msk [vmem:[%s3904 + $0x70] sm:$0xff] %vm1738, %v3983
        %4000 = vst.msk [vmem:[%s3904 + $0x78] sm:$0xff] %vm1738, %v3984
        %v4001 = vpack.c.bf16 %v3889, %v3888
        %v4002 = vpack.c.bf16 %v3891, %v3890
        %v4003 = vpack.c.bf16 %v3893, %v3892
        %v4004 = vpack.c.bf16 %v3895, %v3894
        %v4005 = vpack.c.bf16 %v3897, %v3896
        %v4006 = vpack.c.bf16 %v3899, %v3898
        %v4007 = vpack.c.bf16 %v3901, %v3900
        %v4008 = vpack.c.bf16 %v3903, %v3902
        %4009 = vrot.lane.b32.xlu0 %v1795, 104
        %v4010 = vpop.permute.xlu0 %4009
        %4011 = vrot.lane.b32.xlu0 %v1796, 104
        %v4012 = vpop.permute.xlu0 %4011
        %4013 = vrot.lane.b32.xlu0 %v1797, 104
        %v4014 = vpop.permute.xlu0 %4013
        %4015 = vrot.lane.b32.xlu0 %v1798, 104
        %v4016 = vpop.permute.xlu0 %4015
        %4017 = vrot.lane.b32.xlu0 %v1799, 104
        %v4018 = vpop.permute.xlu0 %4017
        %4019 = vrot.lane.b32.xlu0 %v1800, 104
        %v4020 = vpop.permute.xlu0 %4019
        %4021 = vrot.lane.b32.xlu0 %v1801, 104
        %v4022 = vpop.permute.xlu0 %4021
        %4023 = vrot.lane.b32.xlu0 %v1802, 104
        %v4024 = vpop.permute.xlu0 %4023
        %4033 = vmatpush.bf16.msra.mxu0 %v4024
        %4034 = vmatpush.bf16.msra.mxu0 %v4022
        %4035 = vmatpush.bf16.msra.mxu0 %v4020
        %4036 = vmatpush.bf16.msra.mxu0 %v4018
        %4037 = vmatpush.bf16.msra.mxu0 %v4016
        %4038 = vmatpush.bf16.msra.mxu0 %v4014
        %4039 = vmatpush.bf16.msra.mxu0 %v4012
        %4040 = vmatpush.bf16.msra.mxu0 %v4010
        %4041 = vmatmul.bf16.gmra.mxu0 %v4001
        %v4042 = vpop.f32.mrf.mxu0
        %v4043 = vadd.f32 0.0, %v4042
        %v4044 = vpop.f32.mrf.mxu0
        %v4045 = vadd.f32 0.0, %v4044
        %4046 = vmatmul.bf16.gmra.mxu0 %v4002
        %v4047 = vpop.f32.mrf.mxu0
        %v4048 = vadd.f32 0.0, %v4047
        %v4049 = vpop.f32.mrf.mxu0
        %v4050 = vadd.f32 0.0, %v4049
        %4051 = vmatmul.bf16.gmra.mxu0 %v4003
        %v4052 = vpop.f32.mrf.mxu0
        %v4053 = vadd.f32 0.0, %v4052
        %v4054 = vpop.f32.mrf.mxu0
        %v4055 = vadd.f32 0.0, %v4054
        %4056 = vmatmul.bf16.gmra.mxu0 %v4004
        %v4057 = vpop.f32.mrf.mxu0
        %v4058 = vadd.f32 0.0, %v4057
        %v4059 = vpop.f32.mrf.mxu0
        %v4060 = vadd.f32 0.0, %v4059
        %4061 = vmatmul.bf16.gmra.mxu0 %v4005
        %v4062 = vpop.f32.mrf.mxu0
        %v4063 = vadd.f32 0.0, %v4062
        %v4064 = vpop.f32.mrf.mxu0
        %v4065 = vadd.f32 0.0, %v4064
        %4066 = vmatmul.bf16.gmra.mxu0 %v4006
        %v4067 = vpop.f32.mrf.mxu0
        %v4068 = vadd.f32 0.0, %v4067
        %v4069 = vpop.f32.mrf.mxu0
        %v4070 = vadd.f32 0.0, %v4069
        %4071 = vmatmul.bf16.gmra.mxu0 %v4007
        %v4072 = vpop.f32.mrf.mxu0
        %v4073 = vadd.f32 0.0, %v4072
        %v4074 = vpop.f32.mrf.mxu0
        %v4075 = vadd.f32 0.0, %v4074
        %4076 = vmatmul.bf16.gmra.mxu0 %v4008
        %v4077 = vpop.f32.mrf.mxu0
        %v4078 = vadd.f32 0.0, %v4077
        %v4079 = vpop.f32.mrf.mxu0
        %v4080 = vadd.f32 0.0, %v4079
        %4081 = vdwg.mxu0
        %s4082 = scalar_lea.vmem [#allocation4], 384
        %v4083 = vld [vmem:[%s4082] sm:$0xff]
        %v4084 = vld [vmem:[%s4082 + $0x8] sm:$0xff]
        %v4085 = vld [vmem:[%s4082 + $0x10] sm:$0xff]
        %v4086 = vld [vmem:[%s4082 + $0x18] sm:$0xff]
        %v4087 = vld [vmem:[%s4082 + $0x20] sm:$0xff]
        %v4088 = vld [vmem:[%s4082 + $0x28] sm:$0xff]
        %v4089 = vld [vmem:[%s4082 + $0x30] sm:$0xff]
        %v4090 = vld [vmem:[%s4082 + $0x38] sm:$0xff]
        %v4091 = vld [vmem:[%s4082 + $0x40] sm:$0xff]
        %v4092 = vld [vmem:[%s4082 + $0x48] sm:$0xff]
        %v4093 = vld [vmem:[%s4082 + $0x50] sm:$0xff]
        %v4094 = vld [vmem:[%s4082 + $0x58] sm:$0xff]
        %v4095 = vld [vmem:[%s4082 + $0x60] sm:$0xff]
        %v4096 = vld [vmem:[%s4082 + $0x68] sm:$0xff]
        %v4097 = vld [vmem:[%s4082 + $0x70] sm:$0xff]
        %v4098 = vld [vmem:[%s4082 + $0x78] sm:$0xff]
        %4100 = vset.pattern.permute.xlu0 0
        %4101 = vperm.xlu0 %4100, %v3729
        %v4102 = vpop.permute.xlu0 %4101
        %4105 = vset.pattern.permute.xlu0 0
        %4106 = vperm.xlu0 %4105, %v3731
        %v4107 = vpop.permute.xlu0 %4106
        %4110 = vset.pattern.permute.xlu0 0
        %4111 = vperm.xlu0 %4110, %v3733
        %v4112 = vpop.permute.xlu0 %4111
        %4115 = vset.pattern.permute.xlu0 0
        %4116 = vperm.xlu0 %4115, %v3735
        %v4117 = vpop.permute.xlu0 %4116
        %4120 = vset.pattern.permute.xlu0 0
        %4121 = vperm.xlu0 %4120, %v3737
        %v4122 = vpop.permute.xlu0 %4121
        %4125 = vset.pattern.permute.xlu0 0
        %4126 = vperm.xlu0 %4125, %v3739
        %v4127 = vpop.permute.xlu0 %4126
        %4130 = vset.pattern.permute.xlu0 0
        %4131 = vperm.xlu0 %4130, %v3741
        %v4132 = vpop.permute.xlu0 %4131
        %4135 = vset.pattern.permute.xlu0 0
        %4136 = vperm.xlu0 %4135, %v3743
        %v4137 = vpop.permute.xlu0 %4136
        %4140 = vset.pattern.permute.xlu0 0
        %4141 = vperm.xlu0 %4140, %v3745
        %v4142 = vpop.permute.xlu0 %4141
        %4145 = vset.pattern.permute.xlu0 0
        %4146 = vperm.xlu0 %4145, %v3747
        %v4147 = vpop.permute.xlu0 %4146
        %4150 = vset.pattern.permute.xlu0 0
        %4151 = vperm.xlu0 %4150, %v3749
        %v4152 = vpop.permute.xlu0 %4151
        %4155 = vset.pattern.permute.xlu0 0
        %4156 = vperm.xlu0 %4155, %v3751
        %v4157 = vpop.permute.xlu0 %4156
        %4160 = vset.pattern.permute.xlu0 0
        %4161 = vperm.xlu0 %4160, %v3753
        %v4162 = vpop.permute.xlu0 %4161
        %4165 = vset.pattern.permute.xlu0 0
        %4166 = vperm.xlu0 %4165, %v3755
        %v4167 = vpop.permute.xlu0 %4166
        %4170 = vset.pattern.permute.xlu0 0
        %4171 = vperm.xlu0 %4170, %v3757
        %v4172 = vpop.permute.xlu0 %4171
        %4175 = vset.pattern.permute.xlu0 0
        %4176 = vperm.xlu0 %4175, %v3759
        %v4177 = vpop.permute.xlu0 %4176
        %v4179 = vmul.f32 %v4102, %v4083
        %v4180 = vmul.f32 %v4107, %v4084
        %v4181 = vmul.f32 %v4112, %v4085
        %v4182 = vmul.f32 %v4117, %v4086
        %v4183 = vmul.f32 %v4122, %v4087
        %v4184 = vmul.f32 %v4127, %v4088
        %v4185 = vmul.f32 %v4132, %v4089
        %v4186 = vmul.f32 %v4137, %v4090
        %v4187 = vmul.f32 %v4142, %v4091
        %v4188 = vmul.f32 %v4147, %v4092
        %v4189 = vmul.f32 %v4152, %v4093
        %v4190 = vmul.f32 %v4157, %v4094
        %v4191 = vmul.f32 %v4162, %v4095
        %v4192 = vmul.f32 %v4167, %v4096
        %v4193 = vmul.f32 %v4172, %v4097
        %v4194 = vmul.f32 %v4177, %v4098
        %v4195 = vadd.f32 %v4179, %v4043
        %v4196 = vadd.f32 %v4180, %v4045
        %v4197 = vadd.f32 %v4181, %v4048
        %v4198 = vadd.f32 %v4182, %v4050
        %v4199 = vadd.f32 %v4183, %v4053
        %v4200 = vadd.f32 %v4184, %v4055
        %v4201 = vadd.f32 %v4185, %v4058
        %v4202 = vadd.f32 %v4186, %v4060
        %v4203 = vadd.f32 %v4187, %v4063
        %v4204 = vadd.f32 %v4188, %v4065
        %v4205 = vadd.f32 %v4189, %v4068
        %v4206 = vadd.f32 %v4190, %v4070
        %v4207 = vadd.f32 %v4191, %v4073
        %v4208 = vadd.f32 %v4192, %v4075
        %v4209 = vadd.f32 %v4193, %v4078
        %v4210 = vadd.f32 %v4194, %v4080
        %4211 = vst.msk [vmem:[%s4082] sm:$0xff] %vm1288, %v4195
        %4212 = vst.msk [vmem:[%s4082 + $0x8] sm:$0xff] %vm1288, %v4196
        %4213 = vst.msk [vmem:[%s4082 + $0x10] sm:$0xff] %vm1288, %v4197
        %4214 = vst.msk [vmem:[%s4082 + $0x18] sm:$0xff] %vm1288, %v4198
        %4215 = vst.msk [vmem:[%s4082 + $0x20] sm:$0xff] %vm1288, %v4199
        %4216 = vst.msk [vmem:[%s4082 + $0x28] sm:$0xff] %vm1288, %v4200
        %4217 = vst.msk [vmem:[%s4082 + $0x30] sm:$0xff] %vm1288, %v4201
        %4218 = vst.msk [vmem:[%s4082 + $0x38] sm:$0xff] %vm1288, %v4202
        %4219 = vst.msk [vmem:[%s4082 + $0x40] sm:$0xff] %vm1288, %v4203
        %4220 = vst.msk [vmem:[%s4082 + $0x48] sm:$0xff] %vm1288, %v4204
        %4221 = vst.msk [vmem:[%s4082 + $0x50] sm:$0xff] %vm1288, %v4205
        %4222 = vst.msk [vmem:[%s4082 + $0x58] sm:$0xff] %vm1288, %v4206
        %4223 = vst.msk [vmem:[%s4082 + $0x60] sm:$0xff] %vm1288, %v4207
        %4224 = vst.msk [vmem:[%s4082 + $0x68] sm:$0xff] %vm1288, %v4208
        %4225 = vst.msk [vmem:[%s4082 + $0x70] sm:$0xff] %vm1288, %v4209
        %4226 = vst.msk [vmem:[%s4082 + $0x78] sm:$0xff] %vm1288, %v4210
        %4227 = vst.msk [vmem:[%s3647] sm:$0xff] %vm1738, %v3696
        %4228 = vst.msk [vmem:[%s3647 + $0x8] sm:$0xff] %vm1738, %v3697
        %4229 = vst.msk [vmem:[%s3647 + $0x10] sm:$0xff] %vm1738, %v3698
        %4230 = vst.msk [vmem:[%s3647 + $0x18] sm:$0xff] %vm1738, %v3699
        %4231 = vst.msk [vmem:[%s3647 + $0x20] sm:$0xff] %vm1738, %v3700
        %4232 = vst.msk [vmem:[%s3647 + $0x28] sm:$0xff] %vm1738, %v3701
        %4233 = vst.msk [vmem:[%s3647 + $0x30] sm:$0xff] %vm1738, %v3702
        %4234 = vst.msk [vmem:[%s3647 + $0x38] sm:$0xff] %vm1738, %v3703
        %4235 = vst.msk [vmem:[%s3647 + $0x40] sm:$0xff] %vm1738, %v3704
        %4236 = vst.msk [vmem:[%s3647 + $0x48] sm:$0xff] %vm1738, %v3705
        %4237 = vst.msk [vmem:[%s3647 + $0x50] sm:$0xff] %vm1738, %v3706
        %4238 = vst.msk [vmem:[%s3647 + $0x58] sm:$0xff] %vm1738, %v3707
        %4239 = vst.msk [vmem:[%s3647 + $0x60] sm:$0xff] %vm1738, %v3708
        %4240 = vst.msk [vmem:[%s3647 + $0x68] sm:$0xff] %vm1738, %v3709
        %4241 = vst.msk [vmem:[%s3647 + $0x70] sm:$0xff] %vm1738, %v3710
        %4242 = vst.msk [vmem:[%s3647 + $0x78] sm:$0xff] %vm1738, %v3711
      $region84: #{siglip2_forward.8} parent=75 // pred_fallthru
        _
      %p4243 = scmp.eq.s32.totalorder %s39, 1
      // Predicated region
      $region85: #{siglip2_forward.8} parent=75 // pred_check
        %p4244 = pneg %p4243
      $region86: #{siglip2_forward.8} parent=75 // pred_check_branch
        %4246 = sbr.rel (%p4244) target = $region88
      $region87: #{siglip2_forward.8} parent=75 // pred_region
        %v4247 = vld [vmem:[#allocation4] sm:$0xff]
        %v4248 = vld [vmem:[#allocation4 + $0x8] sm:$0xff]
        %v4249 = vld [vmem:[#allocation4 + $0x10] sm:$0xff]
        %v4250 = vld [vmem:[#allocation4 + $0x18] sm:$0xff]
        %v4251 = vld [vmem:[#allocation4 + $0x20] sm:$0xff]
        %v4252 = vld [vmem:[#allocation4 + $0x28] sm:$0xff]
        %v4253 = vld [vmem:[#allocation4 + $0x30] sm:$0xff]
        %v4254 = vld [vmem:[#allocation4 + $0x38] sm:$0xff]
        %v4255 = vld [vmem:[#allocation4 + $0x40] sm:$0xff]
        %v4256 = vld [vmem:[#allocation4 + $0x48] sm:$0xff]
        %v4257 = vld [vmem:[#allocation4 + $0x50] sm:$0xff]
        %v4258 = vld [vmem:[#allocation4 + $0x58] sm:$0xff]
        %v4259 = vld [vmem:[#allocation4 + $0x60] sm:$0xff]
        %v4260 = vld [vmem:[#allocation4 + $0x68] sm:$0xff]
        %v4261 = vld [vmem:[#allocation4 + $0x70] sm:$0xff]
        %v4262 = vld [vmem:[#allocation4 + $0x78] sm:$0xff]
        %v4263 = vld [vmem:[#allocation3] sm:$0xff]
        %v4264 = vld [vmem:[#allocation3 + $0x8] sm:$0xff]
        %v4265 = vld [vmem:[#allocation3 + $0x10] sm:$0xff]
        %v4266 = vld [vmem:[#allocation3 + $0x18] sm:$0xff]
        %v4267 = vld [vmem:[#allocation3 + $0x20] sm:$0xff]
        %v4268 = vld [vmem:[#allocation3 + $0x28] sm:$0xff]
        %v4269 = vld [vmem:[#allocation3 + $0x30] sm:$0xff]
        %v4270 = vld [vmem:[#allocation3 + $0x38] sm:$0xff]
        %v4271 = vld [vmem:[#allocation3 + $0x40] sm:$0xff]
        %v4272 = vld [vmem:[#allocation3 + $0x48] sm:$0xff]
        %v4273 = vld [vmem:[#allocation3 + $0x50] sm:$0xff]
        %v4274 = vld [vmem:[#allocation3 + $0x58] sm:$0xff]
        %v4275 = vld [vmem:[#allocation3 + $0x60] sm:$0xff]
        %v4276 = vld [vmem:[#allocation3 + $0x68] sm:$0xff]
        %v4277 = vld [vmem:[#allocation3 + $0x70] sm:$0xff]
        %v4278 = vld [vmem:[#allocation3 + $0x78] sm:$0xff]
        %4280 = vset.pattern.permute.xlu0 0
        %4281 = vperm.xlu0 %4280, %v4263
        %v4282 = vpop.permute.xlu0 %4281
        %4285 = vset.pattern.permute.xlu0 0
        %4286 = vperm.xlu0 %4285, %v4264
        %v4287 = vpop.permute.xlu0 %4286
        %4290 = vset.pattern.permute.xlu0 0
        %4291 = vperm.xlu0 %4290, %v4265
        %v4292 = vpop.permute.xlu0 %4291
        %4295 = vset.pattern.permute.xlu0 0
        %4296 = vperm.xlu0 %4295, %v4266
        %v4297 = vpop.permute.xlu0 %4296
        %4300 = vset.pattern.permute.xlu0 0
        %4301 = vperm.xlu0 %4300, %v4267
        %v4302 = vpop.permute.xlu0 %4301
        %4305 = vset.pattern.permute.xlu0 0
        %4306 = vperm.xlu0 %4305, %v4268
        %v4307 = vpop.permute.xlu0 %4306
        %4310 = vset.pattern.permute.xlu0 0
        %4311 = vperm.xlu0 %4310, %v4269
        %v4312 = vpop.permute.xlu0 %4311
        %4315 = vset.pattern.permute.xlu0 0
        %4316 = vperm.xlu0 %4315, %v4270
        %v4317 = vpop.permute.xlu0 %4316
        %4320 = vset.pattern.permute.xlu0 0
        %4321 = vperm.xlu0 %4320, %v4271
        %v4322 = vpop.permute.xlu0 %4321
        %4325 = vset.pattern.permute.xlu0 0
        %4326 = vperm.xlu0 %4325, %v4272
        %v4327 = vpop.permute.xlu0 %4326
        %4330 = vset.pattern.permute.xlu0 0
        %4331 = vperm.xlu0 %4330, %v4273
        %v4332 = vpop.permute.xlu0 %4331
        %4335 = vset.pattern.permute.xlu0 0
        %4336 = vperm.xlu0 %4335, %v4274
        %v4337 = vpop.permute.xlu0 %4336
        %4340 = vset.pattern.permute.xlu0 0
        %4341 = vperm.xlu0 %4340, %v4275
        %v4342 = vpop.permute.xlu0 %4341
        %4345 = vset.pattern.permute.xlu0 0
        %4346 = vperm.xlu0 %4345, %v4276
        %v4347 = vpop.permute.xlu0 %4346
        %4350 = vset.pattern.permute.xlu0 0
        %4351 = vperm.xlu0 %4350, %v4277
        %v4352 = vpop.permute.xlu0 %4351
        %4355 = vset.pattern.permute.xlu0 0
        %4356 = vperm.xlu0 %4355, %v4278
        %v4357 = vpop.permute.xlu0 %4356
        %v4359 = vrcp.pop %v4282
        %v4360 = vmul.f32 %v4282, %v4359
        %v4361 = vsub.f32 1.0, %v4360
        %v4362 = vmul.f32 %v4359, %v4361
        %v4363 = vadd.f32 %v4359, %v4362
        %vm4364 = vweird.f32 %v4282
        %vm4365 = vweird.f32 %v4359
        %vm4366 = vmor %vm4364, %vm4365
        %v4367 = vsel %vm4366, %v4359, %v4363
        %v4368 = vand.u32 2147483647, %v4282
        %vm4369 = vcmp.eq.f32.partialorder %v4368, 8.507059e+37
        %v4370 = vand.u32 %v4282, 2147483648
        %v4371 = vor.u32 1.1754944e-38, %v4370
        %v4372 = vsel %vm4369, %v4371, %v4367
        %v4373 = vmul.f32 %v4247, %v4372
        %v4374 = vrcp.pop %v4287
        %v4375 = vmul.f32 %v4287, %v4374
        %v4376 = vsub.f32 1.0, %v4375
        %v4377 = vmul.f32 %v4374, %v4376
        %v4378 = vadd.f32 %v4374, %v4377
        %vm4379 = vweird.f32 %v4287
        %vm4380 = vweird.f32 %v4374
        %vm4381 = vmor %vm4379, %vm4380
        %v4382 = vsel %vm4381, %v4374, %v4378
        %v4383 = vand.u32 2147483647, %v4287
        %vm4384 = vcmp.eq.f32.partialorder %v4383, 8.507059e+37
        %v4385 = vand.u32 %v4287, 2147483648
        %v4386 = vor.u32 1.1754944e-38, %v4385
        %v4387 = vsel %vm4384, %v4386, %v4382
        %v4388 = vmul.f32 %v4248, %v4387
        %v4389 = vrcp.pop %v4292
        %v4390 = vmul.f32 %v4292, %v4389
        %v4391 = vsub.f32 1.0, %v4390
        %v4392 = vmul.f32 %v4389, %v4391
        %v4393 = vadd.f32 %v4389, %v4392
        %vm4394 = vweird.f32 %v4292
        %vm4395 = vweird.f32 %v4389
        %vm4396 = vmor %vm4394, %vm4395
        %v4397 = vsel %vm4396, %v4389, %v4393
        %v4398 = vand.u32 2147483647, %v4292
        %vm4399 = vcmp.eq.f32.partialorder %v4398, 8.507059e+37
        %v4400 = vand.u32 %v4292, 2147483648
        %v4401 = vor.u32 1.1754944e-38, %v4400
        %v4402 = vsel %vm4399, %v4401, %v4397
        %v4403 = vmul.f32 %v4249, %v4402
        %v4404 = vrcp.pop %v4297
        %v4405 = vmul.f32 %v4297, %v4404
        %v4406 = vsub.f32 1.0, %v4405
        %v4407 = vmul.f32 %v4404, %v4406
        %v4408 = vadd.f32 %v4404, %v4407
        %vm4409 = vweird.f32 %v4297
        %vm4410 = vweird.f32 %v4404
        %vm4411 = vmor %vm4409, %vm4410
        %v4412 = vsel %vm4411, %v4404, %v4408
        %v4413 = vand.u32 2147483647, %v4297
        %vm4414 = vcmp.eq.f32.partialorder %v4413, 8.507059e+37
        %v4415 = vand.u32 %v4297, 2147483648
        %v4416 = vor.u32 1.1754944e-38, %v4415
        %v4417 = vsel %vm4414, %v4416, %v4412
        %v4418 = vmul.f32 %v4250, %v4417
        %v4419 = vrcp.pop %v4302
        %v4420 = vmul.f32 %v4302, %v4419
        %v4421 = vsub.f32 1.0, %v4420
        %v4422 = vmul.f32 %v4419, %v4421
        %v4423 = vadd.f32 %v4419, %v4422
        %vm4424 = vweird.f32 %v4302
        %vm4425 = vweird.f32 %v4419
        %vm4426 = vmor %vm4424, %vm4425
        %v4427 = vsel %vm4426, %v4419, %v4423
        %v4428 = vand.u32 2147483647, %v4302
        %vm4429 = vcmp.eq.f32.partialorder %v4428, 8.507059e+37
        %v4430 = vand.u32 %v4302, 2147483648
        %v4431 = vor.u32 1.1754944e-38, %v4430
        %v4432 = vsel %vm4429, %v4431, %v4427
        %v4433 = vmul.f32 %v4251, %v4432
        %v4434 = vrcp.pop %v4307
        %v4435 = vmul.f32 %v4307, %v4434
        %v4436 = vsub.f32 1.0, %v4435
        %v4437 = vmul.f32 %v4434, %v4436
        %v4438 = vadd.f32 %v4434, %v4437
        %vm4439 = vweird.f32 %v4307
        %vm4440 = vweird.f32 %v4434
        %vm4441 = vmor %vm4439, %vm4440
        %v4442 = vsel %vm4441, %v4434, %v4438
        %v4443 = vand.u32 2147483647, %v4307
        %vm4444 = vcmp.eq.f32.partialorder %v4443, 8.507059e+37
        %v4445 = vand.u32 %v4307, 2147483648
        %v4446 = vor.u32 1.1754944e-38, %v4445
        %v4447 = vsel %vm4444, %v4446, %v4442
        %v4448 = vmul.f32 %v4252, %v4447
        %v4449 = vrcp.pop %v4312
        %v4450 = vmul.f32 %v4312, %v4449
        %v4451 = vsub.f32 1.0, %v4450
        %v4452 = vmul.f32 %v4449, %v4451
        %v4453 = vadd.f32 %v4449, %v4452
        %vm4454 = vweird.f32 %v4312
        %vm4455 = vweird.f32 %v4449
        %vm4456 = vmor %vm4454, %vm4455
        %v4457 = vsel %vm4456, %v4449, %v4453
        %v4458 = vand.u32 2147483647, %v4312
        %vm4459 = vcmp.eq.f32.partialorder %v4458, 8.507059e+37
        %v4460 = vand.u32 %v4312, 2147483648
        %v4461 = vor.u32 1.1754944e-38, %v4460
        %v4462 = vsel %vm4459, %v4461, %v4457
        %v4463 = vmul.f32 %v4253, %v4462
        %v4464 = vrcp.pop %v4317
        %v4465 = vmul.f32 %v4317, %v4464
        %v4466 = vsub.f32 1.0, %v4465
        %v4467 = vmul.f32 %v4464, %v4466
        %v4468 = vadd.f32 %v4464, %v4467
        %vm4469 = vweird.f32 %v4317
        %vm4470 = vweird.f32 %v4464
        %vm4471 = vmor %vm4469, %vm4470
        %v4472 = vsel %vm4471, %v4464, %v4468
        %v4473 = vand.u32 2147483647, %v4317
        %vm4474 = vcmp.eq.f32.partialorder %v4473, 8.507059e+37
        %v4475 = vand.u32 %v4317, 2147483648
        %v4476 = vor.u32 1.1754944e-38, %v4475
        %v4477 = vsel %vm4474, %v4476, %v4472
        %v4478 = vmul.f32 %v4254, %v4477
        %v4479 = vrcp.pop %v4322
        %v4480 = vmul.f32 %v4322, %v4479
        %v4481 = vsub.f32 1.0, %v4480
        %v4482 = vmul.f32 %v4479, %v4481
        %v4483 = vadd.f32 %v4479, %v4482
        %vm4484 = vweird.f32 %v4322
        %vm4485 = vweird.f32 %v4479
        %vm4486 = vmor %vm4484, %vm4485
        %v4487 = vsel %vm4486, %v4479, %v4483
        %v4488 = vand.u32 2147483647, %v4322
        %vm4489 = vcmp.eq.f32.partialorder %v4488, 8.507059e+37
        %v4490 = vand.u32 %v4322, 2147483648
        %v4491 = vor.u32 1.1754944e-38, %v4490
        %v4492 = vsel %vm4489, %v4491, %v4487
        %v4493 = vmul.f32 %v4255, %v4492
        %v4494 = vrcp.pop %v4327
        %v4495 = vmul.f32 %v4327, %v4494
        %v4496 = vsub.f32 1.0, %v4495
        %v4497 = vmul.f32 %v4494, %v4496
        %v4498 = vadd.f32 %v4494, %v4497
        %vm4499 = vweird.f32 %v4327
        %vm4500 = vweird.f32 %v4494
        %vm4501 = vmor %vm4499, %vm4500
        %v4502 = vsel %vm4501, %v4494, %v4498
        %v4503 = vand.u32 2147483647, %v4327
        %vm4504 = vcmp.eq.f32.partialorder %v4503, 8.507059e+37
        %v4505 = vand.u32 %v4327, 2147483648
        %v4506 = vor.u32 1.1754944e-38, %v4505
        %v4507 = vsel %vm4504, %v4506, %v4502
        %v4508 = vmul.f32 %v4256, %v4507
        %v4509 = vrcp.pop %v4332
        %v4510 = vmul.f32 %v4332, %v4509
        %v4511 = vsub.f32 1.0, %v4510
        %v4512 = vmul.f32 %v4509, %v4511
        %v4513 = vadd.f32 %v4509, %v4512
        %vm4514 = vweird.f32 %v4332
        %vm4515 = vweird.f32 %v4509
        %vm4516 = vmor %vm4514, %vm4515
        %v4517 = vsel %vm4516, %v4509, %v4513
        %v4518 = vand.u32 2147483647, %v4332
        %vm4519 = vcmp.eq.f32.partialorder %v4518, 8.507059e+37
        %v4520 = vand.u32 %v4332, 2147483648
        %v4521 = vor.u32 1.1754944e-38, %v4520
        %v4522 = vsel %vm4519, %v4521, %v4517
        %v4523 = vmul.f32 %v4257, %v4522
        %v4524 = vrcp.pop %v4337
        %v4525 = vmul.f32 %v4337, %v4524
        %v4526 = vsub.f32 1.0, %v4525
        %v4527 = vmul.f32 %v4524, %v4526
        %v4528 = vadd.f32 %v4524, %v4527
        %vm4529 = vweird.f32 %v4337
        %vm4530 = vweird.f32 %v4524
        %vm4531 = vmor %vm4529, %vm4530
        %v4532 = vsel %vm4531, %v4524, %v4528
        %v4533 = vand.u32 2147483647, %v4337
        %vm4534 = vcmp.eq.f32.partialorder %v4533, 8.507059e+37
        %v4535 = vand.u32 %v4337, 2147483648
        %v4536 = vor.u32 1.1754944e-38, %v4535
        %v4537 = vsel %vm4534, %v4536, %v4532
        %v4538 = vmul.f32 %v4258, %v4537
        %v4539 = vrcp.pop %v4342
        %v4540 = vmul.f32 %v4342, %v4539
        %v4541 = vsub.f32 1.0, %v4540
        %v4542 = vmul.f32 %v4539, %v4541
        %v4543 = vadd.f32 %v4539, %v4542
        %vm4544 = vweird.f32 %v4342
        %vm4545 = vweird.f32 %v4539
        %vm4546 = vmor %vm4544, %vm4545
        %v4547 = vsel %vm4546, %v4539, %v4543
        %v4548 = vand.u32 2147483647, %v4342
        %vm4549 = vcmp.eq.f32.partialorder %v4548, 8.507059e+37
        %v4550 = vand.u32 %v4342, 2147483648
        %v4551 = vor.u32 1.1754944e-38, %v4550
        %v4552 = vsel %vm4549, %v4551, %v4547
        %v4553 = vmul.f32 %v4259, %v4552
        %v4554 = vrcp.pop %v4347
        %v4555 = vmul.f32 %v4347, %v4554
        %v4556 = vsub.f32 1.0, %v4555
        %v4557 = vmul.f32 %v4554, %v4556
        %v4558 = vadd.f32 %v4554, %v4557
        %vm4559 = vweird.f32 %v4347
        %vm4560 = vweird.f32 %v4554
        %vm4561 = vmor %vm4559, %vm4560
        %v4562 = vsel %vm4561, %v4554, %v4558
        %v4563 = vand.u32 2147483647, %v4347
        %vm4564 = vcmp.eq.f32.partialorder %v4563, 8.507059e+37
        %v4565 = vand.u32 %v4347, 2147483648
        %v4566 = vor.u32 1.1754944e-38, %v4565
        %v4567 = vsel %vm4564, %v4566, %v4562
        %v4568 = vmul.f32 %v4260, %v4567
        %v4569 = vrcp.pop %v4352
        %v4570 = vmul.f32 %v4352, %v4569
        %v4571 = vsub.f32 1.0, %v4570
        %v4572 = vmul.f32 %v4569, %v4571
        %v4573 = vadd.f32 %v4569, %v4572
        %vm4574 = vweird.f32 %v4352
        %vm4575 = vweird.f32 %v4569
        %vm4576 = vmor %vm4574, %vm4575
        %v4577 = vsel %vm4576, %v4569, %v4573
        %v4578 = vand.u32 2147483647, %v4352
        %vm4579 = vcmp.eq.f32.partialorder %v4578, 8.507059e+37
        %v4580 = vand.u32 %v4352, 2147483648
        %v4581 = vor.u32 1.1754944e-38, %v4580
        %v4582 = vsel %vm4579, %v4581, %v4577
        %v4583 = vmul.f32 %v4261, %v4582
        %v4584 = vrcp.pop %v4357
        %v4585 = vmul.f32 %v4357, %v4584
        %v4586 = vsub.f32 1.0, %v4585
        %v4587 = vmul.f32 %v4584, %v4586
        %v4588 = vadd.f32 %v4584, %v4587
        %vm4589 = vweird.f32 %v4357
        %vm4590 = vweird.f32 %v4584
        %vm4591 = vmor %vm4589, %vm4590
        %v4592 = vsel %vm4591, %v4584, %v4588
        %v4593 = vand.u32 2147483647, %v4357
        %vm4594 = vcmp.eq.f32.partialorder %v4593, 8.507059e+37
        %v4595 = vand.u32 %v4357, 2147483648
        %v4596 = vor.u32 1.1754944e-38, %v4595
        %v4597 = vsel %vm4594, %v4596, %v4592
        %v4598 = vmul.f32 %v4262, %v4597
        %s4599 = scalar_lea.vmem [#allocation4], 128
        %v4600 = vld [vmem:[%s4599] sm:$0xff]
        %v4601 = vld [vmem:[%s4599 + $0x8] sm:$0xff]
        %v4602 = vld [vmem:[%s4599 + $0x10] sm:$0xff]
        %v4603 = vld [vmem:[%s4599 + $0x18] sm:$0xff]
        %v4604 = vld [vmem:[%s4599 + $0x20] sm:$0xff]
        %v4605 = vld [vmem:[%s4599 + $0x28] sm:$0xff]
        %v4606 = vld [vmem:[%s4599 + $0x30] sm:$0xff]
        %v4607 = vld [vmem:[%s4599 + $0x38] sm:$0xff]
        %v4608 = vld [vmem:[%s4599 + $0x40] sm:$0xff]
        %v4609 = vld [vmem:[%s4599 + $0x48] sm:$0xff]
        %v4610 = vld [vmem:[%s4599 + $0x50] sm:$0xff]
        %v4611 = vld [vmem:[%s4599 + $0x58] sm:$0xff]
        %v4612 = vld [vmem:[%s4599 + $0x60] sm:$0xff]
        %v4613 = vld [vmem:[%s4599 + $0x68] sm:$0xff]
        %v4614 = vld [vmem:[%s4599 + $0x70] sm:$0xff]
        %v4615 = vld [vmem:[%s4599 + $0x78] sm:$0xff]
        %s4616 = scalar_lea.vmem [#allocation3], 128
        %v4617 = vld [vmem:[%s4616] sm:$0xff]
        %v4618 = vld [vmem:[%s4616 + $0x8] sm:$0xff]
        %v4619 = vld [vmem:[%s4616 + $0x10] sm:$0xff]
        %v4620 = vld [vmem:[%s4616 + $0x18] sm:$0xff]
        %v4621 = vld [vmem:[%s4616 + $0x20] sm:$0xff]
        %v4622 = vld [vmem:[%s4616 + $0x28] sm:$0xff]
        %v4623 = vld [vmem:[%s4616 + $0x30] sm:$0xff]
        %v4624 = vld [vmem:[%s4616 + $0x38] sm:$0xff]
        %v4625 = vld [vmem:[%s4616 + $0x40] sm:$0xff]
        %v4626 = vld [vmem:[%s4616 + $0x48] sm:$0xff]
        %v4627 = vld [vmem:[%s4616 + $0x50] sm:$0xff]
        %v4628 = vld [vmem:[%s4616 + $0x58] sm:$0xff]
        %v4629 = vld [vmem:[%s4616 + $0x60] sm:$0xff]
        %v4630 = vld [vmem:[%s4616 + $0x68] sm:$0xff]
        %v4631 = vld [vmem:[%s4616 + $0x70] sm:$0xff]
        %v4632 = vld [vmem:[%s4616 + $0x78] sm:$0xff]
        %4634 = vset.pattern.permute.xlu0 0
        %4635 = vperm.xlu0 %4634, %v4617
        %v4636 = vpop.permute.xlu0 %4635
        %4639 = vset.pattern.permute.xlu0 0
        %4640 = vperm.xlu0 %4639, %v4618
        %v4641 = vpop.permute.xlu0 %4640
        %4644 = vset.pattern.permute.xlu0 0
        %4645 = vperm.xlu0 %4644, %v4619
        %v4646 = vpop.permute.xlu0 %4645
        %4649 = vset.pattern.permute.xlu0 0
        %4650 = vperm.xlu0 %4649, %v4620
        %v4651 = vpop.permute.xlu0 %4650
        %4654 = vset.pattern.permute.xlu0 0
        %4655 = vperm.xlu0 %4654, %v4621
        %v4656 = vpop.permute.xlu0 %4655
        %4659 = vset.pattern.permute.xlu0 0
        %4660 = vperm.xlu0 %4659, %v4622
        %v4661 = vpop.permute.xlu0 %4660
        %4664 = vset.pattern.permute.xlu0 0
        %4665 = vperm.xlu0 %4664, %v4623
        %v4666 = vpop.permute.xlu0 %4665
        %4669 = vset.pattern.permute.xlu0 0
        %4670 = vperm.xlu0 %4669, %v4624
        %v4671 = vpop.permute.xlu0 %4670
        %4674 = vset.pattern.permute.xlu0 0
        %4675 = vperm.xlu0 %4674, %v4625
        %v4676 = vpop.permute.xlu0 %4675
        %4679 = vset.pattern.permute.xlu0 0
        %4680 = vperm.xlu0 %4679, %v4626
        %v4681 = vpop.permute.xlu0 %4680
        %4684 = vset.pattern.permute.xlu0 0
        %4685 = vperm.xlu0 %4684, %v4627
        %v4686 = vpop.permute.xlu0 %4685
        %4689 = vset.pattern.permute.xlu0 0
        %4690 = vperm.xlu0 %4689, %v4628
        %v4691 = vpop.permute.xlu0 %4690
        %4694 = vset.pattern.permute.xlu0 0
        %4695 = vperm.xlu0 %4694, %v4629
        %v4696 = vpop.permute.xlu0 %4695
        %4699 = vset.pattern.permute.xlu0 0
        %4700 = vperm.xlu0 %4699, %v4630
        %v4701 = vpop.permute.xlu0 %4700
        %4704 = vset.pattern.permute.xlu0 0
        %4705 = vperm.xlu0 %4704, %v4631
        %v4706 = vpop.permute.xlu0 %4705
        %4709 = vset.pattern.permute.xlu0 0
        %4710 = vperm.xlu0 %4709, %v4632
        %v4711 = vpop.permute.xlu0 %4710
        %v4713 = vrcp.pop %v4636
        %v4714 = vmul.f32 %v4636, %v4713
        %v4715 = vsub.f32 1.0, %v4714
        %v4716 = vmul.f32 %v4713, %v4715
        %v4717 = vadd.f32 %v4713, %v4716
        %vm4718 = vweird.f32 %v4636
        %vm4719 = vweird.f32 %v4713
        %vm4720 = vmor %vm4718, %vm4719
        %v4721 = vsel %vm4720, %v4713, %v4717
        %v4722 = vand.u32 2147483647, %v4636
        %vm4723 = vcmp.eq.f32.partialorder %v4722, 8.507059e+37
        %v4724 = vand.u32 %v4636, 2147483648
        %v4725 = vor.u32 1.1754944e-38, %v4724
        %v4726 = vsel %vm4723, %v4725, %v4721
        %v4727 = vmul.f32 %v4600, %v4726
        %v4728 = vrcp.pop %v4641
        %v4729 = vmul.f32 %v4641, %v4728
        %v4730 = vsub.f32 1.0, %v4729
        %v4731 = vmul.f32 %v4728, %v4730
        %v4732 = vadd.f32 %v4728, %v4731
        %vm4733 = vweird.f32 %v4641
        %vm4734 = vweird.f32 %v4728
        %vm4735 = vmor %vm4733, %vm4734
        %v4736 = vsel %vm4735, %v4728, %v4732
        %v4737 = vand.u32 2147483647, %v4641
        %vm4738 = vcmp.eq.f32.partialorder %v4737, 8.507059e+37
        %v4739 = vand.u32 %v4641, 2147483648
        %v4740 = vor.u32 1.1754944e-38, %v4739
        %v4741 = vsel %vm4738, %v4740, %v4736
        %v4742 = vmul.f32 %v4601, %v4741
        %v4743 = vrcp.pop %v4646
        %v4744 = vmul.f32 %v4646, %v4743
        %v4745 = vsub.f32 1.0, %v4744
        %v4746 = vmul.f32 %v4743, %v4745
        %v4747 = vadd.f32 %v4743, %v4746
        %vm4748 = vweird.f32 %v4646
        %vm4749 = vweird.f32 %v4743
        %vm4750 = vmor %vm4748, %vm4749
        %v4751 = vsel %vm4750, %v4743, %v4747
        %v4752 = vand.u32 2147483647, %v4646
        %vm4753 = vcmp.eq.f32.partialorder %v4752, 8.507059e+37
        %v4754 = vand.u32 %v4646, 2147483648
        %v4755 = vor.u32 1.1754944e-38, %v4754
        %v4756 = vsel %vm4753, %v4755, %v4751
        %v4757 = vmul.f32 %v4602, %v4756
        %v4758 = vrcp.pop %v4651
        %v4759 = vmul.f32 %v4651, %v4758
        %v4760 = vsub.f32 1.0, %v4759
        %v4761 = vmul.f32 %v4758, %v4760
        %v4762 = vadd.f32 %v4758, %v4761
        %vm4763 = vweird.f32 %v4651
        %vm4764 = vweird.f32 %v4758
        %vm4765 = vmor %vm4763, %vm4764
        %v4766 = vsel %vm4765, %v4758, %v4762
        %v4767 = vand.u32 2147483647, %v4651
        %vm4768 = vcmp.eq.f32.partialorder %v4767, 8.507059e+37
        %v4769 = vand.u32 %v4651, 2147483648
        %v4770 = vor.u32 1.1754944e-38, %v4769
        %v4771 = vsel %vm4768, %v4770, %v4766
        %v4772 = vmul.f32 %v4603, %v4771
        %v4773 = vrcp.pop %v4656
        %v4774 = vmul.f32 %v4656, %v4773
        %v4775 = vsub.f32 1.0, %v4774
        %v4776 = vmul.f32 %v4773, %v4775
        %v4777 = vadd.f32 %v4773, %v4776
        %vm4778 = vweird.f32 %v4656
        %vm4779 = vweird.f32 %v4773
        %vm4780 = vmor %vm4778, %vm4779
        %v4781 = vsel %vm4780, %v4773, %v4777
        %v4782 = vand.u32 2147483647, %v4656
        %vm4783 = vcmp.eq.f32.partialorder %v4782, 8.507059e+37
        %v4784 = vand.u32 %v4656, 2147483648
        %v4785 = vor.u32 1.1754944e-38, %v4784
        %v4786 = vsel %vm4783, %v4785, %v4781
        %v4787 = vmul.f32 %v4604, %v4786
        %v4788 = vrcp.pop %v4661
        %v4789 = vmul.f32 %v4661, %v4788
        %v4790 = vsub.f32 1.0, %v4789
        %v4791 = vmul.f32 %v4788, %v4790
        %v4792 = vadd.f32 %v4788, %v4791
        %vm4793 = vweird.f32 %v4661
        %vm4794 = vweird.f32 %v4788
        %vm4795 = vmor %vm4793, %vm4794
        %v4796 = vsel %vm4795, %v4788, %v4792
        %v4797 = vand.u32 2147483647, %v4661
        %vm4798 = vcmp.eq.f32.partialorder %v4797, 8.507059e+37
        %v4799 = vand.u32 %v4661, 2147483648
        %v4800 = vor.u32 1.1754944e-38, %v4799
        %v4801 = vsel %vm4798, %v4800, %v4796
        %v4802 = vmul.f32 %v4605, %v4801
        %v4803 = vrcp.pop %v4666
        %v4804 = vmul.f32 %v4666, %v4803
        %v4805 = vsub.f32 1.0, %v4804
        %v4806 = vmul.f32 %v4803, %v4805
        %v4807 = vadd.f32 %v4803, %v4806
        %vm4808 = vweird.f32 %v4666
        %vm4809 = vweird.f32 %v4803
        %vm4810 = vmor %vm4808, %vm4809
        %v4811 = vsel %vm4810, %v4803, %v4807
        %v4812 = vand.u32 2147483647, %v4666
        %vm4813 = vcmp.eq.f32.partialorder %v4812, 8.507059e+37
        %v4814 = vand.u32 %v4666, 2147483648
        %v4815 = vor.u32 1.1754944e-38, %v4814
        %v4816 = vsel %vm4813, %v4815, %v4811
        %v4817 = vmul.f32 %v4606, %v4816
        %v4818 = vrcp.pop %v4671
        %v4819 = vmul.f32 %v4671, %v4818
        %v4820 = vsub.f32 1.0, %v4819
        %v4821 = vmul.f32 %v4818, %v4820
        %v4822 = vadd.f32 %v4818, %v4821
        %vm4823 = vweird.f32 %v4671
        %vm4824 = vweird.f32 %v4818
        %vm4825 = vmor %vm4823, %vm4824
        %v4826 = vsel %vm4825, %v4818, %v4822
        %v4827 = vand.u32 2147483647, %v4671
        %vm4828 = vcmp.eq.f32.partialorder %v4827, 8.507059e+37
        %v4829 = vand.u32 %v4671, 2147483648
        %v4830 = vor.u32 1.1754944e-38, %v4829
        %v4831 = vsel %vm4828, %v4830, %v4826
        %v4832 = vmul.f32 %v4607, %v4831
        %v4833 = vrcp.pop %v4676
        %v4834 = vmul.f32 %v4676, %v4833
        %v4835 = vsub.f32 1.0, %v4834
        %v4836 = vmul.f32 %v4833, %v4835
        %v4837 = vadd.f32 %v4833, %v4836
        %vm4838 = vweird.f32 %v4676
        %vm4839 = vweird.f32 %v4833
        %vm4840 = vmor %vm4838, %vm4839
        %v4841 = vsel %vm4840, %v4833, %v4837
        %v4842 = vand.u32 2147483647, %v4676
        %vm4843 = vcmp.eq.f32.partialorder %v4842, 8.507059e+37
        %v4844 = vand.u32 %v4676, 2147483648
        %v4845 = vor.u32 1.1754944e-38, %v4844
        %v4846 = vsel %vm4843, %v4845, %v4841
        %v4847 = vmul.f32 %v4608, %v4846
        %v4848 = vrcp.pop %v4681
        %v4849 = vmul.f32 %v4681, %v4848
        %v4850 = vsub.f32 1.0, %v4849
        %v4851 = vmul.f32 %v4848, %v4850
        %v4852 = vadd.f32 %v4848, %v4851
        %vm4853 = vweird.f32 %v4681
        %vm4854 = vweird.f32 %v4848
        %vm4855 = vmor %vm4853, %vm4854
        %v4856 = vsel %vm4855, %v4848, %v4852
        %v4857 = vand.u32 2147483647, %v4681
        %vm4858 = vcmp.eq.f32.partialorder %v4857, 8.507059e+37
        %v4859 = vand.u32 %v4681, 2147483648
        %v4860 = vor.u32 1.1754944e-38, %v4859
        %v4861 = vsel %vm4858, %v4860, %v4856
        %v4862 = vmul.f32 %v4609, %v4861
        %v4863 = vrcp.pop %v4686
        %v4864 = vmul.f32 %v4686, %v4863
        %v4865 = vsub.f32 1.0, %v4864
        %v4866 = vmul.f32 %v4863, %v4865
        %v4867 = vadd.f32 %v4863, %v4866
        %vm4868 = vweird.f32 %v4686
        %vm4869 = vweird.f32 %v4863
        %vm4870 = vmor %vm4868, %vm4869
        %v4871 = vsel %vm4870, %v4863, %v4867
        %v4872 = vand.u32 2147483647, %v4686
        %vm4873 = vcmp.eq.f32.partialorder %v4872, 8.507059e+37
        %v4874 = vand.u32 %v4686, 2147483648
        %v4875 = vor.u32 1.1754944e-38, %v4874
        %v4876 = vsel %vm4873, %v4875, %v4871
        %v4877 = vmul.f32 %v4610, %v4876
        %v4878 = vrcp.pop %v4691
        %v4879 = vmul.f32 %v4691, %v4878
        %v4880 = vsub.f32 1.0, %v4879
        %v4881 = vmul.f32 %v4878, %v4880
        %v4882 = vadd.f32 %v4878, %v4881
        %vm4883 = vweird.f32 %v4691
        %vm4884 = vweird.f32 %v4878
        %vm4885 = vmor %vm4883, %vm4884
        %v4886 = vsel %vm4885, %v4878, %v4882
        %v4887 = vand.u32 2147483647, %v4691
        %vm4888 = vcmp.eq.f32.partialorder %v4887, 8.507059e+37
        %v4889 = vand.u32 %v4691, 2147483648
        %v4890 = vor.u32 1.1754944e-38, %v4889
        %v4891 = vsel %vm4888, %v4890, %v4886
        %v4892 = vmul.f32 %v4611, %v4891
        %v4893 = vrcp.pop %v4696
        %v4894 = vmul.f32 %v4696, %v4893
        %v4895 = vsub.f32 1.0, %v4894
        %v4896 = vmul.f32 %v4893, %v4895
        %v4897 = vadd.f32 %v4893, %v4896
        %vm4898 = vweird.f32 %v4696
        %vm4899 = vweird.f32 %v4893
        %vm4900 = vmor %vm4898, %vm4899
        %v4901 = vsel %vm4900, %v4893, %v4897
        %v4902 = vand.u32 2147483647, %v4696
        %vm4903 = vcmp.eq.f32.partialorder %v4902, 8.507059e+37
        %v4904 = vand.u32 %v4696, 2147483648
        %v4905 = vor.u32 1.1754944e-38, %v4904
        %v4906 = vsel %vm4903, %v4905, %v4901
        %v4907 = vmul.f32 %v4612, %v4906
        %v4908 = vrcp.pop %v4701
        %v4909 = vmul.f32 %v4701, %v4908
        %v4910 = vsub.f32 1.0, %v4909
        %v4911 = vmul.f32 %v4908, %v4910
        %v4912 = vadd.f32 %v4908, %v4911
        %vm4913 = vweird.f32 %v4701
        %vm4914 = vweird.f32 %v4908
        %vm4915 = vmor %vm4913, %vm4914
        %v4916 = vsel %vm4915, %v4908, %v4912
        %v4917 = vand.u32 2147483647, %v4701
        %vm4918 = vcmp.eq.f32.partialorder %v4917, 8.507059e+37
        %v4919 = vand.u32 %v4701, 2147483648
        %v4920 = vor.u32 1.1754944e-38, %v4919
        %v4921 = vsel %vm4918, %v4920, %v4916
        %v4922 = vmul.f32 %v4613, %v4921
        %v4923 = vrcp.pop %v4706
        %v4924 = vmul.f32 %v4706, %v4923
        %v4925 = vsub.f32 1.0, %v4924
        %v4926 = vmul.f32 %v4923, %v4925
        %v4927 = vadd.f32 %v4923, %v4926
        %vm4928 = vweird.f32 %v4706
        %vm4929 = vweird.f32 %v4923
        %vm4930 = vmor %vm4928, %vm4929
        %v4931 = vsel %vm4930, %v4923, %v4927
        %v4932 = vand.u32 2147483647, %v4706
        %vm4933 = vcmp.eq.f32.partialorder %v4932, 8.507059e+37
        %v4934 = vand.u32 %v4706, 2147483648
        %v4935 = vor.u32 1.1754944e-38, %v4934
        %v4936 = vsel %vm4933, %v4935, %v4931
        %v4937 = vmul.f32 %v4614, %v4936
        %v4938 = vrcp.pop %v4711
        %v4939 = vmul.f32 %v4711, %v4938
        %v4940 = vsub.f32 1.0, %v4939
        %v4941 = vmul.f32 %v4938, %v4940
        %v4942 = vadd.f32 %v4938, %v4941
        %vm4943 = vweird.f32 %v4711
        %vm4944 = vweird.f32 %v4938
        %vm4945 = vmor %vm4943, %vm4944
        %v4946 = vsel %vm4945, %v4938, %v4942
        %v4947 = vand.u32 2147483647, %v4711
        %vm4948 = vcmp.eq.f32.partialorder %v4947, 8.507059e+37
        %v4949 = vand.u32 %v4711, 2147483648
        %v4950 = vor.u32 1.1754944e-38, %v4949
        %v4951 = vsel %vm4948, %v4950, %v4946
        %v4952 = vmul.f32 %v4615, %v4951
        %s4953 = scalar_lea.vmem [#allocation4], 256
        %v4954 = vld [vmem:[%s4953] sm:$0xff]
        %v4955 = vld [vmem:[%s4953 + $0x8] sm:$0xff]
        %v4956 = vld [vmem:[%s4953 + $0x10] sm:$0xff]
        %v4957 = vld [vmem:[%s4953 + $0x18] sm:$0xff]
        %v4958 = vld [vmem:[%s4953 + $0x20] sm:$0xff]
        %v4959 = vld [vmem:[%s4953 + $0x28] sm:$0xff]
        %v4960 = vld [vmem:[%s4953 + $0x30] sm:$0xff]
        %v4961 = vld [vmem:[%s4953 + $0x38] sm:$0xff]
        %v4962 = vld [vmem:[%s4953 + $0x40] sm:$0xff]
        %v4963 = vld [vmem:[%s4953 + $0x48] sm:$0xff]
        %v4964 = vld [vmem:[%s4953 + $0x50] sm:$0xff]
        %v4965 = vld [vmem:[%s4953 + $0x58] sm:$0xff]
        %v4966 = vld [vmem:[%s4953 + $0x60] sm:$0xff]
        %v4967 = vld [vmem:[%s4953 + $0x68] sm:$0xff]
        %v4968 = vld [vmem:[%s4953 + $0x70] sm:$0xff]
        %v4969 = vld [vmem:[%s4953 + $0x78] sm:$0xff]
        %s4970 = scalar_lea.vmem [#allocation3], 256
        %v4971 = vld [vmem:[%s4970] sm:$0xff]
        %v4972 = vld [vmem:[%s4970 + $0x8] sm:$0xff]
        %v4973 = vld [vmem:[%s4970 + $0x10] sm:$0xff]
        %v4974 = vld [vmem:[%s4970 + $0x18] sm:$0xff]
        %v4975 = vld [vmem:[%s4970 + $0x20] sm:$0xff]
        %v4976 = vld [vmem:[%s4970 + $0x28] sm:$0xff]
        %v4977 = vld [vmem:[%s4970 + $0x30] sm:$0xff]
        %v4978 = vld [vmem:[%s4970 + $0x38] sm:$0xff]
        %v4979 = vld [vmem:[%s4970 + $0x40] sm:$0xff]
        %v4980 = vld [vmem:[%s4970 + $0x48] sm:$0xff]
        %v4981 = vld [vmem:[%s4970 + $0x50] sm:$0xff]
        %v4982 = vld [vmem:[%s4970 + $0x58] sm:$0xff]
        %v4983 = vld [vmem:[%s4970 + $0x60] sm:$0xff]
        %v4984 = vld [vmem:[%s4970 + $0x68] sm:$0xff]
        %v4985 = vld [vmem:[%s4970 + $0x70] sm:$0xff]
        %v4986 = vld [vmem:[%s4970 + $0x78] sm:$0xff]
        %4988 = vset.pattern.permute.xlu0 0
        %4989 = vperm.xlu0 %4988, %v4971
        %v4990 = vpop.permute.xlu0 %4989
        %4993 = vset.pattern.permute.xlu0 0
        %4994 = vperm.xlu0 %4993, %v4972
        %v4995 = vpop.permute.xlu0 %4994
        %4998 = vset.pattern.permute.xlu0 0
        %4999 = vperm.xlu0 %4998, %v4973
        %v5000 = vpop.permute.xlu0 %4999
        %5003 = vset.pattern.permute.xlu0 0
        %5004 = vperm.xlu0 %5003, %v4974
        %v5005 = vpop.permute.xlu0 %5004
        %5008 = vset.pattern.permute.xlu0 0
        %5009 = vperm.xlu0 %5008, %v4975
        %v5010 = vpop.permute.xlu0 %5009
        %5013 = vset.pattern.permute.xlu0 0
        %5014 = vperm.xlu0 %5013, %v4976
        %v5015 = vpop.permute.xlu0 %5014
        %5018 = vset.pattern.permute.xlu0 0
        %5019 = vperm.xlu0 %5018, %v4977
        %v5020 = vpop.permute.xlu0 %5019
        %5023 = vset.pattern.permute.xlu0 0
        %5024 = vperm.xlu0 %5023, %v4978
        %v5025 = vpop.permute.xlu0 %5024
        %5028 = vset.pattern.permute.xlu0 0
        %5029 = vperm.xlu0 %5028, %v4979
        %v5030 = vpop.permute.xlu0 %5029
        %5033 = vset.pattern.permute.xlu0 0
        %5034 = vperm.xlu0 %5033, %v4980
        %v5035 = vpop.permute.xlu0 %5034
        %5038 = vset.pattern.permute.xlu0 0
        %5039 = vperm.xlu0 %5038, %v4981
        %v5040 = vpop.permute.xlu0 %5039
        %5043 = vset.pattern.permute.xlu0 0
        %5044 = vperm.xlu0 %5043, %v4982
        %v5045 = vpop.permute.xlu0 %5044
        %5048 = vset.pattern.permute.xlu0 0
        %5049 = vperm.xlu0 %5048, %v4983
        %v5050 = vpop.permute.xlu0 %5049
        %5053 = vset.pattern.permute.xlu0 0
        %5054 = vperm.xlu0 %5053, %v4984
        %v5055 = vpop.permute.xlu0 %5054
        %5058 = vset.pattern.permute.xlu0 0
        %5059 = vperm.xlu0 %5058, %v4985
        %v5060 = vpop.permute.xlu0 %5059
        %5063 = vset.pattern.permute.xlu0 0
        %5064 = vperm.xlu0 %5063, %v4986
        %v5065 = vpop.permute.xlu0 %5064
        %v5067 = vrcp.pop %v4990
        %v5068 = vmul.f32 %v4990, %v5067
        %v5069 = vsub.f32 1.0, %v5068
        %v5070 = vmul.f32 %v5067, %v5069
        %v5071 = vadd.f32 %v5067, %v5070
        %vm5072 = vweird.f32 %v4990
        %vm5073 = vweird.f32 %v5067
        %vm5074 = vmor %vm5072, %vm5073
        %v5075 = vsel %vm5074, %v5067, %v5071
        %v5076 = vand.u32 2147483647, %v4990
        %vm5077 = vcmp.eq.f32.partialorder %v5076, 8.507059e+37
        %v5078 = vand.u32 %v4990, 2147483648
        %v5079 = vor.u32 1.1754944e-38, %v5078
        %v5080 = vsel %vm5077, %v5079, %v5075
        %v5081 = vmul.f32 %v4954, %v5080
        %v5082 = vrcp.pop %v4995
        %v5083 = vmul.f32 %v4995, %v5082
        %v5084 = vsub.f32 1.0, %v5083
        %v5085 = vmul.f32 %v5082, %v5084
        %v5086 = vadd.f32 %v5082, %v5085
        %vm5087 = vweird.f32 %v4995
        %vm5088 = vweird.f32 %v5082
        %vm5089 = vmor %vm5087, %vm5088
        %v5090 = vsel %vm5089, %v5082, %v5086
        %v5091 = vand.u32 2147483647, %v4995
        %vm5092 = vcmp.eq.f32.partialorder %v5091, 8.507059e+37
        %v5093 = vand.u32 %v4995, 2147483648
        %v5094 = vor.u32 1.1754944e-38, %v5093
        %v5095 = vsel %vm5092, %v5094, %v5090
        %v5096 = vmul.f32 %v4955, %v5095
        %v5097 = vrcp.pop %v5000
        %v5098 = vmul.f32 %v5000, %v5097
        %v5099 = vsub.f32 1.0, %v5098
        %v5100 = vmul.f32 %v5097, %v5099
        %v5101 = vadd.f32 %v5097, %v5100
        %vm5102 = vweird.f32 %v5000
        %vm5103 = vweird.f32 %v5097
        %vm5104 = vmor %vm5102, %vm5103
        %v5105 = vsel %vm5104, %v5097, %v5101
        %v5106 = vand.u32 2147483647, %v5000
        %vm5107 = vcmp.eq.f32.partialorder %v5106, 8.507059e+37
        %v5108 = vand.u32 %v5000, 2147483648
        %v5109 = vor.u32 1.1754944e-38, %v5108
        %v5110 = vsel %vm5107, %v5109, %v5105
        %v5111 = vmul.f32 %v4956, %v5110
        %v5112 = vrcp.pop %v5005
        %v5113 = vmul.f32 %v5005, %v5112
        %v5114 = vsub.f32 1.0, %v5113
        %v5115 = vmul.f32 %v5112, %v5114
        %v5116 = vadd.f32 %v5112, %v5115
        %vm5117 = vweird.f32 %v5005
        %vm5118 = vweird.f32 %v5112
        %vm5119 = vmor %vm5117, %vm5118
        %v5120 = vsel %vm5119, %v5112, %v5116
        %v5121 = vand.u32 2147483647, %v5005
        %vm5122 = vcmp.eq.f32.partialorder %v5121, 8.507059e+37
        %v5123 = vand.u32 %v5005, 2147483648
        %v5124 = vor.u32 1.1754944e-38, %v5123
        %v5125 = vsel %vm5122, %v5124, %v5120
        %v5126 = vmul.f32 %v4957, %v5125
        %v5127 = vrcp.pop %v5010
        %v5128 = vmul.f32 %v5010, %v5127
        %v5129 = vsub.f32 1.0, %v5128
        %v5130 = vmul.f32 %v5127, %v5129
        %v5131 = vadd.f32 %v5127, %v5130
        %vm5132 = vweird.f32 %v5010
        %vm5133 = vweird.f32 %v5127
        %vm5134 = vmor %vm5132, %vm5133
        %v5135 = vsel %vm5134, %v5127, %v5131
        %v5136 = vand.u32 2147483647, %v5010
        %vm5137 = vcmp.eq.f32.partialorder %v5136, 8.507059e+37
        %v5138 = vand.u32 %v5010, 2147483648
        %v5139 = vor.u32 1.1754944e-38, %v5138
        %v5140 = vsel %vm5137, %v5139, %v5135
        %v5141 = vmul.f32 %v4958, %v5140
        %v5142 = vrcp.pop %v5015
        %v5143 = vmul.f32 %v5015, %v5142
        %v5144 = vsub.f32 1.0, %v5143
        %v5145 = vmul.f32 %v5142, %v5144
        %v5146 = vadd.f32 %v5142, %v5145
        %vm5147 = vweird.f32 %v5015
        %vm5148 = vweird.f32 %v5142
        %vm5149 = vmor %vm5147, %vm5148
        %v5150 = vsel %vm5149, %v5142, %v5146
        %v5151 = vand.u32 2147483647, %v5015
        %vm5152 = vcmp.eq.f32.partialorder %v5151, 8.507059e+37
        %v5153 = vand.u32 %v5015, 2147483648
        %v5154 = vor.u32 1.1754944e-38, %v5153
        %v5155 = vsel %vm5152, %v5154, %v5150
        %v5156 = vmul.f32 %v4959, %v5155
        %v5157 = vrcp.pop %v5020
        %v5158 = vmul.f32 %v5020, %v5157
        %v5159 = vsub.f32 1.0, %v5158
        %v5160 = vmul.f32 %v5157, %v5159
        %v5161 = vadd.f32 %v5157, %v5160
        %vm5162 = vweird.f32 %v5020
        %vm5163 = vweird.f32 %v5157
        %vm5164 = vmor %vm5162, %vm5163
        %v5165 = vsel %vm5164, %v5157, %v5161
        %v5166 = vand.u32 2147483647, %v5020
        %vm5167 = vcmp.eq.f32.partialorder %v5166, 8.507059e+37
        %v5168 = vand.u32 %v5020, 2147483648
        %v5169 = vor.u32 1.1754944e-38, %v5168
        %v5170 = vsel %vm5167, %v5169, %v5165
        %v5171 = vmul.f32 %v4960, %v5170
        %v5172 = vrcp.pop %v5025
        %v5173 = vmul.f32 %v5025, %v5172
        %v5174 = vsub.f32 1.0, %v5173
        %v5175 = vmul.f32 %v5172, %v5174
        %v5176 = vadd.f32 %v5172, %v5175
        %vm5177 = vweird.f32 %v5025
        %vm5178 = vweird.f32 %v5172
        %vm5179 = vmor %vm5177, %vm5178
        %v5180 = vsel %vm5179, %v5172, %v5176
        %v5181 = vand.u32 2147483647, %v5025
        %vm5182 = vcmp.eq.f32.partialorder %v5181, 8.507059e+37
        %v5183 = vand.u32 %v5025, 2147483648
        %v5184 = vor.u32 1.1754944e-38, %v5183
        %v5185 = vsel %vm5182, %v5184, %v5180
        %v5186 = vmul.f32 %v4961, %v5185
        %v5187 = vrcp.pop %v5030
        %v5188 = vmul.f32 %v5030, %v5187
        %v5189 = vsub.f32 1.0, %v5188
        %v5190 = vmul.f32 %v5187, %v5189
        %v5191 = vadd.f32 %v5187, %v5190
        %vm5192 = vweird.f32 %v5030
        %vm5193 = vweird.f32 %v5187
        %vm5194 = vmor %vm5192, %vm5193
        %v5195 = vsel %vm5194, %v5187, %v5191
        %v5196 = vand.u32 2147483647, %v5030
        %vm5197 = vcmp.eq.f32.partialorder %v5196, 8.507059e+37
        %v5198 = vand.u32 %v5030, 2147483648
        %v5199 = vor.u32 1.1754944e-38, %v5198
        %v5200 = vsel %vm5197, %v5199, %v5195
        %v5201 = vmul.f32 %v4962, %v5200
        %v5202 = vrcp.pop %v5035
        %v5203 = vmul.f32 %v5035, %v5202
        %v5204 = vsub.f32 1.0, %v5203
        %v5205 = vmul.f32 %v5202, %v5204
        %v5206 = vadd.f32 %v5202, %v5205
        %vm5207 = vweird.f32 %v5035
        %vm5208 = vweird.f32 %v5202
        %vm5209 = vmor %vm5207, %vm5208
        %v5210 = vsel %vm5209, %v5202, %v5206
        %v5211 = vand.u32 2147483647, %v5035
        %vm5212 = vcmp.eq.f32.partialorder %v5211, 8.507059e+37
        %v5213 = vand.u32 %v5035, 2147483648
        %v5214 = vor.u32 1.1754944e-38, %v5213
        %v5215 = vsel %vm5212, %v5214, %v5210
        %v5216 = vmul.f32 %v4963, %v5215
        %v5217 = vrcp.pop %v5040
        %v5218 = vmul.f32 %v5040, %v5217
        %v5219 = vsub.f32 1.0, %v5218
        %v5220 = vmul.f32 %v5217, %v5219
        %v5221 = vadd.f32 %v5217, %v5220
        %vm5222 = vweird.f32 %v5040
        %vm5223 = vweird.f32 %v5217
        %vm5224 = vmor %vm5222, %vm5223
        %v5225 = vsel %vm5224, %v5217, %v5221
        %v5226 = vand.u32 2147483647, %v5040
        %vm5227 = vcmp.eq.f32.partialorder %v5226, 8.507059e+37
        %v5228 = vand.u32 %v5040, 2147483648
        %v5229 = vor.u32 1.1754944e-38, %v5228
        %v5230 = vsel %vm5227, %v5229, %v5225
        %v5231 = vmul.f32 %v4964, %v5230
        %v5232 = vrcp.pop %v5045
        %v5233 = vmul.f32 %v5045, %v5232
        %v5234 = vsub.f32 1.0, %v5233
        %v5235 = vmul.f32 %v5232, %v5234
        %v5236 = vadd.f32 %v5232, %v5235
        %vm5237 = vweird.f32 %v5045
        %vm5238 = vweird.f32 %v5232
        %vm5239 = vmor %vm5237, %vm5238
        %v5240 = vsel %vm5239, %v5232, %v5236
        %v5241 = vand.u32 2147483647, %v5045
        %vm5242 = vcmp.eq.f32.partialorder %v5241, 8.507059e+37
        %v5243 = vand.u32 %v5045, 2147483648
        %v5244 = vor.u32 1.1754944e-38, %v5243
        %v5245 = vsel %vm5242, %v5244, %v5240
        %v5246 = vmul.f32 %v4965, %v5245
        %v5247 = vrcp.pop %v5050
        %v5248 = vmul.f32 %v5050, %v5247
        %v5249 = vsub.f32 1.0, %v5248
        %v5250 = vmul.f32 %v5247, %v5249
        %v5251 = vadd.f32 %v5247, %v5250
        %vm5252 = vweird.f32 %v5050
        %vm5253 = vweird.f32 %v5247
        %vm5254 = vmor %vm5252, %vm5253
        %v5255 = vsel %vm5254, %v5247, %v5251
        %v5256 = vand.u32 2147483647, %v5050
        %vm5257 = vcmp.eq.f32.partialorder %v5256, 8.507059e+37
        %v5258 = vand.u32 %v5050, 2147483648
        %v5259 = vor.u32 1.1754944e-38, %v5258
        %v5260 = vsel %vm5257, %v5259, %v5255
        %v5261 = vmul.f32 %v4966, %v5260
        %v5262 = vrcp.pop %v5055
        %v5263 = vmul.f32 %v5055, %v5262
        %v5264 = vsub.f32 1.0, %v5263
        %v5265 = vmul.f32 %v5262, %v5264
        %v5266 = vadd.f32 %v5262, %v5265
        %vm5267 = vweird.f32 %v5055
        %vm5268 = vweird.f32 %v5262
        %vm5269 = vmor %vm5267, %vm5268
        %v5270 = vsel %vm5269, %v5262, %v5266
        %v5271 = vand.u32 2147483647, %v5055
        %vm5272 = vcmp.eq.f32.partialorder %v5271, 8.507059e+37
        %v5273 = vand.u32 %v5055, 2147483648
        %v5274 = vor.u32 1.1754944e-38, %v5273
        %v5275 = vsel %vm5272, %v5274, %v5270
        %v5276 = vmul.f32 %v4967, %v5275
        %v5277 = vrcp.pop %v5060
        %v5278 = vmul.f32 %v5060, %v5277
        %v5279 = vsub.f32 1.0, %v5278
        %v5280 = vmul.f32 %v5277, %v5279
        %v5281 = vadd.f32 %v5277, %v5280
        %vm5282 = vweird.f32 %v5060
        %vm5283 = vweird.f32 %v5277
        %vm5284 = vmor %vm5282, %vm5283
        %v5285 = vsel %vm5284, %v5277, %v5281
        %v5286 = vand.u32 2147483647, %v5060
        %vm5287 = vcmp.eq.f32.partialorder %v5286, 8.507059e+37
        %v5288 = vand.u32 %v5060, 2147483648
        %v5289 = vor.u32 1.1754944e-38, %v5288
        %v5290 = vsel %vm5287, %v5289, %v5285
        %v5291 = vmul.f32 %v4968, %v5290
        %v5292 = vrcp.pop %v5065
        %v5293 = vmul.f32 %v5065, %v5292
        %v5294 = vsub.f32 1.0, %v5293
        %v5295 = vmul.f32 %v5292, %v5294
        %v5296 = vadd.f32 %v5292, %v5295
        %vm5297 = vweird.f32 %v5065
        %vm5298 = vweird.f32 %v5292
        %vm5299 = vmor %vm5297, %vm5298
        %v5300 = vsel %vm5299, %v5292, %v5296
        %v5301 = vand.u32 2147483647, %v5065
        %vm5302 = vcmp.eq.f32.partialorder %v5301, 8.507059e+37
        %v5303 = vand.u32 %v5065, 2147483648
        %v5304 = vor.u32 1.1754944e-38, %v5303
        %v5305 = vsel %vm5302, %v5304, %v5300
        %v5306 = vmul.f32 %v4969, %v5305
        %s5307 = scalar_lea.vmem [#allocation4], 384
        %v5308 = vld [vmem:[%s5307] sm:$0xff]
        %v5309 = vld [vmem:[%s5307 + $0x8] sm:$0xff]
        %v5310 = vld [vmem:[%s5307 + $0x10] sm:$0xff]
        %v5311 = vld [vmem:[%s5307 + $0x18] sm:$0xff]
        %v5312 = vld [vmem:[%s5307 + $0x20] sm:$0xff]
        %v5313 = vld [vmem:[%s5307 + $0x28] sm:$0xff]
        %v5314 = vld [vmem:[%s5307 + $0x30] sm:$0xff]
        %v5315 = vld [vmem:[%s5307 + $0x38] sm:$0xff]
        %v5316 = vld [vmem:[%s5307 + $0x40] sm:$0xff]
        %v5317 = vld [vmem:[%s5307 + $0x48] sm:$0xff]
        %v5318 = vld [vmem:[%s5307 + $0x50] sm:$0xff]
        %v5319 = vld [vmem:[%s5307 + $0x58] sm:$0xff]
        %v5320 = vld [vmem:[%s5307 + $0x60] sm:$0xff]
        %v5321 = vld [vmem:[%s5307 + $0x68] sm:$0xff]
        %v5322 = vld [vmem:[%s5307 + $0x70] sm:$0xff]
        %v5323 = vld [vmem:[%s5307 + $0x78] sm:$0xff]
        %s5324 = scalar_lea.vmem [#allocation3], 384
        %v5325 = vld [vmem:[%s5324] sm:$0xff]
        %v5326 = vld [vmem:[%s5324 + $0x8] sm:$0xff]
        %v5327 = vld [vmem:[%s5324 + $0x10] sm:$0xff]
        %v5328 = vld [vmem:[%s5324 + $0x18] sm:$0xff]
        %v5329 = vld [vmem:[%s5324 + $0x20] sm:$0xff]
        %v5330 = vld [vmem:[%s5324 + $0x28] sm:$0xff]
        %v5331 = vld [vmem:[%s5324 + $0x30] sm:$0xff]
        %v5332 = vld [vmem:[%s5324 + $0x38] sm:$0xff]
        %v5333 = vld [vmem:[%s5324 + $0x40] sm:$0xff]
        %v5334 = vld [vmem:[%s5324 + $0x48] sm:$0xff]
        %v5335 = vld [vmem:[%s5324 + $0x50] sm:$0xff]
        %v5336 = vld [vmem:[%s5324 + $0x58] sm:$0xff]
        %v5337 = vld [vmem:[%s5324 + $0x60] sm:$0xff]
        %v5338 = vld [vmem:[%s5324 + $0x68] sm:$0xff]
        %v5339 = vld [vmem:[%s5324 + $0x70] sm:$0xff]
        %v5340 = vld [vmem:[%s5324 + $0x78] sm:$0xff]
        %5342 = vset.pattern.permute.xlu0 0
        %5343 = vperm.xlu0 %5342, %v5325
        %v5344 = vpop.permute.xlu0 %5343
        %5347 = vset.pattern.permute.xlu0 0
        %5348 = vperm.xlu0 %5347, %v5326
        %v5349 = vpop.permute.xlu0 %5348
        %5352 = vset.pattern.permute.xlu0 0
        %5353 = vperm.xlu0 %5352, %v5327
        %v5354 = vpop.permute.xlu0 %5353
        %5357 = vset.pattern.permute.xlu0 0
        %5358 = vperm.xlu0 %5357, %v5328
        %v5359 = vpop.permute.xlu0 %5358
        %5362 = vset.pattern.permute.xlu0 0
        %5363 = vperm.xlu0 %5362, %v5329
        %v5364 = vpop.permute.xlu0 %5363
        %5367 = vset.pattern.permute.xlu0 0
        %5368 = vperm.xlu0 %5367, %v5330
        %v5369 = vpop.permute.xlu0 %5368
        %5372 = vset.pattern.permute.xlu0 0
        %5373 = vperm.xlu0 %5372, %v5331
        %v5374 = vpop.permute.xlu0 %5373
        %5377 = vset.pattern.permute.xlu0 0
        %5378 = vperm.xlu0 %5377, %v5332
        %v5379 = vpop.permute.xlu0 %5378
        %5382 = vset.pattern.permute.xlu0 0
        %5383 = vperm.xlu0 %5382, %v5333
        %v5384 = vpop.permute.xlu0 %5383
        %5387 = vset.pattern.permute.xlu0 0
        %5388 = vperm.xlu0 %5387, %v5334
        %v5389 = vpop.permute.xlu0 %5388
        %5392 = vset.pattern.permute.xlu0 0
        %5393 = vperm.xlu0 %5392, %v5335
        %v5394 = vpop.permute.xlu0 %5393
        %5397 = vset.pattern.permute.xlu0 0
        %5398 = vperm.xlu0 %5397, %v5336
        %v5399 = vpop.permute.xlu0 %5398
        %5402 = vset.pattern.permute.xlu0 0
        %5403 = vperm.xlu0 %5402, %v5337
        %v5404 = vpop.permute.xlu0 %5403
        %5407 = vset.pattern.permute.xlu0 0
        %5408 = vperm.xlu0 %5407, %v5338
        %v5409 = vpop.permute.xlu0 %5408
        %5412 = vset.pattern.permute.xlu0 0
        %5413 = vperm.xlu0 %5412, %v5339
        %v5414 = vpop.permute.xlu0 %5413
        %5417 = vset.pattern.permute.xlu0 0
        %5418 = vperm.xlu0 %5417, %v5340
        %v5419 = vpop.permute.xlu0 %5418
        %v5421 = vrcp.pop %v5344
        %v5422 = vmul.f32 %v5344, %v5421
        %v5423 = vsub.f32 1.0, %v5422
        %v5424 = vmul.f32 %v5421, %v5423
        %v5425 = vadd.f32 %v5421, %v5424
        %vm5426 = vweird.f32 %v5344
        %vm5427 = vweird.f32 %v5421
        %vm5428 = vmor %vm5426, %vm5427
        %v5429 = vsel %vm5428, %v5421, %v5425
        %v5430 = vand.u32 2147483647, %v5344
        %vm5431 = vcmp.eq.f32.partialorder %v5430, 8.507059e+37
        %v5432 = vand.u32 %v5344, 2147483648
        %v5433 = vor.u32 1.1754944e-38, %v5432
        %v5434 = vsel %vm5431, %v5433, %v5429
        %v5435 = vmul.f32 %v5308, %v5434
        %v5436 = vrcp.pop %v5349
        %v5437 = vmul.f32 %v5349, %v5436
        %v5438 = vsub.f32 1.0, %v5437
        %v5439 = vmul.f32 %v5436, %v5438
        %v5440 = vadd.f32 %v5436, %v5439
        %vm5441 = vweird.f32 %v5349
        %vm5442 = vweird.f32 %v5436
        %vm5443 = vmor %vm5441, %vm5442
        %v5444 = vsel %vm5443, %v5436, %v5440
        %v5445 = vand.u32 2147483647, %v5349
        %vm5446 = vcmp.eq.f32.partialorder %v5445, 8.507059e+37
        %v5447 = vand.u32 %v5349, 2147483648
        %v5448 = vor.u32 1.1754944e-38, %v5447
        %v5449 = vsel %vm5446, %v5448, %v5444
        %v5450 = vmul.f32 %v5309, %v5449
        %v5451 = vrcp.pop %v5354
        %v5452 = vmul.f32 %v5354, %v5451
        %v5453 = vsub.f32 1.0, %v5452
        %v5454 = vmul.f32 %v5451, %v5453
        %v5455 = vadd.f32 %v5451, %v5454
        %vm5456 = vweird.f32 %v5354
        %vm5457 = vweird.f32 %v5451
        %vm5458 = vmor %vm5456, %vm5457
        %v5459 = vsel %vm5458, %v5451, %v5455
        %v5460 = vand.u32 2147483647, %v5354
        %vm5461 = vcmp.eq.f32.partialorder %v5460, 8.507059e+37
        %v5462 = vand.u32 %v5354, 2147483648
        %v5463 = vor.u32 1.1754944e-38, %v5462
        %v5464 = vsel %vm5461, %v5463, %v5459
        %v5465 = vmul.f32 %v5310, %v5464
        %v5466 = vrcp.pop %v5359
        %v5467 = vmul.f32 %v5359, %v5466
        %v5468 = vsub.f32 1.0, %v5467
        %v5469 = vmul.f32 %v5466, %v5468
        %v5470 = vadd.f32 %v5466, %v5469
        %vm5471 = vweird.f32 %v5359
        %vm5472 = vweird.f32 %v5466
        %vm5473 = vmor %vm5471, %vm5472
        %v5474 = vsel %vm5473, %v5466, %v5470
        %v5475 = vand.u32 2147483647, %v5359
        %vm5476 = vcmp.eq.f32.partialorder %v5475, 8.507059e+37
        %v5477 = vand.u32 %v5359, 2147483648
        %v5478 = vor.u32 1.1754944e-38, %v5477
        %v5479 = vsel %vm5476, %v5478, %v5474
        %v5480 = vmul.f32 %v5311, %v5479
        %v5481 = vrcp.pop %v5364
        %v5482 = vmul.f32 %v5364, %v5481
        %v5483 = vsub.f32 1.0, %v5482
        %v5484 = vmul.f32 %v5481, %v5483
        %v5485 = vadd.f32 %v5481, %v5484
        %vm5486 = vweird.f32 %v5364
        %vm5487 = vweird.f32 %v5481
        %vm5488 = vmor %vm5486, %vm5487
        %v5489 = vsel %vm5488, %v5481, %v5485
        %v5490 = vand.u32 2147483647, %v5364
        %vm5491 = vcmp.eq.f32.partialorder %v5490, 8.507059e+37
        %v5492 = vand.u32 %v5364, 2147483648
        %v5493 = vor.u32 1.1754944e-38, %v5492
        %v5494 = vsel %vm5491, %v5493, %v5489
        %v5495 = vmul.f32 %v5312, %v5494
        %v5496 = vrcp.pop %v5369
        %v5497 = vmul.f32 %v5369, %v5496
        %v5498 = vsub.f32 1.0, %v5497
        %v5499 = vmul.f32 %v5496, %v5498
        %v5500 = vadd.f32 %v5496, %v5499
        %vm5501 = vweird.f32 %v5369
        %vm5502 = vweird.f32 %v5496
        %vm5503 = vmor %vm5501, %vm5502
        %v5504 = vsel %vm5503, %v5496, %v5500
        %v5505 = vand.u32 2147483647, %v5369
        %vm5506 = vcmp.eq.f32.partialorder %v5505, 8.507059e+37
        %v5507 = vand.u32 %v5369, 2147483648
        %v5508 = vor.u32 1.1754944e-38, %v5507
        %v5509 = vsel %vm5506, %v5508, %v5504
        %v5510 = vmul.f32 %v5313, %v5509
        %v5511 = vrcp.pop %v5374
        %v5512 = vmul.f32 %v5374, %v5511
        %v5513 = vsub.f32 1.0, %v5512
        %v5514 = vmul.f32 %v5511, %v5513
        %v5515 = vadd.f32 %v5511, %v5514
        %vm5516 = vweird.f32 %v5374
        %vm5517 = vweird.f32 %v5511
        %vm5518 = vmor %vm5516, %vm5517
        %v5519 = vsel %vm5518, %v5511, %v5515
        %v5520 = vand.u32 2147483647, %v5374
        %vm5521 = vcmp.eq.f32.partialorder %v5520, 8.507059e+37
        %v5522 = vand.u32 %v5374, 2147483648
        %v5523 = vor.u32 1.1754944e-38, %v5522
        %v5524 = vsel %vm5521, %v5523, %v5519
        %v5525 = vmul.f32 %v5314, %v5524
        %v5526 = vrcp.pop %v5379
        %v5527 = vmul.f32 %v5379, %v5526
        %v5528 = vsub.f32 1.0, %v5527
        %v5529 = vmul.f32 %v5526, %v5528
        %v5530 = vadd.f32 %v5526, %v5529
        %vm5531 = vweird.f32 %v5379
        %vm5532 = vweird.f32 %v5526
        %vm5533 = vmor %vm5531, %vm5532
        %v5534 = vsel %vm5533, %v5526, %v5530
        %v5535 = vand.u32 2147483647, %v5379
        %vm5536 = vcmp.eq.f32.partialorder %v5535, 8.507059e+37
        %v5537 = vand.u32 %v5379, 2147483648
        %v5538 = vor.u32 1.1754944e-38, %v5537
        %v5539 = vsel %vm5536, %v5538, %v5534
        %v5540 = vmul.f32 %v5315, %v5539
        %v5541 = vrcp.pop %v5384
        %v5542 = vmul.f32 %v5384, %v5541
        %v5543 = vsub.f32 1.0, %v5542
        %v5544 = vmul.f32 %v5541, %v5543
        %v5545 = vadd.f32 %v5541, %v5544
        %vm5546 = vweird.f32 %v5384
        %vm5547 = vweird.f32 %v5541
        %vm5548 = vmor %vm5546, %vm5547
        %v5549 = vsel %vm5548, %v5541, %v5545
        %v5550 = vand.u32 2147483647, %v5384
        %vm5551 = vcmp.eq.f32.partialorder %v5550, 8.507059e+37
        %v5552 = vand.u32 %v5384, 2147483648
        %v5553 = vor.u32 1.1754944e-38, %v5552
        %v5554 = vsel %vm5551, %v5553, %v5549
        %v5555 = vmul.f32 %v5316, %v5554
        %v5556 = vrcp.pop %v5389
        %v5557 = vmul.f32 %v5389, %v5556
        %v5558 = vsub.f32 1.0, %v5557
        %v5559 = vmul.f32 %v5556, %v5558
        %v5560 = vadd.f32 %v5556, %v5559
        %vm5561 = vweird.f32 %v5389
        %vm5562 = vweird.f32 %v5556
        %vm5563 = vmor %vm5561, %vm5562
        %v5564 = vsel %vm5563, %v5556, %v5560
        %v5565 = vand.u32 2147483647, %v5389
        %vm5566 = vcmp.eq.f32.partialorder %v5565, 8.507059e+37
        %v5567 = vand.u32 %v5389, 2147483648
        %v5568 = vor.u32 1.1754944e-38, %v5567
        %v5569 = vsel %vm5566, %v5568, %v5564
        %v5570 = vmul.f32 %v5317, %v5569
        %v5571 = vrcp.pop %v5394
        %v5572 = vmul.f32 %v5394, %v5571
        %v5573 = vsub.f32 1.0, %v5572
        %v5574 = vmul.f32 %v5571, %v5573
        %v5575 = vadd.f32 %v5571, %v5574
        %vm5576 = vweird.f32 %v5394
        %vm5577 = vweird.f32 %v5571
        %vm5578 = vmor %vm5576, %vm5577
        %v5579 = vsel %vm5578, %v5571, %v5575
        %v5580 = vand.u32 2147483647, %v5394
        %vm5581 = vcmp.eq.f32.partialorder %v5580, 8.507059e+37
        %v5582 = vand.u32 %v5394, 2147483648
        %v5583 = vor.u32 1.1754944e-38, %v5582
        %v5584 = vsel %vm5581, %v5583, %v5579
        %v5585 = vmul.f32 %v5318, %v5584
        %v5586 = vrcp.pop %v5399
        %v5587 = vmul.f32 %v5399, %v5586
        %v5588 = vsub.f32 1.0, %v5587
        %v5589 = vmul.f32 %v5586, %v5588
        %v5590 = vadd.f32 %v5586, %v5589
        %vm5591 = vweird.f32 %v5399
        %vm5592 = vweird.f32 %v5586
        %vm5593 = vmor %vm5591, %vm5592
        %v5594 = vsel %vm5593, %v5586, %v5590
        %v5595 = vand.u32 2147483647, %v5399
        %vm5596 = vcmp.eq.f32.partialorder %v5595, 8.507059e+37
        %v5597 = vand.u32 %v5399, 2147483648
        %v5598 = vor.u32 1.1754944e-38, %v5597
        %v5599 = vsel %vm5596, %v5598, %v5594
        %v5600 = vmul.f32 %v5319, %v5599
        %v5601 = vrcp.pop %v5404
        %v5602 = vmul.f32 %v5404, %v5601
        %v5603 = vsub.f32 1.0, %v5602
        %v5604 = vmul.f32 %v5601, %v5603
        %v5605 = vadd.f32 %v5601, %v5604
        %vm5606 = vweird.f32 %v5404
        %vm5607 = vweird.f32 %v5601
        %vm5608 = vmor %vm5606, %vm5607
        %v5609 = vsel %vm5608, %v5601, %v5605
        %v5610 = vand.u32 2147483647, %v5404
        %vm5611 = vcmp.eq.f32.partialorder %v5610, 8.507059e+37
        %v5612 = vand.u32 %v5404, 2147483648
        %v5613 = vor.u32 1.1754944e-38, %v5612
        %v5614 = vsel %vm5611, %v5613, %v5609
        %v5615 = vmul.f32 %v5320, %v5614
        %v5616 = vrcp.pop %v5409
        %v5617 = vmul.f32 %v5409, %v5616
        %v5618 = vsub.f32 1.0, %v5617
        %v5619 = vmul.f32 %v5616, %v5618
        %v5620 = vadd.f32 %v5616, %v5619
        %vm5621 = vweird.f32 %v5409
        %vm5622 = vweird.f32 %v5616
        %vm5623 = vmor %vm5621, %vm5622
        %v5624 = vsel %vm5623, %v5616, %v5620
        %v5625 = vand.u32 2147483647, %v5409
        %vm5626 = vcmp.eq.f32.partialorder %v5625, 8.507059e+37
        %v5627 = vand.u32 %v5409, 2147483648
        %v5628 = vor.u32 1.1754944e-38, %v5627
        %v5629 = vsel %vm5626, %v5628, %v5624
        %v5630 = vmul.f32 %v5321, %v5629
        %v5631 = vrcp.pop %v5414
        %v5632 = vmul.f32 %v5414, %v5631
        %v5633 = vsub.f32 1.0, %v5632
        %v5634 = vmul.f32 %v5631, %v5633
        %v5635 = vadd.f32 %v5631, %v5634
        %vm5636 = vweird.f32 %v5414
        %vm5637 = vweird.f32 %v5631
        %vm5638 = vmor %vm5636, %vm5637
        %v5639 = vsel %vm5638, %v5631, %v5635
        %v5640 = vand.u32 2147483647, %v5414
        %vm5641 = vcmp.eq.f32.partialorder %v5640, 8.507059e+37
        %v5642 = vand.u32 %v5414, 2147483648
        %v5643 = vor.u32 1.1754944e-38, %v5642
        %v5644 = vsel %vm5641, %v5643, %v5639
        %v5645 = vmul.f32 %v5322, %v5644
        %v5646 = vrcp.pop %v5419
        %v5647 = vmul.f32 %v5419, %v5646
        %v5648 = vsub.f32 1.0, %v5647
        %v5649 = vmul.f32 %v5646, %v5648
        %v5650 = vadd.f32 %v5646, %v5649
        %vm5651 = vweird.f32 %v5419
        %vm5652 = vweird.f32 %v5646
        %vm5653 = vmor %vm5651, %vm5652
        %v5654 = vsel %vm5653, %v5646, %v5650
        %v5655 = vand.u32 2147483647, %v5419
        %vm5656 = vcmp.eq.f32.partialorder %v5655, 8.507059e+37
        %v5657 = vand.u32 %v5419, 2147483648
        %v5658 = vor.u32 1.1754944e-38, %v5657
        %v5659 = vsel %vm5656, %v5658, %v5654
        %v5660 = vmul.f32 %v5323, %v5659
        %5677 = vrot.lane.b32.xlu0 %v4727, 8
        %v5678 = vpop.permute.xlu0 %5677
        %5679 = vrot.lane.b32.xlu0 %v4742, 8
        %v5680 = vpop.permute.xlu0 %5679
        %5681 = vrot.lane.b32.xlu0 %v4757, 8
        %v5682 = vpop.permute.xlu0 %5681
        %5683 = vrot.lane.b32.xlu0 %v4772, 8
        %v5684 = vpop.permute.xlu0 %5683
        %5685 = vrot.lane.b32.xlu0 %v4787, 8
        %v5686 = vpop.permute.xlu0 %5685
        %5687 = vrot.lane.b32.xlu0 %v4802, 8
        %v5688 = vpop.permute.xlu0 %5687
        %5689 = vrot.lane.b32.xlu0 %v4817, 8
        %v5690 = vpop.permute.xlu0 %5689
        %5691 = vrot.lane.b32.xlu0 %v4832, 8
        %v5692 = vpop.permute.xlu0 %5691
        %5693 = vrot.lane.b32.xlu0 %v4847, 8
        %v5694 = vpop.permute.xlu0 %5693
        %5695 = vrot.lane.b32.xlu0 %v4862, 8
        %v5696 = vpop.permute.xlu0 %5695
        %5697 = vrot.lane.b32.xlu0 %v4877, 8
        %v5698 = vpop.permute.xlu0 %5697
        %5699 = vrot.lane.b32.xlu0 %v4892, 8
        %v5700 = vpop.permute.xlu0 %5699
        %5701 = vrot.lane.b32.xlu0 %v4907, 8
        %v5702 = vpop.permute.xlu0 %5701
        %5703 = vrot.lane.b32.xlu0 %v4922, 8
        %v5704 = vpop.permute.xlu0 %5703
        %5705 = vrot.lane.b32.xlu0 %v4937, 8
        %v5706 = vpop.permute.xlu0 %5705
        %5707 = vrot.lane.b32.xlu0 %v4952, 8
        %v5708 = vpop.permute.xlu0 %5707
        %5741 = vrot.lane.b32.xlu0 %v5081, 16
        %v5742 = vpop.permute.xlu0 %5741
        %5743 = vrot.lane.b32.xlu0 %v5096, 16
        %v5744 = vpop.permute.xlu0 %5743
        %5745 = vrot.lane.b32.xlu0 %v5111, 16
        %v5746 = vpop.permute.xlu0 %5745
        %5747 = vrot.lane.b32.xlu0 %v5126, 16
        %v5748 = vpop.permute.xlu0 %5747
        %5749 = vrot.lane.b32.xlu0 %v5141, 16
        %v5750 = vpop.permute.xlu0 %5749
        %5751 = vrot.lane.b32.xlu0 %v5156, 16
        %v5752 = vpop.permute.xlu0 %5751
        %5753 = vrot.lane.b32.xlu0 %v5171, 16
        %v5754 = vpop.permute.xlu0 %5753
        %5755 = vrot.lane.b32.xlu0 %v5186, 16
        %v5756 = vpop.permute.xlu0 %5755
        %5757 = vrot.lane.b32.xlu0 %v5201, 16
        %v5758 = vpop.permute.xlu0 %5757
        %5759 = vrot.lane.b32.xlu0 %v5216, 16
        %v5760 = vpop.permute.xlu0 %5759
        %5761 = vrot.lane.b32.xlu0 %v5231, 16
        %v5762 = vpop.permute.xlu0 %5761
        %5763 = vrot.lane.b32.xlu0 %v5246, 16
        %v5764 = vpop.permute.xlu0 %5763
        %5765 = vrot.lane.b32.xlu0 %v5261, 16
        %v5766 = vpop.permute.xlu0 %5765
        %5767 = vrot.lane.b32.xlu0 %v5276, 16
        %v5768 = vpop.permute.xlu0 %5767
        %5769 = vrot.lane.b32.xlu0 %v5291, 16
        %v5770 = vpop.permute.xlu0 %5769
        %5771 = vrot.lane.b32.xlu0 %v5306, 16
        %v5772 = vpop.permute.xlu0 %5771
        %5805 = vrot.lane.b32.xlu0 %v5435, 24
        %v5806 = vpop.permute.xlu0 %5805
        %5807 = vrot.lane.b32.xlu0 %v5450, 24
        %v5808 = vpop.permute.xlu0 %5807
        %5809 = vrot.lane.b32.xlu0 %v5465, 24
        %v5810 = vpop.permute.xlu0 %5809
        %5811 = vrot.lane.b32.xlu0 %v5480, 24
        %v5812 = vpop.permute.xlu0 %5811
        %5813 = vrot.lane.b32.xlu0 %v5495, 24
        %v5814 = vpop.permute.xlu0 %5813
        %5815 = vrot.lane.b32.xlu0 %v5510, 24
        %v5816 = vpop.permute.xlu0 %5815
        %5817 = vrot.lane.b32.xlu0 %v5525, 24
        %v5818 = vpop.permute.xlu0 %5817
        %5819 = vrot.lane.b32.xlu0 %v5540, 24
        %v5820 = vpop.permute.xlu0 %5819
        %5821 = vrot.lane.b32.xlu0 %v5555, 24
        %v5822 = vpop.permute.xlu0 %5821
        %5823 = vrot.lane.b32.xlu0 %v5570, 24
        %v5824 = vpop.permute.xlu0 %5823
        %5825 = vrot.lane.b32.xlu0 %v5585, 24
        %v5826 = vpop.permute.xlu0 %5825
        %5827 = vrot.lane.b32.xlu0 %v5600, 24
        %v5828 = vpop.permute.xlu0 %5827
        %5829 = vrot.lane.b32.xlu0 %v5615, 24
        %v5830 = vpop.permute.xlu0 %5829
        %5831 = vrot.lane.b32.xlu0 %v5630, 24
        %v5832 = vpop.permute.xlu0 %5831
        %5833 = vrot.lane.b32.xlu0 %v5645, 24
        %v5834 = vpop.permute.xlu0 %5833
        %5835 = vrot.lane.b32.xlu0 %v5660, 24
        %v5836 = vpop.permute.xlu0 %5835
        %vm5853 = vcmask 64512
        %v5854 = vsel %vm5853, %v4373, %v5678
        %v5855 = vsel %vm5853, %v4388, %v5680
        %v5856 = vsel %vm5853, %v4403, %v5682
        %v5857 = vsel %vm5853, %v4418, %v5684
        %v5858 = vsel %vm5853, %v4433, %v5686
        %v5859 = vsel %vm5853, %v4448, %v5688
        %v5860 = vsel %vm5853, %v4463, %v5690
        %v5861 = vsel %vm5853, %v4478, %v5692
        %v5862 = vsel %vm5853, %v4493, %v5694
        %v5863 = vsel %vm5853, %v4508, %v5696
        %v5864 = vsel %vm5853, %v4523, %v5698
        %v5865 = vsel %vm5853, %v4538, %v5700
        %v5866 = vsel %vm5853, %v4553, %v5702
        %v5867 = vsel %vm5853, %v4568, %v5704
        %v5868 = vsel %vm5853, %v4583, %v5706
        %v5869 = vsel %vm5853, %v4598, %v5708
        %vm5870 = vcmask 130048
        %v5871 = vsel %vm5870, %v5854, %v5742
        %v5872 = vsel %vm5870, %v5855, %v5744
        %v5873 = vsel %vm5870, %v5856, %v5746
        %v5874 = vsel %vm5870, %v5857, %v5748
        %v5875 = vsel %vm5870, %v5858, %v5750
        %v5876 = vsel %vm5870, %v5859, %v5752
        %v5877 = vsel %vm5870, %v5860, %v5754
        %v5878 = vsel %vm5870, %v5861, %v5756
        %v5879 = vsel %vm5870, %v5862, %v5758
        %v5880 = vsel %vm5870, %v5863, %v5760
        %v5881 = vsel %vm5870, %v5864, %v5762
        %v5882 = vsel %vm5870, %v5865, %v5764
        %v5883 = vsel %vm5870, %v5866, %v5766
        %v5884 = vsel %vm5870, %v5867, %v5768
        %v5885 = vsel %vm5870, %v5868, %v5770
        %v5886 = vsel %vm5870, %v5869, %v5772
        %vm5887 = vcmask 195584
        %v5888 = vsel %vm5887, %v5871, %v5806
        %v5889 = vsel %vm5887, %v5872, %v5808
        %v5890 = vsel %vm5887, %v5873, %v5810
        %v5891 = vsel %vm5887, %v5874, %v5812
        %v5892 = vsel %vm5887, %v5875, %v5814
        %v5893 = vsel %vm5887, %v5876, %v5816
        %v5894 = vsel %vm5887, %v5877, %v5818
        %v5895 = vsel %vm5887, %v5878, %v5820
        %v5896 = vsel %vm5887, %v5879, %v5822
        %v5897 = vsel %vm5887, %v5880, %v5824
        %v5898 = vsel %vm5887, %v5881, %v5826
        %v5899 = vsel %vm5887, %v5882, %v5828
        %v5900 = vsel %vm5887, %v5883, %v5830
        %v5901 = vsel %vm5887, %v5884, %v5832
        %v5902 = vsel %vm5887, %v5885, %v5834
        %v5903 = vsel %vm5887, %v5886, %v5836
        %v5904 = vpack.c.bf16 %v5889, %v5888
        %v5905 = vpack.c.bf16 %v5891, %v5890
        %v5906 = vpack.c.bf16 %v5893, %v5892
        %v5907 = vpack.c.bf16 %v5895, %v5894
        %v5908 = vpack.c.bf16 %v5897, %v5896
        %v5909 = vpack.c.bf16 %v5899, %v5898
        %v5910 = vpack.c.bf16 %v5901, %v5900
        %v5911 = vpack.c.bf16 %v5903, %v5902
        %v5912 = vld [vmem:[%s7] sm:$0xf]
        %v5913 = vld [vmem:[%s7 + $0x4] sm:$0xf]
        %v5914 = vld [vmem:[%s7 + $0x8] sm:$0xf]
        %v5915 = vld [vmem:[%s7 + $0xc] sm:$0xf]
        %v5916 = vld [vmem:[%s8] sm:$0x1]
        %v5918 = vperm.slane %v5916, 0
        %v5924 = vunpack.c.l.b16 %v5912
        %v5925 = vunpack.c.l.b16 %v5913
        %v5926 = vunpack.c.l.b16 %v5914
        %v5927 = vunpack.c.l.b16 %v5915
        %v5928 = vpack.c.b16 %v5925, %v5924
        %v5929 = vpack.c.b16 %v5927, %v5926
        %vm5932 = vcmask 261120
        %v5934 = vsel %vm5932, %v5904, 0
        %v5937 = vsel %vm5932, %v5905, 0
        %v5940 = vsel %vm5932, %v5906, 0
        %v5943 = vsel %vm5932, %v5907, 0
        %v5946 = vsel %vm5932, %v5908, 0
        %v5949 = vsel %vm5932, %v5909, 0
        %v5952 = vsel %vm5932, %v5910, 0
        %v5955 = vsel %vm5932, %v5911, 0
        %5957 = vmatpush.bf16.msra.mxu0 0
        %5958 = vmatpush.bf16.msra.mxu0 0
        %5959 = vmatpush.bf16.msra.mxu0 0
        %5960 = vmatpush.bf16.msra.mxu0 0
        %5961 = vmatpush.bf16.msra.mxu0 0
        %5962 = vmatpush.bf16.msra.mxu0 0
        %5963 = vmatpush.bf16.msra.mxu0 %v5929
        %5964 = vmatpush.bf16.msra.mxu0 %v5928
        %5965 = vmatmul.bf16.gmra.mxu0 %v5934
        %v5966 = vpop.f32.mrf.mxu0
        %v5967 = vadd.f32 %v5918, %v5966
        %v5968 = vpop.f32.mrf.mxu0
        %v5969 = vadd.f32 %v5918, %v5968
        %5970 = vmatmul.bf16.gmra.mxu0 %v5937
        %v5971 = vpop.f32.mrf.mxu0
        %v5972 = vadd.f32 %v5918, %v5971
        %v5973 = vpop.f32.mrf.mxu0
        %v5974 = vadd.f32 %v5918, %v5973
        %5975 = vmatmul.bf16.gmra.mxu0 %v5940
        %v5976 = vpop.f32.mrf.mxu0
        %v5977 = vadd.f32 %v5918, %v5976
        %v5978 = vpop.f32.mrf.mxu0
        %v5979 = vadd.f32 %v5918, %v5978
        %5980 = vmatmul.bf16.gmra.mxu0 %v5943
        %v5981 = vpop.f32.mrf.mxu0
        %v5982 = vadd.f32 %v5918, %v5981
        %v5983 = vpop.f32.mrf.mxu0
        %v5984 = vadd.f32 %v5918, %v5983
        %5985 = vmatmul.bf16.gmra.mxu0 %v5946
        %v5986 = vpop.f32.mrf.mxu0
        %v5987 = vadd.f32 %v5918, %v5986
        %v5988 = vpop.f32.mrf.mxu0
        %v5989 = vadd.f32 %v5918, %v5988
        %5990 = vmatmul.bf16.gmra.mxu0 %v5949
        %v5991 = vpop.f32.mrf.mxu0
        %v5992 = vadd.f32 %v5918, %v5991
        %v5993 = vpop.f32.mrf.mxu0
        %v5994 = vadd.f32 %v5918, %v5993
        %5995 = vmatmul.bf16.gmra.mxu0 %v5952
        %v5996 = vpop.f32.mrf.mxu0
        %v5997 = vadd.f32 %v5918, %v5996
        %v5998 = vpop.f32.mrf.mxu0
        %v5999 = vadd.f32 %v5918, %v5998
        %6000 = vmatmul.bf16.gmra.mxu0 %v5955
        %v6001 = vpop.f32.mrf.mxu0
        %v6002 = vadd.f32 %v5918, %v6001
        %v6003 = vpop.f32.mrf.mxu0
        %v6004 = vadd.f32 %v5918, %v6003
        %6005 = vdwg.mxu0
        %v6006 = vld [vmem:[%s859] sm:$0xf]
        %v6007 = vld [vmem:[%s859 + $0x4] sm:$0xf]
        %v6008 = vld [vmem:[%s859 + $0x8] sm:$0xf]
        %v6009 = vld [vmem:[%s859 + $0xc] sm:$0xf]
        %v6010 = vld [vmem:[%s859 + $0x10] sm:$0xf]
        %v6011 = vld [vmem:[%s859 + $0x14] sm:$0xf]
        %v6012 = vld [vmem:[%s859 + $0x18] sm:$0xf]
        %v6013 = vld [vmem:[%s859 + $0x1c] sm:$0xf]
        %v6014 = vld [vmem:[%s859 + $0x20] sm:$0xf]
        %v6015 = vld [vmem:[%s859 + $0x24] sm:$0xf]
        %v6016 = vld [vmem:[%s859 + $0x28] sm:$0xf]
        %v6017 = vld [vmem:[%s859 + $0x2c] sm:$0xf]
        %v6018 = vld [vmem:[%s859 + $0x30] sm:$0xf]
        %v6019 = vld [vmem:[%s859 + $0x34] sm:$0xf]
        %v6020 = vld [vmem:[%s859 + $0x38] sm:$0xf]
        %v6021 = vld [vmem:[%s859 + $0x3c] sm:$0xf]
        %v6022 = vunpack.c.l.bf16 %v6006
        %v6023 = vunpack.c.l.bf16 %v6007
        %v6024 = vunpack.c.l.bf16 %v6008
        %v6025 = vunpack.c.l.bf16 %v6009
        %v6026 = vunpack.c.l.bf16 %v6010
        %v6027 = vunpack.c.l.bf16 %v6011
        %v6028 = vunpack.c.l.bf16 %v6012
        %v6029 = vunpack.c.l.bf16 %v6013
        %v6030 = vunpack.c.l.bf16 %v6014
        %v6031 = vunpack.c.l.bf16 %v6015
        %v6032 = vunpack.c.l.bf16 %v6016
        %v6033 = vunpack.c.l.bf16 %v6017
        %v6034 = vunpack.c.l.bf16 %v6018
        %v6035 = vunpack.c.l.bf16 %v6019
        %v6036 = vunpack.c.l.bf16 %v6020
        %v6037 = vunpack.c.l.bf16 %v6021
        %v6038 = vadd.f32 %v5967, %v6022
        %v6039 = vadd.f32 %v5969, %v6023
        %v6040 = vadd.f32 %v5972, %v6024
        %v6041 = vadd.f32 %v5974, %v6025
        %v6042 = vadd.f32 %v5977, %v6026
        %v6043 = vadd.f32 %v5979, %v6027
        %v6044 = vadd.f32 %v5982, %v6028
        %v6045 = vadd.f32 %v5984, %v6029
        %v6046 = vadd.f32 %v5987, %v6030
        %v6047 = vadd.f32 %v5989, %v6031
        %v6048 = vadd.f32 %v5992, %v6032
        %v6049 = vadd.f32 %v5994, %v6033
        %v6050 = vadd.f32 %v5997, %v6034
        %v6051 = vadd.f32 %v5999, %v6035
        %v6052 = vadd.f32 %v6002, %v6036
        %v6053 = vadd.f32 %v6004, %v6037
        %v6054 = vsel %vm5932, %v6038, 0.0
        %6055 = vadd.xlane.f32.xlu0 %v6054
        %v6056 = vpop.xlane.xlu0 %6055
        %v6057 = vsel %vm5932, %v6039, 0.0
        %6058 = vadd.xlane.f32.xlu0 %v6057
        %v6059 = vpop.xlane.xlu0 %6058
        %v6060 = vsel %vm5932, %v6040, 0.0
        %6061 = vadd.xlane.f32.xlu0 %v6060
        %v6062 = vpop.xlane.xlu0 %6061
        %v6063 = vsel %vm5932, %v6041, 0.0
        %6064 = vadd.xlane.f32.xlu0 %v6063
        %v6065 = vpop.xlane.xlu0 %6064
        %v6066 = vsel %vm5932, %v6042, 0.0
        %6067 = vadd.xlane.f32.xlu0 %v6066
        %v6068 = vpop.xlane.xlu0 %6067
        %v6069 = vsel %vm5932, %v6043, 0.0
        %6070 = vadd.xlane.f32.xlu0 %v6069
        %v6071 = vpop.xlane.xlu0 %6070
        %v6072 = vsel %vm5932, %v6044, 0.0
        %6073 = vadd.xlane.f32.xlu0 %v6072
        %v6074 = vpop.xlane.xlu0 %6073
        %v6075 = vsel %vm5932, %v6045, 0.0
        %6076 = vadd.xlane.f32.xlu0 %v6075
        %v6077 = vpop.xlane.xlu0 %6076
        %v6078 = vsel %vm5932, %v6046, 0.0
        %6079 = vadd.xlane.f32.xlu0 %v6078
        %v6080 = vpop.xlane.xlu0 %6079
        %v6081 = vsel %vm5932, %v6047, 0.0
        %6082 = vadd.xlane.f32.xlu0 %v6081
        %v6083 = vpop.xlane.xlu0 %6082
        %v6084 = vsel %vm5932, %v6048, 0.0
        %6085 = vadd.xlane.f32.xlu0 %v6084
        %v6086 = vpop.xlane.xlu0 %6085
        %v6087 = vsel %vm5932, %v6049, 0.0
        %6088 = vadd.xlane.f32.xlu0 %v6087
        %v6089 = vpop.xlane.xlu0 %6088
        %v6090 = vsel %vm5932, %v6050, 0.0
        %6091 = vadd.xlane.f32.xlu0 %v6090
        %v6092 = vpop.xlane.xlu0 %6091
        %v6093 = vsel %vm5932, %v6051, 0.0
        %6094 = vadd.xlane.f32.xlu0 %v6093
        %v6095 = vpop.xlane.xlu0 %6094
        %v6096 = vsel %vm5932, %v6052, 0.0
        %6097 = vadd.xlane.f32.xlu0 %v6096
        %v6098 = vpop.xlane.xlu0 %6097
        %v6099 = vsel %vm5932, %v6053, 0.0
        %6100 = vadd.xlane.f32.xlu0 %v6099
        %v6101 = vpop.xlane.xlu0 %6100
        %v6102 = vrcp.pop 32.0
        %v6103 = vmul.f32 32.0, %v6102
        %v6104 = vsub.f32 1.0, %v6103
        %v6105 = vmul.f32 %v6102, %v6104
        %v6106 = vadd.f32 %v6102, %v6105
        %vm6107 = vweird.f32 %v6102
        %v6108 = vsel %vm6107, %v6102, %v6106
        %v6109 = vmul.f32 %v6056, %v6108
        %v6110 = vmul.f32 %v6059, %v6108
        %v6111 = vmul.f32 %v6062, %v6108
        %v6112 = vmul.f32 %v6065, %v6108
        %v6113 = vmul.f32 %v6068, %v6108
        %v6114 = vmul.f32 %v6071, %v6108
        %v6115 = vmul.f32 %v6074, %v6108
        %v6116 = vmul.f32 %v6077, %v6108
        %v6117 = vmul.f32 %v6080, %v6108
        %v6118 = vmul.f32 %v6083, %v6108
        %v6119 = vmul.f32 %v6086, %v6108
        %v6120 = vmul.f32 %v6089, %v6108
        %v6121 = vmul.f32 %v6092, %v6108
        %v6122 = vmul.f32 %v6095, %v6108
        %v6123 = vmul.f32 %v6098, %v6108
        %v6124 = vmul.f32 %v6101, %v6108
        %v6125 = vsub.f32 %v6038, %v6109
        %v6126 = vsub.f32 %v6039, %v6110
        %v6127 = vsub.f32 %v6040, %v6111
        %v6128 = vsub.f32 %v6041, %v6112
        %v6129 = vsub.f32 %v6042, %v6113
        %v6130 = vsub.f32 %v6043, %v6114
        %v6131 = vsub.f32 %v6044, %v6115
        %v6132 = vsub.f32 %v6045, %v6116
        %v6133 = vsub.f32 %v6046, %v6117
        %v6134 = vsub.f32 %v6047, %v6118
        %v6135 = vsub.f32 %v6048, %v6119
        %v6136 = vsub.f32 %v6049, %v6120
        %v6137 = vsub.f32 %v6050, %v6121
        %v6138 = vsub.f32 %v6051, %v6122
        %v6139 = vsub.f32 %v6052, %v6123
        %v6140 = vsub.f32 %v6053, %v6124
        %v6141 = vmul.f32 %v6125, %v6125
        %v6142 = vmul.f32 %v6126, %v6126
        %v6143 = vmul.f32 %v6127, %v6127
        %v6144 = vmul.f32 %v6128, %v6128
        %v6145 = vmul.f32 %v6129, %v6129
        %v6146 = vmul.f32 %v6130, %v6130
        %v6147 = vmul.f32 %v6131, %v6131
        %v6148 = vmul.f32 %v6132, %v6132
        %v6149 = vmul.f32 %v6133, %v6133
        %v6150 = vmul.f32 %v6134, %v6134
        %v6151 = vmul.f32 %v6135, %v6135
        %v6152 = vmul.f32 %v6136, %v6136
        %v6153 = vmul.f32 %v6137, %v6137
        %v6154 = vmul.f32 %v6138, %v6138
        %v6155 = vmul.f32 %v6139, %v6139
        %v6156 = vmul.f32 %v6140, %v6140
        %v6157 = vsel %vm5932, %v6141, 0.0
        %6158 = vadd.xlane.f32.xlu0 %v6157
        %v6159 = vpop.xlane.xlu0 %6158
        %v6160 = vsel %vm5932, %v6142, 0.0
        %6161 = vadd.xlane.f32.xlu0 %v6160
        %v6162 = vpop.xlane.xlu0 %6161
        %v6163 = vsel %vm5932, %v6143, 0.0
        %6164 = vadd.xlane.f32.xlu0 %v6163
        %v6165 = vpop.xlane.xlu0 %6164
        %v6166 = vsel %vm5932, %v6144, 0.0
        %6167 = vadd.xlane.f32.xlu0 %v6166
        %v6168 = vpop.xlane.xlu0 %6167
        %v6169 = vsel %vm5932, %v6145, 0.0
        %6170 = vadd.xlane.f32.xlu0 %v6169
        %v6171 = vpop.xlane.xlu0 %6170
        %v6172 = vsel %vm5932, %v6146, 0.0
        %6173 = vadd.xlane.f32.xlu0 %v6172
        %v6174 = vpop.xlane.xlu0 %6173
        %v6175 = vsel %vm5932, %v6147, 0.0
        %6176 = vadd.xlane.f32.xlu0 %v6175
        %v6177 = vpop.xlane.xlu0 %6176
        %v6178 = vsel %vm5932, %v6148, 0.0
        %6179 = vadd.xlane.f32.xlu0 %v6178
        %v6180 = vpop.xlane.xlu0 %6179
        %v6181 = vsel %vm5932, %v6149, 0.0
        %6182 = vadd.xlane.f32.xlu0 %v6181
        %v6183 = vpop.xlane.xlu0 %6182
        %v6184 = vsel %vm5932, %v6150, 0.0
        %6185 = vadd.xlane.f32.xlu0 %v6184
        %v6186 = vpop.xlane.xlu0 %6185
        %v6187 = vsel %vm5932, %v6151, 0.0
        %6188 = vadd.xlane.f32.xlu0 %v6187
        %v6189 = vpop.xlane.xlu0 %6188
        %v6190 = vsel %vm5932, %v6152, 0.0
        %6191 = vadd.xlane.f32.xlu0 %v6190
        %v6192 = vpop.xlane.xlu0 %6191
        %v6193 = vsel %vm5932, %v6153, 0.0
        %6194 = vadd.xlane.f32.xlu0 %v6193
        %v6195 = vpop.xlane.xlu0 %6194
        %v6196 = vsel %vm5932, %v6154, 0.0
        %6197 = vadd.xlane.f32.xlu0 %v6196
        %v6198 = vpop.xlane.xlu0 %6197
        %v6199 = vsel %vm5932, %v6155, 0.0
        %6200 = vadd.xlane.f32.xlu0 %v6199
        %v6201 = vpop.xlane.xlu0 %6200
        %v6202 = vsel %vm5932, %v6156, 0.0
        %6203 = vadd.xlane.f32.xlu0 %v6202
        %v6204 = vpop.xlane.xlu0 %6203
        %v6205 = vmul.f32 %v6159, %v6108
        %v6206 = vmul.f32 %v6162, %v6108
        %v6207 = vmul.f32 %v6165, %v6108
        %v6208 = vmul.f32 %v6168, %v6108
        %v6209 = vmul.f32 %v6171, %v6108
        %v6210 = vmul.f32 %v6174, %v6108
        %v6211 = vmul.f32 %v6177, %v6108
        %v6212 = vmul.f32 %v6180, %v6108
        %v6213 = vmul.f32 %v6183, %v6108
        %v6214 = vmul.f32 %v6186, %v6108
        %v6215 = vmul.f32 %v6189, %v6108
        %v6216 = vmul.f32 %v6192, %v6108
        %v6217 = vmul.f32 %v6195, %v6108
        %v6218 = vmul.f32 %v6198, %v6108
        %v6219 = vmul.f32 %v6201, %v6108
        %v6220 = vmul.f32 %v6204, %v6108
        %v6221 = vadd.f32 %v6205, 1e-06
        %v6222 = vadd.f32 %v6206, 1e-06
        %v6223 = vadd.f32 %v6207, 1e-06
        %v6224 = vadd.f32 %v6208, 1e-06
        %v6225 = vadd.f32 %v6209, 1e-06
        %v6226 = vadd.f32 %v6210, 1e-06
        %v6227 = vadd.f32 %v6211, 1e-06
        %v6228 = vadd.f32 %v6212, 1e-06
        %v6229 = vadd.f32 %v6213, 1e-06
        %v6230 = vadd.f32 %v6214, 1e-06
        %v6231 = vadd.f32 %v6215, 1e-06
        %v6232 = vadd.f32 %v6216, 1e-06
        %v6233 = vadd.f32 %v6217, 1e-06
        %v6234 = vadd.f32 %v6218, 1e-06
        %v6235 = vadd.f32 %v6219, 1e-06
        %v6236 = vadd.f32 %v6220, 1e-06
        %v6237 = vrsqrt.pop %v6221
        %v6238 = vmul.f32 %v6237, %v6221
        %v6239 = vmul.f32 %v6238, %v6237
        %v6240 = vmul.f32 0.5, %v6239
        %v6241 = vsub.f32 1.5, %v6240
        %v6242 = vmul.f32 %v6237, %v6241
        %vm6243 = vweird.f32 %v6221
        %vm6244 = vweird.f32 %v6237
        %vm6245 = vmor %vm6243, %vm6244
        %v6246 = vsel %vm6245, %v6237, %v6242
        %v6247 = vrsqrt.pop %v6222
        %v6248 = vmul.f32 %v6247, %v6222
        %v6249 = vmul.f32 %v6248, %v6247
        %v6250 = vmul.f32 0.5, %v6249
        %v6251 = vsub.f32 1.5, %v6250
        %v6252 = vmul.f32 %v6247, %v6251
        %vm6253 = vweird.f32 %v6222
        %vm6254 = vweird.f32 %v6247
        %vm6255 = vmor %vm6253, %vm6254
        %v6256 = vsel %vm6255, %v6247, %v6252
        %v6257 = vrsqrt.pop %v6223
        %v6258 = vmul.f32 %v6257, %v6223
        %v6259 = vmul.f32 %v6258, %v6257
        %v6260 = vmul.f32 0.5, %v6259
        %v6261 = vsub.f32 1.5, %v6260
        %v6262 = vmul.f32 %v6257, %v6261
        %vm6263 = vweird.f32 %v6223
        %vm6264 = vweird.f32 %v6257
        %vm6265 = vmor %vm6263, %vm6264
        %v6266 = vsel %vm6265, %v6257, %v6262
        %v6267 = vrsqrt.pop %v6224
        %v6268 = vmul.f32 %v6267, %v6224
        %v6269 = vmul.f32 %v6268, %v6267
        %v6270 = vmul.f32 0.5, %v6269
        %v6271 = vsub.f32 1.5, %v6270
        %v6272 = vmul.f32 %v6267, %v6271
        %vm6273 = vweird.f32 %v6224
        %vm6274 = vweird.f32 %v6267
        %vm6275 = vmor %vm6273, %vm6274
        %v6276 = vsel %vm6275, %v6267, %v6272
        %v6277 = vrsqrt.pop %v6225
        %v6278 = vmul.f32 %v6277, %v6225
        %v6279 = vmul.f32 %v6278, %v6277
        %v6280 = vmul.f32 0.5, %v6279
        %v6281 = vsub.f32 1.5, %v6280
        %v6282 = vmul.f32 %v6277, %v6281
        %vm6283 = vweird.f32 %v6225
        %vm6284 = vweird.f32 %v6277
        %vm6285 = vmor %vm6283, %vm6284
        %v6286 = vsel %vm6285, %v6277, %v6282
        %v6287 = vrsqrt.pop %v6226
        %v6288 = vmul.f32 %v6287, %v6226
        %v6289 = vmul.f32 %v6288, %v6287
        %v6290 = vmul.f32 0.5, %v6289
        %v6291 = vsub.f32 1.5, %v6290
        %v6292 = vmul.f32 %v6287, %v6291
        %vm6293 = vweird.f32 %v6226
        %vm6294 = vweird.f32 %v6287
        %vm6295 = vmor %vm6293, %vm6294
        %v6296 = vsel %vm6295, %v6287, %v6292
        %v6297 = vrsqrt.pop %v6227
        %v6298 = vmul.f32 %v6297, %v6227
        %v6299 = vmul.f32 %v6298, %v6297
        %v6300 = vmul.f32 0.5, %v6299
        %v6301 = vsub.f32 1.5, %v6300
        %v6302 = vmul.f32 %v6297, %v6301
        %vm6303 = vweird.f32 %v6227
        %vm6304 = vweird.f32 %v6297
        %vm6305 = vmor %vm6303, %vm6304
        %v6306 = vsel %vm6305, %v6297, %v6302
        %v6307 = vrsqrt.pop %v6228
        %v6308 = vmul.f32 %v6307, %v6228
        %v6309 = vmul.f32 %v6308, %v6307
        %v6310 = vmul.f32 0.5, %v6309
        %v6311 = vsub.f32 1.5, %v6310
        %v6312 = vmul.f32 %v6307, %v6311
        %vm6313 = vweird.f32 %v6228
        %vm6314 = vweird.f32 %v6307
        %vm6315 = vmor %vm6313, %vm6314
        %v6316 = vsel %vm6315, %v6307, %v6312
        %v6317 = vrsqrt.pop %v6229
        %v6318 = vmul.f32 %v6317, %v6229
        %v6319 = vmul.f32 %v6318, %v6317
        %v6320 = vmul.f32 0.5, %v6319
        %v6321 = vsub.f32 1.5, %v6320
        %v6322 = vmul.f32 %v6317, %v6321
        %vm6323 = vweird.f32 %v6229
        %vm6324 = vweird.f32 %v6317
        %vm6325 = vmor %vm6323, %vm6324
        %v6326 = vsel %vm6325, %v6317, %v6322
        %v6327 = vrsqrt.pop %v6230
        %v6328 = vmul.f32 %v6327, %v6230
        %v6329 = vmul.f32 %v6328, %v6327
        %v6330 = vmul.f32 0.5, %v6329
        %v6331 = vsub.f32 1.5, %v6330
        %v6332 = vmul.f32 %v6327, %v6331
        %vm6333 = vweird.f32 %v6230
        %vm6334 = vweird.f32 %v6327
        %vm6335 = vmor %vm6333, %vm6334
        %v6336 = vsel %vm6335, %v6327, %v6332
        %v6337 = vrsqrt.pop %v6231
        %v6338 = vmul.f32 %v6337, %v6231
        %v6339 = vmul.f32 %v6338, %v6337
        %v6340 = vmul.f32 0.5, %v6339
        %v6341 = vsub.f32 1.5, %v6340
        %v6342 = vmul.f32 %v6337, %v6341
        %vm6343 = vweird.f32 %v6231
        %vm6344 = vweird.f32 %v6337
        %vm6345 = vmor %vm6343, %vm6344
        %v6346 = vsel %vm6345, %v6337, %v6342
        %v6347 = vrsqrt.pop %v6232
        %v6348 = vmul.f32 %v6347, %v6232
        %v6349 = vmul.f32 %v6348, %v6347
        %v6350 = vmul.f32 0.5, %v6349
        %v6351 = vsub.f32 1.5, %v6350
        %v6352 = vmul.f32 %v6347, %v6351
        %vm6353 = vweird.f32 %v6232
        %vm6354 = vweird.f32 %v6347
        %vm6355 = vmor %vm6353, %vm6354
        %v6356 = vsel %vm6355, %v6347, %v6352
        %v6357 = vrsqrt.pop %v6233
        %v6358 = vmul.f32 %v6357, %v6233
        %v6359 = vmul.f32 %v6358, %v6357
        %v6360 = vmul.f32 0.5, %v6359
        %v6361 = vsub.f32 1.5, %v6360
        %v6362 = vmul.f32 %v6357, %v6361
        %vm6363 = vweird.f32 %v6233
        %vm6364 = vweird.f32 %v6357
        %vm6365 = vmor %vm6363, %vm6364
        %v6366 = vsel %vm6365, %v6357, %v6362
        %v6367 = vrsqrt.pop %v6234
        %v6368 = vmul.f32 %v6367, %v6234
        %v6369 = vmul.f32 %v6368, %v6367
        %v6370 = vmul.f32 0.5, %v6369
        %v6371 = vsub.f32 1.5, %v6370
        %v6372 = vmul.f32 %v6367, %v6371
        %vm6373 = vweird.f32 %v6234
        %vm6374 = vweird.f32 %v6367
        %vm6375 = vmor %vm6373, %vm6374
        %v6376 = vsel %vm6375, %v6367, %v6372
        %v6377 = vrsqrt.pop %v6235
        %v6378 = vmul.f32 %v6377, %v6235
        %v6379 = vmul.f32 %v6378, %v6377
        %v6380 = vmul.f32 0.5, %v6379
        %v6381 = vsub.f32 1.5, %v6380
        %v6382 = vmul.f32 %v6377, %v6381
        %vm6383 = vweird.f32 %v6235
        %vm6384 = vweird.f32 %v6377
        %vm6385 = vmor %vm6383, %vm6384
        %v6386 = vsel %vm6385, %v6377, %v6382
        %v6387 = vrsqrt.pop %v6236
        %v6388 = vmul.f32 %v6387, %v6236
        %v6389 = vmul.f32 %v6388, %v6387
        %v6390 = vmul.f32 0.5, %v6389
        %v6391 = vsub.f32 1.5, %v6390
        %v6392 = vmul.f32 %v6387, %v6391
        %vm6393 = vweird.f32 %v6236
        %vm6394 = vweird.f32 %v6387
        %vm6395 = vmor %vm6393, %vm6394
        %v6396 = vsel %vm6395, %v6387, %v6392
        %v6397 = vmul.f32 %v6125, %v6246
        %v6398 = vmul.f32 %v6126, %v6256
        %v6399 = vmul.f32 %v6127, %v6266
        %v6400 = vmul.f32 %v6128, %v6276
        %v6401 = vmul.f32 %v6129, %v6286
        %v6402 = vmul.f32 %v6130, %v6296
        %v6403 = vmul.f32 %v6131, %v6306
        %v6404 = vmul.f32 %v6132, %v6316
        %v6405 = vmul.f32 %v6133, %v6326
        %v6406 = vmul.f32 %v6134, %v6336
        %v6407 = vmul.f32 %v6135, %v6346
        %v6408 = vmul.f32 %v6136, %v6356
        %v6409 = vmul.f32 %v6137, %v6366
        %v6410 = vmul.f32 %v6138, %v6376
        %v6411 = vmul.f32 %v6139, %v6386
        %v6412 = vmul.f32 %v6140, %v6396
        %v6413 = vld [vmem:[%s9] sm:$0x1]
        %v6415 = vperm.slane %v6413, 0
        %v6417 = vmul.f32 %v6397, %v6415
        %v6418 = vmul.f32 %v6398, %v6415
        %v6419 = vmul.f32 %v6399, %v6415
        %v6420 = vmul.f32 %v6400, %v6415
        %v6421 = vmul.f32 %v6401, %v6415
        %v6422 = vmul.f32 %v6402, %v6415
        %v6423 = vmul.f32 %v6403, %v6415
        %v6424 = vmul.f32 %v6404, %v6415
        %v6425 = vmul.f32 %v6405, %v6415
        %v6426 = vmul.f32 %v6406, %v6415
        %v6427 = vmul.f32 %v6407, %v6415
        %v6428 = vmul.f32 %v6408, %v6415
        %v6429 = vmul.f32 %v6409, %v6415
        %v6430 = vmul.f32 %v6410, %v6415
        %v6431 = vmul.f32 %v6411, %v6415
        %v6432 = vmul.f32 %v6412, %v6415
        %v6433 = vld [vmem:[%s10] sm:$0x1]
        %v6435 = vperm.slane %v6433, 0
        %v6437 = vadd.f32 %v6417, %v6435
        %v6438 = vadd.f32 %v6418, %v6435
        %v6439 = vadd.f32 %v6419, %v6435
        %v6440 = vadd.f32 %v6420, %v6435
        %v6441 = vadd.f32 %v6421, %v6435
        %v6442 = vadd.f32 %v6422, %v6435
        %v6443 = vadd.f32 %v6423, %v6435
        %v6444 = vadd.f32 %v6424, %v6435
        %v6445 = vadd.f32 %v6425, %v6435
        %v6446 = vadd.f32 %v6426, %v6435
        %v6447 = vadd.f32 %v6427, %v6435
        %v6448 = vadd.f32 %v6428, %v6435
        %v6449 = vadd.f32 %v6429, %v6435
        %v6450 = vadd.f32 %v6430, %v6435
        %v6451 = vadd.f32 %v6431, %v6435
        %v6452 = vadd.f32 %v6432, %v6435
        %v6453 = vpack.c.bf16 %v6438, %v6437
        %v6454 = vpack.c.bf16 %v6440, %v6439
        %v6455 = vpack.c.bf16 %v6442, %v6441
        %v6456 = vpack.c.bf16 %v6444, %v6443
        %v6457 = vpack.c.bf16 %v6446, %v6445
        %v6458 = vpack.c.bf16 %v6448, %v6447
        %v6459 = vpack.c.bf16 %v6450, %v6449
        %v6460 = vpack.c.bf16 %v6452, %v6451
        %v6461 = vld [vmem:[%s11] sm:$0xf]
        %v6462 = vld [vmem:[%s11 + $0x4] sm:$0xf]
        %v6463 = vld [vmem:[%s11 + $0x8] sm:$0xf]
        %v6464 = vld [vmem:[%s11 + $0xc] sm:$0xf]
        %v6465 = vld [vmem:[%s12] sm:$0x1]
        %v6467 = vperm.slane %v6465, 0
        %v6473 = vunpack.c.l.b16 %v6461
        %v6474 = vunpack.c.l.b16 %v6462
        %v6475 = vunpack.c.l.b16 %v6463
        %v6476 = vunpack.c.l.b16 %v6464
        %v6477 = vpack.c.b16 %v6474, %v6473
        %v6478 = vpack.c.b16 %v6476, %v6475
        %v6482 = vsel %vm5932, %v6453, 0
        %v6485 = vsel %vm5932, %v6454, 0
        %v6488 = vsel %vm5932, %v6455, 0
        %v6491 = vsel %vm5932, %v6456, 0
        %v6494 = vsel %vm5932, %v6457, 0
        %v6497 = vsel %vm5932, %v6458, 0
        %v6500 = vsel %vm5932, %v6459, 0
        %v6503 = vsel %vm5932, %v6460, 0
        %6505 = vmatpush.bf16.msra.mxu0 0
        %6506 = vmatpush.bf16.msra.mxu0 0
        %6507 = vmatpush.bf16.msra.mxu0 0
        %6508 = vmatpush.bf16.msra.mxu0 0
        %6509 = vmatpush.bf16.msra.mxu0 0
        %6510 = vmatpush.bf16.msra.mxu0 0
        %6511 = vmatpush.bf16.msra.mxu0 %v6478
        %6512 = vmatpush.bf16.msra.mxu0 %v6477
        %6513 = vmatmul.bf16.gmra.mxu0 %v6482
        %v6514 = vpop.f32.mrf.mxu0
        %v6515 = vadd.f32 %v6467, %v6514
        %v6516 = vpop.f32.mrf.mxu0
        %v6517 = vadd.f32 %v6467, %v6516
        %6518 = vmatmul.bf16.gmra.mxu0 %v6485
        %v6519 = vpop.f32.mrf.mxu0
        %v6520 = vadd.f32 %v6467, %v6519
        %v6521 = vpop.f32.mrf.mxu0
        %v6522 = vadd.f32 %v6467, %v6521
        %6523 = vmatmul.bf16.gmra.mxu0 %v6488
        %v6524 = vpop.f32.mrf.mxu0
        %v6525 = vadd.f32 %v6467, %v6524
        %v6526 = vpop.f32.mrf.mxu0
        %v6527 = vadd.f32 %v6467, %v6526
        %6528 = vmatmul.bf16.gmra.mxu0 %v6491
        %v6529 = vpop.f32.mrf.mxu0
        %v6530 = vadd.f32 %v6467, %v6529
        %v6531 = vpop.f32.mrf.mxu0
        %v6532 = vadd.f32 %v6467, %v6531
        %6533 = vmatmul.bf16.gmra.mxu0 %v6494
        %v6534 = vpop.f32.mrf.mxu0
        %v6535 = vadd.f32 %v6467, %v6534
        %v6536 = vpop.f32.mrf.mxu0
        %v6537 = vadd.f32 %v6467, %v6536
        %6538 = vmatmul.bf16.gmra.mxu0 %v6497
        %v6539 = vpop.f32.mrf.mxu0
        %v6540 = vadd.f32 %v6467, %v6539
        %v6541 = vpop.f32.mrf.mxu0
        %v6542 = vadd.f32 %v6467, %v6541
        %6543 = vmatmul.bf16.gmra.mxu0 %v6500
        %v6544 = vpop.f32.mrf.mxu0
        %v6545 = vadd.f32 %v6467, %v6544
        %v6546 = vpop.f32.mrf.mxu0
        %v6547 = vadd.f32 %v6467, %v6546
        %6548 = vmatmul.bf16.gmra.mxu0 %v6503
        %v6549 = vpop.f32.mrf.mxu0
        %v6550 = vadd.f32 %v6467, %v6549
        %v6551 = vpop.f32.mrf.mxu0
        %v6552 = vadd.f32 %v6467, %v6551
        %6553 = vdwg.mxu0
        %v6554 = vmul.f32 %v6515, %v6515
        %v6555 = vmul.f32 %v6517, %v6517
        %v6556 = vmul.f32 %v6520, %v6520
        %v6557 = vmul.f32 %v6522, %v6522
        %v6558 = vmul.f32 %v6525, %v6525
        %v6559 = vmul.f32 %v6527, %v6527
        %v6560 = vmul.f32 %v6530, %v6530
        %v6561 = vmul.f32 %v6532, %v6532
        %v6562 = vmul.f32 %v6535, %v6535
        %v6563 = vmul.f32 %v6537, %v6537
        %v6564 = vmul.f32 %v6540, %v6540
        %v6565 = vmul.f32 %v6542, %v6542
        %v6566 = vmul.f32 %v6545, %v6545
        %v6567 = vmul.f32 %v6547, %v6547
        %v6568 = vmul.f32 %v6550, %v6550
        %v6569 = vmul.f32 %v6552, %v6552
        %v6570 = vmul.f32 %v6515, %v6554
        %v6571 = vmul.f32 %v6517, %v6555
        %v6572 = vmul.f32 %v6520, %v6556
        %v6573 = vmul.f32 %v6522, %v6557
        %v6574 = vmul.f32 %v6525, %v6558
        %v6575 = vmul.f32 %v6527, %v6559
        %v6576 = vmul.f32 %v6530, %v6560
        %v6577 = vmul.f32 %v6532, %v6561
        %v6578 = vmul.f32 %v6535, %v6562
        %v6579 = vmul.f32 %v6537, %v6563
        %v6580 = vmul.f32 %v6540, %v6564
        %v6581 = vmul.f32 %v6542, %v6565
        %v6582 = vmul.f32 %v6545, %v6566
        %v6583 = vmul.f32 %v6547, %v6567
        %v6584 = vmul.f32 %v6550, %v6568
        %v6585 = vmul.f32 %v6552, %v6569
        %v6586 = vmul.f32 %v6570, 0.044715
        %v6587 = vmul.f32 %v6571, 0.044715
        %v6588 = vmul.f32 %v6572, 0.044715
        %v6589 = vmul.f32 %v6573, 0.044715
        %v6590 = vmul.f32 %v6574, 0.044715
        %v6591 = vmul.f32 %v6575, 0.044715
        %v6592 = vmul.f32 %v6576, 0.044715
        %v6593 = vmul.f32 %v6577, 0.044715
        %v6594 = vmul.f32 %v6578, 0.044715
        %v6595 = vmul.f32 %v6579, 0.044715
        %v6596 = vmul.f32 %v6580, 0.044715
        %v6597 = vmul.f32 %v6581, 0.044715
        %v6598 = vmul.f32 %v6582, 0.044715
        %v6599 = vmul.f32 %v6583, 0.044715
        %v6600 = vmul.f32 %v6584, 0.044715
        %v6601 = vmul.f32 %v6585, 0.044715
        %v6602 = vadd.f32 %v6515, %v6586
        %v6603 = vadd.f32 %v6517, %v6587
        %v6604 = vadd.f32 %v6520, %v6588
        %v6605 = vadd.f32 %v6522, %v6589
        %v6606 = vadd.f32 %v6525, %v6590
        %v6607 = vadd.f32 %v6527, %v6591
        %v6608 = vadd.f32 %v6530, %v6592
        %v6609 = vadd.f32 %v6532, %v6593
        %v6610 = vadd.f32 %v6535, %v6594
        %v6611 = vadd.f32 %v6537, %v6595
        %v6612 = vadd.f32 %v6540, %v6596
        %v6613 = vadd.f32 %v6542, %v6597
        %v6614 = vadd.f32 %v6545, %v6598
        %v6615 = vadd.f32 %v6547, %v6599
        %v6616 = vadd.f32 %v6550, %v6600
        %v6617 = vadd.f32 %v6552, %v6601
        %v6618 = vmul.f32 %v6602, 0.7978846
        %v6619 = vmul.f32 %v6603, 0.7978846
        %v6620 = vmul.f32 %v6604, 0.7978846
        %v6621 = vmul.f32 %v6605, 0.7978846
        %v6622 = vmul.f32 %v6606, 0.7978846
        %v6623 = vmul.f32 %v6607, 0.7978846
        %v6624 = vmul.f32 %v6608, 0.7978846
        %v6625 = vmul.f32 %v6609, 0.7978846
        %v6626 = vmul.f32 %v6610, 0.7978846
        %v6627 = vmul.f32 %v6611, 0.7978846
        %v6628 = vmul.f32 %v6612, 0.7978846
        %v6629 = vmul.f32 %v6613, 0.7978846
        %v6630 = vmul.f32 %v6614, 0.7978846
        %v6631 = vmul.f32 %v6615, 0.7978846
        %v6632 = vmul.f32 %v6616, 0.7978846
        %v6633 = vmul.f32 %v6617, 0.7978846
        %v6634 = vtanh.pop %v6618
        %v6635 = vtanh.pop %v6619
        %v6636 = vtanh.pop %v6620
        %v6637 = vtanh.pop %v6621
        %v6638 = vtanh.pop %v6622
        %v6639 = vtanh.pop %v6623
        %v6640 = vtanh.pop %v6624
        %v6641 = vtanh.pop %v6625
        %v6642 = vtanh.pop %v6626
        %v6643 = vtanh.pop %v6627
        %v6644 = vtanh.pop %v6628
        %v6645 = vtanh.pop %v6629
        %v6646 = vtanh.pop %v6630
        %v6647 = vtanh.pop %v6631
        %v6648 = vtanh.pop %v6632
        %v6649 = vtanh.pop %v6633
        %v6650 = vadd.f32 %v6634, 1.0
        %v6651 = vadd.f32 %v6635, 1.0
        %v6652 = vadd.f32 %v6636, 1.0
        %v6653 = vadd.f32 %v6637, 1.0
        %v6654 = vadd.f32 %v6638, 1.0
        %v6655 = vadd.f32 %v6639, 1.0
        %v6656 = vadd.f32 %v6640, 1.0
        %v6657 = vadd.f32 %v6641, 1.0
        %v6658 = vadd.f32 %v6642, 1.0
        %v6659 = vadd.f32 %v6643, 1.0
        %v6660 = vadd.f32 %v6644, 1.0
        %v6661 = vadd.f32 %v6645, 1.0
        %v6662 = vadd.f32 %v6646, 1.0
        %v6663 = vadd.f32 %v6647, 1.0
        %v6664 = vadd.f32 %v6648, 1.0
        %v6665 = vadd.f32 %v6649, 1.0
        %v6666 = vmul.f32 %v6650, 0.5
        %v6667 = vmul.f32 %v6651, 0.5
        %v6668 = vmul.f32 %v6652, 0.5
        %v6669 = vmul.f32 %v6653, 0.5
        %v6670 = vmul.f32 %v6654, 0.5
        %v6671 = vmul.f32 %v6655, 0.5
        %v6672 = vmul.f32 %v6656, 0.5
        %v6673 = vmul.f32 %v6657, 0.5
        %v6674 = vmul.f32 %v6658, 0.5
        %v6675 = vmul.f32 %v6659, 0.5
        %v6676 = vmul.f32 %v6660, 0.5
        %v6677 = vmul.f32 %v6661, 0.5
        %v6678 = vmul.f32 %v6662, 0.5
        %v6679 = vmul.f32 %v6663, 0.5
        %v6680 = vmul.f32 %v6664, 0.5
        %v6681 = vmul.f32 %v6665, 0.5
        %v6682 = vmul.f32 %v6515, %v6666
        %v6683 = vmul.f32 %v6517, %v6667
        %v6684 = vmul.f32 %v6520, %v6668
        %v6685 = vmul.f32 %v6522, %v6669
        %v6686 = vmul.f32 %v6525, %v6670
        %v6687 = vmul.f32 %v6527, %v6671
        %v6688 = vmul.f32 %v6530, %v6672
        %v6689 = vmul.f32 %v6532, %v6673
        %v6690 = vmul.f32 %v6535, %v6674
        %v6691 = vmul.f32 %v6537, %v6675
        %v6692 = vmul.f32 %v6540, %v6676
        %v6693 = vmul.f32 %v6542, %v6677
        %v6694 = vmul.f32 %v6545, %v6678
        %v6695 = vmul.f32 %v6547, %v6679
        %v6696 = vmul.f32 %v6550, %v6680
        %v6697 = vmul.f32 %v6552, %v6681
        %v6698 = vpack.c.bf16 %v6683, %v6682
        %v6699 = vpack.c.bf16 %v6685, %v6684
        %v6700 = vpack.c.bf16 %v6687, %v6686
        %v6701 = vpack.c.bf16 %v6689, %v6688
        %v6702 = vpack.c.bf16 %v6691, %v6690
        %v6703 = vpack.c.bf16 %v6693, %v6692
        %v6704 = vpack.c.bf16 %v6695, %v6694
        %v6705 = vpack.c.bf16 %v6697, %v6696
        %v6706 = vld [vmem:[%s13] sm:$0xf]
        %v6707 = vld [vmem:[%s13 + $0x4] sm:$0xf]
        %v6708 = vld [vmem:[%s13 + $0x8] sm:$0xf]
        %v6709 = vld [vmem:[%s13 + $0xc] sm:$0xf]
        %v6710 = vld [vmem:[%s13 + $0x10] sm:$0xf]
        %v6711 = vld [vmem:[%s13 + $0x14] sm:$0xf]
        %v6712 = vld [vmem:[%s13 + $0x18] sm:$0xf]
        %v6713 = vld [vmem:[%s13 + $0x1c] sm:$0xf]
        %v6714 = vld [vmem:[%s14] sm:$0x1]
        %v6716 = vperm.slane %v6714, 0
        %v6726 = vunpack.c.l.b16 %v6706
        %v6727 = vunpack.c.l.b16 %v6707
        %v6728 = vunpack.c.l.b16 %v6708
        %v6729 = vunpack.c.l.b16 %v6709
        %v6730 = vunpack.c.l.b16 %v6710
        %v6731 = vunpack.c.l.b16 %v6711
        %v6732 = vunpack.c.l.b16 %v6712
        %v6733 = vunpack.c.l.b16 %v6713
        %v6734 = vpack.c.b16 %v6727, %v6726
        %v6735 = vpack.c.b16 %v6729, %v6728
        %v6736 = vpack.c.b16 %v6731, %v6730
        %v6737 = vpack.c.b16 %v6733, %v6732
        %vm6742 = vcmask 523264
        %v6744 = vsel %vm6742, %v6698, 0
        %v6747 = vsel %vm6742, %v6699, 0
        %v6750 = vsel %vm6742, %v6700, 0
        %v6753 = vsel %vm6742, %v6701, 0
        %v6756 = vsel %vm6742, %v6702, 0
        %v6759 = vsel %vm6742, %v6703, 0
        %v6762 = vsel %vm6742, %v6704, 0
        %v6765 = vsel %vm6742, %v6705, 0
        %6767 = vmatpush.bf16.msra.mxu0 0
        %6768 = vmatpush.bf16.msra.mxu0 0
        %6769 = vmatpush.bf16.msra.mxu0 0
        %6770 = vmatpush.bf16.msra.mxu0 0
        %6771 = vmatpush.bf16.msra.mxu0 %v6737
        %6772 = vmatpush.bf16.msra.mxu0 %v6736
        %6773 = vmatpush.bf16.msra.mxu0 %v6735
        %6774 = vmatpush.bf16.msra.mxu0 %v6734
        %6775 = vmatmul.bf16.gmra.mxu0 %v6744
        %v6776 = vpop.f32.mrf.mxu0
        %v6777 = vadd.f32 %v6716, %v6776
        %v6778 = vpop.f32.mrf.mxu0
        %v6779 = vadd.f32 %v6716, %v6778
        %6780 = vmatmul.bf16.gmra.mxu0 %v6747
        %v6781 = vpop.f32.mrf.mxu0
        %v6782 = vadd.f32 %v6716, %v6781
        %v6783 = vpop.f32.mrf.mxu0
        %v6784 = vadd.f32 %v6716, %v6783
        %6785 = vmatmul.bf16.gmra.mxu0 %v6750
        %v6786 = vpop.f32.mrf.mxu0
        %v6787 = vadd.f32 %v6716, %v6786
        %v6788 = vpop.f32.mrf.mxu0
        %v6789 = vadd.f32 %v6716, %v6788
        %6790 = vmatmul.bf16.gmra.mxu0 %v6753
        %v6791 = vpop.f32.mrf.mxu0
        %v6792 = vadd.f32 %v6716, %v6791
        %v6793 = vpop.f32.mrf.mxu0
        %v6794 = vadd.f32 %v6716, %v6793
        %6795 = vmatmul.bf16.gmra.mxu0 %v6756
        %v6796 = vpop.f32.mrf.mxu0
        %v6797 = vadd.f32 %v6716, %v6796
        %v6798 = vpop.f32.mrf.mxu0
        %v6799 = vadd.f32 %v6716, %v6798
        %6800 = vmatmul.bf16.gmra.mxu0 %v6759
        %v6801 = vpop.f32.mrf.mxu0
        %v6802 = vadd.f32 %v6716, %v6801
        %v6803 = vpop.f32.mrf.mxu0
        %v6804 = vadd.f32 %v6716, %v6803
        %6805 = vmatmul.bf16.gmra.mxu0 %v6762
        %v6806 = vpop.f32.mrf.mxu0
        %v6807 = vadd.f32 %v6716, %v6806
        %v6808 = vpop.f32.mrf.mxu0
        %v6809 = vadd.f32 %v6716, %v6808
        %6810 = vmatmul.bf16.gmra.mxu0 %v6765
        %v6811 = vpop.f32.mrf.mxu0
        %v6812 = vadd.f32 %v6716, %v6811
        %v6813 = vpop.f32.mrf.mxu0
        %v6814 = vadd.f32 %v6716, %v6813
        %6815 = vdwg.mxu0
        %v6816 = vadd.f32 %v6038, %v6777
        %v6817 = vadd.f32 %v6039, %v6779
        %v6818 = vadd.f32 %v6040, %v6782
        %v6819 = vadd.f32 %v6041, %v6784
        %v6820 = vadd.f32 %v6042, %v6787
        %v6821 = vadd.f32 %v6043, %v6789
        %v6822 = vadd.f32 %v6044, %v6792
        %v6823 = vadd.f32 %v6045, %v6794
        %v6824 = vadd.f32 %v6046, %v6797
        %v6825 = vadd.f32 %v6047, %v6799
        %v6826 = vadd.f32 %v6048, %v6802
        %v6827 = vadd.f32 %v6049, %v6804
        %v6828 = vadd.f32 %v6050, %v6807
        %v6829 = vadd.f32 %v6051, %v6809
        %v6830 = vadd.f32 %v6052, %v6812
        %v6831 = vadd.f32 %v6053, %v6814
        %v6832 = vpack.c.bf16 %v6816, %v6816
        %v6833 = vpack.c.bf16 %v6817, %v6817
        %v6834 = vpack.c.bf16 %v6818, %v6818
        %v6835 = vpack.c.bf16 %v6819, %v6819
        %v6836 = vpack.c.bf16 %v6820, %v6820
        %v6837 = vpack.c.bf16 %v6821, %v6821
        %v6838 = vpack.c.bf16 %v6822, %v6822
        %v6839 = vpack.c.bf16 %v6823, %v6823
        %v6840 = vpack.c.bf16 %v6824, %v6824
        %v6841 = vpack.c.bf16 %v6825, %v6825
        %v6842 = vpack.c.bf16 %v6826, %v6826
        %v6843 = vpack.c.bf16 %v6827, %v6827
        %v6844 = vpack.c.bf16 %v6828, %v6828
        %v6845 = vpack.c.bf16 %v6829, %v6829
        %v6846 = vpack.c.bf16 %v6830, %v6830
        %v6847 = vpack.c.bf16 %v6831, %v6831
        %vm6848 = vcmask 257024
        %6849 = vst.msk [vmem:[%s865] sm:$0xf] %vm6848, %v6832
        %6850 = vst.msk [vmem:[%s865 + $0x4] sm:$0xf] %vm6848, %v6833
        %6851 = vst.msk [vmem:[%s865 + $0x8] sm:$0xf] %vm6848, %v6834
        %6852 = vst.msk [vmem:[%s865 + $0xc] sm:$0xf] %vm6848, %v6835
        %6853 = vst.msk [vmem:[%s865 + $0x10] sm:$0xf] %vm6848, %v6836
        %6854 = vst.msk [vmem:[%s865 + $0x14] sm:$0xf] %vm6848, %v6837
        %6855 = vst.msk [vmem:[%s865 + $0x18] sm:$0xf] %vm6848, %v6838
        %6856 = vst.msk [vmem:[%s865 + $0x1c] sm:$0xf] %vm6848, %v6839
        %6857 = vst.msk [vmem:[%s865 + $0x20] sm:$0xf] %vm6848, %v6840
        %6858 = vst.msk [vmem:[%s865 + $0x24] sm:$0xf] %vm6848, %v6841
        %6859 = vst.msk [vmem:[%s865 + $0x28] sm:$0xf] %vm6848, %v6842
        %6860 = vst.msk [vmem:[%s865 + $0x2c] sm:$0xf] %vm6848, %v6843
        %6861 = vst.msk [vmem:[%s865 + $0x30] sm:$0xf] %vm6848, %v6844
        %6862 = vst.msk [vmem:[%s865 + $0x34] sm:$0xf] %vm6848, %v6845
        %6863 = vst.msk [vmem:[%s865 + $0x38] sm:$0xf] %vm6848, %v6846
        %6864 = vst.msk [vmem:[%s865 + $0x3c] sm:$0xf] %vm6848, %v6847
      $region88: #{siglip2_forward.8} parent=75 // pred_fallthru
        _
      %s6865 = smul.u32 16, %s38
      %p6866 = scmp.lt.s32.totalorder %s6865, 47
      %s6867 = scalar_select %p6866, %s6865, 47
      %s6868 = smul.addr %s6867, 4
      %s6869 = scalar_lea.vmem %s15, %s6868
      // Predicated region
      $region89: #{siglip2_forward.8} parent=75 // pred_check
        %p6870 = pneg %p466
      $region90: #{siglip2_forward.8} parent=75 // pred_check_branch
        %6872 = sbr.rel (%p6870) target = $region92
      $region91: #{siglip2_forward.8} parent=75 // pred_region
        %s6873 = smul.u32 16, %s38
      $region92: #{siglip2_forward.8} parent=75 // pred_fallthru
        _
    $region76: #{siglip2_forward.8} parent=5 // pred_fallthru
      _
    %p6874 = scmp.le.s32.totalorder 2, %s29
    // Predicated region
    $region93: #{siglip2_forward.8} parent=5 // pred_check
      %p6875 = pneg %p6874
    $region94: #{siglip2_forward.8} parent=5 // pred_check_branch
      %6877 = sbr.rel (%p6875) target = $region96
    $region95: #{siglip2_forward.8} parent=5 // pred_region
      %s6878 = ssub.s32 %s29, 2
      // Predicated region
      $region97: #{siglip2_forward.8} parent=95 // pred_check
        %p6879 = pneg %p472
      $region98: #{siglip2_forward.8} parent=95 // pred_check_branch
        %6881 = sbr.rel (%p6879) target = $region100
      $region99: #{siglip2_forward.8} parent=95 // pred_region
        %s6882 = smul.u32 16, %s40
        %p6883 = scmp.lt.s32.totalorder %s6882, 47
        %s6884 = scalar_select %p6883, %s6882, 47
        %s6885 = smul.addr %s6884, 4
        %s6886 = scalar_lea.vmem %s15, %s6885
      $region100: #{siglip2_forward.8} parent=95 // pred_fallthru
        _
    $region96: #{siglip2_forward.8} parent=5 // pred_fallthru
      _
  $region6: #{siglip2_forward.8} parent=0 // loop_footer
    %s33 = sadd.s32 1, %s29
  $region7: #{siglip2_forward.8} parent=0 // loop_footer_branch
    %28 = sbr.rel target = $region3
  $region8: #{siglip2_forward.8} parent=0 // loop_exit
    _

</llo_original>
